<compile_context>
chip_gen: v7x
topology: tpu7x:2x2x1
jax: 0.10.0
libtpu: 0.0.40
codegen_flags: <defaults>
</compile_context>

<pallas_src>
import math
from functools import partial

import jax
import jax.numpy as jnp
from jax.experimental import pallas as pl
from jax.experimental.pallas import tpu as pltpu


# ---------------------------------------------------------------------------
# Fused whole-model kernel.
#   x_ref   : (T*Bp, D)    f32   zero-padded layer-0 input (D = 2*hidden)
#   wih_ref : (L, D, 8H)   bf16  gate-interleaved fused fwd/bwd input weights
#   whh_ref : (L, D, 8H)   bf16  gate-interleaved block-diagonal recurrent weights
#   b_ref   : (L, 1, 8H)   f32   fused biases (b_ih + b_hh, both directions)
#   lw_ref  : (D, Op)      bf16  final linear weight (transposed, lane-padded)
#   lb_ref  : (1, Op)      f32   final linear bias (lane-padded)
#   out_ref : (Bp, Op)     f32
# ---------------------------------------------------------------------------
def _lstm_stack_kernel(x_ref, wih_ref, whh_ref, b_ref, lw_ref, lb_ref, out_ref,
                       act_a, act_b, pre_scr, *, batch):
    TB, D = act_a.shape               # D = 2 * hidden
    G2 = pre_scr.shape[-1]            # 8 * hidden (fused fwd+bwd gates)
    L = wih_ref.shape[0]
    H = D // 2
    Bp = batch                        # sublane-padded batch (multiple of 8)
    T = TB // Bp

    # Lane masks (hoisted; computed once).  In the interleaved gate layout every
    # 2H-lane block is [fwd (H lanes) | bwd (H lanes)].
    lane_g = jax.lax.broadcasted_iota(jnp.int32, (Bp, G2), 1)
    gmask = (lane_g % D) < H                       # fwd lanes of a (Bp, 8H) gate slab
    lane_d = jax.lax.broadcasted_iota(jnp.int32, (Bp, D), 1)
    hmask = lane_d < H                             # fwd half of a (Bp, 2H) hidden slab

    last = None
    for layer in range(L):            # 4 stacked bidirectional layers (static unroll)
        src = x_ref if layer == 0 else (act_a if layer % 2 == 1 else act_b)
        dst = act_a if layer % 2 == 0 else act_b

        # ---- batched input projection for ALL timesteps (off the recurrent path) ----
        xin = src[...].astype(jnp.bfloat16)                          # (T*Bp, D)
        pre_scr[...] = jnp.dot(xin, wih_ref[layer],
                               preferred_element_type=jnp.float32) + b_ref[layer]

        # ---- swizzle: bwd lanes of time-block s must hold pre(T-1-s).  Pairwise
        #      in-place half-swap, dense aligned tiles, off the serial chain. ----
        for t in range(T // 2):
            ra, rb = t * Bp, (T - 1 - t) * Bp
            pa = pre_scr[pl.ds(ra, Bp), :]
            pb = pre_scr[pl.ds(rb, Bp), :]
            pre_scr[pl.ds(ra, Bp), :] = jnp.where(gmask, pa, pb)
            pre_scr[pl.ds(rb, Bp), :] = jnp.where(gmask, pb, pa)

        whh = whh_ref[layer]                                         # (D, 8H) bf16

        # ---- recurrent loop: fwd direction at time s, bwd direction at time T-1-s ----
        def step(s, carry):
            h_cat, c_cat = carry                                     # (Bp, D) f32 [f|b]
            r = pl.multiple_of(s * Bp, Bp)
            gates = pre_scr[pl.ds(r, Bp), :] + jnp.dot(
                h_cat.astype(jnp.bfloat16), whh,
                preferred_element_type=jnp.float32)                  # (Bp, 8H) f32
            i = jax.nn.sigmoid(gates[:, 0 * D:1 * D])                # 128-lane slices
            f = jax.nn.sigmoid(gates[:, 1 * D:2 * D])
            g = jnp.tanh(gates[:, 2 * D:3 * D])
            o = jax.nn.sigmoid(gates[:, 3 * D:4 * D])
            c_new = f * c_cat + i * g
            h_new = o * jnp.tanh(c_new)                              # [h_f(s) | h_b(T-1-s)]
            dst[pl.ds(r, Bp), :] = h_new                             # dense (8,128) tile
            return h_new, c_new

        zero = jnp.zeros((Bp, D), jnp.float32)                       # PyTorch zero init
        jax.lax.fori_loop(0, T, step, (zero, zero), unroll=True)

        if layer == L - 1:
            # out[:, -1, :] = [h_f(T-1) | h_b(T-1)]; h_b(T-1) sits in block 0 bwd lanes.
            last = jnp.where(hmask,
                             dst[pl.ds((T - 1) * Bp, Bp), :],
                             dst[pl.ds(0, Bp), :])
        else:
            # un-swizzle hidden outputs into time order for the next layer's input.
            for t in range(T // 2):
                ra, rb = t * Bp, (T - 1 - t) * Bp
                ha = dst[pl.ds(ra, Bp), :]
                hb = dst[pl.ds(rb, Bp), :]
                dst[pl.ds(ra, Bp), :] = jnp.where(hmask, ha, hb)
                dst[pl.ds(rb, Bp), :] = jnp.where(hmask, hb, ha)

    # ---- final Linear on the last timestep of the last layer (lane-dense store) ----
    out_ref[...] = jnp.dot(last.astype(jnp.bfloat16), lw_ref[...],
                           preferred_element_type=jnp.float32) + lb_ref[...]


# ---------------------------------------------------------------------------
# One-time parameter preparation (hoisted out of the forward path):
# transpose, fuse fwd/bwd, interleave gates, pad layer-0 input dim, cast to bf16.
# PyTorch gate order per direction: [i, f, g, o], each of size H.
# ---------------------------------------------------------------------------
def _fuse_ih(w_ih_f, w_ih_b, hidden, d_pad):
    d_in = w_ih_f.shape[1]
    wf = jnp.asarray(w_ih_f, jnp.float32).T.reshape(d_in, 4, hidden)
    wb = jnp.asarray(w_ih_b, jnp.float32).T.reshape(d_in, 4, hidden)
    w = jnp.concatenate([wf, wb], axis=-1).reshape(d_in, 8 * hidden)
    if d_in < d_pad:
        w = jnp.pad(w, ((0, d_pad - d_in), (0, 0)))
    return w


def _fuse_hh(w_hh_f, w_hh_b, hidden):
    wf = jnp.asarray(w_hh_f, jnp.float32).T.reshape(hidden, 4, hidden)
    wb = jnp.asarray(w_hh_b, jnp.float32).T.reshape(hidden, 4, hidden)
    z = jnp.zeros_like(wf)
    top = jnp.concatenate([wf, z], axis=-1)       # h_f rows -> fwd gate columns only
    bot = jnp.concatenate([z, wb], axis=-1)       # h_b rows -> bwd gate columns only
    return jnp.concatenate([top, bot], axis=0).reshape(2 * hidden, 8 * hidden)


def _fuse_bias(b_f, b_b, hidden):
    bf = jnp.asarray(b_f, jnp.float32).reshape(4, hidden)
    bb = jnp.asarray(b_b, jnp.float32).reshape(4, hidden)
    return jnp.concatenate([bf, bb], axis=-1).reshape(1, 8 * hidden)


def prepare_params(raw):
    layers = list(raw["lstm1"]) + list(raw["lstm2"])
    hidden = layers[0]["fwd"][1].shape[1]          # w_hh: (4H, H)
    D = 2 * hidden
    assert layers[0]["fwd"][0].shape[1] <= D, "input_size must be <= 2*hidden_size"
    wih, whh, bias = [], [], []
    for layer in layers:
        w_ih_f, w_hh_f, b_ih_f, b_hh_f = layer["fwd"]
        w_ih_b, w_hh_b, b_ih_b, b_hh_b = layer["bwd"]
        wih.append(_fuse_ih(w_ih_f, w_ih_b, hidden, D))
        whh.append(_fuse_hh(w_hh_f, w_hh_b, hidden))
        bias.append(_fuse_bias(b_ih_f + b_hh_f, b_ih_b + b_hh_b, hidden))
    out_size = raw["linear_w"].shape[0]
    o_pad = pl.cdiv(out_size, 128) * 128
    lw = jnp.asarray(raw["linear_w"], jnp.float32).T                 # (2H, O)
    lw = jnp.pad(lw, ((0, 0), (0, o_pad - out_size)))
    lb = jnp.pad(jnp.asarray(raw["linear_b"], jnp.float32).reshape(1, -1),
                 ((0, 0), (0, o_pad - out_size)))
    return {
        "wih": jnp.stack(wih).astype(jnp.bfloat16),        # (L, D, 8H)
        "whh": jnp.stack(whh).astype(jnp.bfloat16),        # (L, D, 8H)
        "bias": jnp.stack(bias).astype(jnp.float32),       # (L, 1, 8H)
        "lin_w": lw.astype(jnp.bfloat16),                  # (D, Op)
        "lin_b": lb,                                       # (1, Op)
    }


# ---------------------------------------------------------------------------
# Full model forward: one pallas_call.
# ---------------------------------------------------------------------------
@partial(jax.jit, static_argnames=("out_dim",))
def lstm_lstm_forward(x, prep, *, out_dim):
    # x: (B, input_size, T) -- same layout the PyTorch module receives.
    wih, whh, bias = prep["wih"], prep["whh"], prep["bias"]
    lw, lb = prep["lin_w"], prep["lin_b"]
    L, D, G2 = wih.shape
    Op = lw.shape[1]
    B, d_in, T = x.shape
    Bp = max(8, ((B + 7) // 8) * 8)                # sublane-pad batch to multiple of 8

    x_tbd = jnp.transpose(x, (2, 0, 1)).astype(jnp.float32)            # (T, B, d_in)
    x_pad = jnp.pad(x_tbd, ((0, 0), (0, Bp - B), (0, D - d_in)))       # zero-pad B and D
    x2d = x_pad.reshape(T * Bp, D)                                     # row t*Bp + b

    out_pad = pl.pallas_call(
        partial(_lstm_stack_kernel, batch=Bp),
        out_shape=jax.ShapeDtypeStruct((Bp, Op), jnp.float32),
        grid_spec=pltpu.PrefetchScalarGridSpec(
            num_scalar_prefetch=0,
            grid=(1,),
            in_specs=[
                pl.BlockSpec((T * Bp, D), lambda i: (0, 0)),
                pl.BlockSpec((L, D, G2), lambda i: (0, 0, 0)),
                pl.BlockSpec((L, D, G2), lambda i: (0, 0, 0)),
                pl.BlockSpec((L, 1, G2), lambda i: (0, 0, 0)),
                pl.BlockSpec((D, Op), lambda i: (0, 0)),
                pl.BlockSpec((1, Op), lambda i: (0, 0)),
            ],
            out_specs=pl.BlockSpec((Bp, Op), lambda i: (0, 0)),
            scratch_shapes=[
                pltpu.VMEM((T * Bp, D), jnp.float32),    # activation ping
                pltpu.VMEM((T * Bp, D), jnp.float32),    # activation pong
                pltpu.VMEM((T * Bp, G2), jnp.float32),   # per-layer input projections
            ],
        ),
        compiler_params=pltpu.CompilerParams(
            dimension_semantics=("arbitrary",)),
    )(x2d, wih, whh, bias, lw, lb)
    return out_pad[:B, :out_dim]


# ---------------------------------------------------------------------------
# Deterministic parameter construction (PyTorch LSTM/Linear init scheme:
# U(-1/sqrt(H), 1/sqrt(H)), seeded with PRNGKey(0)).  Raw PyTorch-layout weights.
# ---------------------------------------------------------------------------
def _uniform(key, shape, bound):
    return jax.random.uniform(key, shape, jnp.float32, -bound, bound)


def init_bilstm_params(key, input_size, hidden_size, num_layers):
    layers = []
    bound = 1.0 / math.sqrt(hidden_size)
    for l in range(num_layers):
        d_in = input_size if l == 0 else 2 * hidden_size
        layer = {}
        for dname in ("fwd", "bwd"):
            key, k1, k2, k3, k4 = jax.random.split(key, 5)
            layer[dname] = (
                _uniform(k1, (4 * hidden_size, d_in), bound),         # weight_ih
                _uniform(k2, (4 * hidden_size, hidden_size), bound),  # weight_hh
                _uniform(k3, (4 * hidden_size,), bound),              # bias_ih
                _uniform(k4, (4 * hidden_size,), bound),              # bias_hh
            )
        layers.append(layer)
    return key, layers


if __name__ == "__main__":
    # Module hyperparameters (defaults of LSTM_LSTM) with small batch/seq.
    input_size, hidden_size, num_layers, output_size = 22, 64, 2, 54
    B, T = 2, 8

    key = jax.random.PRNGKey(0)
    key, kx = jax.random.split(key)
    x = jax.random.normal(kx, (B, input_size, T), jnp.float32)

    key, lstm1_params = init_bilstm_params(key, input_size, hidden_size, num_layers)
    key, lstm2_params = init_bilstm_params(key, 2 * hidden_size, hidden_size, num_layers)
    key, kw, kb = jax.random.split(key, 3)
    lin_bound = 1.0 / math.sqrt(2 * hidden_size)
    raw_params = {
        "lstm1": lstm1_params,
        "lstm2": lstm2_params,
        "linear_w": _uniform(kw, (output_size, 2 * hidden_size), lin_bound),
        "linear_b": _uniform(kb, (output_size,), lin_bound),
    }

    prep = prepare_params(raw_params)   # one-time: transpose / fuse / interleave / bf16
    out = lstm_lstm_forward(x, prep, out_dim=output_size)
    out = jax.block_until_ready(out)
    assert out.shape == (B, output_size), out.shape
    assert out.dtype == jnp.float32
    assert bool(jnp.all(jnp.isfinite(out)))
    print("KERNEL_OK")
</pallas_src>

<mosaic_0001>
module attributes {stable_mosaic.version = 11 : i64} {
  func.func @_lstm_stack_kernel(%arg0: i32, %arg1: memref<64x128xf32, #tpu.memory_space<vmem>>, %arg2: memref<4x128x512xbf16, #tpu.memory_space<vmem>>, %arg3: memref<4x128x512xbf16, #tpu.memory_space<vmem>>, %arg4: memref<4x1x512xf32, #tpu.memory_space<vmem>>, %arg5: memref<128x128xbf16, #tpu.memory_space<vmem>>, %arg6: memref<1x128xf32, #tpu.memory_space<vmem>>, %arg7: memref<8x128xf32, #tpu.memory_space<vmem>>, %arg8: memref<64x128xf32, #tpu.memory_space<vmem>>, %arg9: memref<64x128xf32, #tpu.memory_space<vmem>>, %arg10: memref<64x512xf32, #tpu.memory_space<vmem>>) attributes {dimension_semantics = [#tpu.dimension_semantics<arbitrary>], iteration_bounds = array<i64: 1>, scalar_prefetch = 0 : i64, scratch_operands = 3 : i64, tpu.core_type = #tpu.core_type<tc>, window_params = [{pipeline_mode = #tpu.pipeline_mode<synchronous>, transform_indices = @transform_0, window_bounds = array<i64: 64, 128>}, {pipeline_mode = #tpu.pipeline_mode<synchronous>, transform_indices = @transform_1, window_bounds = array<i64: 4, 128, 512>}, {pipeline_mode = #tpu.pipeline_mode<synchronous>, transform_indices = @transform_2, window_bounds = array<i64: 4, 128, 512>}, {pipeline_mode = #tpu.pipeline_mode<synchronous>, transform_indices = @transform_3, window_bounds = array<i64: 4, 1, 512>}, {pipeline_mode = #tpu.pipeline_mode<synchronous>, transform_indices = @transform_4, window_bounds = array<i64: 128, 128>}, {pipeline_mode = #tpu.pipeline_mode<synchronous>, transform_indices = @transform_5, window_bounds = array<i64: 1, 128>}, {pipeline_mode = #tpu.pipeline_mode<synchronous>, transform_indices = @transform_6, window_bounds = array<i64: 8, 128>}]} {
    %0 = tpu.iota {dimensions = array<i32: 1>} : vector<8x512xi32>
    %c128_i32 = arith.constant 128 : i32
    %c0_i32 = arith.constant 0 : i32
    %1 = arith.cmpi eq, %c128_i32, %c0_i32 : i32
    %c1_i32 = arith.constant 1 : i32
    %2 = arith.select %1, %c1_i32, %c128_i32 : i32
    %3 = vector.broadcast %2 : i32 to vector<8x512xi32>
    %4 = arith.remsi %0, %3 : vector<8x512xi32>
    %c0_i32_0 = arith.constant 0 : i32
    %5 = vector.broadcast %c0_i32_0 : i32 to vector<8x512xi32>
    %6 = arith.cmpi ne, %4, %5 : vector<8x512xi32>
    %c0_i32_1 = arith.constant 0 : i32
    %7 = vector.broadcast %c0_i32_1 : i32 to vector<8x512xi32>
    %8 = arith.cmpi slt, %4, %7 : vector<8x512xi32>
    %c0_i32_2 = arith.constant 0 : i32
    %9 = arith.cmpi slt, %2, %c0_i32_2 : i32
    %10 = vector.broadcast %9 : i1 to vector<8x512xi1>
    %11 = vector.broadcast %10 : vector<8x512xi1> to vector<8x512xi1>
    %12 = arith.xori %8, %11 : vector<8x512xi1>
    %13 = arith.andi %12, %6 : vector<8x512xi1>
    %14 = vector.broadcast %2 : i32 to vector<8x512xi32>
    %15 = arith.addi %4, %14 : vector<8x512xi32>
    %16 = arith.select %13, %15, %4 : vector<8x512xi1>, vector<8x512xi32>
    %c64_i32 = arith.constant 64 : i32
    %17 = vector.broadcast %c64_i32 : i32 to vector<8x512xi32>
    %18 = arith.cmpi slt, %16, %17 : vector<8x512xi32>
    %19 = tpu.iota {dimensions = array<i32: 1>} : vector<8x128xi32>
    %c64_i32_3 = arith.constant 64 : i32
    %20 = vector.broadcast %c64_i32_3 : i32 to vector<8x128xi32>
    %21 = arith.cmpi slt, %19, %20 : vector<8x128xi32>
    %c0 = arith.constant 0 : index
    %c0_4 = arith.constant 0 : index
    %22 = vector.load %arg1[%c0, %c0_4] : memref<64x128xf32, #tpu.memory_space<vmem>>, vector<64x128xf32>
    %23 = arith.truncf %22 : vector<64x128xf32> to vector<64x128xbf16>
    %c0_5 = arith.constant 0 : index
    %c0_6 = arith.constant 0 : index
    %c0_7 = arith.constant 0 : index
    %24 = vector.load %arg2[%c0_5, %c0_6, %c0_7] : memref<4x128x512xbf16, #tpu.memory_space<vmem>>, vector<1x128x512xbf16>
    %25 = vector.shape_cast %24 : vector<1x128x512xbf16> to vector<128x512xbf16>
    %cst = arith.constant dense<0.000000e+00> : vector<64x512xf32>
    %26 = tpu.matmul %23, %25, %cst {dimension_numbers = #tpu.dot_dimension_numbers<[1], [0], [0], [1], [0, 0, 1, 1], [], []>} : vector<64x128xbf16>, vector<128x512xbf16>, vector<64x512xf32> -> vector<64x512xf32>
    %c0_8 = arith.constant 0 : index
    %c0_9 = arith.constant 0 : index
    %c0_10 = arith.constant 0 : index
    %27 = vector.load %arg4[%c0_8, %c0_9, %c0_10] : memref<4x1x512xf32, #tpu.memory_space<vmem>>, vector<1x1x512xf32>
    %28 = vector.shape_cast %27 : vector<1x1x512xf32> to vector<1x512xf32>
    %29 = vector.broadcast %28 : vector<1x512xf32> to vector<64x512xf32>
    %30 = arith.addf %26, %29 : vector<64x512xf32>
    %c0_11 = arith.constant 0 : index
    %c0_12 = arith.constant 0 : index
    %31 = vector.load %arg10[%c0_11, %c0_12] : memref<64x512xf32, #tpu.memory_space<vmem>>, vector<64x512xf32>
    tpu.vector_store %arg10[%c0_11, %c0_12], %30 {strides = array<i32>} : memref<64x512xf32, #tpu.memory_space<vmem>>, vector<64x512xf32>,
    %c0_13 = arith.constant 0 : index
    %c0_14 = arith.constant 0 : index
    %32 = vector.load %arg10[%c0_13, %c0_14] : memref<64x512xf32, #tpu.memory_space<vmem>>, vector<8x512xf32>
    %c56 = arith.constant 56 : index
    %c0_15 = arith.constant 0 : index
    %33 = vector.load %arg10[%c56, %c0_15] : memref<64x512xf32, #tpu.memory_space<vmem>>, vector<8x512xf32>
    %34 = arith.select %18, %32, %33 : vector<8x512xi1>, vector<8x512xf32>
    %c0_16 = arith.constant 0 : index
    %c0_17 = arith.constant 0 : index
    %35 = vector.load %arg10[%c0_16, %c0_17] : memref<64x512xf32, #tpu.memory_space<vmem>>, vector<8x512xf32>
    tpu.vector_store %arg10[%c0_16, %c0_17], %34 {strides = array<i32>} : memref<64x512xf32, #tpu.memory_space<vmem>>, vector<8x512xf32>,
    %36 = arith.select %18, %33, %32 : vector<8x512xi1>, vector<8x512xf32>
    %c56_18 = arith.constant 56 : index
    %c0_19 = arith.constant 0 : index
    %37 = vector.load %arg10[%c56_18, %c0_19] : memref<64x512xf32, #tpu.memory_space<vmem>>, vector<8x512xf32>
    tpu.vector_store %arg10[%c56_18, %c0_19], %36 {strides = array<i32>} : memref<64x512xf32, #tpu.memory_space<vmem>>, vector<8x512xf32>,
    %c8 = arith.constant 8 : index
    %c0_20 = arith.constant 0 : index
    %38 = vector.load %arg10[%c8, %c0_20] : memref<64x512xf32, #tpu.memory_space<vmem>>, vector<8x512xf32>
    %c48 = arith.constant 48 : index
    %c0_21 = arith.constant 0 : index
    %39 = vector.load %arg10[%c48, %c0_21] : memref<64x512xf32, #tpu.memory_space<vmem>>, vector<8x512xf32>
    %40 = arith.select %18, %38, %39 : vector<8x512xi1>, vector<8x512xf32>
    %c8_22 = arith.constant 8 : index
    %c0_23 = arith.constant 0 : index
    %41 = vector.load %arg10[%c8_22, %c0_23] : memref<64x512xf32, #tpu.memory_space<vmem>>, vector<8x512xf32>
    tpu.vector_store %arg10[%c8_22, %c0_23], %40 {strides = array<i32>} : memref<64x512xf32, #tpu.memory_space<vmem>>, vector<8x512xf32>,
    %42 = arith.select %18, %39, %38 : vector<8x512xi1>, vector<8x512xf32>
    %c48_24 = arith.constant 48 : index
    %c0_25 = arith.constant 0 : index
    %43 = vector.load %arg10[%c48_24, %c0_25] : memref<64x512xf32, #tpu.memory_space<vmem>>, vector<8x512xf32>
    tpu.vector_store %arg10[%c48_24, %c0_25], %42 {strides = array<i32>} : memref<64x512xf32, #tpu.memory_space<vmem>>, vector<8x512xf32>,
    %c16 = arith.constant 16 : index
    %c0_26 = arith.constant 0 : index
    %44 = vector.load %arg10[%c16, %c0_26] : memref<64x512xf32, #tpu.memory_space<vmem>>, vector<8x512xf32>
    %c40 = arith.constant 40 : index
    %c0_27 = arith.constant 0 : index
    %45 = vector.load %arg10[%c40, %c0_27] : memref<64x512xf32, #tpu.memory_space<vmem>>, vector<8x512xf32>
    %46 = arith.select %18, %44, %45 : vector<8x512xi1>, vector<8x512xf32>
    %c16_28 = arith.constant 16 : index
    %c0_29 = arith.constant 0 : index
    %47 = vector.load %arg10[%c16_28, %c0_29] : memref<64x512xf32, #tpu.memory_space<vmem>>, vector<8x512xf32>
    tpu.vector_store %arg10[%c16_28, %c0_29], %46 {strides = array<i32>} : memref<64x512xf32, #tpu.memory_space<vmem>>, vector<8x512xf32>,
    %48 = arith.select %18, %45, %44 : vector<8x512xi1>, vector<8x512xf32>
    %c40_30 = arith.constant 40 : index
    %c0_31 = arith.constant 0 : index
    %49 = vector.load %arg10[%c40_30, %c0_31] : memref<64x512xf32, #tpu.memory_space<vmem>>, vector<8x512xf32>
    tpu.vector_store %arg10[%c40_30, %c0_31], %48 {strides = array<i32>} : memref<64x512xf32, #tpu.memory_space<vmem>>, vector<8x512xf32>,
    %c24 = arith.constant 24 : index
    %c0_32 = arith.constant 0 : index
    %50 = vector.load %arg10[%c24, %c0_32] : memref<64x512xf32, #tpu.memory_space<vmem>>, vector<8x512xf32>
    %c32 = arith.constant 32 : index
    %c0_33 = arith.constant 0 : index
    %51 = vector.load %arg10[%c32, %c0_33] : memref<64x512xf32, #tpu.memory_space<vmem>>, vector<8x512xf32>
    %52 = arith.select %18, %50, %51 : vector<8x512xi1>, vector<8x512xf32>
    %c24_34 = arith.constant 24 : index
    %c0_35 = arith.constant 0 : index
    %53 = vector.load %arg10[%c24_34, %c0_35] : memref<64x512xf32, #tpu.memory_space<vmem>>, vector<8x512xf32>
    tpu.vector_store %arg10[%c24_34, %c0_35], %52 {strides = array<i32>} : memref<64x512xf32, #tpu.memory_space<vmem>>, vector<8x512xf32>,
    %54 = arith.select %18, %51, %50 : vector<8x512xi1>, vector<8x512xf32>
    %c32_36 = arith.constant 32 : index
    %c0_37 = arith.constant 0 : index
    %55 = vector.load %arg10[%c32_36, %c0_37] : memref<64x512xf32, #tpu.memory_space<vmem>>, vector<8x512xf32>
    tpu.vector_store %arg10[%c32_36, %c0_37], %54 {strides = array<i32>} : memref<64x512xf32, #tpu.memory_space<vmem>>, vector<8x512xf32>,
    %c0_38 = arith.constant 0 : index
    %c0_39 = arith.constant 0 : index
    %c0_40 = arith.constant 0 : index
    %56 = vector.load %arg3[%c0_38, %c0_39, %c0_40] : memref<4x128x512xbf16, #tpu.memory_space<vmem>>, vector<1x128x512xbf16>
    %57 = vector.shape_cast %56 : vector<1x128x512xbf16> to vector<128x512xbf16>
    %cst_41 = arith.constant 0.000000e+00 : f32
    %58 = vector.broadcast %cst_41 : f32 to vector<8x128xf32>
    %c0_i32_42 = arith.constant 0 : i32
    %c8_i32 = arith.constant 8 : i32
    %59 = arith.muli %c0_i32_42, %c8_i32 : i32
    %60 = tpu.assume_multiple %59, 8 : i32
    %61 = arith.index_cast %60 : i32 to index
    %c0_43 = arith.constant 0 : index
    %62 = vector.load %arg10[%61, %c0_43] : memref<64x512xf32, #tpu.memory_space<vmem>>, vector<8x512xf32>
    %63 = arith.truncf %58 : vector<8x128xf32> to vector<8x128xbf16>
    %cst_44 = arith.constant dense<0.000000e+00> : vector<8x512xf32>
    %64 = tpu.matmul %63, %57, %cst_44 {dimension_numbers = #tpu.dot_dimension_numbers<[1], [0], [0], [1], [0, 0, 1, 1], [], []>} : vector<8x128xbf16>, vector<128x512xbf16>, vector<8x512xf32> -> vector<8x512xf32>
    %65 = arith.addf %62, %64 : vector<8x512xf32>
    %66 = vector.extract_strided_slice %65 {offsets = [0, 0], sizes = [8, 128], strides = [1, 1]} : vector<8x512xf32> to vector<8x128xf32>
    %67 = arith.negf %66 : vector<8x128xf32>
    %68 = math.exp %67 : vector<8x128xf32>
    %cst_45 = arith.constant 1.000000e+00 : f32
    %69 = vector.broadcast %cst_45 : f32 to vector<8x128xf32>
    %70 = arith.addf %69, %68 : vector<8x128xf32>
    %71 = arith.divf %69, %70 : vector<8x128xf32>
    %72 = vector.extract_strided_slice %65 {offsets = [0, 128], sizes = [8, 128], strides = [1, 1]} : vector<8x512xf32> to vector<8x128xf32>
    %73 = arith.negf %72 : vector<8x128xf32>
    %74 = math.exp %73 : vector<8x128xf32>
    %cst_46 = arith.constant 1.000000e+00 : f32
    %75 = vector.broadcast %cst_46 : f32 to vector<8x128xf32>
    %76 = arith.addf %75, %74 : vector<8x128xf32>
    %77 = arith.divf %75, %76 : vector<8x128xf32>
    %78 = vector.extract_strided_slice %65 {offsets = [0, 256], sizes = [8, 128], strides = [1, 1]} : vector<8x512xf32> to vector<8x128xf32>
    %79 = math.tanh %78 : vector<8x128xf32>
    %80 = vector.extract_strided_slice %65 {offsets = [0, 384], sizes = [8, 128], strides = [1, 1]} : vector<8x512xf32> to vector<8x128xf32>
    %81 = arith.negf %80 : vector<8x128xf32>
    %82 = math.exp %81 : vector<8x128xf32>
    %cst_47 = arith.constant 1.000000e+00 : f32
    %83 = vector.broadcast %cst_47 : f32 to vector<8x128xf32>
    %84 = arith.addf %83, %82 : vector<8x128xf32>
    %85 = arith.divf %83, %84 : vector<8x128xf32>
    %86 = arith.mulf %77, %58 : vector<8x128xf32>
    %87 = arith.mulf %71, %79 : vector<8x128xf32>
    %88 = arith.addf %86, %87 : vector<8x128xf32>
    %89 = math.tanh %88 : vector<8x128xf32>
    %90 = arith.mulf %85, %89 : vector<8x128xf32>
    %91 = arith.index_cast %60 : i32 to index
    %c0_48 = arith.constant 0 : index
    %92 = vector.load %arg8[%91, %c0_48] : memref<64x128xf32, #tpu.memory_space<vmem>>, vector<8x128xf32>
    tpu.vector_store %arg8[%91, %c0_48], %90 {strides = array<i32>} : memref<64x128xf32, #tpu.memory_space<vmem>>, vector<8x128xf32>,
    %c1_i32_49 = arith.constant 1 : i32
    %c8_i32_50 = arith.constant 8 : i32
    %93 = arith.muli %c1_i32_49, %c8_i32_50 : i32
    %94 = tpu.assume_multiple %93, 8 : i32
    %95 = arith.index_cast %94 : i32 to index
    %c0_51 = arith.constant 0 : index
    %96 = vector.load %arg10[%95, %c0_51] : memref<64x512xf32, #tpu.memory_space<vmem>>, vector<8x512xf32>
    %97 = arith.truncf %90 : vector<8x128xf32> to vector<8x128xbf16>
    %cst_52 = arith.constant dense<0.000000e+00> : vector<8x512xf32>
    %98 = tpu.matmul %97, %57, %cst_52 {dimension_numbers = #tpu.dot_dimension_numbers<[1], [0], [0], [1], [0, 0, 1, 1], [], []>} : vector<8x128xbf16>, vector<128x512xbf16>, vector<8x512xf32> -> vector<8x512xf32>
    %99 = arith.addf %96, %98 : vector<8x512xf32>
    %100 = vector.extract_strided_slice %99 {offsets = [0, 0], sizes = [8, 128], strides = [1, 1]} : vector<8x512xf32> to vector<8x128xf32>
    %101 = arith.negf %100 : vector<8x128xf32>
    %102 = math.exp %101 : vector<8x128xf32>
    %cst_53 = arith.constant 1.000000e+00 : f32
    %103 = vector.broadcast %cst_53 : f32 to vector<8x128xf32>
    %104 = arith.addf %103, %102 : vector<8x128xf32>
    %105 = arith.divf %103, %104 : vector<8x128xf32>
    %106 = vector.extract_strided_slice %99 {offsets = [0, 128], sizes = [8, 128], strides = [1, 1]} : vector<8x512xf32> to vector<8x128xf32>
    %107 = arith.negf %106 : vector<8x128xf32>
    %108 = math.exp %107 : vector<8x128xf32>
    %cst_54 = arith.constant 1.000000e+00 : f32
    %109 = vector.broadcast %cst_54 : f32 to vector<8x128xf32>
    %110 = arith.addf %109, %108 : vector<8x128xf32>
    %111 = arith.divf %109, %110 : vector<8x128xf32>
    %112 = vector.extract_strided_slice %99 {offsets = [0, 256], sizes = [8, 128], strides = [1, 1]} : vector<8x512xf32> to vector<8x128xf32>
    %113 = math.tanh %112 : vector<8x128xf32>
    %114 = vector.extract_strided_slice %99 {offsets = [0, 384], sizes = [8, 128], strides = [1, 1]} : vector<8x512xf32> to vector<8x128xf32>
    %115 = arith.negf %114 : vector<8x128xf32>
    %116 = math.exp %115 : vector<8x128xf32>
    %cst_55 = arith.constant 1.000000e+00 : f32
    %117 = vector.broadcast %cst_55 : f32 to vector<8x128xf32>
    %118 = arith.addf %117, %116 : vector<8x128xf32>
    %119 = arith.divf %117, %118 : vector<8x128xf32>
    %120 = arith.mulf %111, %88 : vector<8x128xf32>
    %121 = arith.mulf %105, %113 : vector<8x128xf32>
    %122 = arith.addf %120, %121 : vector<8x128xf32>
    %123 = math.tanh %122 : vector<8x128xf32>
    %124 = arith.mulf %119, %123 : vector<8x128xf32>
    %125 = arith.index_cast %94 : i32 to index
    %c0_56 = arith.constant 0 : index
    %126 = vector.load %arg8[%125, %c0_56] : memref<64x128xf32, #tpu.memory_space<vmem>>, vector<8x128xf32>
    tpu.vector_store %arg8[%125, %c0_56], %124 {strides = array<i32>} : memref<64x128xf32, #tpu.memory_space<vmem>>, vector<8x128xf32>,
    %c2_i32 = arith.constant 2 : i32
    %c8_i32_57 = arith.constant 8 : i32
    %127 = arith.muli %c2_i32, %c8_i32_57 : i32
    %128 = tpu.assume_multiple %127, 8 : i32
    %129 = arith.index_cast %128 : i32 to index
    %c0_58 = arith.constant 0 : index
    %130 = vector.load %arg10[%129, %c0_58] : memref<64x512xf32, #tpu.memory_space<vmem>>, vector<8x512xf32>
    %131 = arith.truncf %124 : vector<8x128xf32> to vector<8x128xbf16>
    %cst_59 = arith.constant dense<0.000000e+00> : vector<8x512xf32>
    %132 = tpu.matmul %131, %57, %cst_59 {dimension_numbers = #tpu.dot_dimension_numbers<[1], [0], [0], [1], [0, 0, 1, 1], [], []>} : vector<8x128xbf16>, vector<128x512xbf16>, vector<8x512xf32> -> vector<8x512xf32>
    %133 = arith.addf %130, %132 : vector<8x512xf32>
    %134 = vector.extract_strided_slice %133 {offsets = [0, 0], sizes = [8, 128], strides = [1, 1]} : vector<8x512xf32> to vector<8x128xf32>
    %135 = arith.negf %134 : vector<8x128xf32>
    %136 = math.exp %135 : vector<8x128xf32>
    %cst_60 = arith.constant 1.000000e+00 : f32
    %137 = vector.broadcast %cst_60 : f32 to vector<8x128xf32>
    %138 = arith.addf %137, %136 : vector<8x128xf32>
    %139 = arith.divf %137, %138 : vector<8x128xf32>
    %140 = vector.extract_strided_slice %133 {offsets = [0, 128], sizes = [8, 128], strides = [1, 1]} : vector<8x512xf32> to vector<8x128xf32>
    %141 = arith.negf %140 : vector<8x128xf32>
    %142 = math.exp %141 : vector<8x128xf32>
    %cst_61 = arith.constant 1.000000e+00 : f32
    %143 = vector.broadcast %cst_61 : f32 to vector<8x128xf32>
    %144 = arith.addf %143, %142 : vector<8x128xf32>
    %145 = arith.divf %143, %144 : vector<8x128xf32>
    %146 = vector.extract_strided_slice %133 {offsets = [0, 256], sizes = [8, 128], strides = [1, 1]} : vector<8x512xf32> to vector<8x128xf32>
    %147 = math.tanh %146 : vector<8x128xf32>
    %148 = vector.extract_strided_slice %133 {offsets = [0, 384], sizes = [8, 128], strides = [1, 1]} : vector<8x512xf32> to vector<8x128xf32>
    %149 = arith.negf %148 : vector<8x128xf32>
    %150 = math.exp %149 : vector<8x128xf32>
    %cst_62 = arith.constant 1.000000e+00 : f32
    %151 = vector.broadcast %cst_62 : f32 to vector<8x128xf32>
    %152 = arith.addf %151, %150 : vector<8x128xf32>
    %153 = arith.divf %151, %152 : vector<8x128xf32>
    %154 = arith.mulf %145, %122 : vector<8x128xf32>
    %155 = arith.mulf %139, %147 : vector<8x128xf32>
    %156 = arith.addf %154, %155 : vector<8x128xf32>
    %157 = math.tanh %156 : vector<8x128xf32>
    %158 = arith.mulf %153, %157 : vector<8x128xf32>
    %159 = arith.index_cast %128 : i32 to index
    %c0_63 = arith.constant 0 : index
    %160 = vector.load %arg8[%159, %c0_63] : memref<64x128xf32, #tpu.memory_space<vmem>>, vector<8x128xf32>
    tpu.vector_store %arg8[%159, %c0_63], %158 {strides = array<i32>} : memref<64x128xf32, #tpu.memory_space<vmem>>, vector<8x128xf32>,
    %c3_i32 = arith.constant 3 : i32
    %c8_i32_64 = arith.constant 8 : i32
    %161 = arith.muli %c3_i32, %c8_i32_64 : i32
    %162 = tpu.assume_multiple %161, 8 : i32
    %163 = arith.index_cast %162 : i32 to index
    %c0_65 = arith.constant 0 : index
    %164 = vector.load %arg10[%163, %c0_65] : memref<64x512xf32, #tpu.memory_space<vmem>>, vector<8x512xf32>
    %165 = arith.truncf %158 : vector<8x128xf32> to vector<8x128xbf16>
    %cst_66 = arith.constant dense<0.000000e+00> : vector<8x512xf32>
    %166 = tpu.matmul %165, %57, %cst_66 {dimension_numbers = #tpu.dot_dimension_numbers<[1], [0], [0], [1], [0, 0, 1, 1], [], []>} : vector<8x128xbf16>, vector<128x512xbf16>, vector<8x512xf32> -> vector<8x512xf32>
    %167 = arith.addf %164, %166 : vector<8x512xf32>
    %168 = vector.extract_strided_slice %167 {offsets = [0, 0], sizes = [8, 128], strides = [1, 1]} : vector<8x512xf32> to vector<8x128xf32>
    %169 = arith.negf %168 : vector<8x128xf32>
    %170 = math.exp %169 : vector<8x128xf32>
    %cst_67 = arith.constant 1.000000e+00 : f32
    %171 = vector.broadcast %cst_67 : f32 to vector<8x128xf32>
    %172 = arith.addf %171, %170 : vector<8x128xf32>
    %173 = arith.divf %171, %172 : vector<8x128xf32>
    %174 = vector.extract_strided_slice %167 {offsets = [0, 128], sizes = [8, 128], strides = [1, 1]} : vector<8x512xf32> to vector<8x128xf32>
    %175 = arith.negf %174 : vector<8x128xf32>
    %176 = math.exp %175 : vector<8x128xf32>
    %cst_68 = arith.constant 1.000000e+00 : f32
    %177 = vector.broadcast %cst_68 : f32 to vector<8x128xf32>
    %178 = arith.addf %177, %176 : vector<8x128xf32>
    %179 = arith.divf %177, %178 : vector<8x128xf32>
    %180 = vector.extract_strided_slice %167 {offsets = [0, 256], sizes = [8, 128], strides = [1, 1]} : vector<8x512xf32> to vector<8x128xf32>
    %181 = math.tanh %180 : vector<8x128xf32>
    %182 = vector.extract_strided_slice %167 {offsets = [0, 384], sizes = [8, 128], strides = [1, 1]} : vector<8x512xf32> to vector<8x128xf32>
    %183 = arith.negf %182 : vector<8x128xf32>
    %184 = math.exp %183 : vector<8x128xf32>
    %cst_69 = arith.constant 1.000000e+00 : f32
    %185 = vector.broadcast %cst_69 : f32 to vector<8x128xf32>
    %186 = arith.addf %185, %184 : vector<8x128xf32>
    %187 = arith.divf %185, %186 : vector<8x128xf32>
    %188 = arith.mulf %179, %156 : vector<8x128xf32>
    %189 = arith.mulf %173, %181 : vector<8x128xf32>
    %190 = arith.addf %188, %189 : vector<8x128xf32>
    %191 = math.tanh %190 : vector<8x128xf32>
    %192 = arith.mulf %187, %191 : vector<8x128xf32>
    %193 = arith.index_cast %162 : i32 to index
    %c0_70 = arith.constant 0 : index
    %194 = vector.load %arg8[%193, %c0_70] : memref<64x128xf32, #tpu.memory_space<vmem>>, vector<8x128xf32>
    tpu.vector_store %arg8[%193, %c0_70], %192 {strides = array<i32>} : memref<64x128xf32, #tpu.memory_space<vmem>>, vector<8x128xf32>,
    %c4_i32 = arith.constant 4 : i32
    %c8_i32_71 = arith.constant 8 : i32
    %195 = arith.muli %c4_i32, %c8_i32_71 : i32
    %196 = tpu.assume_multiple %195, 8 : i32
    %197 = arith.index_cast %196 : i32 to index
    %c0_72 = arith.constant 0 : index
    %198 = vector.load %arg10[%197, %c0_72] : memref<64x512xf32, #tpu.memory_space<vmem>>, vector<8x512xf32>
    %199 = arith.truncf %192 : vector<8x128xf32> to vector<8x128xbf16>
    %cst_73 = arith.constant dense<0.000000e+00> : vector<8x512xf32>
    %200 = tpu.matmul %199, %57, %cst_73 {dimension_numbers = #tpu.dot_dimension_numbers<[1], [0], [0], [1], [0, 0, 1, 1], [], []>} : vector<8x128xbf16>, vector<128x512xbf16>, vector<8x512xf32> -> vector<8x512xf32>
    %201 = arith.addf %198, %200 : vector<8x512xf32>
    %202 = vector.extract_strided_slice %201 {offsets = [0, 0], sizes = [8, 128], strides = [1, 1]} : vector<8x512xf32> to vector<8x128xf32>
    %203 = arith.negf %202 : vector<8x128xf32>
    %204 = math.exp %203 : vector<8x128xf32>
    %cst_74 = arith.constant 1.000000e+00 : f32
    %205 = vector.broadcast %cst_74 : f32 to vector<8x128xf32>
    %206 = arith.addf %205, %204 : vector<8x128xf32>
    %207 = arith.divf %205, %206 : vector<8x128xf32>
    %208 = vector.extract_strided_slice %201 {offsets = [0, 128], sizes = [8, 128], strides = [1, 1]} : vector<8x512xf32> to vector<8x128xf32>
    %209 = arith.negf %208 : vector<8x128xf32>
    %210 = math.exp %209 : vector<8x128xf32>
    %cst_75 = arith.constant 1.000000e+00 : f32
    %211 = vector.broadcast %cst_75 : f32 to vector<8x128xf32>
    %212 = arith.addf %211, %210 : vector<8x128xf32>
    %213 = arith.divf %211, %212 : vector<8x128xf32>
    %214 = vector.extract_strided_slice %201 {offsets = [0, 256], sizes = [8, 128], strides = [1, 1]} : vector<8x512xf32> to vector<8x128xf32>
    %215 = math.tanh %214 : vector<8x128xf32>
    %216 = vector.extract_strided_slice %201 {offsets = [0, 384], sizes = [8, 128], strides = [1, 1]} : vector<8x512xf32> to vector<8x128xf32>
    %217 = arith.negf %216 : vector<8x128xf32>
    %218 = math.exp %217 : vector<8x128xf32>
    %cst_76 = arith.constant 1.000000e+00 : f32
    %219 = vector.broadcast %cst_76 : f32 to vector<8x128xf32>
    %220 = arith.addf %219, %218 : vector<8x128xf32>
    %221 = arith.divf %219, %220 : vector<8x128xf32>
    %222 = arith.mulf %213, %190 : vector<8x128xf32>
    %223 = arith.mulf %207, %215 : vector<8x128xf32>
    %224 = arith.addf %222, %223 : vector<8x128xf32>
    %225 = math.tanh %224 : vector<8x128xf32>
    %226 = arith.mulf %221, %225 : vector<8x128xf32>
    %227 = arith.index_cast %196 : i32 to index
    %c0_77 = arith.constant 0 : index
    %228 = vector.load %arg8[%227, %c0_77] : memref<64x128xf32, #tpu.memory_space<vmem>>, vector<8x128xf32>
    tpu.vector_store %arg8[%227, %c0_77], %226 {strides = array<i32>} : memref<64x128xf32, #tpu.memory_space<vmem>>, vector<8x128xf32>,
    %c5_i32 = arith.constant 5 : i32
    %c8_i32_78 = arith.constant 8 : i32
    %229 = arith.muli %c5_i32, %c8_i32_78 : i32
    %230 = tpu.assume_multiple %229, 8 : i32
    %231 = arith.index_cast %230 : i32 to index
    %c0_79 = arith.constant 0 : index
    %232 = vector.load %arg10[%231, %c0_79] : memref<64x512xf32, #tpu.memory_space<vmem>>, vector<8x512xf32>
    %233 = arith.truncf %226 : vector<8x128xf32> to vector<8x128xbf16>
    %cst_80 = arith.constant dense<0.000000e+00> : vector<8x512xf32>
    %234 = tpu.matmul %233, %57, %cst_80 {dimension_numbers = #tpu.dot_dimension_numbers<[1], [0], [0], [1], [0, 0, 1, 1], [], []>} : vector<8x128xbf16>, vector<128x512xbf16>, vector<8x512xf32> -> vector<8x512xf32>
    %235 = arith.addf %232, %234 : vector<8x512xf32>
    %236 = vector.extract_strided_slice %235 {offsets = [0, 0], sizes = [8, 128], strides = [1, 1]} : vector<8x512xf32> to vector<8x128xf32>
    %237 = arith.negf %236 : vector<8x128xf32>
    %238 = math.exp %237 : vector<8x128xf32>
    %cst_81 = arith.constant 1.000000e+00 : f32
    %239 = vector.broadcast %cst_81 : f32 to vector<8x128xf32>
    %240 = arith.addf %239, %238 : vector<8x128xf32>
    %241 = arith.divf %239, %240 : vector<8x128xf32>
    %242 = vector.extract_strided_slice %235 {offsets = [0, 128], sizes = [8, 128], strides = [1, 1]} : vector<8x512xf32> to vector<8x128xf32>
    %243 = arith.negf %242 : vector<8x128xf32>
    %244 = math.exp %243 : vector<8x128xf32>
    %cst_82 = arith.constant 1.000000e+00 : f32
    %245 = vector.broadcast %cst_82 : f32 to vector<8x128xf32>
    %246 = arith.addf %245, %244 : vector<8x128xf32>
    %247 = arith.divf %245, %246 : vector<8x128xf32>
    %248 = vector.extract_strided_slice %235 {offsets = [0, 256], sizes = [8, 128], strides = [1, 1]} : vector<8x512xf32> to vector<8x128xf32>
    %249 = math.tanh %248 : vector<8x128xf32>
    %250 = vector.extract_strided_slice %235 {offsets = [0, 384], sizes = [8, 128], strides = [1, 1]} : vector<8x512xf32> to vector<8x128xf32>
    %251 = arith.negf %250 : vector<8x128xf32>
    %252 = math.exp %251 : vector<8x128xf32>
    %cst_83 = arith.constant 1.000000e+00 : f32
    %253 = vector.broadcast %cst_83 : f32 to vector<8x128xf32>
    %254 = arith.addf %253, %252 : vector<8x128xf32>
    %255 = arith.divf %253, %254 : vector<8x128xf32>
    %256 = arith.mulf %247, %224 : vector<8x128xf32>
    %257 = arith.mulf %241, %249 : vector<8x128xf32>
    %258 = arith.addf %256, %257 : vector<8x128xf32>
    %259 = math.tanh %258 : vector<8x128xf32>
    %260 = arith.mulf %255, %259 : vector<8x128xf32>
    %261 = arith.index_cast %230 : i32 to index
    %c0_84 = arith.constant 0 : index
    %262 = vector.load %arg8[%261, %c0_84] : memref<64x128xf32, #tpu.memory_space<vmem>>, vector<8x128xf32>
    tpu.vector_store %arg8[%261, %c0_84], %260 {strides = array<i32>} : memref<64x128xf32, #tpu.memory_space<vmem>>, vector<8x128xf32>,
    %c6_i32 = arith.constant 6 : i32
    %c8_i32_85 = arith.constant 8 : i32
    %263 = arith.muli %c6_i32, %c8_i32_85 : i32
    %264 = tpu.assume_multiple %263, 8 : i32
    %265 = arith.index_cast %264 : i32 to index
    %c0_86 = arith.constant 0 : index
    %266 = vector.load %arg10[%265, %c0_86] : memref<64x512xf32, #tpu.memory_space<vmem>>, vector<8x512xf32>
    %267 = arith.truncf %260 : vector<8x128xf32> to vector<8x128xbf16>
    %cst_87 = arith.constant dense<0.000000e+00> : vector<8x512xf32>
    %268 = tpu.matmul %267, %57, %cst_87 {dimension_numbers = #tpu.dot_dimension_numbers<[1], [0], [0], [1], [0, 0, 1, 1], [], []>} : vector<8x128xbf16>, vector<128x512xbf16>, vector<8x512xf32> -> vector<8x512xf32>
    %269 = arith.addf %266, %268 : vector<8x512xf32>
    %270 = vector.extract_strided_slice %269 {offsets = [0, 0], sizes = [8, 128], strides = [1, 1]} : vector<8x512xf32> to vector<8x128xf32>
    %271 = arith.negf %270 : vector<8x128xf32>
    %272 = math.exp %271 : vector<8x128xf32>
    %cst_88 = arith.constant 1.000000e+00 : f32
    %273 = vector.broadcast %cst_88 : f32 to vector<8x128xf32>
    %274 = arith.addf %273, %272 : vector<8x128xf32>
    %275 = arith.divf %273, %274 : vector<8x128xf32>
    %276 = vector.extract_strided_slice %269 {offsets = [0, 128], sizes = [8, 128], strides = [1, 1]} : vector<8x512xf32> to vector<8x128xf32>
    %277 = arith.negf %276 : vector<8x128xf32>
    %278 = math.exp %277 : vector<8x128xf32>
    %cst_89 = arith.constant 1.000000e+00 : f32
    %279 = vector.broadcast %cst_89 : f32 to vector<8x128xf32>
    %280 = arith.addf %279, %278 : vector<8x128xf32>
    %281 = arith.divf %279, %280 : vector<8x128xf32>
    %282 = vector.extract_strided_slice %269 {offsets = [0, 256], sizes = [8, 128], strides = [1, 1]} : vector<8x512xf32> to vector<8x128xf32>
    %283 = math.tanh %282 : vector<8x128xf32>
    %284 = vector.extract_strided_slice %269 {offsets = [0, 384], sizes = [8, 128], strides = [1, 1]} : vector<8x512xf32> to vector<8x128xf32>
    %285 = arith.negf %284 : vector<8x128xf32>
    %286 = math.exp %285 : vector<8x128xf32>
    %cst_90 = arith.constant 1.000000e+00 : f32
    %287 = vector.broadcast %cst_90 : f32 to vector<8x128xf32>
    %288 = arith.addf %287, %286 : vector<8x128xf32>
    %289 = arith.divf %287, %288 : vector<8x128xf32>
    %290 = arith.mulf %281, %258 : vector<8x128xf32>
    %291 = arith.mulf %275, %283 : vector<8x128xf32>
    %292 = arith.addf %290, %291 : vector<8x128xf32>
    %293 = math.tanh %292 : vector<8x128xf32>
    %294 = arith.mulf %289, %293 : vector<8x128xf32>
    %295 = arith.index_cast %264 : i32 to index
    %c0_91 = arith.constant 0 : index
    %296 = vector.load %arg8[%295, %c0_91] : memref<64x128xf32, #tpu.memory_space<vmem>>, vector<8x128xf32>
    tpu.vector_store %arg8[%295, %c0_91], %294 {strides = array<i32>} : memref<64x128xf32, #tpu.memory_space<vmem>>, vector<8x128xf32>,
    %c7_i32 = arith.constant 7 : i32
    %c8_i32_92 = arith.constant 8 : i32
    %297 = arith.muli %c7_i32, %c8_i32_92 : i32
    %298 = tpu.assume_multiple %297, 8 : i32
    %299 = arith.index_cast %298 : i32 to index
    %c0_93 = arith.constant 0 : index
    %300 = vector.load %arg10[%299, %c0_93] : memref<64x512xf32, #tpu.memory_space<vmem>>, vector<8x512xf32>
    %301 = arith.truncf %294 : vector<8x128xf32> to vector<8x128xbf16>
    %cst_94 = arith.constant dense<0.000000e+00> : vector<8x512xf32>
    %302 = tpu.matmul %301, %57, %cst_94 {dimension_numbers = #tpu.dot_dimension_numbers<[1], [0], [0], [1], [0, 0, 1, 1], [], []>} : vector<8x128xbf16>, vector<128x512xbf16>, vector<8x512xf32> -> vector<8x512xf32>
    %303 = arith.addf %300, %302 : vector<8x512xf32>
    %304 = vector.extract_strided_slice %303 {offsets = [0, 0], sizes = [8, 128], strides = [1, 1]} : vector<8x512xf32> to vector<8x128xf32>
    %305 = arith.negf %304 : vector<8x128xf32>
    %306 = math.exp %305 : vector<8x128xf32>
    %cst_95 = arith.constant 1.000000e+00 : f32
    %307 = vector.broadcast %cst_95 : f32 to vector<8x128xf32>
    %308 = arith.addf %307, %306 : vector<8x128xf32>
    %309 = arith.divf %307, %308 : vector<8x128xf32>
    %310 = vector.extract_strided_slice %303 {offsets = [0, 128], sizes = [8, 128], strides = [1, 1]} : vector<8x512xf32> to vector<8x128xf32>
    %311 = arith.negf %310 : vector<8x128xf32>
    %312 = math.exp %311 : vector<8x128xf32>
    %cst_96 = arith.constant 1.000000e+00 : f32
    %313 = vector.broadcast %cst_96 : f32 to vector<8x128xf32>
    %314 = arith.addf %313, %312 : vector<8x128xf32>
    %315 = arith.divf %313, %314 : vector<8x128xf32>
    %316 = vector.extract_strided_slice %303 {offsets = [0, 256], sizes = [8, 128], strides = [1, 1]} : vector<8x512xf32> to vector<8x128xf32>
    %317 = math.tanh %316 : vector<8x128xf32>
    %318 = vector.extract_strided_slice %303 {offsets = [0, 384], sizes = [8, 128], strides = [1, 1]} : vector<8x512xf32> to vector<8x128xf32>
    %319 = arith.negf %318 : vector<8x128xf32>
    %320 = math.exp %319 : vector<8x128xf32>
    %cst_97 = arith.constant 1.000000e+00 : f32
    %321 = vector.broadcast %cst_97 : f32 to vector<8x128xf32>
    %322 = arith.addf %321, %320 : vector<8x128xf32>
    %323 = arith.divf %321, %322 : vector<8x128xf32>
    %324 = arith.mulf %315, %292 : vector<8x128xf32>
    %325 = arith.mulf %309, %317 : vector<8x128xf32>
    %326 = arith.addf %324, %325 : vector<8x128xf32>
    %327 = math.tanh %326 : vector<8x128xf32>
    %328 = arith.mulf %323, %327 : vector<8x128xf32>
    %329 = arith.index_cast %298 : i32 to index
    %c0_98 = arith.constant 0 : index
    %330 = vector.load %arg8[%329, %c0_98] : memref<64x128xf32, #tpu.memory_space<vmem>>, vector<8x128xf32>
    tpu.vector_store %arg8[%329, %c0_98], %328 {strides = array<i32>} : memref<64x128xf32, #tpu.memory_space<vmem>>, vector<8x128xf32>,
    %c8_i32_99 = arith.constant 8 : i32
    %c0_100 = arith.constant 0 : index
    %c0_101 = arith.constant 0 : index
    %331 = vector.load %arg8[%c0_100, %c0_101] : memref<64x128xf32, #tpu.memory_space<vmem>>, vector<8x128xf32>
    %c56_102 = arith.constant 56 : index
    %c0_103 = arith.constant 0 : index
    %332 = vector.load %arg8[%c56_102, %c0_103] : memref<64x128xf32, #tpu.memory_space<vmem>>, vector<8x128xf32>
    %333 = arith.select %21, %331, %332 : vector<8x128xi1>, vector<8x128xf32>
    %c0_104 = arith.constant 0 : index
    %c0_105 = arith.constant 0 : index
    %334 = vector.load %arg8[%c0_104, %c0_105] : memref<64x128xf32, #tpu.memory_space<vmem>>, vector<8x128xf32>
    tpu.vector_store %arg8[%c0_104, %c0_105], %333 {strides = array<i32>} : memref<64x128xf32, #tpu.memory_space<vmem>>, vector<8x128xf32>,
    %335 = arith.select %21, %332, %331 : vector<8x128xi1>, vector<8x128xf32>
    %c56_106 = arith.constant 56 : index
    %c0_107 = arith.constant 0 : index
    %336 = vector.load %arg8[%c56_106, %c0_107] : memref<64x128xf32, #tpu.memory_space<vmem>>, vector<8x128xf32>
    tpu.vector_store %arg8[%c56_106, %c0_107], %335 {strides = array<i32>} : memref<64x128xf32, #tpu.memory_space<vmem>>, vector<8x128xf32>,
    %c8_108 = arith.constant 8 : index
    %c0_109 = arith.constant 0 : index
    %337 = vector.load %arg8[%c8_108, %c0_109] : memref<64x128xf32, #tpu.memory_space<vmem>>, vector<8x128xf32>
    %c48_110 = arith.constant 48 : index
    %c0_111 = arith.constant 0 : index
    %338 = vector.load %arg8[%c48_110, %c0_111] : memref<64x128xf32, #tpu.memory_space<vmem>>, vector<8x128xf32>
    %339 = arith.select %21, %337, %338 : vector<8x128xi1>, vector<8x128xf32>
    %c8_112 = arith.constant 8 : index
    %c0_113 = arith.constant 0 : index
    %340 = vector.load %arg8[%c8_112, %c0_113] : memref<64x128xf32, #tpu.memory_space<vmem>>, vector<8x128xf32>
    tpu.vector_store %arg8[%c8_112, %c0_113], %339 {strides = array<i32>} : memref<64x128xf32, #tpu.memory_space<vmem>>, vector<8x128xf32>,
    %341 = arith.select %21, %338, %337 : vector<8x128xi1>, vector<8x128xf32>
    %c48_114 = arith.constant 48 : index
    %c0_115 = arith.constant 0 : index
    %342 = vector.load %arg8[%c48_114, %c0_115] : memref<64x128xf32, #tpu.memory_space<vmem>>, vector<8x128xf32>
    tpu.vector_store %arg8[%c48_114, %c0_115], %341 {strides = array<i32>} : memref<64x128xf32, #tpu.memory_space<vmem>>, vector<8x128xf32>,
    %c16_116 = arith.constant 16 : index
    %c0_117 = arith.constant 0 : index
    %343 = vector.load %arg8[%c16_116, %c0_117] : memref<64x128xf32, #tpu.memory_space<vmem>>, vector<8x128xf32>
    %c40_118 = arith.constant 40 : index
    %c0_119 = arith.constant 0 : index
    %344 = vector.load %arg8[%c40_118, %c0_119] : memref<64x128xf32, #tpu.memory_space<vmem>>, vector<8x128xf32>
    %345 = arith.select %21, %343, %344 : vector<8x128xi1>, vector<8x128xf32>
    %c16_120 = arith.constant 16 : index
    %c0_121 = arith.constant 0 : index
    %346 = vector.load %arg8[%c16_120, %c0_121] : memref<64x128xf32, #tpu.memory_space<vmem>>, vector<8x128xf32>
    tpu.vector_store %arg8[%c16_120, %c0_121], %345 {strides = array<i32>} : memref<64x128xf32, #tpu.memory_space<vmem>>, vector<8x128xf32>,
    %347 = arith.select %21, %344, %343 : vector<8x128xi1>, vector<8x128xf32>
    %c40_122 = arith.constant 40 : index
    %c0_123 = arith.constant 0 : index
    %348 = vector.load %arg8[%c40_122, %c0_123] : memref<64x128xf32, #tpu.memory_space<vmem>>, vector<8x128xf32>
    tpu.vector_store %arg8[%c40_122, %c0_123], %347 {strides = array<i32>} : memref<64x128xf32, #tpu.memory_space<vmem>>, vector<8x128xf32>,
    %c24_124 = arith.constant 24 : index
    %c0_125 = arith.constant 0 : index
    %349 = vector.load %arg8[%c24_124, %c0_125] : memref<64x128xf32, #tpu.memory_space<vmem>>, vector<8x128xf32>
    %c32_126 = arith.constant 32 : index
    %c0_127 = arith.constant 0 : index
    %350 = vector.load %arg8[%c32_126, %c0_127] : memref<64x128xf32, #tpu.memory_space<vmem>>, vector<8x128xf32>
    %351 = arith.select %21, %349, %350 : vector<8x128xi1>, vector<8x128xf32>
    %c24_128 = arith.constant 24 : index
    %c0_129 = arith.constant 0 : index
    %352 = vector.load %arg8[%c24_128, %c0_129] : memref<64x128xf32, #tpu.memory_space<vmem>>, vector<8x128xf32>
    tpu.vector_store %arg8[%c24_128, %c0_129], %351 {strides = array<i32>} : memref<64x128xf32, #tpu.memory_space<vmem>>, vector<8x128xf32>,
    %353 = arith.select %21, %350, %349 : vector<8x128xi1>, vector<8x128xf32>
    %c32_130 = arith.constant 32 : index
    %c0_131 = arith.constant 0 : index
    %354 = vector.load %arg8[%c32_130, %c0_131] : memref<64x128xf32, #tpu.memory_space<vmem>>, vector<8x128xf32>
    tpu.vector_store %arg8[%c32_130, %c0_131], %353 {strides = array<i32>} : memref<64x128xf32, #tpu.memory_space<vmem>>, vector<8x128xf32>,
    %c0_132 = arith.constant 0 : index
    %c0_133 = arith.constant 0 : index
    %355 = vector.load %arg8[%c0_132, %c0_133] : memref<64x128xf32, #tpu.memory_space<vmem>>, vector<64x128xf32>
    %356 = arith.truncf %355 : vector<64x128xf32> to vector<64x128xbf16>
    %c1 = arith.constant 1 : index
    %c0_134 = arith.constant 0 : index
    %c0_135 = arith.constant 0 : index
    %357 = vector.load %arg2[%c1, %c0_134, %c0_135] : memref<4x128x512xbf16, #tpu.memory_space<vmem>>, vector<1x128x512xbf16>
    %358 = vector.shape_cast %357 : vector<1x128x512xbf16> to vector<128x512xbf16>
    %cst_136 = arith.constant dense<0.000000e+00> : vector<64x512xf32>
    %359 = tpu.matmul %356, %358, %cst_136 {dimension_numbers = #tpu.dot_dimension_numbers<[1], [0], [0], [1], [0, 0, 1, 1], [], []>} : vector<64x128xbf16>, vector<128x512xbf16>, vector<64x512xf32> -> vector<64x512xf32>
    %c1_137 = arith.constant 1 : index
    %c0_138 = arith.constant 0 : index
    %c0_139 = arith.constant 0 : index
    %360 = vector.load %arg4[%c1_137, %c0_138, %c0_139] : memref<4x1x512xf32, #tpu.memory_space<vmem>>, vector<1x1x512xf32>
    %361 = vector.shape_cast %360 : vector<1x1x512xf32> to vector<1x512xf32>
    %362 = vector.broadcast %361 : vector<1x512xf32> to vector<64x512xf32>
    %363 = arith.addf %359, %362 : vector<64x512xf32>
    %c0_140 = arith.constant 0 : index
    %c0_141 = arith.constant 0 : index
    %364 = vector.load %arg10[%c0_140, %c0_141] : memref<64x512xf32, #tpu.memory_space<vmem>>, vector<64x512xf32>
    tpu.vector_store %arg10[%c0_140, %c0_141], %363 {strides = array<i32>} : memref<64x512xf32, #tpu.memory_space<vmem>>, vector<64x512xf32>,
    %c0_142 = arith.constant 0 : index
    %c0_143 = arith.constant 0 : index
    %365 = vector.load %arg10[%c0_142, %c0_143] : memref<64x512xf32, #tpu.memory_space<vmem>>, vector<8x512xf32>
    %c56_144 = arith.constant 56 : index
    %c0_145 = arith.constant 0 : index
    %366 = vector.load %arg10[%c56_144, %c0_145] : memref<64x512xf32, #tpu.memory_space<vmem>>, vector<8x512xf32>
    %367 = arith.select %18, %365, %366 : vector<8x512xi1>, vector<8x512xf32>
    %c0_146 = arith.constant 0 : index
    %c0_147 = arith.constant 0 : index
    %368 = vector.load %arg10[%c0_146, %c0_147] : memref<64x512xf32, #tpu.memory_space<vmem>>, vector<8x512xf32>
    tpu.vector_store %arg10[%c0_146, %c0_147], %367 {strides = array<i32>} : memref<64x512xf32, #tpu.memory_space<vmem>>, vector<8x512xf32>,
    %369 = arith.select %18, %366, %365 : vector<8x512xi1>, vector<8x512xf32>
    %c56_148 = arith.constant 56 : index
    %c0_149 = arith.constant 0 : index
    %370 = vector.load %arg10[%c56_148, %c0_149] : memref<64x512xf32, #tpu.memory_space<vmem>>, vector<8x512xf32>
    tpu.vector_store %arg10[%c56_148, %c0_149], %369 {strides = array<i32>} : memref<64x512xf32, #tpu.memory_space<vmem>>, vector<8x512xf32>,
    %c8_150 = arith.constant 8 : index
    %c0_151 = arith.constant 0 : index
    %371 = vector.load %arg10[%c8_150, %c0_151] : memref<64x512xf32, #tpu.memory_space<vmem>>, vector<8x512xf32>
    %c48_152 = arith.constant 48 : index
    %c0_153 = arith.constant 0 : index
    %372 = vector.load %arg10[%c48_152, %c0_153] : memref<64x512xf32, #tpu.memory_space<vmem>>, vector<8x512xf32>
    %373 = arith.select %18, %371, %372 : vector<8x512xi1>, vector<8x512xf32>
    %c8_154 = arith.constant 8 : index
    %c0_155 = arith.constant 0 : index
    %374 = vector.load %arg10[%c8_154, %c0_155] : memref<64x512xf32, #tpu.memory_space<vmem>>, vector<8x512xf32>
    tpu.vector_store %arg10[%c8_154, %c0_155], %373 {strides = array<i32>} : memref<64x512xf32, #tpu.memory_space<vmem>>, vector<8x512xf32>,
    %375 = arith.select %18, %372, %371 : vector<8x512xi1>, vector<8x512xf32>
    %c48_156 = arith.constant 48 : index
    %c0_157 = arith.constant 0 : index
    %376 = vector.load %arg10[%c48_156, %c0_157] : memref<64x512xf32, #tpu.memory_space<vmem>>, vector<8x512xf32>
    tpu.vector_store %arg10[%c48_156, %c0_157], %375 {strides = array<i32>} : memref<64x512xf32, #tpu.memory_space<vmem>>, vector<8x512xf32>,
    %c16_158 = arith.constant 16 : index
    %c0_159 = arith.constant 0 : index
    %377 = vector.load %arg10[%c16_158, %c0_159] : memref<64x512xf32, #tpu.memory_space<vmem>>, vector<8x512xf32>
    %c40_160 = arith.constant 40 : index
    %c0_161 = arith.constant 0 : index
    %378 = vector.load %arg10[%c40_160, %c0_161] : memref<64x512xf32, #tpu.memory_space<vmem>>, vector<8x512xf32>
    %379 = arith.select %18, %377, %378 : vector<8x512xi1>, vector<8x512xf32>
    %c16_162 = arith.constant 16 : index
    %c0_163 = arith.constant 0 : index
    %380 = vector.load %arg10[%c16_162, %c0_163] : memref<64x512xf32, #tpu.memory_space<vmem>>, vector<8x512xf32>
    tpu.vector_store %arg10[%c16_162, %c0_163], %379 {strides = array<i32>} : memref<64x512xf32, #tpu.memory_space<vmem>>, vector<8x512xf32>,
    %381 = arith.select %18, %378, %377 : vector<8x512xi1>, vector<8x512xf32>
    %c40_164 = arith.constant 40 : index
    %c0_165 = arith.constant 0 : index
    %382 = vector.load %arg10[%c40_164, %c0_165] : memref<64x512xf32, #tpu.memory_space<vmem>>, vector<8x512xf32>
    tpu.vector_store %arg10[%c40_164, %c0_165], %381 {strides = array<i32>} : memref<64x512xf32, #tpu.memory_space<vmem>>, vector<8x512xf32>,
    %c24_166 = arith.constant 24 : index
    %c0_167 = arith.constant 0 : index
    %383 = vector.load %arg10[%c24_166, %c0_167] : memref<64x512xf32, #tpu.memory_space<vmem>>, vector<8x512xf32>
    %c32_168 = arith.constant 32 : index
    %c0_169 = arith.constant 0 : index
    %384 = vector.load %arg10[%c32_168, %c0_169] : memref<64x512xf32, #tpu.memory_space<vmem>>, vector<8x512xf32>
    %385 = arith.select %18, %383, %384 : vector<8x512xi1>, vector<8x512xf32>
    %c24_170 = arith.constant 24 : index
    %c0_171 = arith.constant 0 : index
    %386 = vector.load %arg10[%c24_170, %c0_171] : memref<64x512xf32, #tpu.memory_space<vmem>>, vector<8x512xf32>
    tpu.vector_store %arg10[%c24_170, %c0_171], %385 {strides = array<i32>} : memref<64x512xf32, #tpu.memory_space<vmem>>, vector<8x512xf32>,
    %387 = arith.select %18, %384, %383 : vector<8x512xi1>, vector<8x512xf32>
    %c32_172 = arith.constant 32 : index
    %c0_173 = arith.constant 0 : index
    %388 = vector.load %arg10[%c32_172, %c0_173] : memref<64x512xf32, #tpu.memory_space<vmem>>, vector<8x512xf32>
    tpu.vector_store %arg10[%c32_172, %c0_173], %387 {strides = array<i32>} : memref<64x512xf32, #tpu.memory_space<vmem>>, vector<8x512xf32>,
    %c1_174 = arith.constant 1 : index
    %c0_175 = arith.constant 0 : index
    %c0_176 = arith.constant 0 : index
    %389 = vector.load %arg3[%c1_174, %c0_175, %c0_176] : memref<4x128x512xbf16, #tpu.memory_space<vmem>>, vector<1x128x512xbf16>
    %390 = vector.shape_cast %389 : vector<1x128x512xbf16> to vector<128x512xbf16>
    %cst_177 = arith.constant 0.000000e+00 : f32
    %391 = vector.broadcast %cst_177 : f32 to vector<8x128xf32>
    %c0_i32_178 = arith.constant 0 : i32
    %c8_i32_179 = arith.constant 8 : i32
    %392 = arith.muli %c0_i32_178, %c8_i32_179 : i32
    %393 = tpu.assume_multiple %392, 8 : i32
    %394 = arith.index_cast %393 : i32 to index
    %c0_180 = arith.constant 0 : index
    %395 = vector.load %arg10[%394, %c0_180] : memref<64x512xf32, #tpu.memory_space<vmem>>, vector<8x512xf32>
    %396 = arith.truncf %391 : vector<8x128xf32> to vector<8x128xbf16>
    %cst_181 = arith.constant dense<0.000000e+00> : vector<8x512xf32>
    %397 = tpu.matmul %396, %390, %cst_181 {dimension_numbers = #tpu.dot_dimension_numbers<[1], [0], [0], [1], [0, 0, 1, 1], [], []>} : vector<8x128xbf16>, vector<128x512xbf16>, vector<8x512xf32> -> vector<8x512xf32>
    %398 = arith.addf %395, %397 : vector<8x512xf32>
    %399 = vector.extract_strided_slice %398 {offsets = [0, 0], sizes = [8, 128], strides = [1, 1]} : vector<8x512xf32> to vector<8x128xf32>
    %400 = arith.negf %399 : vector<8x128xf32>
    %401 = math.exp %400 : vector<8x128xf32>
    %cst_182 = arith.constant 1.000000e+00 : f32
    %402 = vector.broadcast %cst_182 : f32 to vector<8x128xf32>
    %403 = arith.addf %402, %401 : vector<8x128xf32>
    %404 = arith.divf %402, %403 : vector<8x128xf32>
    %405 = vector.extract_strided_slice %398 {offsets = [0, 128], sizes = [8, 128], strides = [1, 1]} : vector<8x512xf32> to vector<8x128xf32>
    %406 = arith.negf %405 : vector<8x128xf32>
    %407 = math.exp %406 : vector<8x128xf32>
    %cst_183 = arith.constant 1.000000e+00 : f32
    %408 = vector.broadcast %cst_183 : f32 to vector<8x128xf32>
    %409 = arith.addf %408, %407 : vector<8x128xf32>
    %410 = arith.divf %408, %409 : vector<8x128xf32>
    %411 = vector.extract_strided_slice %398 {offsets = [0, 256], sizes = [8, 128], strides = [1, 1]} : vector<8x512xf32> to vector<8x128xf32>
    %412 = math.tanh %411 : vector<8x128xf32>
    %413 = vector.extract_strided_slice %398 {offsets = [0, 384], sizes = [8, 128], strides = [1, 1]} : vector<8x512xf32> to vector<8x128xf32>
    %414 = arith.negf %413 : vector<8x128xf32>
    %415 = math.exp %414 : vector<8x128xf32>
    %cst_184 = arith.constant 1.000000e+00 : f32
    %416 = vector.broadcast %cst_184 : f32 to vector<8x128xf32>
    %417 = arith.addf %416, %415 : vector<8x128xf32>
    %418 = arith.divf %416, %417 : vector<8x128xf32>
    %419 = arith.mulf %410, %391 : vector<8x128xf32>
    %420 = arith.mulf %404, %412 : vector<8x128xf32>
    %421 = arith.addf %419, %420 : vector<8x128xf32>
    %422 = math.tanh %421 : vector<8x128xf32>
    %423 = arith.mulf %418, %422 : vector<8x128xf32>
    %424 = arith.index_cast %393 : i32 to index
    %c0_185 = arith.constant 0 : index
    %425 = vector.load %arg9[%424, %c0_185] : memref<64x128xf32, #tpu.memory_space<vmem>>, vector<8x128xf32>
    tpu.vector_store %arg9[%424, %c0_185], %423 {strides = array<i32>} : memref<64x128xf32, #tpu.memory_space<vmem>>, vector<8x128xf32>,
    %c1_i32_186 = arith.constant 1 : i32
    %c8_i32_187 = arith.constant 8 : i32
    %426 = arith.muli %c1_i32_186, %c8_i32_187 : i32
    %427 = tpu.assume_multiple %426, 8 : i32
    %428 = arith.index_cast %427 : i32 to index
    %c0_188 = arith.constant 0 : index
    %429 = vector.load %arg10[%428, %c0_188] : memref<64x512xf32, #tpu.memory_space<vmem>>, vector<8x512xf32>
    %430 = arith.truncf %423 : vector<8x128xf32> to vector<8x128xbf16>
    %cst_189 = arith.constant dense<0.000000e+00> : vector<8x512xf32>
    %431 = tpu.matmul %430, %390, %cst_189 {dimension_numbers = #tpu.dot_dimension_numbers<[1], [0], [0], [1], [0, 0, 1, 1], [], []>} : vector<8x128xbf16>, vector<128x512xbf16>, vector<8x512xf32> -> vector<8x512xf32>
    %432 = arith.addf %429, %431 : vector<8x512xf32>
    %433 = vector.extract_strided_slice %432 {offsets = [0, 0], sizes = [8, 128], strides = [1, 1]} : vector<8x512xf32> to vector<8x128xf32>
    %434 = arith.negf %433 : vector<8x128xf32>
    %435 = math.exp %434 : vector<8x128xf32>
    %cst_190 = arith.constant 1.000000e+00 : f32
    %436 = vector.broadcast %cst_190 : f32 to vector<8x128xf32>
    %437 = arith.addf %436, %435 : vector<8x128xf32>
    %438 = arith.divf %436, %437 : vector<8x128xf32>
    %439 = vector.extract_strided_slice %432 {offsets = [0, 128], sizes = [8, 128], strides = [1, 1]} : vector<8x512xf32> to vector<8x128xf32>
    %440 = arith.negf %439 : vector<8x128xf32>
    %441 = math.exp %440 : vector<8x128xf32>
    %cst_191 = arith.constant 1.000000e+00 : f32
    %442 = vector.broadcast %cst_191 : f32 to vector<8x128xf32>
    %443 = arith.addf %442, %441 : vector<8x128xf32>
    %444 = arith.divf %442, %443 : vector<8x128xf32>
    %445 = vector.extract_strided_slice %432 {offsets = [0, 256], sizes = [8, 128], strides = [1, 1]} : vector<8x512xf32> to vector<8x128xf32>
    %446 = math.tanh %445 : vector<8x128xf32>
    %447 = vector.extract_strided_slice %432 {offsets = [0, 384], sizes = [8, 128], strides = [1, 1]} : vector<8x512xf32> to vector<8x128xf32>
    %448 = arith.negf %447 : vector<8x128xf32>
    %449 = math.exp %448 : vector<8x128xf32>
    %cst_192 = arith.constant 1.000000e+00 : f32
    %450 = vector.broadcast %cst_192 : f32 to vector<8x128xf32>
    %451 = arith.addf %450, %449 : vector<8x128xf32>
    %452 = arith.divf %450, %451 : vector<8x128xf32>
    %453 = arith.mulf %444, %421 : vector<8x128xf32>
    %454 = arith.mulf %438, %446 : vector<8x128xf32>
    %455 = arith.addf %453, %454 : vector<8x128xf32>
    %456 = math.tanh %455 : vector<8x128xf32>
    %457 = arith.mulf %452, %456 : vector<8x128xf32>
    %458 = arith.index_cast %427 : i32 to index
    %c0_193 = arith.constant 0 : index
    %459 = vector.load %arg9[%458, %c0_193] : memref<64x128xf32, #tpu.memory_space<vmem>>, vector<8x128xf32>
    tpu.vector_store %arg9[%458, %c0_193], %457 {strides = array<i32>} : memref<64x128xf32, #tpu.memory_space<vmem>>, vector<8x128xf32>,
    %c2_i32_194 = arith.constant 2 : i32
    %c8_i32_195 = arith.constant 8 : i32
    %460 = arith.muli %c2_i32_194, %c8_i32_195 : i32
    %461 = tpu.assume_multiple %460, 8 : i32
    %462 = arith.index_cast %461 : i32 to index
    %c0_196 = arith.constant 0 : index
    %463 = vector.load %arg10[%462, %c0_196] : memref<64x512xf32, #tpu.memory_space<vmem>>, vector<8x512xf32>
    %464 = arith.truncf %457 : vector<8x128xf32> to vector<8x128xbf16>
    %cst_197 = arith.constant dense<0.000000e+00> : vector<8x512xf32>
    %465 = tpu.matmul %464, %390, %cst_197 {dimension_numbers = #tpu.dot_dimension_numbers<[1], [0], [0], [1], [0, 0, 1, 1], [], []>} : vector<8x128xbf16>, vector<128x512xbf16>, vector<8x512xf32> -> vector<8x512xf32>
    %466 = arith.addf %463, %465 : vector<8x512xf32>
    %467 = vector.extract_strided_slice %466 {offsets = [0, 0], sizes = [8, 128], strides = [1, 1]} : vector<8x512xf32> to vector<8x128xf32>
    %468 = arith.negf %467 : vector<8x128xf32>
    %469 = math.exp %468 : vector<8x128xf32>
    %cst_198 = arith.constant 1.000000e+00 : f32
    %470 = vector.broadcast %cst_198 : f32 to vector<8x128xf32>
    %471 = arith.addf %470, %469 : vector<8x128xf32>
    %472 = arith.divf %470, %471 : vector<8x128xf32>
    %473 = vector.extract_strided_slice %466 {offsets = [0, 128], sizes = [8, 128], strides = [1, 1]} : vector<8x512xf32> to vector<8x128xf32>
    %474 = arith.negf %473 : vector<8x128xf32>
    %475 = math.exp %474 : vector<8x128xf32>
    %cst_199 = arith.constant 1.000000e+00 : f32
    %476 = vector.broadcast %cst_199 : f32 to vector<8x128xf32>
    %477 = arith.addf %476, %475 : vector<8x128xf32>
    %478 = arith.divf %476, %477 : vector<8x128xf32>
    %479 = vector.extract_strided_slice %466 {offsets = [0, 256], sizes = [8, 128], strides = [1, 1]} : vector<8x512xf32> to vector<8x128xf32>
    %480 = math.tanh %479 : vector<8x128xf32>
    %481 = vector.extract_strided_slice %466 {offsets = [0, 384], sizes = [8, 128], strides = [1, 1]} : vector<8x512xf32> to vector<8x128xf32>
    %482 = arith.negf %481 : vector<8x128xf32>
    %483 = math.exp %482 : vector<8x128xf32>
    %cst_200 = arith.constant 1.000000e+00 : f32
    %484 = vector.broadcast %cst_200 : f32 to vector<8x128xf32>
    %485 = arith.addf %484, %483 : vector<8x128xf32>
    %486 = arith.divf %484, %485 : vector<8x128xf32>
    %487 = arith.mulf %478, %455 : vector<8x128xf32>
    %488 = arith.mulf %472, %480 : vector<8x128xf32>
    %489 = arith.addf %487, %488 : vector<8x128xf32>
    %490 = math.tanh %489 : vector<8x128xf32>
    %491 = arith.mulf %486, %490 : vector<8x128xf32>
    %492 = arith.index_cast %461 : i32 to index
    %c0_201 = arith.constant 0 : index
    %493 = vector.load %arg9[%492, %c0_201] : memref<64x128xf32, #tpu.memory_space<vmem>>, vector<8x128xf32>
    tpu.vector_store %arg9[%492, %c0_201], %491 {strides = array<i32>} : memref<64x128xf32, #tpu.memory_space<vmem>>, vector<8x128xf32>,
    %c3_i32_202 = arith.constant 3 : i32
    %c8_i32_203 = arith.constant 8 : i32
    %494 = arith.muli %c3_i32_202, %c8_i32_203 : i32
    %495 = tpu.assume_multiple %494, 8 : i32
    %496 = arith.index_cast %495 : i32 to index
    %c0_204 = arith.constant 0 : index
    %497 = vector.load %arg10[%496, %c0_204] : memref<64x512xf32, #tpu.memory_space<vmem>>, vector<8x512xf32>
    %498 = arith.truncf %491 : vector<8x128xf32> to vector<8x128xbf16>
    %cst_205 = arith.constant dense<0.000000e+00> : vector<8x512xf32>
    %499 = tpu.matmul %498, %390, %cst_205 {dimension_numbers = #tpu.dot_dimension_numbers<[1], [0], [0], [1], [0, 0, 1, 1], [], []>} : vector<8x128xbf16>, vector<128x512xbf16>, vector<8x512xf32> -> vector<8x512xf32>
    %500 = arith.addf %497, %499 : vector<8x512xf32>
    %501 = vector.extract_strided_slice %500 {offsets = [0, 0], sizes = [8, 128], strides = [1, 1]} : vector<8x512xf32> to vector<8x128xf32>
    %502 = arith.negf %501 : vector<8x128xf32>
    %503 = math.exp %502 : vector<8x128xf32>
    %cst_206 = arith.constant 1.000000e+00 : f32
    %504 = vector.broadcast %cst_206 : f32 to vector<8x128xf32>
    %505 = arith.addf %504, %503 : vector<8x128xf32>
    %506 = arith.divf %504, %505 : vector<8x128xf32>
    %507 = vector.extract_strided_slice %500 {offsets = [0, 128], sizes = [8, 128], strides = [1, 1]} : vector<8x512xf32> to vector<8x128xf32>
    %508 = arith.negf %507 : vector<8x128xf32>
    %509 = math.exp %508 : vector<8x128xf32>
    %cst_207 = arith.constant 1.000000e+00 : f32
    %510 = vector.broadcast %cst_207 : f32 to vector<8x128xf32>
    %511 = arith.addf %510, %509 : vector<8x128xf32>
    %512 = arith.divf %510, %511 : vector<8x128xf32>
    %513 = vector.extract_strided_slice %500 {offsets = [0, 256], sizes = [8, 128], strides = [1, 1]} : vector<8x512xf32> to vector<8x128xf32>
    %514 = math.tanh %513 : vector<8x128xf32>
    %515 = vector.extract_strided_slice %500 {offsets = [0, 384], sizes = [8, 128], strides = [1, 1]} : vector<8x512xf32> to vector<8x128xf32>
    %516 = arith.negf %515 : vector<8x128xf32>
    %517 = math.exp %516 : vector<8x128xf32>
    %cst_208 = arith.constant 1.000000e+00 : f32
    %518 = vector.broadcast %cst_208 : f32 to vector<8x128xf32>
    %519 = arith.addf %518, %517 : vector<8x128xf32>
    %520 = arith.divf %518, %519 : vector<8x128xf32>
    %521 = arith.mulf %512, %489 : vector<8x128xf32>
    %522 = arith.mulf %506, %514 : vector<8x128xf32>
    %523 = arith.addf %521, %522 : vector<8x128xf32>
    %524 = math.tanh %523 : vector<8x128xf32>
    %525 = arith.mulf %520, %524 : vector<8x128xf32>
    %526 = arith.index_cast %495 : i32 to index
    %c0_209 = arith.constant 0 : index
    %527 = vector.load %arg9[%526, %c0_209] : memref<64x128xf32, #tpu.memory_space<vmem>>, vector<8x128xf32>
    tpu.vector_store %arg9[%526, %c0_209], %525 {strides = array<i32>} : memref<64x128xf32, #tpu.memory_space<vmem>>, vector<8x128xf32>,
    %c4_i32_210 = arith.constant 4 : i32
    %c8_i32_211 = arith.constant 8 : i32
    %528 = arith.muli %c4_i32_210, %c8_i32_211 : i32
    %529 = tpu.assume_multiple %528, 8 : i32
    %530 = arith.index_cast %529 : i32 to index
    %c0_212 = arith.constant 0 : index
    %531 = vector.load %arg10[%530, %c0_212] : memref<64x512xf32, #tpu.memory_space<vmem>>, vector<8x512xf32>
    %532 = arith.truncf %525 : vector<8x128xf32> to vector<8x128xbf16>
    %cst_213 = arith.constant dense<0.000000e+00> : vector<8x512xf32>
    %533 = tpu.matmul %532, %390, %cst_213 {dimension_numbers = #tpu.dot_dimension_numbers<[1], [0], [0], [1], [0, 0, 1, 1], [], []>} : vector<8x128xbf16>, vector<128x512xbf16>, vector<8x512xf32> -> vector<8x512xf32>
    %534 = arith.addf %531, %533 : vector<8x512xf32>
    %535 = vector.extract_strided_slice %534 {offsets = [0, 0], sizes = [8, 128], strides = [1, 1]} : vector<8x512xf32> to vector<8x128xf32>
    %536 = arith.negf %535 : vector<8x128xf32>
    %537 = math.exp %536 : vector<8x128xf32>
    %cst_214 = arith.constant 1.000000e+00 : f32
    %538 = vector.broadcast %cst_214 : f32 to vector<8x128xf32>
    %539 = arith.addf %538, %537 : vector<8x128xf32>
    %540 = arith.divf %538, %539 : vector<8x128xf32>
    %541 = vector.extract_strided_slice %534 {offsets = [0, 128], sizes = [8, 128], strides = [1, 1]} : vector<8x512xf32> to vector<8x128xf32>
    %542 = arith.negf %541 : vector<8x128xf32>
    %543 = math.exp %542 : vector<8x128xf32>
    %cst_215 = arith.constant 1.000000e+00 : f32
    %544 = vector.broadcast %cst_215 : f32 to vector<8x128xf32>
    %545 = arith.addf %544, %543 : vector<8x128xf32>
    %546 = arith.divf %544, %545 : vector<8x128xf32>
    %547 = vector.extract_strided_slice %534 {offsets = [0, 256], sizes = [8, 128], strides = [1, 1]} : vector<8x512xf32> to vector<8x128xf32>
    %548 = math.tanh %547 : vector<8x128xf32>
    %549 = vector.extract_strided_slice %534 {offsets = [0, 384], sizes = [8, 128], strides = [1, 1]} : vector<8x512xf32> to vector<8x128xf32>
    %550 = arith.negf %549 : vector<8x128xf32>
    %551 = math.exp %550 : vector<8x128xf32>
    %cst_216 = arith.constant 1.000000e+00 : f32
    %552 = vector.broadcast %cst_216 : f32 to vector<8x128xf32>
    %553 = arith.addf %552, %551 : vector<8x128xf32>
    %554 = arith.divf %552, %553 : vector<8x128xf32>
    %555 = arith.mulf %546, %523 : vector<8x128xf32>
    %556 = arith.mulf %540, %548 : vector<8x128xf32>
    %557 = arith.addf %555, %556 : vector<8x128xf32>
    %558 = math.tanh %557 : vector<8x128xf32>
    %559 = arith.mulf %554, %558 : vector<8x128xf32>
    %560 = arith.index_cast %529 : i32 to index
    %c0_217 = arith.constant 0 : index
    %561 = vector.load %arg9[%560, %c0_217] : memref<64x128xf32, #tpu.memory_space<vmem>>, vector<8x128xf32>
    tpu.vector_store %arg9[%560, %c0_217], %559 {strides = array<i32>} : memref<64x128xf32, #tpu.memory_space<vmem>>, vector<8x128xf32>,
    %c5_i32_218 = arith.constant 5 : i32
    %c8_i32_219 = arith.constant 8 : i32
    %562 = arith.muli %c5_i32_218, %c8_i32_219 : i32
    %563 = tpu.assume_multiple %562, 8 : i32
    %564 = arith.index_cast %563 : i32 to index
    %c0_220 = arith.constant 0 : index
    %565 = vector.load %arg10[%564, %c0_220] : memref<64x512xf32, #tpu.memory_space<vmem>>, vector<8x512xf32>
    %566 = arith.truncf %559 : vector<8x128xf32> to vector<8x128xbf16>
    %cst_221 = arith.constant dense<0.000000e+00> : vector<8x512xf32>
    %567 = tpu.matmul %566, %390, %cst_221 {dimension_numbers = #tpu.dot_dimension_numbers<[1], [0], [0], [1], [0, 0, 1, 1], [], []>} : vector<8x128xbf16>, vector<128x512xbf16>, vector<8x512xf32> -> vector<8x512xf32>
    %568 = arith.addf %565, %567 : vector<8x512xf32>
    %569 = vector.extract_strided_slice %568 {offsets = [0, 0], sizes = [8, 128], strides = [1, 1]} : vector<8x512xf32> to vector<8x128xf32>
    %570 = arith.negf %569 : vector<8x128xf32>
    %571 = math.exp %570 : vector<8x128xf32>
    %cst_222 = arith.constant 1.000000e+00 : f32
    %572 = vector.broadcast %cst_222 : f32 to vector<8x128xf32>
    %573 = arith.addf %572, %571 : vector<8x128xf32>
    %574 = arith.divf %572, %573 : vector<8x128xf32>
    %575 = vector.extract_strided_slice %568 {offsets = [0, 128], sizes = [8, 128], strides = [1, 1]} : vector<8x512xf32> to vector<8x128xf32>
    %576 = arith.negf %575 : vector<8x128xf32>
    %577 = math.exp %576 : vector<8x128xf32>
    %cst_223 = arith.constant 1.000000e+00 : f32
    %578 = vector.broadcast %cst_223 : f32 to vector<8x128xf32>
    %579 = arith.addf %578, %577 : vector<8x128xf32>
    %580 = arith.divf %578, %579 : vector<8x128xf32>
    %581 = vector.extract_strided_slice %568 {offsets = [0, 256], sizes = [8, 128], strides = [1, 1]} : vector<8x512xf32> to vector<8x128xf32>
    %582 = math.tanh %581 : vector<8x128xf32>
    %583 = vector.extract_strided_slice %568 {offsets = [0, 384], sizes = [8, 128], strides = [1, 1]} : vector<8x512xf32> to vector<8x128xf32>
    %584 = arith.negf %583 : vector<8x128xf32>
    %585 = math.exp %584 : vector<8x128xf32>
    %cst_224 = arith.constant 1.000000e+00 : f32
    %586 = vector.broadcast %cst_224 : f32 to vector<8x128xf32>
    %587 = arith.addf %586, %585 : vector<8x128xf32>
    %588 = arith.divf %586, %587 : vector<8x128xf32>
    %589 = arith.mulf %580, %557 : vector<8x128xf32>
    %590 = arith.mulf %574, %582 : vector<8x128xf32>
    %591 = arith.addf %589, %590 : vector<8x128xf32>
    %592 = math.tanh %591 : vector<8x128xf32>
    %593 = arith.mulf %588, %592 : vector<8x128xf32>
    %594 = arith.index_cast %563 : i32 to index
    %c0_225 = arith.constant 0 : index
    %595 = vector.load %arg9[%594, %c0_225] : memref<64x128xf32, #tpu.memory_space<vmem>>, vector<8x128xf32>
    tpu.vector_store %arg9[%594, %c0_225], %593 {strides = array<i32>} : memref<64x128xf32, #tpu.memory_space<vmem>>, vector<8x128xf32>,
    %c6_i32_226 = arith.constant 6 : i32
    %c8_i32_227 = arith.constant 8 : i32
    %596 = arith.muli %c6_i32_226, %c8_i32_227 : i32
    %597 = tpu.assume_multiple %596, 8 : i32
    %598 = arith.index_cast %597 : i32 to index
    %c0_228 = arith.constant 0 : index
    %599 = vector.load %arg10[%598, %c0_228] : memref<64x512xf32, #tpu.memory_space<vmem>>, vector<8x512xf32>
    %600 = arith.truncf %593 : vector<8x128xf32> to vector<8x128xbf16>
    %cst_229 = arith.constant dense<0.000000e+00> : vector<8x512xf32>
    %601 = tpu.matmul %600, %390, %cst_229 {dimension_numbers = #tpu.dot_dimension_numbers<[1], [0], [0], [1], [0, 0, 1, 1], [], []>} : vector<8x128xbf16>, vector<128x512xbf16>, vector<8x512xf32> -> vector<8x512xf32>
    %602 = arith.addf %599, %601 : vector<8x512xf32>
    %603 = vector.extract_strided_slice %602 {offsets = [0, 0], sizes = [8, 128], strides = [1, 1]} : vector<8x512xf32> to vector<8x128xf32>
    %604 = arith.negf %603 : vector<8x128xf32>
    %605 = math.exp %604 : vector<8x128xf32>
    %cst_230 = arith.constant 1.000000e+00 : f32
    %606 = vector.broadcast %cst_230 : f32 to vector<8x128xf32>
    %607 = arith.addf %606, %605 : vector<8x128xf32>
    %608 = arith.divf %606, %607 : vector<8x128xf32>
    %609 = vector.extract_strided_slice %602 {offsets = [0, 128], sizes = [8, 128], strides = [1, 1]} : vector<8x512xf32> to vector<8x128xf32>
    %610 = arith.negf %609 : vector<8x128xf32>
    %611 = math.exp %610 : vector<8x128xf32>
    %cst_231 = arith.constant 1.000000e+00 : f32
    %612 = vector.broadcast %cst_231 : f32 to vector<8x128xf32>
    %613 = arith.addf %612, %611 : vector<8x128xf32>
    %614 = arith.divf %612, %613 : vector<8x128xf32>
    %615 = vector.extract_strided_slice %602 {offsets = [0, 256], sizes = [8, 128], strides = [1, 1]} : vector<8x512xf32> to vector<8x128xf32>
    %616 = math.tanh %615 : vector<8x128xf32>
    %617 = vector.extract_strided_slice %602 {offsets = [0, 384], sizes = [8, 128], strides = [1, 1]} : vector<8x512xf32> to vector<8x128xf32>
    %618 = arith.negf %617 : vector<8x128xf32>
    %619 = math.exp %618 : vector<8x128xf32>
    %cst_232 = arith.constant 1.000000e+00 : f32
    %620 = vector.broadcast %cst_232 : f32 to vector<8x128xf32>
    %621 = arith.addf %620, %619 : vector<8x128xf32>
    %622 = arith.divf %620, %621 : vector<8x128xf32>
    %623 = arith.mulf %614, %591 : vector<8x128xf32>
    %624 = arith.mulf %608, %616 : vector<8x128xf32>
    %625 = arith.addf %623, %624 : vector<8x128xf32>
    %626 = math.tanh %625 : vector<8x128xf32>
    %627 = arith.mulf %622, %626 : vector<8x128xf32>
    %628 = arith.index_cast %597 : i32 to index
    %c0_233 = arith.constant 0 : index
    %629 = vector.load %arg9[%628, %c0_233] : memref<64x128xf32, #tpu.memory_space<vmem>>, vector<8x128xf32>
    tpu.vector_store %arg9[%628, %c0_233], %627 {strides = array<i32>} : memref<64x128xf32, #tpu.memory_space<vmem>>, vector<8x128xf32>,
    %c7_i32_234 = arith.constant 7 : i32
    %c8_i32_235 = arith.constant 8 : i32
    %630 = arith.muli %c7_i32_234, %c8_i32_235 : i32
    %631 = tpu.assume_multiple %630, 8 : i32
    %632 = arith.index_cast %631 : i32 to index
    %c0_236 = arith.constant 0 : index
    %633 = vector.load %arg10[%632, %c0_236] : memref<64x512xf32, #tpu.memory_space<vmem>>, vector<8x512xf32>
    %634 = arith.truncf %627 : vector<8x128xf32> to vector<8x128xbf16>
    %cst_237 = arith.constant dense<0.000000e+00> : vector<8x512xf32>
    %635 = tpu.matmul %634, %390, %cst_237 {dimension_numbers = #tpu.dot_dimension_numbers<[1], [0], [0], [1], [0, 0, 1, 1], [], []>} : vector<8x128xbf16>, vector<128x512xbf16>, vector<8x512xf32> -> vector<8x512xf32>
    %636 = arith.addf %633, %635 : vector<8x512xf32>
    %637 = vector.extract_strided_slice %636 {offsets = [0, 0], sizes = [8, 128], strides = [1, 1]} : vector<8x512xf32> to vector<8x128xf32>
    %638 = arith.negf %637 : vector<8x128xf32>
    %639 = math.exp %638 : vector<8x128xf32>
    %cst_238 = arith.constant 1.000000e+00 : f32
    %640 = vector.broadcast %cst_238 : f32 to vector<8x128xf32>
    %641 = arith.addf %640, %639 : vector<8x128xf32>
    %642 = arith.divf %640, %641 : vector<8x128xf32>
    %643 = vector.extract_strided_slice %636 {offsets = [0, 128], sizes = [8, 128], strides = [1, 1]} : vector<8x512xf32> to vector<8x128xf32>
    %644 = arith.negf %643 : vector<8x128xf32>
    %645 = math.exp %644 : vector<8x128xf32>
    %cst_239 = arith.constant 1.000000e+00 : f32
    %646 = vector.broadcast %cst_239 : f32 to vector<8x128xf32>
    %647 = arith.addf %646, %645 : vector<8x128xf32>
    %648 = arith.divf %646, %647 : vector<8x128xf32>
    %649 = vector.extract_strided_slice %636 {offsets = [0, 256], sizes = [8, 128], strides = [1, 1]} : vector<8x512xf32> to vector<8x128xf32>
    %650 = math.tanh %649 : vector<8x128xf32>
    %651 = vector.extract_strided_slice %636 {offsets = [0, 384], sizes = [8, 128], strides = [1, 1]} : vector<8x512xf32> to vector<8x128xf32>
    %652 = arith.negf %651 : vector<8x128xf32>
    %653 = math.exp %652 : vector<8x128xf32>
    %cst_240 = arith.constant 1.000000e+00 : f32
    %654 = vector.broadcast %cst_240 : f32 to vector<8x128xf32>
    %655 = arith.addf %654, %653 : vector<8x128xf32>
    %656 = arith.divf %654, %655 : vector<8x128xf32>
    %657 = arith.mulf %648, %625 : vector<8x128xf32>
    %658 = arith.mulf %642, %650 : vector<8x128xf32>
    %659 = arith.addf %657, %658 : vector<8x128xf32>
    %660 = math.tanh %659 : vector<8x128xf32>
    %661 = arith.mulf %656, %660 : vector<8x128xf32>
    %662 = arith.index_cast %631 : i32 to index
    %c0_241 = arith.constant 0 : index
    %663 = vector.load %arg9[%662, %c0_241] : memref<64x128xf32, #tpu.memory_space<vmem>>, vector<8x128xf32>
    tpu.vector_store %arg9[%662, %c0_241], %661 {strides = array<i32>} : memref<64x128xf32, #tpu.memory_space<vmem>>, vector<8x128xf32>,
    %c8_i32_242 = arith.constant 8 : i32
    %c0_243 = arith.constant 0 : index
    %c0_244 = arith.constant 0 : index
    %664 = vector.load %arg9[%c0_243, %c0_244] : memref<64x128xf32, #tpu.memory_space<vmem>>, vector<8x128xf32>
    %c56_245 = arith.constant 56 : index
    %c0_246 = arith.constant 0 : index
    %665 = vector.load %arg9[%c56_245, %c0_246] : memref<64x128xf32, #tpu.memory_space<vmem>>, vector<8x128xf32>
    %666 = arith.select %21, %664, %665 : vector<8x128xi1>, vector<8x128xf32>
    %c0_247 = arith.constant 0 : index
    %c0_248 = arith.constant 0 : index
    %667 = vector.load %arg9[%c0_247, %c0_248] : memref<64x128xf32, #tpu.memory_space<vmem>>, vector<8x128xf32>
    tpu.vector_store %arg9[%c0_247, %c0_248], %666 {strides = array<i32>} : memref<64x128xf32, #tpu.memory_space<vmem>>, vector<8x128xf32>,
    %668 = arith.select %21, %665, %664 : vector<8x128xi1>, vector<8x128xf32>
    %c56_249 = arith.constant 56 : index
    %c0_250 = arith.constant 0 : index
    %669 = vector.load %arg9[%c56_249, %c0_250] : memref<64x128xf32, #tpu.memory_space<vmem>>, vector<8x128xf32>
    tpu.vector_store %arg9[%c56_249, %c0_250], %668 {strides = array<i32>} : memref<64x128xf32, #tpu.memory_space<vmem>>, vector<8x128xf32>,
    %c8_251 = arith.constant 8 : index
    %c0_252 = arith.constant 0 : index
    %670 = vector.load %arg9[%c8_251, %c0_252] : memref<64x128xf32, #tpu.memory_space<vmem>>, vector<8x128xf32>
    %c48_253 = arith.constant 48 : index
    %c0_254 = arith.constant 0 : index
    %671 = vector.load %arg9[%c48_253, %c0_254] : memref<64x128xf32, #tpu.memory_space<vmem>>, vector<8x128xf32>
    %672 = arith.select %21, %670, %671 : vector<8x128xi1>, vector<8x128xf32>
    %c8_255 = arith.constant 8 : index
    %c0_256 = arith.constant 0 : index
    %673 = vector.load %arg9[%c8_255, %c0_256] : memref<64x128xf32, #tpu.memory_space<vmem>>, vector<8x128xf32>
    tpu.vector_store %arg9[%c8_255, %c0_256], %672 {strides = array<i32>} : memref<64x128xf32, #tpu.memory_space<vmem>>, vector<8x128xf32>,
    %674 = arith.select %21, %671, %670 : vector<8x128xi1>, vector<8x128xf32>
    %c48_257 = arith.constant 48 : index
    %c0_258 = arith.constant 0 : index
    %675 = vector.load %arg9[%c48_257, %c0_258] : memref<64x128xf32, #tpu.memory_space<vmem>>, vector<8x128xf32>
    tpu.vector_store %arg9[%c48_257, %c0_258], %674 {strides = array<i32>} : memref<64x128xf32, #tpu.memory_space<vmem>>, vector<8x128xf32>,
    %c16_259 = arith.constant 16 : index
    %c0_260 = arith.constant 0 : index
    %676 = vector.load %arg9[%c16_259, %c0_260] : memref<64x128xf32, #tpu.memory_space<vmem>>, vector<8x128xf32>
    %c40_261 = arith.constant 40 : index
    %c0_262 = arith.constant 0 : index
    %677 = vector.load %arg9[%c40_261, %c0_262] : memref<64x128xf32, #tpu.memory_space<vmem>>, vector<8x128xf32>
    %678 = arith.select %21, %676, %677 : vector<8x128xi1>, vector<8x128xf32>
    %c16_263 = arith.constant 16 : index
    %c0_264 = arith.constant 0 : index
    %679 = vector.load %arg9[%c16_263, %c0_264] : memref<64x128xf32, #tpu.memory_space<vmem>>, vector<8x128xf32>
    tpu.vector_store %arg9[%c16_263, %c0_264], %678 {strides = array<i32>} : memref<64x128xf32, #tpu.memory_space<vmem>>, vector<8x128xf32>,
    %680 = arith.select %21, %677, %676 : vector<8x128xi1>, vector<8x128xf32>
    %c40_265 = arith.constant 40 : index
    %c0_266 = arith.constant 0 : index
    %681 = vector.load %arg9[%c40_265, %c0_266] : memref<64x128xf32, #tpu.memory_space<vmem>>, vector<8x128xf32>
    tpu.vector_store %arg9[%c40_265, %c0_266], %680 {strides = array<i32>} : memref<64x128xf32, #tpu.memory_space<vmem>>, vector<8x128xf32>,
    %c24_267 = arith.constant 24 : index
    %c0_268 = arith.constant 0 : index
    %682 = vector.load %arg9[%c24_267, %c0_268] : memref<64x128xf32, #tpu.memory_space<vmem>>, vector<8x128xf32>
    %c32_269 = arith.constant 32 : index
    %c0_270 = arith.constant 0 : index
    %683 = vector.load %arg9[%c32_269, %c0_270] : memref<64x128xf32, #tpu.memory_space<vmem>>, vector<8x128xf32>
    %684 = arith.select %21, %682, %683 : vector<8x128xi1>, vector<8x128xf32>
    %c24_271 = arith.constant 24 : index
    %c0_272 = arith.constant 0 : index
    %685 = vector.load %arg9[%c24_271, %c0_272] : memref<64x128xf32, #tpu.memory_space<vmem>>, vector<8x128xf32>
    tpu.vector_store %arg9[%c24_271, %c0_272], %684 {strides = array<i32>} : memref<64x128xf32, #tpu.memory_space<vmem>>, vector<8x128xf32>,
    %686 = arith.select %21, %683, %682 : vector<8x128xi1>, vector<8x128xf32>
    %c32_273 = arith.constant 32 : index
    %c0_274 = arith.constant 0 : index
    %687 = vector.load %arg9[%c32_273, %c0_274] : memref<64x128xf32, #tpu.memory_space<vmem>>, vector<8x128xf32>
    tpu.vector_store %arg9[%c32_273, %c0_274], %686 {strides = array<i32>} : memref<64x128xf32, #tpu.memory_space<vmem>>, vector<8x128xf32>,
    %c0_275 = arith.constant 0 : index
    %c0_276 = arith.constant 0 : index
    %688 = vector.load %arg9[%c0_275, %c0_276] : memref<64x128xf32, #tpu.memory_space<vmem>>, vector<64x128xf32>
    %689 = arith.truncf %688 : vector<64x128xf32> to vector<64x128xbf16>
    %c2 = arith.constant 2 : index
    %c0_277 = arith.constant 0 : index
    %c0_278 = arith.constant 0 : index
    %690 = vector.load %arg2[%c2, %c0_277, %c0_278] : memref<4x128x512xbf16, #tpu.memory_space<vmem>>, vector<1x128x512xbf16>
    %691 = vector.shape_cast %690 : vector<1x128x512xbf16> to vector<128x512xbf16>
    %cst_279 = arith.constant dense<0.000000e+00> : vector<64x512xf32>
    %692 = tpu.matmul %689, %691, %cst_279 {dimension_numbers = #tpu.dot_dimension_numbers<[1], [0], [0], [1], [0, 0, 1, 1], [], []>} : vector<64x128xbf16>, vector<128x512xbf16>, vector<64x512xf32> -> vector<64x512xf32>
    %c2_280 = arith.constant 2 : index
    %c0_281 = arith.constant 0 : index
    %c0_282 = arith.constant 0 : index
    %693 = vector.load %arg4[%c2_280, %c0_281, %c0_282] : memref<4x1x512xf32, #tpu.memory_space<vmem>>, vector<1x1x512xf32>
    %694 = vector.shape_cast %693 : vector<1x1x512xf32> to vector<1x512xf32>
    %695 = vector.broadcast %694 : vector<1x512xf32> to vector<64x512xf32>
    %696 = arith.addf %692, %695 : vector<64x512xf32>
    %c0_283 = arith.constant 0 : index
    %c0_284 = arith.constant 0 : index
    %697 = vector.load %arg10[%c0_283, %c0_284] : memref<64x512xf32, #tpu.memory_space<vmem>>, vector<64x512xf32>
    tpu.vector_store %arg10[%c0_283, %c0_284], %696 {strides = array<i32>} : memref<64x512xf32, #tpu.memory_space<vmem>>, vector<64x512xf32>,
    %c0_285 = arith.constant 0 : index
    %c0_286 = arith.constant 0 : index
    %698 = vector.load %arg10[%c0_285, %c0_286] : memref<64x512xf32, #tpu.memory_space<vmem>>, vector<8x512xf32>
    %c56_287 = arith.constant 56 : index
    %c0_288 = arith.constant 0 : index
    %699 = vector.load %arg10[%c56_287, %c0_288] : memref<64x512xf32, #tpu.memory_space<vmem>>, vector<8x512xf32>
    %700 = arith.select %18, %698, %699 : vector<8x512xi1>, vector<8x512xf32>
    %c0_289 = arith.constant 0 : index
    %c0_290 = arith.constant 0 : index
    %701 = vector.load %arg10[%c0_289, %c0_290] : memref<64x512xf32, #tpu.memory_space<vmem>>, vector<8x512xf32>
    tpu.vector_store %arg10[%c0_289, %c0_290], %700 {strides = array<i32>} : memref<64x512xf32, #tpu.memory_space<vmem>>, vector<8x512xf32>,
    %702 = arith.select %18, %699, %698 : vector<8x512xi1>, vector<8x512xf32>
    %c56_291 = arith.constant 56 : index
    %c0_292 = arith.constant 0 : index
    %703 = vector.load %arg10[%c56_291, %c0_292] : memref<64x512xf32, #tpu.memory_space<vmem>>, vector<8x512xf32>
    tpu.vector_store %arg10[%c56_291, %c0_292], %702 {strides = array<i32>} : memref<64x512xf32, #tpu.memory_space<vmem>>, vector<8x512xf32>,
    %c8_293 = arith.constant 8 : index
    %c0_294 = arith.constant 0 : index
    %704 = vector.load %arg10[%c8_293, %c0_294] : memref<64x512xf32, #tpu.memory_space<vmem>>, vector<8x512xf32>
    %c48_295 = arith.constant 48 : index
    %c0_296 = arith.constant 0 : index
    %705 = vector.load %arg10[%c48_295, %c0_296] : memref<64x512xf32, #tpu.memory_space<vmem>>, vector<8x512xf32>
    %706 = arith.select %18, %704, %705 : vector<8x512xi1>, vector<8x512xf32>
    %c8_297 = arith.constant 8 : index
    %c0_298 = arith.constant 0 : index
    %707 = vector.load %arg10[%c8_297, %c0_298] : memref<64x512xf32, #tpu.memory_space<vmem>>, vector<8x512xf32>
    tpu.vector_store %arg10[%c8_297, %c0_298], %706 {strides = array<i32>} : memref<64x512xf32, #tpu.memory_space<vmem>>, vector<8x512xf32>,
    %708 = arith.select %18, %705, %704 : vector<8x512xi1>, vector<8x512xf32>
    %c48_299 = arith.constant 48 : index
    %c0_300 = arith.constant 0 : index
    %709 = vector.load %arg10[%c48_299, %c0_300] : memref<64x512xf32, #tpu.memory_space<vmem>>, vector<8x512xf32>
    tpu.vector_store %arg10[%c48_299, %c0_300], %708 {strides = array<i32>} : memref<64x512xf32, #tpu.memory_space<vmem>>, vector<8x512xf32>,
    %c16_301 = arith.constant 16 : index
    %c0_302 = arith.constant 0 : index
    %710 = vector.load %arg10[%c16_301, %c0_302] : memref<64x512xf32, #tpu.memory_space<vmem>>, vector<8x512xf32>
    %c40_303 = arith.constant 40 : index
    %c0_304 = arith.constant 0 : index
    %711 = vector.load %arg10[%c40_303, %c0_304] : memref<64x512xf32, #tpu.memory_space<vmem>>, vector<8x512xf32>
    %712 = arith.select %18, %710, %711 : vector<8x512xi1>, vector<8x512xf32>
    %c16_305 = arith.constant 16 : index
    %c0_306 = arith.constant 0 : index
    %713 = vector.load %arg10[%c16_305, %c0_306] : memref<64x512xf32, #tpu.memory_space<vmem>>, vector<8x512xf32>
    tpu.vector_store %arg10[%c16_305, %c0_306], %712 {strides = array<i32>} : memref<64x512xf32, #tpu.memory_space<vmem>>, vector<8x512xf32>,
    %714 = arith.select %18, %711, %710 : vector<8x512xi1>, vector<8x512xf32>
    %c40_307 = arith.constant 40 : index
    %c0_308 = arith.constant 0 : index
    %715 = vector.load %arg10[%c40_307, %c0_308] : memref<64x512xf32, #tpu.memory_space<vmem>>, vector<8x512xf32>
    tpu.vector_store %arg10[%c40_307, %c0_308], %714 {strides = array<i32>} : memref<64x512xf32, #tpu.memory_space<vmem>>, vector<8x512xf32>,
    %c24_309 = arith.constant 24 : index
    %c0_310 = arith.constant 0 : index
    %716 = vector.load %arg10[%c24_309, %c0_310] : memref<64x512xf32, #tpu.memory_space<vmem>>, vector<8x512xf32>
    %c32_311 = arith.constant 32 : index
    %c0_312 = arith.constant 0 : index
    %717 = vector.load %arg10[%c32_311, %c0_312] : memref<64x512xf32, #tpu.memory_space<vmem>>, vector<8x512xf32>
    %718 = arith.select %18, %716, %717 : vector<8x512xi1>, vector<8x512xf32>
    %c24_313 = arith.constant 24 : index
    %c0_314 = arith.constant 0 : index
    %719 = vector.load %arg10[%c24_313, %c0_314] : memref<64x512xf32, #tpu.memory_space<vmem>>, vector<8x512xf32>
    tpu.vector_store %arg10[%c24_313, %c0_314], %718 {strides = array<i32>} : memref<64x512xf32, #tpu.memory_space<vmem>>, vector<8x512xf32>,
    %720 = arith.select %18, %717, %716 : vector<8x512xi1>, vector<8x512xf32>
    %c32_315 = arith.constant 32 : index
    %c0_316 = arith.constant 0 : index
    %721 = vector.load %arg10[%c32_315, %c0_316] : memref<64x512xf32, #tpu.memory_space<vmem>>, vector<8x512xf32>
    tpu.vector_store %arg10[%c32_315, %c0_316], %720 {strides = array<i32>} : memref<64x512xf32, #tpu.memory_space<vmem>>, vector<8x512xf32>,
    %c2_317 = arith.constant 2 : index
    %c0_318 = arith.constant 0 : index
    %c0_319 = arith.constant 0 : index
    %722 = vector.load %arg3[%c2_317, %c0_318, %c0_319] : memref<4x128x512xbf16, #tpu.memory_space<vmem>>, vector<1x128x512xbf16>
    %723 = vector.shape_cast %722 : vector<1x128x512xbf16> to vector<128x512xbf16>
    %cst_320 = arith.constant 0.000000e+00 : f32
    %724 = vector.broadcast %cst_320 : f32 to vector<8x128xf32>
    %c0_i32_321 = arith.constant 0 : i32
    %c8_i32_322 = arith.constant 8 : i32
    %725 = arith.muli %c0_i32_321, %c8_i32_322 : i32
    %726 = tpu.assume_multiple %725, 8 : i32
    %727 = arith.index_cast %726 : i32 to index
    %c0_323 = arith.constant 0 : index
    %728 = vector.load %arg10[%727, %c0_323] : memref<64x512xf32, #tpu.memory_space<vmem>>, vector<8x512xf32>
    %729 = arith.truncf %724 : vector<8x128xf32> to vector<8x128xbf16>
    %cst_324 = arith.constant dense<0.000000e+00> : vector<8x512xf32>
    %730 = tpu.matmul %729, %723, %cst_324 {dimension_numbers = #tpu.dot_dimension_numbers<[1], [0], [0], [1], [0, 0, 1, 1], [], []>} : vector<8x128xbf16>, vector<128x512xbf16>, vector<8x512xf32> -> vector<8x512xf32>
    %731 = arith.addf %728, %730 : vector<8x512xf32>
    %732 = vector.extract_strided_slice %731 {offsets = [0, 0], sizes = [8, 128], strides = [1, 1]} : vector<8x512xf32> to vector<8x128xf32>
    %733 = arith.negf %732 : vector<8x128xf32>
    %734 = math.exp %733 : vector<8x128xf32>
    %cst_325 = arith.constant 1.000000e+00 : f32
    %735 = vector.broadcast %cst_325 : f32 to vector<8x128xf32>
    %736 = arith.addf %735, %734 : vector<8x128xf32>
    %737 = arith.divf %735, %736 : vector<8x128xf32>
    %738 = vector.extract_strided_slice %731 {offsets = [0, 128], sizes = [8, 128], strides = [1, 1]} : vector<8x512xf32> to vector<8x128xf32>
    %739 = arith.negf %738 : vector<8x128xf32>
    %740 = math.exp %739 : vector<8x128xf32>
    %cst_326 = arith.constant 1.000000e+00 : f32
    %741 = vector.broadcast %cst_326 : f32 to vector<8x128xf32>
    %742 = arith.addf %741, %740 : vector<8x128xf32>
    %743 = arith.divf %741, %742 : vector<8x128xf32>
    %744 = vector.extract_strided_slice %731 {offsets = [0, 256], sizes = [8, 128], strides = [1, 1]} : vector<8x512xf32> to vector<8x128xf32>
    %745 = math.tanh %744 : vector<8x128xf32>
    %746 = vector.extract_strided_slice %731 {offsets = [0, 384], sizes = [8, 128], strides = [1, 1]} : vector<8x512xf32> to vector<8x128xf32>
    %747 = arith.negf %746 : vector<8x128xf32>
    %748 = math.exp %747 : vector<8x128xf32>
    %cst_327 = arith.constant 1.000000e+00 : f32
    %749 = vector.broadcast %cst_327 : f32 to vector<8x128xf32>
    %750 = arith.addf %749, %748 : vector<8x128xf32>
    %751 = arith.divf %749, %750 : vector<8x128xf32>
    %752 = arith.mulf %743, %724 : vector<8x128xf32>
    %753 = arith.mulf %737, %745 : vector<8x128xf32>
    %754 = arith.addf %752, %753 : vector<8x128xf32>
    %755 = math.tanh %754 : vector<8x128xf32>
    %756 = arith.mulf %751, %755 : vector<8x128xf32>
    %757 = arith.index_cast %726 : i32 to index
    %c0_328 = arith.constant 0 : index
    %758 = vector.load %arg8[%757, %c0_328] : memref<64x128xf32, #tpu.memory_space<vmem>>, vector<8x128xf32>
    tpu.vector_store %arg8[%757, %c0_328], %756 {strides = array<i32>} : memref<64x128xf32, #tpu.memory_space<vmem>>, vector<8x128xf32>,
    %c1_i32_329 = arith.constant 1 : i32
    %c8_i32_330 = arith.constant 8 : i32
    %759 = arith.muli %c1_i32_329, %c8_i32_330 : i32
    %760 = tpu.assume_multiple %759, 8 : i32
    %761 = arith.index_cast %760 : i32 to index
    %c0_331 = arith.constant 0 : index
    %762 = vector.load %arg10[%761, %c0_331] : memref<64x512xf32, #tpu.memory_space<vmem>>, vector<8x512xf32>
    %763 = arith.truncf %756 : vector<8x128xf32> to vector<8x128xbf16>
    %cst_332 = arith.constant dense<0.000000e+00> : vector<8x512xf32>
    %764 = tpu.matmul %763, %723, %cst_332 {dimension_numbers = #tpu.dot_dimension_numbers<[1], [0], [0], [1], [0, 0, 1, 1], [], []>} : vector<8x128xbf16>, vector<128x512xbf16>, vector<8x512xf32> -> vector<8x512xf32>
    %765 = arith.addf %762, %764 : vector<8x512xf32>
    %766 = vector.extract_strided_slice %765 {offsets = [0, 0], sizes = [8, 128], strides = [1, 1]} : vector<8x512xf32> to vector<8x128xf32>
    %767 = arith.negf %766 : vector<8x128xf32>
    %768 = math.exp %767 : vector<8x128xf32>
    %cst_333 = arith.constant 1.000000e+00 : f32
    %769 = vector.broadcast %cst_333 : f32 to vector<8x128xf32>
    %770 = arith.addf %769, %768 : vector<8x128xf32>
    %771 = arith.divf %769, %770 : vector<8x128xf32>
    %772 = vector.extract_strided_slice %765 {offsets = [0, 128], sizes = [8, 128], strides = [1, 1]} : vector<8x512xf32> to vector<8x128xf32>
    %773 = arith.negf %772 : vector<8x128xf32>
    %774 = math.exp %773 : vector<8x128xf32>
    %cst_334 = arith.constant 1.000000e+00 : f32
    %775 = vector.broadcast %cst_334 : f32 to vector<8x128xf32>
    %776 = arith.addf %775, %774 : vector<8x128xf32>
    %777 = arith.divf %775, %776 : vector<8x128xf32>
    %778 = vector.extract_strided_slice %765 {offsets = [0, 256], sizes = [8, 128], strides = [1, 1]} : vector<8x512xf32> to vector<8x128xf32>
    %779 = math.tanh %778 : vector<8x128xf32>
    %780 = vector.extract_strided_slice %765 {offsets = [0, 384], sizes = [8, 128], strides = [1, 1]} : vector<8x512xf32> to vector<8x128xf32>
    %781 = arith.negf %780 : vector<8x128xf32>
    %782 = math.exp %781 : vector<8x128xf32>
    %cst_335 = arith.constant 1.000000e+00 : f32
    %783 = vector.broadcast %cst_335 : f32 to vector<8x128xf32>
    %784 = arith.addf %783, %782 : vector<8x128xf32>
    %785 = arith.divf %783, %784 : vector<8x128xf32>
    %786 = arith.mulf %777, %754 : vector<8x128xf32>
    %787 = arith.mulf %771, %779 : vector<8x128xf32>
    %788 = arith.addf %786, %787 : vector<8x128xf32>
    %789 = math.tanh %788 : vector<8x128xf32>
    %790 = arith.mulf %785, %789 : vector<8x128xf32>
    %791 = arith.index_cast %760 : i32 to index
    %c0_336 = arith.constant 0 : index
    %792 = vector.load %arg8[%791, %c0_336] : memref<64x128xf32, #tpu.memory_space<vmem>>, vector<8x128xf32>
    tpu.vector_store %arg8[%791, %c0_336], %790 {strides = array<i32>} : memref<64x128xf32, #tpu.memory_space<vmem>>, vector<8x128xf32>,
    %c2_i32_337 = arith.constant 2 : i32
    %c8_i32_338 = arith.constant 8 : i32
    %793 = arith.muli %c2_i32_337, %c8_i32_338 : i32
    %794 = tpu.assume_multiple %793, 8 : i32
    %795 = arith.index_cast %794 : i32 to index
    %c0_339 = arith.constant 0 : index
    %796 = vector.load %arg10[%795, %c0_339] : memref<64x512xf32, #tpu.memory_space<vmem>>, vector<8x512xf32>
    %797 = arith.truncf %790 : vector<8x128xf32> to vector<8x128xbf16>
    %cst_340 = arith.constant dense<0.000000e+00> : vector<8x512xf32>
    %798 = tpu.matmul %797, %723, %cst_340 {dimension_numbers = #tpu.dot_dimension_numbers<[1], [0], [0], [1], [0, 0, 1, 1], [], []>} : vector<8x128xbf16>, vector<128x512xbf16>, vector<8x512xf32> -> vector<8x512xf32>
    %799 = arith.addf %796, %798 : vector<8x512xf32>
    %800 = vector.extract_strided_slice %799 {offsets = [0, 0], sizes = [8, 128], strides = [1, 1]} : vector<8x512xf32> to vector<8x128xf32>
    %801 = arith.negf %800 : vector<8x128xf32>
    %802 = math.exp %801 : vector<8x128xf32>
    %cst_341 = arith.constant 1.000000e+00 : f32
    %803 = vector.broadcast %cst_341 : f32 to vector<8x128xf32>
    %804 = arith.addf %803, %802 : vector<8x128xf32>
    %805 = arith.divf %803, %804 : vector<8x128xf32>
    %806 = vector.extract_strided_slice %799 {offsets = [0, 128], sizes = [8, 128], strides = [1, 1]} : vector<8x512xf32> to vector<8x128xf32>
    %807 = arith.negf %806 : vector<8x128xf32>
    %808 = math.exp %807 : vector<8x128xf32>
    %cst_342 = arith.constant 1.000000e+00 : f32
    %809 = vector.broadcast %cst_342 : f32 to vector<8x128xf32>
    %810 = arith.addf %809, %808 : vector<8x128xf32>
    %811 = arith.divf %809, %810 : vector<8x128xf32>
    %812 = vector.extract_strided_slice %799 {offsets = [0, 256], sizes = [8, 128], strides = [1, 1]} : vector<8x512xf32> to vector<8x128xf32>
    %813 = math.tanh %812 : vector<8x128xf32>
    %814 = vector.extract_strided_slice %799 {offsets = [0, 384], sizes = [8, 128], strides = [1, 1]} : vector<8x512xf32> to vector<8x128xf32>
    %815 = arith.negf %814 : vector<8x128xf32>
    %816 = math.exp %815 : vector<8x128xf32>
    %cst_343 = arith.constant 1.000000e+00 : f32
    %817 = vector.broadcast %cst_343 : f32 to vector<8x128xf32>
    %818 = arith.addf %817, %816 : vector<8x128xf32>
    %819 = arith.divf %817, %818 : vector<8x128xf32>
    %820 = arith.mulf %811, %788 : vector<8x128xf32>
    %821 = arith.mulf %805, %813 : vector<8x128xf32>
    %822 = arith.addf %820, %821 : vector<8x128xf32>
    %823 = math.tanh %822 : vector<8x128xf32>
    %824 = arith.mulf %819, %823 : vector<8x128xf32>
    %825 = arith.index_cast %794 : i32 to index
    %c0_344 = arith.constant 0 : index
    %826 = vector.load %arg8[%825, %c0_344] : memref<64x128xf32, #tpu.memory_space<vmem>>, vector<8x128xf32>
    tpu.vector_store %arg8[%825, %c0_344], %824 {strides = array<i32>} : memref<64x128xf32, #tpu.memory_space<vmem>>, vector<8x128xf32>,
    %c3_i32_345 = arith.constant 3 : i32
    %c8_i32_346 = arith.constant 8 : i32
    %827 = arith.muli %c3_i32_345, %c8_i32_346 : i32
    %828 = tpu.assume_multiple %827, 8 : i32
    %829 = arith.index_cast %828 : i32 to index
    %c0_347 = arith.constant 0 : index
    %830 = vector.load %arg10[%829, %c0_347] : memref<64x512xf32, #tpu.memory_space<vmem>>, vector<8x512xf32>
    %831 = arith.truncf %824 : vector<8x128xf32> to vector<8x128xbf16>
    %cst_348 = arith.constant dense<0.000000e+00> : vector<8x512xf32>
    %832 = tpu.matmul %831, %723, %cst_348 {dimension_numbers = #tpu.dot_dimension_numbers<[1], [0], [0], [1], [0, 0, 1, 1], [], []>} : vector<8x128xbf16>, vector<128x512xbf16>, vector<8x512xf32> -> vector<8x512xf32>
    %833 = arith.addf %830, %832 : vector<8x512xf32>
    %834 = vector.extract_strided_slice %833 {offsets = [0, 0], sizes = [8, 128], strides = [1, 1]} : vector<8x512xf32> to vector<8x128xf32>
    %835 = arith.negf %834 : vector<8x128xf32>
    %836 = math.exp %835 : vector<8x128xf32>
    %cst_349 = arith.constant 1.000000e+00 : f32
    %837 = vector.broadcast %cst_349 : f32 to vector<8x128xf32>
    %838 = arith.addf %837, %836 : vector<8x128xf32>
    %839 = arith.divf %837, %838 : vector<8x128xf32>
    %840 = vector.extract_strided_slice %833 {offsets = [0, 128], sizes = [8, 128], strides = [1, 1]} : vector<8x512xf32> to vector<8x128xf32>
    %841 = arith.negf %840 : vector<8x128xf32>
    %842 = math.exp %841 : vector<8x128xf32>
    %cst_350 = arith.constant 1.000000e+00 : f32
    %843 = vector.broadcast %cst_350 : f32 to vector<8x128xf32>
    %844 = arith.addf %843, %842 : vector<8x128xf32>
    %845 = arith.divf %843, %844 : vector<8x128xf32>
    %846 = vector.extract_strided_slice %833 {offsets = [0, 256], sizes = [8, 128], strides = [1, 1]} : vector<8x512xf32> to vector<8x128xf32>
    %847 = math.tanh %846 : vector<8x128xf32>
    %848 = vector.extract_strided_slice %833 {offsets = [0, 384], sizes = [8, 128], strides = [1, 1]} : vector<8x512xf32> to vector<8x128xf32>
    %849 = arith.negf %848 : vector<8x128xf32>
    %850 = math.exp %849 : vector<8x128xf32>
    %cst_351 = arith.constant 1.000000e+00 : f32
    %851 = vector.broadcast %cst_351 : f32 to vector<8x128xf32>
    %852 = arith.addf %851, %850 : vector<8x128xf32>
    %853 = arith.divf %851, %852 : vector<8x128xf32>
    %854 = arith.mulf %845, %822 : vector<8x128xf32>
    %855 = arith.mulf %839, %847 : vector<8x128xf32>
    %856 = arith.addf %854, %855 : vector<8x128xf32>
    %857 = math.tanh %856 : vector<8x128xf32>
    %858 = arith.mulf %853, %857 : vector<8x128xf32>
    %859 = arith.index_cast %828 : i32 to index
    %c0_352 = arith.constant 0 : index
    %860 = vector.load %arg8[%859, %c0_352] : memref<64x128xf32, #tpu.memory_space<vmem>>, vector<8x128xf32>
    tpu.vector_store %arg8[%859, %c0_352], %858 {strides = array<i32>} : memref<64x128xf32, #tpu.memory_space<vmem>>, vector<8x128xf32>,
    %c4_i32_353 = arith.constant 4 : i32
    %c8_i32_354 = arith.constant 8 : i32
    %861 = arith.muli %c4_i32_353, %c8_i32_354 : i32
    %862 = tpu.assume_multiple %861, 8 : i32
    %863 = arith.index_cast %862 : i32 to index
    %c0_355 = arith.constant 0 : index
    %864 = vector.load %arg10[%863, %c0_355] : memref<64x512xf32, #tpu.memory_space<vmem>>, vector<8x512xf32>
    %865 = arith.truncf %858 : vector<8x128xf32> to vector<8x128xbf16>
    %cst_356 = arith.constant dense<0.000000e+00> : vector<8x512xf32>
    %866 = tpu.matmul %865, %723, %cst_356 {dimension_numbers = #tpu.dot_dimension_numbers<[1], [0], [0], [1], [0, 0, 1, 1], [], []>} : vector<8x128xbf16>, vector<128x512xbf16>, vector<8x512xf32> -> vector<8x512xf32>
    %867 = arith.addf %864, %866 : vector<8x512xf32>
    %868 = vector.extract_strided_slice %867 {offsets = [0, 0], sizes = [8, 128], strides = [1, 1]} : vector<8x512xf32> to vector<8x128xf32>
    %869 = arith.negf %868 : vector<8x128xf32>
    %870 = math.exp %869 : vector<8x128xf32>
    %cst_357 = arith.constant 1.000000e+00 : f32
    %871 = vector.broadcast %cst_357 : f32 to vector<8x128xf32>
    %872 = arith.addf %871, %870 : vector<8x128xf32>
    %873 = arith.divf %871, %872 : vector<8x128xf32>
    %874 = vector.extract_strided_slice %867 {offsets = [0, 128], sizes = [8, 128], strides = [1, 1]} : vector<8x512xf32> to vector<8x128xf32>
    %875 = arith.negf %874 : vector<8x128xf32>
    %876 = math.exp %875 : vector<8x128xf32>
    %cst_358 = arith.constant 1.000000e+00 : f32
    %877 = vector.broadcast %cst_358 : f32 to vector<8x128xf32>
    %878 = arith.addf %877, %876 : vector<8x128xf32>
    %879 = arith.divf %877, %878 : vector<8x128xf32>
    %880 = vector.extract_strided_slice %867 {offsets = [0, 256], sizes = [8, 128], strides = [1, 1]} : vector<8x512xf32> to vector<8x128xf32>
    %881 = math.tanh %880 : vector<8x128xf32>
    %882 = vector.extract_strided_slice %867 {offsets = [0, 384], sizes = [8, 128], strides = [1, 1]} : vector<8x512xf32> to vector<8x128xf32>
    %883 = arith.negf %882 : vector<8x128xf32>
    %884 = math.exp %883 : vector<8x128xf32>
    %cst_359 = arith.constant 1.000000e+00 : f32
    %885 = vector.broadcast %cst_359 : f32 to vector<8x128xf32>
    %886 = arith.addf %885, %884 : vector<8x128xf32>
    %887 = arith.divf %885, %886 : vector<8x128xf32>
    %888 = arith.mulf %879, %856 : vector<8x128xf32>
    %889 = arith.mulf %873, %881 : vector<8x128xf32>
    %890 = arith.addf %888, %889 : vector<8x128xf32>
    %891 = math.tanh %890 : vector<8x128xf32>
    %892 = arith.mulf %887, %891 : vector<8x128xf32>
    %893 = arith.index_cast %862 : i32 to index
    %c0_360 = arith.constant 0 : index
    %894 = vector.load %arg8[%893, %c0_360] : memref<64x128xf32, #tpu.memory_space<vmem>>, vector<8x128xf32>
    tpu.vector_store %arg8[%893, %c0_360], %892 {strides = array<i32>} : memref<64x128xf32, #tpu.memory_space<vmem>>, vector<8x128xf32>,
    %c5_i32_361 = arith.constant 5 : i32
    %c8_i32_362 = arith.constant 8 : i32
    %895 = arith.muli %c5_i32_361, %c8_i32_362 : i32
    %896 = tpu.assume_multiple %895, 8 : i32
    %897 = arith.index_cast %896 : i32 to index
    %c0_363 = arith.constant 0 : index
    %898 = vector.load %arg10[%897, %c0_363] : memref<64x512xf32, #tpu.memory_space<vmem>>, vector<8x512xf32>
    %899 = arith.truncf %892 : vector<8x128xf32> to vector<8x128xbf16>
    %cst_364 = arith.constant dense<0.000000e+00> : vector<8x512xf32>
    %900 = tpu.matmul %899, %723, %cst_364 {dimension_numbers = #tpu.dot_dimension_numbers<[1], [0], [0], [1], [0, 0, 1, 1], [], []>} : vector<8x128xbf16>, vector<128x512xbf16>, vector<8x512xf32> -> vector<8x512xf32>
    %901 = arith.addf %898, %900 : vector<8x512xf32>
    %902 = vector.extract_strided_slice %901 {offsets = [0, 0], sizes = [8, 128], strides = [1, 1]} : vector<8x512xf32> to vector<8x128xf32>
    %903 = arith.negf %902 : vector<8x128xf32>
    %904 = math.exp %903 : vector<8x128xf32>
    %cst_365 = arith.constant 1.000000e+00 : f32
    %905 = vector.broadcast %cst_365 : f32 to vector<8x128xf32>
    %906 = arith.addf %905, %904 : vector<8x128xf32>
    %907 = arith.divf %905, %906 : vector<8x128xf32>
    %908 = vector.extract_strided_slice %901 {offsets = [0, 128], sizes = [8, 128], strides = [1, 1]} : vector<8x512xf32> to vector<8x128xf32>
    %909 = arith.negf %908 : vector<8x128xf32>
    %910 = math.exp %909 : vector<8x128xf32>
    %cst_366 = arith.constant 1.000000e+00 : f32
    %911 = vector.broadcast %cst_366 : f32 to vector<8x128xf32>
    %912 = arith.addf %911, %910 : vector<8x128xf32>
    %913 = arith.divf %911, %912 : vector<8x128xf32>
    %914 = vector.extract_strided_slice %901 {offsets = [0, 256], sizes = [8, 128], strides = [1, 1]} : vector<8x512xf32> to vector<8x128xf32>
    %915 = math.tanh %914 : vector<8x128xf32>
    %916 = vector.extract_strided_slice %901 {offsets = [0, 384], sizes = [8, 128], strides = [1, 1]} : vector<8x512xf32> to vector<8x128xf32>
    %917 = arith.negf %916 : vector<8x128xf32>
    %918 = math.exp %917 : vector<8x128xf32>
    %cst_367 = arith.constant 1.000000e+00 : f32
    %919 = vector.broadcast %cst_367 : f32 to vector<8x128xf32>
    %920 = arith.addf %919, %918 : vector<8x128xf32>
    %921 = arith.divf %919, %920 : vector<8x128xf32>
    %922 = arith.mulf %913, %890 : vector<8x128xf32>
    %923 = arith.mulf %907, %915 : vector<8x128xf32>
    %924 = arith.addf %922, %923 : vector<8x128xf32>
    %925 = math.tanh %924 : vector<8x128xf32>
    %926 = arith.mulf %921, %925 : vector<8x128xf32>
    %927 = arith.index_cast %896 : i32 to index
    %c0_368 = arith.constant 0 : index
    %928 = vector.load %arg8[%927, %c0_368] : memref<64x128xf32, #tpu.memory_space<vmem>>, vector<8x128xf32>
    tpu.vector_store %arg8[%927, %c0_368], %926 {strides = array<i32>} : memref<64x128xf32, #tpu.memory_space<vmem>>, vector<8x128xf32>,
    %c6_i32_369 = arith.constant 6 : i32
    %c8_i32_370 = arith.constant 8 : i32
    %929 = arith.muli %c6_i32_369, %c8_i32_370 : i32
    %930 = tpu.assume_multiple %929, 8 : i32
    %931 = arith.index_cast %930 : i32 to index
    %c0_371 = arith.constant 0 : index
    %932 = vector.load %arg10[%931, %c0_371] : memref<64x512xf32, #tpu.memory_space<vmem>>, vector<8x512xf32>
    %933 = arith.truncf %926 : vector<8x128xf32> to vector<8x128xbf16>
    %cst_372 = arith.constant dense<0.000000e+00> : vector<8x512xf32>
    %934 = tpu.matmul %933, %723, %cst_372 {dimension_numbers = #tpu.dot_dimension_numbers<[1], [0], [0], [1], [0, 0, 1, 1], [], []>} : vector<8x128xbf16>, vector<128x512xbf16>, vector<8x512xf32> -> vector<8x512xf32>
    %935 = arith.addf %932, %934 : vector<8x512xf32>
    %936 = vector.extract_strided_slice %935 {offsets = [0, 0], sizes = [8, 128], strides = [1, 1]} : vector<8x512xf32> to vector<8x128xf32>
    %937 = arith.negf %936 : vector<8x128xf32>
    %938 = math.exp %937 : vector<8x128xf32>
    %cst_373 = arith.constant 1.000000e+00 : f32
    %939 = vector.broadcast %cst_373 : f32 to vector<8x128xf32>
    %940 = arith.addf %939, %938 : vector<8x128xf32>
    %941 = arith.divf %939, %940 : vector<8x128xf32>
    %942 = vector.extract_strided_slice %935 {offsets = [0, 128], sizes = [8, 128], strides = [1, 1]} : vector<8x512xf32> to vector<8x128xf32>
    %943 = arith.negf %942 : vector<8x128xf32>
    %944 = math.exp %943 : vector<8x128xf32>
    %cst_374 = arith.constant 1.000000e+00 : f32
    %945 = vector.broadcast %cst_374 : f32 to vector<8x128xf32>
    %946 = arith.addf %945, %944 : vector<8x128xf32>
    %947 = arith.divf %945, %946 : vector<8x128xf32>
    %948 = vector.extract_strided_slice %935 {offsets = [0, 256], sizes = [8, 128], strides = [1, 1]} : vector<8x512xf32> to vector<8x128xf32>
    %949 = math.tanh %948 : vector<8x128xf32>
    %950 = vector.extract_strided_slice %935 {offsets = [0, 384], sizes = [8, 128], strides = [1, 1]} : vector<8x512xf32> to vector<8x128xf32>
    %951 = arith.negf %950 : vector<8x128xf32>
    %952 = math.exp %951 : vector<8x128xf32>
    %cst_375 = arith.constant 1.000000e+00 : f32
    %953 = vector.broadcast %cst_375 : f32 to vector<8x128xf32>
    %954 = arith.addf %953, %952 : vector<8x128xf32>
    %955 = arith.divf %953, %954 : vector<8x128xf32>
    %956 = arith.mulf %947, %924 : vector<8x128xf32>
    %957 = arith.mulf %941, %949 : vector<8x128xf32>
    %958 = arith.addf %956, %957 : vector<8x128xf32>
    %959 = math.tanh %958 : vector<8x128xf32>
    %960 = arith.mulf %955, %959 : vector<8x128xf32>
    %961 = arith.index_cast %930 : i32 to index
    %c0_376 = arith.constant 0 : index
    %962 = vector.load %arg8[%961, %c0_376] : memref<64x128xf32, #tpu.memory_space<vmem>>, vector<8x128xf32>
    tpu.vector_store %arg8[%961, %c0_376], %960 {strides = array<i32>} : memref<64x128xf32, #tpu.memory_space<vmem>>, vector<8x128xf32>,
    %c7_i32_377 = arith.constant 7 : i32
    %c8_i32_378 = arith.constant 8 : i32
    %963 = arith.muli %c7_i32_377, %c8_i32_378 : i32
    %964 = tpu.assume_multiple %963, 8 : i32
    %965 = arith.index_cast %964 : i32 to index
    %c0_379 = arith.constant 0 : index
    %966 = vector.load %arg10[%965, %c0_379] : memref<64x512xf32, #tpu.memory_space<vmem>>, vector<8x512xf32>
    %967 = arith.truncf %960 : vector<8x128xf32> to vector<8x128xbf16>
    %cst_380 = arith.constant dense<0.000000e+00> : vector<8x512xf32>
    %968 = tpu.matmul %967, %723, %cst_380 {dimension_numbers = #tpu.dot_dimension_numbers<[1], [0], [0], [1], [0, 0, 1, 1], [], []>} : vector<8x128xbf16>, vector<128x512xbf16>, vector<8x512xf32> -> vector<8x512xf32>
    %969 = arith.addf %966, %968 : vector<8x512xf32>
    %970 = vector.extract_strided_slice %969 {offsets = [0, 0], sizes = [8, 128], strides = [1, 1]} : vector<8x512xf32> to vector<8x128xf32>
    %971 = arith.negf %970 : vector<8x128xf32>
    %972 = math.exp %971 : vector<8x128xf32>
    %cst_381 = arith.constant 1.000000e+00 : f32
    %973 = vector.broadcast %cst_381 : f32 to vector<8x128xf32>
    %974 = arith.addf %973, %972 : vector<8x128xf32>
    %975 = arith.divf %973, %974 : vector<8x128xf32>
    %976 = vector.extract_strided_slice %969 {offsets = [0, 128], sizes = [8, 128], strides = [1, 1]} : vector<8x512xf32> to vector<8x128xf32>
    %977 = arith.negf %976 : vector<8x128xf32>
    %978 = math.exp %977 : vector<8x128xf32>
    %cst_382 = arith.constant 1.000000e+00 : f32
    %979 = vector.broadcast %cst_382 : f32 to vector<8x128xf32>
    %980 = arith.addf %979, %978 : vector<8x128xf32>
    %981 = arith.divf %979, %980 : vector<8x128xf32>
    %982 = vector.extract_strided_slice %969 {offsets = [0, 256], sizes = [8, 128], strides = [1, 1]} : vector<8x512xf32> to vector<8x128xf32>
    %983 = math.tanh %982 : vector<8x128xf32>
    %984 = vector.extract_strided_slice %969 {offsets = [0, 384], sizes = [8, 128], strides = [1, 1]} : vector<8x512xf32> to vector<8x128xf32>
    %985 = arith.negf %984 : vector<8x128xf32>
    %986 = math.exp %985 : vector<8x128xf32>
    %cst_383 = arith.constant 1.000000e+00 : f32
    %987 = vector.broadcast %cst_383 : f32 to vector<8x128xf32>
    %988 = arith.addf %987, %986 : vector<8x128xf32>
    %989 = arith.divf %987, %988 : vector<8x128xf32>
    %990 = arith.mulf %981, %958 : vector<8x128xf32>
    %991 = arith.mulf %975, %983 : vector<8x128xf32>
    %992 = arith.addf %990, %991 : vector<8x128xf32>
    %993 = math.tanh %992 : vector<8x128xf32>
    %994 = arith.mulf %989, %993 : vector<8x128xf32>
    %995 = arith.index_cast %964 : i32 to index
    %c0_384 = arith.constant 0 : index
    %996 = vector.load %arg8[%995, %c0_384] : memref<64x128xf32, #tpu.memory_space<vmem>>, vector<8x128xf32>
    tpu.vector_store %arg8[%995, %c0_384], %994 {strides = array<i32>} : memref<64x128xf32, #tpu.memory_space<vmem>>, vector<8x128xf32>,
    %c8_i32_385 = arith.constant 8 : i32
    %c0_386 = arith.constant 0 : index
    %c0_387 = arith.constant 0 : index
    %997 = vector.load %arg8[%c0_386, %c0_387] : memref<64x128xf32, #tpu.memory_space<vmem>>, vector<8x128xf32>
    %c56_388 = arith.constant 56 : index
    %c0_389 = arith.constant 0 : index
    %998 = vector.load %arg8[%c56_388, %c0_389] : memref<64x128xf32, #tpu.memory_space<vmem>>, vector<8x128xf32>
    %999 = arith.select %21, %997, %998 : vector<8x128xi1>, vector<8x128xf32>
    %c0_390 = arith.constant 0 : index
    %c0_391 = arith.constant 0 : index
    %1000 = vector.load %arg8[%c0_390, %c0_391] : memref<64x128xf32, #tpu.memory_space<vmem>>, vector<8x128xf32>
    tpu.vector_store %arg8[%c0_390, %c0_391], %999 {strides = array<i32>} : memref<64x128xf32, #tpu.memory_space<vmem>>, vector<8x128xf32>,
    %1001 = arith.select %21, %998, %997 : vector<8x128xi1>, vector<8x128xf32>
    %c56_392 = arith.constant 56 : index
    %c0_393 = arith.constant 0 : index
    %1002 = vector.load %arg8[%c56_392, %c0_393] : memref<64x128xf32, #tpu.memory_space<vmem>>, vector<8x128xf32>
    tpu.vector_store %arg8[%c56_392, %c0_393], %1001 {strides = array<i32>} : memref<64x128xf32, #tpu.memory_space<vmem>>, vector<8x128xf32>,
    %c8_394 = arith.constant 8 : index
    %c0_395 = arith.constant 0 : index
    %1003 = vector.load %arg8[%c8_394, %c0_395] : memref<64x128xf32, #tpu.memory_space<vmem>>, vector<8x128xf32>
    %c48_396 = arith.constant 48 : index
    %c0_397 = arith.constant 0 : index
    %1004 = vector.load %arg8[%c48_396, %c0_397] : memref<64x128xf32, #tpu.memory_space<vmem>>, vector<8x128xf32>
    %1005 = arith.select %21, %1003, %1004 : vector<8x128xi1>, vector<8x128xf32>
    %c8_398 = arith.constant 8 : index
    %c0_399 = arith.constant 0 : index
    %1006 = vector.load %arg8[%c8_398, %c0_399] : memref<64x128xf32, #tpu.memory_space<vmem>>, vector<8x128xf32>
    tpu.vector_store %arg8[%c8_398, %c0_399], %1005 {strides = array<i32>} : memref<64x128xf32, #tpu.memory_space<vmem>>, vector<8x128xf32>,
    %1007 = arith.select %21, %1004, %1003 : vector<8x128xi1>, vector<8x128xf32>
    %c48_400 = arith.constant 48 : index
    %c0_401 = arith.constant 0 : index
    %1008 = vector.load %arg8[%c48_400, %c0_401] : memref<64x128xf32, #tpu.memory_space<vmem>>, vector<8x128xf32>
    tpu.vector_store %arg8[%c48_400, %c0_401], %1007 {strides = array<i32>} : memref<64x128xf32, #tpu.memory_space<vmem>>, vector<8x128xf32>,
    %c16_402 = arith.constant 16 : index
    %c0_403 = arith.constant 0 : index
    %1009 = vector.load %arg8[%c16_402, %c0_403] : memref<64x128xf32, #tpu.memory_space<vmem>>, vector<8x128xf32>
    %c40_404 = arith.constant 40 : index
    %c0_405 = arith.constant 0 : index
    %1010 = vector.load %arg8[%c40_404, %c0_405] : memref<64x128xf32, #tpu.memory_space<vmem>>, vector<8x128xf32>
    %1011 = arith.select %21, %1009, %1010 : vector<8x128xi1>, vector<8x128xf32>
    %c16_406 = arith.constant 16 : index
    %c0_407 = arith.constant 0 : index
    %1012 = vector.load %arg8[%c16_406, %c0_407] : memref<64x128xf32, #tpu.memory_space<vmem>>, vector<8x128xf32>
    tpu.vector_store %arg8[%c16_406, %c0_407], %1011 {strides = array<i32>} : memref<64x128xf32, #tpu.memory_space<vmem>>, vector<8x128xf32>,
    %1013 = arith.select %21, %1010, %1009 : vector<8x128xi1>, vector<8x128xf32>
    %c40_408 = arith.constant 40 : index
    %c0_409 = arith.constant 0 : index
    %1014 = vector.load %arg8[%c40_408, %c0_409] : memref<64x128xf32, #tpu.memory_space<vmem>>, vector<8x128xf32>
    tpu.vector_store %arg8[%c40_408, %c0_409], %1013 {strides = array<i32>} : memref<64x128xf32, #tpu.memory_space<vmem>>, vector<8x128xf32>,
    %c24_410 = arith.constant 24 : index
    %c0_411 = arith.constant 0 : index
    %1015 = vector.load %arg8[%c24_410, %c0_411] : memref<64x128xf32, #tpu.memory_space<vmem>>, vector<8x128xf32>
    %c32_412 = arith.constant 32 : index
    %c0_413 = arith.constant 0 : index
    %1016 = vector.load %arg8[%c32_412, %c0_413] : memref<64x128xf32, #tpu.memory_space<vmem>>, vector<8x128xf32>
    %1017 = arith.select %21, %1015, %1016 : vector<8x128xi1>, vector<8x128xf32>
    %c24_414 = arith.constant 24 : index
    %c0_415 = arith.constant 0 : index
    %1018 = vector.load %arg8[%c24_414, %c0_415] : memref<64x128xf32, #tpu.memory_space<vmem>>, vector<8x128xf32>
    tpu.vector_store %arg8[%c24_414, %c0_415], %1017 {strides = array<i32>} : memref<64x128xf32, #tpu.memory_space<vmem>>, vector<8x128xf32>,
    %1019 = arith.select %21, %1016, %1015 : vector<8x128xi1>, vector<8x128xf32>
    %c32_416 = arith.constant 32 : index
    %c0_417 = arith.constant 0 : index
    %1020 = vector.load %arg8[%c32_416, %c0_417] : memref<64x128xf32, #tpu.memory_space<vmem>>, vector<8x128xf32>
    tpu.vector_store %arg8[%c32_416, %c0_417], %1019 {strides = array<i32>} : memref<64x128xf32, #tpu.memory_space<vmem>>, vector<8x128xf32>,
    %c0_418 = arith.constant 0 : index
    %c0_419 = arith.constant 0 : index
    %1021 = vector.load %arg8[%c0_418, %c0_419] : memref<64x128xf32, #tpu.memory_space<vmem>>, vector<64x128xf32>
    %1022 = arith.truncf %1021 : vector<64x128xf32> to vector<64x128xbf16>
    %c3 = arith.constant 3 : index
    %c0_420 = arith.constant 0 : index
    %c0_421 = arith.constant 0 : index
    %1023 = vector.load %arg2[%c3, %c0_420, %c0_421] : memref<4x128x512xbf16, #tpu.memory_space<vmem>>, vector<1x128x512xbf16>
    %1024 = vector.shape_cast %1023 : vector<1x128x512xbf16> to vector<128x512xbf16>
    %cst_422 = arith.constant dense<0.000000e+00> : vector<64x512xf32>
    %1025 = tpu.matmul %1022, %1024, %cst_422 {dimension_numbers = #tpu.dot_dimension_numbers<[1], [0], [0], [1], [0, 0, 1, 1], [], []>} : vector<64x128xbf16>, vector<128x512xbf16>, vector<64x512xf32> -> vector<64x512xf32>
    %c3_423 = arith.constant 3 : index
    %c0_424 = arith.constant 0 : index
    %c0_425 = arith.constant 0 : index
    %1026 = vector.load %arg4[%c3_423, %c0_424, %c0_425] : memref<4x1x512xf32, #tpu.memory_space<vmem>>, vector<1x1x512xf32>
    %1027 = vector.shape_cast %1026 : vector<1x1x512xf32> to vector<1x512xf32>
    %1028 = vector.broadcast %1027 : vector<1x512xf32> to vector<64x512xf32>
    %1029 = arith.addf %1025, %1028 : vector<64x512xf32>
    %c0_426 = arith.constant 0 : index
    %c0_427 = arith.constant 0 : index
    %1030 = vector.load %arg10[%c0_426, %c0_427] : memref<64x512xf32, #tpu.memory_space<vmem>>, vector<64x512xf32>
    tpu.vector_store %arg10[%c0_426, %c0_427], %1029 {strides = array<i32>} : memref<64x512xf32, #tpu.memory_space<vmem>>, vector<64x512xf32>,
    %c0_428 = arith.constant 0 : index
    %c0_429 = arith.constant 0 : index
    %1031 = vector.load %arg10[%c0_428, %c0_429] : memref<64x512xf32, #tpu.memory_space<vmem>>, vector<8x512xf32>
    %c56_430 = arith.constant 56 : index
    %c0_431 = arith.constant 0 : index
    %1032 = vector.load %arg10[%c56_430, %c0_431] : memref<64x512xf32, #tpu.memory_space<vmem>>, vector<8x512xf32>
    %1033 = arith.select %18, %1031, %1032 : vector<8x512xi1>, vector<8x512xf32>
    %c0_432 = arith.constant 0 : index
    %c0_433 = arith.constant 0 : index
    %1034 = vector.load %arg10[%c0_432, %c0_433] : memref<64x512xf32, #tpu.memory_space<vmem>>, vector<8x512xf32>
    tpu.vector_store %arg10[%c0_432, %c0_433], %1033 {strides = array<i32>} : memref<64x512xf32, #tpu.memory_space<vmem>>, vector<8x512xf32>,
    %1035 = arith.select %18, %1032, %1031 : vector<8x512xi1>, vector<8x512xf32>
    %c56_434 = arith.constant 56 : index
    %c0_435 = arith.constant 0 : index
    %1036 = vector.load %arg10[%c56_434, %c0_435] : memref<64x512xf32, #tpu.memory_space<vmem>>, vector<8x512xf32>
    tpu.vector_store %arg10[%c56_434, %c0_435], %1035 {strides = array<i32>} : memref<64x512xf32, #tpu.memory_space<vmem>>, vector<8x512xf32>,
    %c8_436 = arith.constant 8 : index
    %c0_437 = arith.constant 0 : index
    %1037 = vector.load %arg10[%c8_436, %c0_437] : memref<64x512xf32, #tpu.memory_space<vmem>>, vector<8x512xf32>
    %c48_438 = arith.constant 48 : index
    %c0_439 = arith.constant 0 : index
    %1038 = vector.load %arg10[%c48_438, %c0_439] : memref<64x512xf32, #tpu.memory_space<vmem>>, vector<8x512xf32>
    %1039 = arith.select %18, %1037, %1038 : vector<8x512xi1>, vector<8x512xf32>
    %c8_440 = arith.constant 8 : index
    %c0_441 = arith.constant 0 : index
    %1040 = vector.load %arg10[%c8_440, %c0_441] : memref<64x512xf32, #tpu.memory_space<vmem>>, vector<8x512xf32>
    tpu.vector_store %arg10[%c8_440, %c0_441], %1039 {strides = array<i32>} : memref<64x512xf32, #tpu.memory_space<vmem>>, vector<8x512xf32>,
    %1041 = arith.select %18, %1038, %1037 : vector<8x512xi1>, vector<8x512xf32>
    %c48_442 = arith.constant 48 : index
    %c0_443 = arith.constant 0 : index
    %1042 = vector.load %arg10[%c48_442, %c0_443] : memref<64x512xf32, #tpu.memory_space<vmem>>, vector<8x512xf32>
    tpu.vector_store %arg10[%c48_442, %c0_443], %1041 {strides = array<i32>} : memref<64x512xf32, #tpu.memory_space<vmem>>, vector<8x512xf32>,
    %c16_444 = arith.constant 16 : index
    %c0_445 = arith.constant 0 : index
    %1043 = vector.load %arg10[%c16_444, %c0_445] : memref<64x512xf32, #tpu.memory_space<vmem>>, vector<8x512xf32>
    %c40_446 = arith.constant 40 : index
    %c0_447 = arith.constant 0 : index
    %1044 = vector.load %arg10[%c40_446, %c0_447] : memref<64x512xf32, #tpu.memory_space<vmem>>, vector<8x512xf32>
    %1045 = arith.select %18, %1043, %1044 : vector<8x512xi1>, vector<8x512xf32>
    %c16_448 = arith.constant 16 : index
    %c0_449 = arith.constant 0 : index
    %1046 = vector.load %arg10[%c16_448, %c0_449] : memref<64x512xf32, #tpu.memory_space<vmem>>, vector<8x512xf32>
    tpu.vector_store %arg10[%c16_448, %c0_449], %1045 {strides = array<i32>} : memref<64x512xf32, #tpu.memory_space<vmem>>, vector<8x512xf32>,
    %1047 = arith.select %18, %1044, %1043 : vector<8x512xi1>, vector<8x512xf32>
    %c40_450 = arith.constant 40 : index
    %c0_451 = arith.constant 0 : index
    %1048 = vector.load %arg10[%c40_450, %c0_451] : memref<64x512xf32, #tpu.memory_space<vmem>>, vector<8x512xf32>
    tpu.vector_store %arg10[%c40_450, %c0_451], %1047 {strides = array<i32>} : memref<64x512xf32, #tpu.memory_space<vmem>>, vector<8x512xf32>,
    %c24_452 = arith.constant 24 : index
    %c0_453 = arith.constant 0 : index
    %1049 = vector.load %arg10[%c24_452, %c0_453] : memref<64x512xf32, #tpu.memory_space<vmem>>, vector<8x512xf32>
    %c32_454 = arith.constant 32 : index
    %c0_455 = arith.constant 0 : index
    %1050 = vector.load %arg10[%c32_454, %c0_455] : memref<64x512xf32, #tpu.memory_space<vmem>>, vector<8x512xf32>
    %1051 = arith.select %18, %1049, %1050 : vector<8x512xi1>, vector<8x512xf32>
    %c24_456 = arith.constant 24 : index
    %c0_457 = arith.constant 0 : index
    %1052 = vector.load %arg10[%c24_456, %c0_457] : memref<64x512xf32, #tpu.memory_space<vmem>>, vector<8x512xf32>
    tpu.vector_store %arg10[%c24_456, %c0_457], %1051 {strides = array<i32>} : memref<64x512xf32, #tpu.memory_space<vmem>>, vector<8x512xf32>,
    %1053 = arith.select %18, %1050, %1049 : vector<8x512xi1>, vector<8x512xf32>
    %c32_458 = arith.constant 32 : index
    %c0_459 = arith.constant 0 : index
    %1054 = vector.load %arg10[%c32_458, %c0_459] : memref<64x512xf32, #tpu.memory_space<vmem>>, vector<8x512xf32>
    tpu.vector_store %arg10[%c32_458, %c0_459], %1053 {strides = array<i32>} : memref<64x512xf32, #tpu.memory_space<vmem>>, vector<8x512xf32>,
    %c3_460 = arith.constant 3 : index
    %c0_461 = arith.constant 0 : index
    %c0_462 = arith.constant 0 : index
    %1055 = vector.load %arg3[%c3_460, %c0_461, %c0_462] : memref<4x128x512xbf16, #tpu.memory_space<vmem>>, vector<1x128x512xbf16>
    %1056 = vector.shape_cast %1055 : vector<1x128x512xbf16> to vector<128x512xbf16>
    %cst_463 = arith.constant 0.000000e+00 : f32
    %1057 = vector.broadcast %cst_463 : f32 to vector<8x128xf32>
    %c0_i32_464 = arith.constant 0 : i32
    %c8_i32_465 = arith.constant 8 : i32
    %1058 = arith.muli %c0_i32_464, %c8_i32_465 : i32
    %1059 = tpu.assume_multiple %1058, 8 : i32
    %1060 = arith.index_cast %1059 : i32 to index
    %c0_466 = arith.constant 0 : index
    %1061 = vector.load %arg10[%1060, %c0_466] : memref<64x512xf32, #tpu.memory_space<vmem>>, vector<8x512xf32>
    %1062 = arith.truncf %1057 : vector<8x128xf32> to vector<8x128xbf16>
    %cst_467 = arith.constant dense<0.000000e+00> : vector<8x512xf32>
    %1063 = tpu.matmul %1062, %1056, %cst_467 {dimension_numbers = #tpu.dot_dimension_numbers<[1], [0], [0], [1], [0, 0, 1, 1], [], []>} : vector<8x128xbf16>, vector<128x512xbf16>, vector<8x512xf32> -> vector<8x512xf32>
    %1064 = arith.addf %1061, %1063 : vector<8x512xf32>
    %1065 = vector.extract_strided_slice %1064 {offsets = [0, 0], sizes = [8, 128], strides = [1, 1]} : vector<8x512xf32> to vector<8x128xf32>
    %1066 = arith.negf %1065 : vector<8x128xf32>
    %1067 = math.exp %1066 : vector<8x128xf32>
    %cst_468 = arith.constant 1.000000e+00 : f32
    %1068 = vector.broadcast %cst_468 : f32 to vector<8x128xf32>
    %1069 = arith.addf %1068, %1067 : vector<8x128xf32>
    %1070 = arith.divf %1068, %1069 : vector<8x128xf32>
    %1071 = vector.extract_strided_slice %1064 {offsets = [0, 128], sizes = [8, 128], strides = [1, 1]} : vector<8x512xf32> to vector<8x128xf32>
    %1072 = arith.negf %1071 : vector<8x128xf32>
    %1073 = math.exp %1072 : vector<8x128xf32>
    %cst_469 = arith.constant 1.000000e+00 : f32
    %1074 = vector.broadcast %cst_469 : f32 to vector<8x128xf32>
    %1075 = arith.addf %1074, %1073 : vector<8x128xf32>
    %1076 = arith.divf %1074, %1075 : vector<8x128xf32>
    %1077 = vector.extract_strided_slice %1064 {offsets = [0, 256], sizes = [8, 128], strides = [1, 1]} : vector<8x512xf32> to vector<8x128xf32>
    %1078 = math.tanh %1077 : vector<8x128xf32>
    %1079 = vector.extract_strided_slice %1064 {offsets = [0, 384], sizes = [8, 128], strides = [1, 1]} : vector<8x512xf32> to vector<8x128xf32>
    %1080 = arith.negf %1079 : vector<8x128xf32>
    %1081 = math.exp %1080 : vector<8x128xf32>
    %cst_470 = arith.constant 1.000000e+00 : f32
    %1082 = vector.broadcast %cst_470 : f32 to vector<8x128xf32>
    %1083 = arith.addf %1082, %1081 : vector<8x128xf32>
    %1084 = arith.divf %1082, %1083 : vector<8x128xf32>
    %1085 = arith.mulf %1076, %1057 : vector<8x128xf32>
    %1086 = arith.mulf %1070, %1078 : vector<8x128xf32>
    %1087 = arith.addf %1085, %1086 : vector<8x128xf32>
    %1088 = math.tanh %1087 : vector<8x128xf32>
    %1089 = arith.mulf %1084, %1088 : vector<8x128xf32>
    %1090 = arith.index_cast %1059 : i32 to index
    %c0_471 = arith.constant 0 : index
    %1091 = vector.load %arg9[%1090, %c0_471] : memref<64x128xf32, #tpu.memory_space<vmem>>, vector<8x128xf32>
    tpu.vector_store %arg9[%1090, %c0_471], %1089 {strides = array<i32>} : memref<64x128xf32, #tpu.memory_space<vmem>>, vector<8x128xf32>,
    %c1_i32_472 = arith.constant 1 : i32
    %c8_i32_473 = arith.constant 8 : i32
    %1092 = arith.muli %c1_i32_472, %c8_i32_473 : i32
    %1093 = tpu.assume_multiple %1092, 8 : i32
    %1094 = arith.index_cast %1093 : i32 to index
    %c0_474 = arith.constant 0 : index
    %1095 = vector.load %arg10[%1094, %c0_474] : memref<64x512xf32, #tpu.memory_space<vmem>>, vector<8x512xf32>
    %1096 = arith.truncf %1089 : vector<8x128xf32> to vector<8x128xbf16>
    %cst_475 = arith.constant dense<0.000000e+00> : vector<8x512xf32>
    %1097 = tpu.matmul %1096, %1056, %cst_475 {dimension_numbers = #tpu.dot_dimension_numbers<[1], [0], [0], [1], [0, 0, 1, 1], [], []>} : vector<8x128xbf16>, vector<128x512xbf16>, vector<8x512xf32> -> vector<8x512xf32>
    %1098 = arith.addf %1095, %1097 : vector<8x512xf32>
    %1099 = vector.extract_strided_slice %1098 {offsets = [0, 0], sizes = [8, 128], strides = [1, 1]} : vector<8x512xf32> to vector<8x128xf32>
    %1100 = arith.negf %1099 : vector<8x128xf32>
    %1101 = math.exp %1100 : vector<8x128xf32>
    %cst_476 = arith.constant 1.000000e+00 : f32
    %1102 = vector.broadcast %cst_476 : f32 to vector<8x128xf32>
    %1103 = arith.addf %1102, %1101 : vector<8x128xf32>
    %1104 = arith.divf %1102, %1103 : vector<8x128xf32>
    %1105 = vector.extract_strided_slice %1098 {offsets = [0, 128], sizes = [8, 128], strides = [1, 1]} : vector<8x512xf32> to vector<8x128xf32>
    %1106 = arith.negf %1105 : vector<8x128xf32>
    %1107 = math.exp %1106 : vector<8x128xf32>
    %cst_477 = arith.constant 1.000000e+00 : f32
    %1108 = vector.broadcast %cst_477 : f32 to vector<8x128xf32>
    %1109 = arith.addf %1108, %1107 : vector<8x128xf32>
    %1110 = arith.divf %1108, %1109 : vector<8x128xf32>
    %1111 = vector.extract_strided_slice %1098 {offsets = [0, 256], sizes = [8, 128], strides = [1, 1]} : vector<8x512xf32> to vector<8x128xf32>
    %1112 = math.tanh %1111 : vector<8x128xf32>
    %1113 = vector.extract_strided_slice %1098 {offsets = [0, 384], sizes = [8, 128], strides = [1, 1]} : vector<8x512xf32> to vector<8x128xf32>
    %1114 = arith.negf %1113 : vector<8x128xf32>
    %1115 = math.exp %1114 : vector<8x128xf32>
    %cst_478 = arith.constant 1.000000e+00 : f32
    %1116 = vector.broadcast %cst_478 : f32 to vector<8x128xf32>
    %1117 = arith.addf %1116, %1115 : vector<8x128xf32>
    %1118 = arith.divf %1116, %1117 : vector<8x128xf32>
    %1119 = arith.mulf %1110, %1087 : vector<8x128xf32>
    %1120 = arith.mulf %1104, %1112 : vector<8x128xf32>
    %1121 = arith.addf %1119, %1120 : vector<8x128xf32>
    %1122 = math.tanh %1121 : vector<8x128xf32>
    %1123 = arith.mulf %1118, %1122 : vector<8x128xf32>
    %1124 = arith.index_cast %1093 : i32 to index
    %c0_479 = arith.constant 0 : index
    %1125 = vector.load %arg9[%1124, %c0_479] : memref<64x128xf32, #tpu.memory_space<vmem>>, vector<8x128xf32>
    tpu.vector_store %arg9[%1124, %c0_479], %1123 {strides = array<i32>} : memref<64x128xf32, #tpu.memory_space<vmem>>, vector<8x128xf32>,
    %c2_i32_480 = arith.constant 2 : i32
    %c8_i32_481 = arith.constant 8 : i32
    %1126 = arith.muli %c2_i32_480, %c8_i32_481 : i32
    %1127 = tpu.assume_multiple %1126, 8 : i32
    %1128 = arith.index_cast %1127 : i32 to index
    %c0_482 = arith.constant 0 : index
    %1129 = vector.load %arg10[%1128, %c0_482] : memref<64x512xf32, #tpu.memory_space<vmem>>, vector<8x512xf32>
    %1130 = arith.truncf %1123 : vector<8x128xf32> to vector<8x128xbf16>
    %cst_483 = arith.constant dense<0.000000e+00> : vector<8x512xf32>
    %1131 = tpu.matmul %1130, %1056, %cst_483 {dimension_numbers = #tpu.dot_dimension_numbers<[1], [0], [0], [1], [0, 0, 1, 1], [], []>} : vector<8x128xbf16>, vector<128x512xbf16>, vector<8x512xf32> -> vector<8x512xf32>
    %1132 = arith.addf %1129, %1131 : vector<8x512xf32>
    %1133 = vector.extract_strided_slice %1132 {offsets = [0, 0], sizes = [8, 128], strides = [1, 1]} : vector<8x512xf32> to vector<8x128xf32>
    %1134 = arith.negf %1133 : vector<8x128xf32>
    %1135 = math.exp %1134 : vector<8x128xf32>
    %cst_484 = arith.constant 1.000000e+00 : f32
    %1136 = vector.broadcast %cst_484 : f32 to vector<8x128xf32>
    %1137 = arith.addf %1136, %1135 : vector<8x128xf32>
    %1138 = arith.divf %1136, %1137 : vector<8x128xf32>
    %1139 = vector.extract_strided_slice %1132 {offsets = [0, 128], sizes = [8, 128], strides = [1, 1]} : vector<8x512xf32> to vector<8x128xf32>
    %1140 = arith.negf %1139 : vector<8x128xf32>
    %1141 = math.exp %1140 : vector<8x128xf32>
    %cst_485 = arith.constant 1.000000e+00 : f32
    %1142 = vector.broadcast %cst_485 : f32 to vector<8x128xf32>
    %1143 = arith.addf %1142, %1141 : vector<8x128xf32>
    %1144 = arith.divf %1142, %1143 : vector<8x128xf32>
    %1145 = vector.extract_strided_slice %1132 {offsets = [0, 256], sizes = [8, 128], strides = [1, 1]} : vector<8x512xf32> to vector<8x128xf32>
    %1146 = math.tanh %1145 : vector<8x128xf32>
    %1147 = vector.extract_strided_slice %1132 {offsets = [0, 384], sizes = [8, 128], strides = [1, 1]} : vector<8x512xf32> to vector<8x128xf32>
    %1148 = arith.negf %1147 : vector<8x128xf32>
    %1149 = math.exp %1148 : vector<8x128xf32>
    %cst_486 = arith.constant 1.000000e+00 : f32
    %1150 = vector.broadcast %cst_486 : f32 to vector<8x128xf32>
    %1151 = arith.addf %1150, %1149 : vector<8x128xf32>
    %1152 = arith.divf %1150, %1151 : vector<8x128xf32>
    %1153 = arith.mulf %1144, %1121 : vector<8x128xf32>
    %1154 = arith.mulf %1138, %1146 : vector<8x128xf32>
    %1155 = arith.addf %1153, %1154 : vector<8x128xf32>
    %1156 = math.tanh %1155 : vector<8x128xf32>
    %1157 = arith.mulf %1152, %1156 : vector<8x128xf32>
    %1158 = arith.index_cast %1127 : i32 to index
    %c0_487 = arith.constant 0 : index
    %1159 = vector.load %arg9[%1158, %c0_487] : memref<64x128xf32, #tpu.memory_space<vmem>>, vector<8x128xf32>
    tpu.vector_store %arg9[%1158, %c0_487], %1157 {strides = array<i32>} : memref<64x128xf32, #tpu.memory_space<vmem>>, vector<8x128xf32>,
    %c3_i32_488 = arith.constant 3 : i32
    %c8_i32_489 = arith.constant 8 : i32
    %1160 = arith.muli %c3_i32_488, %c8_i32_489 : i32
    %1161 = tpu.assume_multiple %1160, 8 : i32
    %1162 = arith.index_cast %1161 : i32 to index
    %c0_490 = arith.constant 0 : index
    %1163 = vector.load %arg10[%1162, %c0_490] : memref<64x512xf32, #tpu.memory_space<vmem>>, vector<8x512xf32>
    %1164 = arith.truncf %1157 : vector<8x128xf32> to vector<8x128xbf16>
    %cst_491 = arith.constant dense<0.000000e+00> : vector<8x512xf32>
    %1165 = tpu.matmul %1164, %1056, %cst_491 {dimension_numbers = #tpu.dot_dimension_numbers<[1], [0], [0], [1], [0, 0, 1, 1], [], []>} : vector<8x128xbf16>, vector<128x512xbf16>, vector<8x512xf32> -> vector<8x512xf32>
    %1166 = arith.addf %1163, %1165 : vector<8x512xf32>
    %1167 = vector.extract_strided_slice %1166 {offsets = [0, 0], sizes = [8, 128], strides = [1, 1]} : vector<8x512xf32> to vector<8x128xf32>
    %1168 = arith.negf %1167 : vector<8x128xf32>
    %1169 = math.exp %1168 : vector<8x128xf32>
    %cst_492 = arith.constant 1.000000e+00 : f32
    %1170 = vector.broadcast %cst_492 : f32 to vector<8x128xf32>
    %1171 = arith.addf %1170, %1169 : vector<8x128xf32>
    %1172 = arith.divf %1170, %1171 : vector<8x128xf32>
    %1173 = vector.extract_strided_slice %1166 {offsets = [0, 128], sizes = [8, 128], strides = [1, 1]} : vector<8x512xf32> to vector<8x128xf32>
    %1174 = arith.negf %1173 : vector<8x128xf32>
    %1175 = math.exp %1174 : vector<8x128xf32>
    %cst_493 = arith.constant 1.000000e+00 : f32
    %1176 = vector.broadcast %cst_493 : f32 to vector<8x128xf32>
    %1177 = arith.addf %1176, %1175 : vector<8x128xf32>
    %1178 = arith.divf %1176, %1177 : vector<8x128xf32>
    %1179 = vector.extract_strided_slice %1166 {offsets = [0, 256], sizes = [8, 128], strides = [1, 1]} : vector<8x512xf32> to vector<8x128xf32>
    %1180 = math.tanh %1179 : vector<8x128xf32>
    %1181 = vector.extract_strided_slice %1166 {offsets = [0, 384], sizes = [8, 128], strides = [1, 1]} : vector<8x512xf32> to vector<8x128xf32>
    %1182 = arith.negf %1181 : vector<8x128xf32>
    %1183 = math.exp %1182 : vector<8x128xf32>
    %cst_494 = arith.constant 1.000000e+00 : f32
    %1184 = vector.broadcast %cst_494 : f32 to vector<8x128xf32>
    %1185 = arith.addf %1184, %1183 : vector<8x128xf32>
    %1186 = arith.divf %1184, %1185 : vector<8x128xf32>
    %1187 = arith.mulf %1178, %1155 : vector<8x128xf32>
    %1188 = arith.mulf %1172, %1180 : vector<8x128xf32>
    %1189 = arith.addf %1187, %1188 : vector<8x128xf32>
    %1190 = math.tanh %1189 : vector<8x128xf32>
    %1191 = arith.mulf %1186, %1190 : vector<8x128xf32>
    %1192 = arith.index_cast %1161 : i32 to index
    %c0_495 = arith.constant 0 : index
    %1193 = vector.load %arg9[%1192, %c0_495] : memref<64x128xf32, #tpu.memory_space<vmem>>, vector<8x128xf32>
    tpu.vector_store %arg9[%1192, %c0_495], %1191 {strides = array<i32>} : memref<64x128xf32, #tpu.memory_space<vmem>>, vector<8x128xf32>,
    %c4_i32_496 = arith.constant 4 : i32
    %c8_i32_497 = arith.constant 8 : i32
    %1194 = arith.muli %c4_i32_496, %c8_i32_497 : i32
    %1195 = tpu.assume_multiple %1194, 8 : i32
    %1196 = arith.index_cast %1195 : i32 to index
    %c0_498 = arith.constant 0 : index
    %1197 = vector.load %arg10[%1196, %c0_498] : memref<64x512xf32, #tpu.memory_space<vmem>>, vector<8x512xf32>
    %1198 = arith.truncf %1191 : vector<8x128xf32> to vector<8x128xbf16>
    %cst_499 = arith.constant dense<0.000000e+00> : vector<8x512xf32>
    %1199 = tpu.matmul %1198, %1056, %cst_499 {dimension_numbers = #tpu.dot_dimension_numbers<[1], [0], [0], [1], [0, 0, 1, 1], [], []>} : vector<8x128xbf16>, vector<128x512xbf16>, vector<8x512xf32> -> vector<8x512xf32>
    %1200 = arith.addf %1197, %1199 : vector<8x512xf32>
    %1201 = vector.extract_strided_slice %1200 {offsets = [0, 0], sizes = [8, 128], strides = [1, 1]} : vector<8x512xf32> to vector<8x128xf32>
    %1202 = arith.negf %1201 : vector<8x128xf32>
    %1203 = math.exp %1202 : vector<8x128xf32>
    %cst_500 = arith.constant 1.000000e+00 : f32
    %1204 = vector.broadcast %cst_500 : f32 to vector<8x128xf32>
    %1205 = arith.addf %1204, %1203 : vector<8x128xf32>
    %1206 = arith.divf %1204, %1205 : vector<8x128xf32>
    %1207 = vector.extract_strided_slice %1200 {offsets = [0, 128], sizes = [8, 128], strides = [1, 1]} : vector<8x512xf32> to vector<8x128xf32>
    %1208 = arith.negf %1207 : vector<8x128xf32>
    %1209 = math.exp %1208 : vector<8x128xf32>
    %cst_501 = arith.constant 1.000000e+00 : f32
    %1210 = vector.broadcast %cst_501 : f32 to vector<8x128xf32>
    %1211 = arith.addf %1210, %1209 : vector<8x128xf32>
    %1212 = arith.divf %1210, %1211 : vector<8x128xf32>
    %1213 = vector.extract_strided_slice %1200 {offsets = [0, 256], sizes = [8, 128], strides = [1, 1]} : vector<8x512xf32> to vector<8x128xf32>
    %1214 = math.tanh %1213 : vector<8x128xf32>
    %1215 = vector.extract_strided_slice %1200 {offsets = [0, 384], sizes = [8, 128], strides = [1, 1]} : vector<8x512xf32> to vector<8x128xf32>
    %1216 = arith.negf %1215 : vector<8x128xf32>
    %1217 = math.exp %1216 : vector<8x128xf32>
    %cst_502 = arith.constant 1.000000e+00 : f32
    %1218 = vector.broadcast %cst_502 : f32 to vector<8x128xf32>
    %1219 = arith.addf %1218, %1217 : vector<8x128xf32>
    %1220 = arith.divf %1218, %1219 : vector<8x128xf32>
    %1221 = arith.mulf %1212, %1189 : vector<8x128xf32>
    %1222 = arith.mulf %1206, %1214 : vector<8x128xf32>
    %1223 = arith.addf %1221, %1222 : vector<8x128xf32>
    %1224 = math.tanh %1223 : vector<8x128xf32>
    %1225 = arith.mulf %1220, %1224 : vector<8x128xf32>
    %1226 = arith.index_cast %1195 : i32 to index
    %c0_503 = arith.constant 0 : index
    %1227 = vector.load %arg9[%1226, %c0_503] : memref<64x128xf32, #tpu.memory_space<vmem>>, vector<8x128xf32>
    tpu.vector_store %arg9[%1226, %c0_503], %1225 {strides = array<i32>} : memref<64x128xf32, #tpu.memory_space<vmem>>, vector<8x128xf32>,
    %c5_i32_504 = arith.constant 5 : i32
    %c8_i32_505 = arith.constant 8 : i32
    %1228 = arith.muli %c5_i32_504, %c8_i32_505 : i32
    %1229 = tpu.assume_multiple %1228, 8 : i32
    %1230 = arith.index_cast %1229 : i32 to index
    %c0_506 = arith.constant 0 : index
    %1231 = vector.load %arg10[%1230, %c0_506] : memref<64x512xf32, #tpu.memory_space<vmem>>, vector<8x512xf32>
    %1232 = arith.truncf %1225 : vector<8x128xf32> to vector<8x128xbf16>
    %cst_507 = arith.constant dense<0.000000e+00> : vector<8x512xf32>
    %1233 = tpu.matmul %1232, %1056, %cst_507 {dimension_numbers = #tpu.dot_dimension_numbers<[1], [0], [0], [1], [0, 0, 1, 1], [], []>} : vector<8x128xbf16>, vector<128x512xbf16>, vector<8x512xf32> -> vector<8x512xf32>
    %1234 = arith.addf %1231, %1233 : vector<8x512xf32>
    %1235 = vector.extract_strided_slice %1234 {offsets = [0, 0], sizes = [8, 128], strides = [1, 1]} : vector<8x512xf32> to vector<8x128xf32>
    %1236 = arith.negf %1235 : vector<8x128xf32>
    %1237 = math.exp %1236 : vector<8x128xf32>
    %cst_508 = arith.constant 1.000000e+00 : f32
    %1238 = vector.broadcast %cst_508 : f32 to vector<8x128xf32>
    %1239 = arith.addf %1238, %1237 : vector<8x128xf32>
    %1240 = arith.divf %1238, %1239 : vector<8x128xf32>
    %1241 = vector.extract_strided_slice %1234 {offsets = [0, 128], sizes = [8, 128], strides = [1, 1]} : vector<8x512xf32> to vector<8x128xf32>
    %1242 = arith.negf %1241 : vector<8x128xf32>
    %1243 = math.exp %1242 : vector<8x128xf32>
    %cst_509 = arith.constant 1.000000e+00 : f32
    %1244 = vector.broadcast %cst_509 : f32 to vector<8x128xf32>
    %1245 = arith.addf %1244, %1243 : vector<8x128xf32>
    %1246 = arith.divf %1244, %1245 : vector<8x128xf32>
    %1247 = vector.extract_strided_slice %1234 {offsets = [0, 256], sizes = [8, 128], strides = [1, 1]} : vector<8x512xf32> to vector<8x128xf32>
    %1248 = math.tanh %1247 : vector<8x128xf32>
    %1249 = vector.extract_strided_slice %1234 {offsets = [0, 384], sizes = [8, 128], strides = [1, 1]} : vector<8x512xf32> to vector<8x128xf32>
    %1250 = arith.negf %1249 : vector<8x128xf32>
    %1251 = math.exp %1250 : vector<8x128xf32>
    %cst_510 = arith.constant 1.000000e+00 : f32
    %1252 = vector.broadcast %cst_510 : f32 to vector<8x128xf32>
    %1253 = arith.addf %1252, %1251 : vector<8x128xf32>
    %1254 = arith.divf %1252, %1253 : vector<8x128xf32>
    %1255 = arith.mulf %1246, %1223 : vector<8x128xf32>
    %1256 = arith.mulf %1240, %1248 : vector<8x128xf32>
    %1257 = arith.addf %1255, %1256 : vector<8x128xf32>
    %1258 = math.tanh %1257 : vector<8x128xf32>
    %1259 = arith.mulf %1254, %1258 : vector<8x128xf32>
    %1260 = arith.index_cast %1229 : i32 to index
    %c0_511 = arith.constant 0 : index
    %1261 = vector.load %arg9[%1260, %c0_511] : memref<64x128xf32, #tpu.memory_space<vmem>>, vector<8x128xf32>
    tpu.vector_store %arg9[%1260, %c0_511], %1259 {strides = array<i32>} : memref<64x128xf32, #tpu.memory_space<vmem>>, vector<8x128xf32>,
    %c6_i32_512 = arith.constant 6 : i32
    %c8_i32_513 = arith.constant 8 : i32
    %1262 = arith.muli %c6_i32_512, %c8_i32_513 : i32
    %1263 = tpu.assume_multiple %1262, 8 : i32
    %1264 = arith.index_cast %1263 : i32 to index
    %c0_514 = arith.constant 0 : index
    %1265 = vector.load %arg10[%1264, %c0_514] : memref<64x512xf32, #tpu.memory_space<vmem>>, vector<8x512xf32>
    %1266 = arith.truncf %1259 : vector<8x128xf32> to vector<8x128xbf16>
    %cst_515 = arith.constant dense<0.000000e+00> : vector<8x512xf32>
    %1267 = tpu.matmul %1266, %1056, %cst_515 {dimension_numbers = #tpu.dot_dimension_numbers<[1], [0], [0], [1], [0, 0, 1, 1], [], []>} : vector<8x128xbf16>, vector<128x512xbf16>, vector<8x512xf32> -> vector<8x512xf32>
    %1268 = arith.addf %1265, %1267 : vector<8x512xf32>
    %1269 = vector.extract_strided_slice %1268 {offsets = [0, 0], sizes = [8, 128], strides = [1, 1]} : vector<8x512xf32> to vector<8x128xf32>
    %1270 = arith.negf %1269 : vector<8x128xf32>
    %1271 = math.exp %1270 : vector<8x128xf32>
    %cst_516 = arith.constant 1.000000e+00 : f32
    %1272 = vector.broadcast %cst_516 : f32 to vector<8x128xf32>
    %1273 = arith.addf %1272, %1271 : vector<8x128xf32>
    %1274 = arith.divf %1272, %1273 : vector<8x128xf32>
    %1275 = vector.extract_strided_slice %1268 {offsets = [0, 128], sizes = [8, 128], strides = [1, 1]} : vector<8x512xf32> to vector<8x128xf32>
    %1276 = arith.negf %1275 : vector<8x128xf32>
    %1277 = math.exp %1276 : vector<8x128xf32>
    %cst_517 = arith.constant 1.000000e+00 : f32
    %1278 = vector.broadcast %cst_517 : f32 to vector<8x128xf32>
    %1279 = arith.addf %1278, %1277 : vector<8x128xf32>
    %1280 = arith.divf %1278, %1279 : vector<8x128xf32>
    %1281 = vector.extract_strided_slice %1268 {offsets = [0, 256], sizes = [8, 128], strides = [1, 1]} : vector<8x512xf32> to vector<8x128xf32>
    %1282 = math.tanh %1281 : vector<8x128xf32>
    %1283 = vector.extract_strided_slice %1268 {offsets = [0, 384], sizes = [8, 128], strides = [1, 1]} : vector<8x512xf32> to vector<8x128xf32>
    %1284 = arith.negf %1283 : vector<8x128xf32>
    %1285 = math.exp %1284 : vector<8x128xf32>
    %cst_518 = arith.constant 1.000000e+00 : f32
    %1286 = vector.broadcast %cst_518 : f32 to vector<8x128xf32>
    %1287 = arith.addf %1286, %1285 : vector<8x128xf32>
    %1288 = arith.divf %1286, %1287 : vector<8x128xf32>
    %1289 = arith.mulf %1280, %1257 : vector<8x128xf32>
    %1290 = arith.mulf %1274, %1282 : vector<8x128xf32>
    %1291 = arith.addf %1289, %1290 : vector<8x128xf32>
    %1292 = math.tanh %1291 : vector<8x128xf32>
    %1293 = arith.mulf %1288, %1292 : vector<8x128xf32>
    %1294 = arith.index_cast %1263 : i32 to index
    %c0_519 = arith.constant 0 : index
    %1295 = vector.load %arg9[%1294, %c0_519] : memref<64x128xf32, #tpu.memory_space<vmem>>, vector<8x128xf32>
    tpu.vector_store %arg9[%1294, %c0_519], %1293 {strides = array<i32>} : memref<64x128xf32, #tpu.memory_space<vmem>>, vector<8x128xf32>,
    %c7_i32_520 = arith.constant 7 : i32
    %c8_i32_521 = arith.constant 8 : i32
    %1296 = arith.muli %c7_i32_520, %c8_i32_521 : i32
    %1297 = tpu.assume_multiple %1296, 8 : i32
    %1298 = arith.index_cast %1297 : i32 to index
    %c0_522 = arith.constant 0 : index
    %1299 = vector.load %arg10[%1298, %c0_522] : memref<64x512xf32, #tpu.memory_space<vmem>>, vector<8x512xf32>
    %1300 = arith.truncf %1293 : vector<8x128xf32> to vector<8x128xbf16>
    %cst_523 = arith.constant dense<0.000000e+00> : vector<8x512xf32>
    %1301 = tpu.matmul %1300, %1056, %cst_523 {dimension_numbers = #tpu.dot_dimension_numbers<[1], [0], [0], [1], [0, 0, 1, 1], [], []>} : vector<8x128xbf16>, vector<128x512xbf16>, vector<8x512xf32> -> vector<8x512xf32>
    %1302 = arith.addf %1299, %1301 : vector<8x512xf32>
    %1303 = vector.extract_strided_slice %1302 {offsets = [0, 0], sizes = [8, 128], strides = [1, 1]} : vector<8x512xf32> to vector<8x128xf32>
    %1304 = arith.negf %1303 : vector<8x128xf32>
    %1305 = math.exp %1304 : vector<8x128xf32>
    %cst_524 = arith.constant 1.000000e+00 : f32
    %1306 = vector.broadcast %cst_524 : f32 to vector<8x128xf32>
    %1307 = arith.addf %1306, %1305 : vector<8x128xf32>
    %1308 = arith.divf %1306, %1307 : vector<8x128xf32>
    %1309 = vector.extract_strided_slice %1302 {offsets = [0, 128], sizes = [8, 128], strides = [1, 1]} : vector<8x512xf32> to vector<8x128xf32>
    %1310 = arith.negf %1309 : vector<8x128xf32>
    %1311 = math.exp %1310 : vector<8x128xf32>
    %cst_525 = arith.constant 1.000000e+00 : f32
    %1312 = vector.broadcast %cst_525 : f32 to vector<8x128xf32>
    %1313 = arith.addf %1312, %1311 : vector<8x128xf32>
    %1314 = arith.divf %1312, %1313 : vector<8x128xf32>
    %1315 = vector.extract_strided_slice %1302 {offsets = [0, 256], sizes = [8, 128], strides = [1, 1]} : vector<8x512xf32> to vector<8x128xf32>
    %1316 = math.tanh %1315 : vector<8x128xf32>
    %1317 = vector.extract_strided_slice %1302 {offsets = [0, 384], sizes = [8, 128], strides = [1, 1]} : vector<8x512xf32> to vector<8x128xf32>
    %1318 = arith.negf %1317 : vector<8x128xf32>
    %1319 = math.exp %1318 : vector<8x128xf32>
    %cst_526 = arith.constant 1.000000e+00 : f32
    %1320 = vector.broadcast %cst_526 : f32 to vector<8x128xf32>
    %1321 = arith.addf %1320, %1319 : vector<8x128xf32>
    %1322 = arith.divf %1320, %1321 : vector<8x128xf32>
    %1323 = arith.mulf %1314, %1291 : vector<8x128xf32>
    %1324 = arith.mulf %1308, %1316 : vector<8x128xf32>
    %1325 = arith.addf %1323, %1324 : vector<8x128xf32>
    %1326 = math.tanh %1325 : vector<8x128xf32>
    %1327 = arith.mulf %1322, %1326 : vector<8x128xf32>
    %1328 = arith.index_cast %1297 : i32 to index
    %c0_527 = arith.constant 0 : index
    %1329 = vector.load %arg9[%1328, %c0_527] : memref<64x128xf32, #tpu.memory_space<vmem>>, vector<8x128xf32>
    tpu.vector_store %arg9[%1328, %c0_527], %1327 {strides = array<i32>} : memref<64x128xf32, #tpu.memory_space<vmem>>, vector<8x128xf32>,
    %c8_i32_528 = arith.constant 8 : i32
    %c56_529 = arith.constant 56 : index
    %c0_530 = arith.constant 0 : index
    %1330 = vector.load %arg9[%c56_529, %c0_530] : memref<64x128xf32, #tpu.memory_space<vmem>>, vector<8x128xf32>
    %c0_531 = arith.constant 0 : index
    %c0_532 = arith.constant 0 : index
    %1331 = vector.load %arg9[%c0_531, %c0_532] : memref<64x128xf32, #tpu.memory_space<vmem>>, vector<8x128xf32>
    %1332 = arith.select %21, %1330, %1331 : vector<8x128xi1>, vector<8x128xf32>
    %1333 = arith.truncf %1332 : vector<8x128xf32> to vector<8x128xbf16>
    %c0_533 = arith.constant 0 : index
    %c0_534 = arith.constant 0 : index
    %1334 = vector.load %arg5[%c0_533, %c0_534] : memref<128x128xbf16, #tpu.memory_space<vmem>>, vector<128x128xbf16>
    %cst_535 = arith.constant dense<0.000000e+00> : vector<8x128xf32>
    %1335 = tpu.matmul %1333, %1334, %cst_535 {dimension_numbers = #tpu.dot_dimension_numbers<[1], [0], [0], [1], [0, 0, 1, 1], [], []>} : vector<8x128xbf16>, vector<128x128xbf16>, vector<8x128xf32> -> vector<8x128xf32>
    %c0_536 = arith.constant 0 : index
    %c0_537 = arith.constant 0 : index
    %1336 = vector.load %arg6[%c0_536, %c0_537] : memref<1x128xf32, #tpu.memory_space<vmem>>, vector<1x128xf32>
    %1337 = vector.broadcast %1336 : vector<1x128xf32> to vector<8x128xf32>
    %1338 = arith.addf %1335, %1337 : vector<8x128xf32>
    %c0_538 = arith.constant 0 : index
    %c0_539 = arith.constant 0 : index
    %1339 = vector.load %arg7[%c0_538, %c0_539] : memref<8x128xf32, #tpu.memory_space<vmem>>, vector<8x128xf32>
    tpu.vector_store %arg7[%c0_538, %c0_539], %1338 {strides = array<i32>} : memref<8x128xf32, #tpu.memory_space<vmem>>, vector<8x128xf32>,
    return
  }
  func.func @transform_0(%arg0: i32) -> (i32, i32) {
    %c0_i32 = arith.constant 0 : i32
    %c0_i32_0 = arith.constant 0 : i32
    %c0_i32_1 = arith.constant 0 : i32
    return %c0_i32, %c0_i32_0 : i32, i32
  }
  func.func @transform_1(%arg0: i32) -> (i32, i32, i32) {
    %c0_i32 = arith.constant 0 : i32
    %c0_i32_0 = arith.constant 0 : i32
    %c0_i32_1 = arith.constant 0 : i32
    %c0_i32_2 = arith.constant 0 : i32
    return %c0_i32, %c0_i32_0, %c0_i32_1 : i32, i32, i32
  }
  func.func @transform_2(%arg0: i32) -> (i32, i32, i32) {
    %c0_i32 = arith.constant 0 : i32
    %c0_i32_0 = arith.constant 0 : i32
    %c0_i32_1 = arith.constant 0 : i32
    %c0_i32_2 = arith.constant 0 : i32
    return %c0_i32, %c0_i32_0, %c0_i32_1 : i32, i32, i32
  }
  func.func @transform_3(%arg0: i32) -> (i32, i32, i32) {
    %c0_i32 = arith.constant 0 : i32
    %c0_i32_0 = arith.constant 0 : i32
    %c0_i32_1 = arith.constant 0 : i32
    %c0_i32_2 = arith.constant 0 : i32
    return %c0_i32, %c0_i32_0, %c0_i32_1 : i32, i32, i32
  }
  func.func @transform_4(%arg0: i32) -> (i32, i32) {
    %c0_i32 = arith.constant 0 : i32
    %c0_i32_0 = arith.constant 0 : i32
    %c0_i32_1 = arith.constant 0 : i32
    return %c0_i32, %c0_i32_0 : i32, i32
  }
  func.func @transform_5(%arg0: i32) -> (i32, i32) {
    %c0_i32 = arith.constant 0 : i32
    %c0_i32_0 = arith.constant 0 : i32
    %c0_i32_1 = arith.constant 0 : i32
    return %c0_i32, %c0_i32_0 : i32, i32
  }
  func.func @transform_6(%arg0: i32) -> (i32, i32) {
    %c0_i32 = arith.constant 0 : i32
    %c0_i32_0 = arith.constant 0 : i32
    %c0_i32_1 = arith.constant 0 : i32
    return %c0_i32, %c0_i32_0 : i32, i32
  }
}

</mosaic_0001>

<llo_original>
// kernel: lstm_lstm_forward.1
$region0: #{lstm_lstm_forward.1}
  #allocation0 [shape = 'u32[]', space=smem, size = 0x4, offset = 0x4, fixed_abs, tag = 'smem constant byte address 0x4 - core index']
  #allocation1 [shape = 'u32[144,128]{1,0:T(1,128)}', space=vmem, size = 0x12000, scoped, tag = 'internal scratch']
  #allocation2 [shape = 'f32[64,128]{1,0:T(8,128)}', space=vmem, size = 0x8000, scoped, tag = 'scratch operand']
  #allocation3 [shape = 'f32[64,128]{1,0:T(8,128)}', space=vmem, size = 0x8000, scoped, tag = 'scratch operand']
  #allocation4 [shape = 'f32[64,512]{1,0:T(8,128)}', space=vmem, size = 0x20000, scoped, tag = 'scratch operand']
  %s0 = inlined_call_operand.vmem [shape: f32[64,128], index: 0, kind: input, shape index: {}]
  %s1 = inlined_call_operand.hbm [shape: bf16[4,128,512], index: 1, kind: input, shape index: {}]
  %s2 = inlined_call_operand.hbm [shape: bf16[4,128,512], index: 2, kind: input, shape index: {}]
  %s3 = inlined_call_operand.vmem [shape: f32[4,1,512], index: 3, kind: input, shape index: {}]
  %s4 = inlined_call_operand.vmem [shape: bf16[128,128], index: 4, kind: input, shape index: {}]
  %s5 = inlined_call_operand.vmem [shape: f32[1,128], index: 5, kind: input, shape index: {}]
  %s6 = inlined_call_operand.vmem [shape: f32[8,128], index: 6, kind: output, shape index: {}]
  %s7 = sld [smem:[#allocation0]]
  $region42: #{lstm_lstm_forward.1} parent=0
    _
  %s9 = ssub.s32 1, %s7
  %s10 = scalar_select 0, %s9, %s7
  $region1: #{lstm_lstm_forward.1} parent=0
    #allocation5 [shape = 'u8[524288]{0}', space=vmem, size = 0x80000, scoped, tag = 'input window, operand 1, single buffered']
    #allocation6 [shape = 's32[1]{0}', space=sflag, size = 0x4, scoped, tag = 'scoped memory for lstm_lstm_forward.1']
    #allocation7 [shape = 'u8[524288]{0}', space=vmem, size = 0x80000, scoped, tag = 'input window, operand 2, single buffered']
    #allocation8 [shape = 's32[1]{0}', space=sflag, size = 0x4, scoped, tag = 'scoped memory for lstm_lstm_forward.1']
    %11 = vsyncpa [#allocation6], 0
    %12 = vsyncpa [#allocation8], 0
    // Predicated region
    $region2: #{lstm_lstm_forward.1} parent=1 // pred_check
      _
    $region3: #{lstm_lstm_forward.1} parent=1 // pred_check_branch
      %14 = sbr.rel (0) target = $region5
    $region4: #{lstm_lstm_forward.1} parent=1 // pred_region
      _
    $region5: #{lstm_lstm_forward.1} parent=1 // pred_fallthru
      _
    // Predicated region
    $region6: #{lstm_lstm_forward.1} parent=1 // pred_check
      _
    $region7: #{lstm_lstm_forward.1} parent=1 // pred_check_branch
      %16 = sbr.rel (0) target = $region9
    $region8: #{lstm_lstm_forward.1} parent=1 // pred_region
      %s18 = ssub.s32 16384, 16384
      %19 = vsyncadd [#allocation6], %s18
      %s20 = sshll.u32 [#allocation5], 4
      %s21 = int_to_ptr.vmem [resolvable:$true] %s20
      %26 = dma.hbm_to_vmem [thread:$0]  %s1, 16384, %s21, [#allocation6], 256, 256, 16
    $region9: #{lstm_lstm_forward.1} parent=1 // pred_fallthru
      _
    // Predicated region
    $region10: #{lstm_lstm_forward.1} parent=1 // pred_check
      _
    $region11: #{lstm_lstm_forward.1} parent=1 // pred_check_branch
      %28 = sbr.rel (0) target = $region13
    $region12: #{lstm_lstm_forward.1} parent=1 // pred_region
      %s30 = ssub.s32 16384, 16384
      %31 = vsyncadd [#allocation8], %s30
      %s32 = sshll.u32 [#allocation7], 4
      %s33 = int_to_ptr.vmem [resolvable:$true] %s32
      %38 = dma.hbm_to_vmem [thread:$0]  %s2, 16384, %s33, [#allocation8], 256, 256, 16
    $region13: #{lstm_lstm_forward.1} parent=1 // pred_fallthru
      _
    // Predicated region
    $region14: #{lstm_lstm_forward.1} parent=1 // pred_check
      _
    $region15: #{lstm_lstm_forward.1} parent=1 // pred_check_branch
      %40 = sbr.rel (0) target = $region17
    $region16: #{lstm_lstm_forward.1} parent=1 // pred_region
      _
    $region17: #{lstm_lstm_forward.1} parent=1 // pred_fallthru
      _
    // Predicated region
    $region18: #{lstm_lstm_forward.1} parent=1 // pred_check
      _
    $region19: #{lstm_lstm_forward.1} parent=1 // pred_check_branch
      %42 = sbr.rel (0) target = $region21
    $region20: #{lstm_lstm_forward.1} parent=1 // pred_region
      _
    $region21: #{lstm_lstm_forward.1} parent=1 // pred_fallthru
      _
    // Predicated region
    $region22: #{lstm_lstm_forward.1} parent=1 // pred_check
      _
    $region23: #{lstm_lstm_forward.1} parent=1 // pred_check_branch
      %44 = sbr.rel (0) target = $region25
    $region24: #{lstm_lstm_forward.1} parent=1 // pred_region
      _
    $region25: #{lstm_lstm_forward.1} parent=1 // pred_fallthru
      _
    // Predicated region
    $region26: #{lstm_lstm_forward.1} parent=1 // pred_check
      _
    $region27: #{lstm_lstm_forward.1} parent=1 // pred_check_branch
      %46 = sbr.rel (0) target = $region29
    $region28: #{lstm_lstm_forward.1} parent=1 // pred_region
      %47 = dma.done [#allocation6], 16384
    $region29: #{lstm_lstm_forward.1} parent=1 // pred_fallthru
      _
    // Predicated region
    $region30: #{lstm_lstm_forward.1} parent=1 // pred_check
      _
    $region31: #{lstm_lstm_forward.1} parent=1 // pred_check_branch
      %49 = sbr.rel (0) target = $region33
    $region32: #{lstm_lstm_forward.1} parent=1 // pred_region
      %50 = dma.done [#allocation8], 16384
    $region33: #{lstm_lstm_forward.1} parent=1 // pred_fallthru
      _
    %v52 = vlaneseq
    %v53 = vand.u32 %v52, 127
    %v54 = vadd.s32 %v53, 128
    %v55 = vadd.s32 %v53, 256
    %v56 = vadd.s32 %v53, 384
    %vm57 = vcmp.lt.s32.totalorder %v53, 0
    %v58 = vsub.s32 0, %v53
    %v59 = vsel %vm57, %v58, %v53
    %v60 = vshrl.u32 %v59, 7
    %v61 = vand.u32 %v59, 127
    %v62 = vsub.s32 0, %v61
    %v63 = vsel %vm57, %v62, %v61
    %vm64 = vcmp.lt.s32.totalorder %v54, 0
    %v65 = vsub.s32 0, %v54
    %v66 = vsel %vm64, %v65, %v54
    %v67 = vshrl.u32 %v66, 7
    %v68 = vand.u32 %v66, 127
    %v69 = vsub.s32 0, %v68
    %v70 = vsel %vm64, %v69, %v68
    %vm71 = vcmp.lt.s32.totalorder %v55, 0
    %v72 = vsub.s32 0, %v55
    %v73 = vsel %vm71, %v72, %v55
    %v74 = vshrl.u32 %v73, 7
    %v75 = vand.u32 %v73, 127
    %v76 = vsub.s32 0, %v75
    %v77 = vsel %vm71, %v76, %v75
    %vm78 = vcmp.lt.s32.totalorder %v56, 0
    %v79 = vsub.s32 0, %v56
    %v80 = vsel %vm78, %v79, %v56
    %v81 = vshrl.u32 %v80, 7
    %v82 = vand.u32 %v80, 127
    %v83 = vsub.s32 0, %v82
    %v84 = vsel %vm78, %v83, %v82
    %vm85 = vcmp.ne.s32.totalorder %v63, 0
    %vm86 = vcmp.ne.s32.totalorder %v70, 0
    %vm87 = vcmp.ne.s32.totalorder %v77, 0
    %vm88 = vcmp.ne.s32.totalorder %v84, 0
    %vm89 = vcmp.lt.s32.totalorder %v63, 0
    %vm90 = vcmp.lt.s32.totalorder %v70, 0
    %vm91 = vcmp.lt.s32.totalorder %v77, 0
    %vm92 = vcmp.lt.s32.totalorder %v84, 0
    %vm93 = vmand %vm89, %vm85
    %vm94 = vmand %vm90, %vm86
    %vm95 = vmand %vm91, %vm87
    %vm96 = vmand %vm92, %vm88
    %v97 = vadd.s32 %v63, 128
    %v98 = vadd.s32 %v70, 128
    %v99 = vadd.s32 %v77, 128
    %v100 = vadd.s32 %v84, 128
    %v101 = vsel %vm93, %v97, %v63
    %v102 = vsel %vm94, %v98, %v70
    %v103 = vsel %vm95, %v99, %v77
    %v104 = vsel %vm96, %v100, %v84
    %vm105 = vcmp.lt.s32.totalorder %v101, 64
    %vm106 = vcmp.lt.s32.totalorder %v102, 64
    %vm107 = vcmp.lt.s32.totalorder %v103, 64
    %vm108 = vcmp.lt.s32.totalorder %v104, 64
    %vm109 = vcmp.lt.s32.totalorder %v53, 64
    %v110 = vld [vmem:[%s0] sm:$0xff]
    %v111 = vld [vmem:[%s0 + $0x8] sm:$0xff]
    %v112 = vld [vmem:[%s0 + $0x10] sm:$0xff]
    %v113 = vld [vmem:[%s0 + $0x18] sm:$0xff]
    %v114 = vld [vmem:[%s0 + $0x20] sm:$0xff]
    %v115 = vld [vmem:[%s0 + $0x28] sm:$0xff]
    %v116 = vld [vmem:[%s0 + $0x30] sm:$0xff]
    %v117 = vld [vmem:[%s0 + $0x38] sm:$0xff]
    %v118 = vpack.c.bf16 %v111, %v110
    %v119 = vpack.c.bf16 %v113, %v112
    %v120 = vpack.c.bf16 %v115, %v114
    %v121 = vpack.c.bf16 %v117, %v116
    %v122 = vld [vmem:[#allocation5] sm:$0xff]
    %v123 = vld [vmem:[#allocation5 + $0x8] sm:$0xff]
    %v124 = vld [vmem:[#allocation5 + $0x10] sm:$0xff]
    %v125 = vld [vmem:[#allocation5 + $0x18] sm:$0xff]
    %v126 = vld [vmem:[#allocation5 + $0x20] sm:$0xff]
    %v127 = vld [vmem:[#allocation5 + $0x28] sm:$0xff]
    %v128 = vld [vmem:[#allocation5 + $0x30] sm:$0xff]
    %v129 = vld [vmem:[#allocation5 + $0x38] sm:$0xff]
    %v130 = vld [vmem:[#allocation5 + $0x40] sm:$0xff]
    %v131 = vld [vmem:[#allocation5 + $0x48] sm:$0xff]
    %v132 = vld [vmem:[#allocation5 + $0x50] sm:$0xff]
    %v133 = vld [vmem:[#allocation5 + $0x58] sm:$0xff]
    %v134 = vld [vmem:[#allocation5 + $0x60] sm:$0xff]
    %v135 = vld [vmem:[#allocation5 + $0x68] sm:$0xff]
    %v136 = vld [vmem:[#allocation5 + $0x70] sm:$0xff]
    %v137 = vld [vmem:[#allocation5 + $0x78] sm:$0xff]
    %v138 = vld [vmem:[#allocation5 + $0x80] sm:$0xff]
    %v139 = vld [vmem:[#allocation5 + $0x88] sm:$0xff]
    %v140 = vld [vmem:[#allocation5 + $0x90] sm:$0xff]
    %v141 = vld [vmem:[#allocation5 + $0x98] sm:$0xff]
    %v142 = vld [vmem:[#allocation5 + $0xa0] sm:$0xff]
    %v143 = vld [vmem:[#allocation5 + $0xa8] sm:$0xff]
    %v144 = vld [vmem:[#allocation5 + $0xb0] sm:$0xff]
    %v145 = vld [vmem:[#allocation5 + $0xb8] sm:$0xff]
    %v146 = vld [vmem:[#allocation5 + $0xc0] sm:$0xff]
    %v147 = vld [vmem:[#allocation5 + $0xc8] sm:$0xff]
    %v148 = vld [vmem:[#allocation5 + $0xd0] sm:$0xff]
    %v149 = vld [vmem:[#allocation5 + $0xd8] sm:$0xff]
    %v150 = vld [vmem:[#allocation5 + $0xe0] sm:$0xff]
    %v151 = vld [vmem:[#allocation5 + $0xe8] sm:$0xff]
    %v152 = vld [vmem:[#allocation5 + $0xf0] sm:$0xff]
    %v153 = vld [vmem:[#allocation5 + $0xf8] sm:$0xff]
    %v154 = vld [vmem:[%s3] sm:$0xf]
    %v156 = vlaneseq
    %v157 = vshrl.u32 %v156, 7
    %v158 = vsub.s32 0, %v157
    %v159 = vrot.slane %v154, %v158
    %v160 = vlaneseq
    %v161 = vshrl.u32 %v160, 7
    %v162 = vsub.s32 1, %v161
    %v163 = vrot.slane %v154, %v162
    %v164 = vlaneseq
    %v165 = vshrl.u32 %v164, 7
    %v166 = vsub.s32 2, %v165
    %v167 = vrot.slane %v154, %v166
    %v168 = vlaneseq
    %v169 = vshrl.u32 %v168, 7
    %v170 = vsub.s32 3, %v169
    %v171 = vrot.slane %v154, %v170
    %v208 = vunpack.c.l.b16 %v122
    %v209 = vunpack.c.h.b16 %v122
    %v210 = vunpack.c.l.b16 %v123
    %v211 = vunpack.c.h.b16 %v123
    %v212 = vunpack.c.l.b16 %v124
    %v213 = vunpack.c.h.b16 %v124
    %v214 = vunpack.c.l.b16 %v125
    %v215 = vunpack.c.h.b16 %v125
    %v216 = vunpack.c.l.b16 %v126
    %v217 = vunpack.c.h.b16 %v126
    %v218 = vunpack.c.l.b16 %v127
    %v219 = vunpack.c.h.b16 %v127
    %v220 = vunpack.c.l.b16 %v128
    %v221 = vunpack.c.h.b16 %v128
    %v222 = vunpack.c.l.b16 %v129
    %v223 = vunpack.c.h.b16 %v129
    %v224 = vunpack.c.l.b16 %v130
    %v225 = vunpack.c.h.b16 %v130
    %v226 = vunpack.c.l.b16 %v131
    %v227 = vunpack.c.h.b16 %v131
    %v228 = vunpack.c.l.b16 %v132
    %v229 = vunpack.c.h.b16 %v132
    %v230 = vunpack.c.l.b16 %v133
    %v231 = vunpack.c.h.b16 %v133
    %v232 = vunpack.c.l.b16 %v134
    %v233 = vunpack.c.h.b16 %v134
    %v234 = vunpack.c.l.b16 %v135
    %v235 = vunpack.c.h.b16 %v135
    %v236 = vunpack.c.l.b16 %v136
    %v237 = vunpack.c.h.b16 %v136
    %v238 = vunpack.c.l.b16 %v137
    %v239 = vunpack.c.h.b16 %v137
    %v240 = vunpack.c.l.b16 %v138
    %v241 = vunpack.c.h.b16 %v138
    %v242 = vunpack.c.l.b16 %v139
    %v243 = vunpack.c.h.b16 %v139
    %v244 = vunpack.c.l.b16 %v140
    %v245 = vunpack.c.h.b16 %v140
    %v246 = vunpack.c.l.b16 %v141
    %v247 = vunpack.c.h.b16 %v141
    %v248 = vunpack.c.l.b16 %v142
    %v249 = vunpack.c.h.b16 %v142
    %v250 = vunpack.c.l.b16 %v143
    %v251 = vunpack.c.h.b16 %v143
    %v252 = vunpack.c.l.b16 %v144
    %v253 = vunpack.c.h.b16 %v144
    %v254 = vunpack.c.l.b16 %v145
    %v255 = vunpack.c.h.b16 %v145
    %v256 = vunpack.c.l.b16 %v146
    %v257 = vunpack.c.h.b16 %v146
    %v258 = vunpack.c.l.b16 %v147
    %v259 = vunpack.c.h.b16 %v147
    %v260 = vunpack.c.l.b16 %v148
    %v261 = vunpack.c.h.b16 %v148
    %v262 = vunpack.c.l.b16 %v149
    %v263 = vunpack.c.h.b16 %v149
    %v264 = vunpack.c.l.b16 %v150
    %v265 = vunpack.c.h.b16 %v150
    %v266 = vunpack.c.l.b16 %v151
    %v267 = vunpack.c.h.b16 %v151
    %v268 = vunpack.c.l.b16 %v152
    %v269 = vunpack.c.h.b16 %v152
    %v270 = vunpack.c.l.b16 %v153
    %v271 = vunpack.c.h.b16 %v153
    %v272 = vpack.c.b16 %v212, %v208
    %v273 = vpack.c.b16 %v213, %v209
    %v274 = vpack.c.b16 %v214, %v210
    %v275 = vpack.c.b16 %v215, %v211
    %v276 = vpack.c.b16 %v220, %v216
    %v277 = vpack.c.b16 %v221, %v217
    %v278 = vpack.c.b16 %v222, %v218
    %v279 = vpack.c.b16 %v223, %v219
    %v280 = vpack.c.b16 %v228, %v224
    %v281 = vpack.c.b16 %v229, %v225
    %v282 = vpack.c.b16 %v230, %v226
    %v283 = vpack.c.b16 %v231, %v227
    %v284 = vpack.c.b16 %v236, %v232
    %v285 = vpack.c.b16 %v237, %v233
    %v286 = vpack.c.b16 %v238, %v234
    %v287 = vpack.c.b16 %v239, %v235
    %v288 = vpack.c.b16 %v244, %v240
    %v289 = vpack.c.b16 %v245, %v241
    %v290 = vpack.c.b16 %v246, %v242
    %v291 = vpack.c.b16 %v247, %v243
    %v292 = vpack.c.b16 %v252, %v248
    %v293 = vpack.c.b16 %v253, %v249
    %v294 = vpack.c.b16 %v254, %v250
    %v295 = vpack.c.b16 %v255, %v251
    %v296 = vpack.c.b16 %v260, %v256
    %v297 = vpack.c.b16 %v261, %v257
    %v298 = vpack.c.b16 %v262, %v258
    %v299 = vpack.c.b16 %v263, %v259
    %v300 = vpack.c.b16 %v268, %v264
    %v301 = vpack.c.b16 %v269, %v265
    %v302 = vpack.c.b16 %v270, %v266
    %v303 = vpack.c.b16 %v271, %v267
    %336 = vmatprep.subr.bf16.mxu0 %v273
    %337 = vmatpush1.bf16.msra.mxu0 %v272
    %338 = vmatprep.subr.bf16.mxu0 %v277
    %339 = vmatpush1.bf16.msra.mxu0 %v276
    %340 = vmatprep.subr.bf16.mxu0 %v281
    %341 = vmatpush1.bf16.msra.mxu0 %v280
    %342 = vmatprep.subr.bf16.mxu0 %v285
    %343 = vmatpush1.bf16.msra.mxu0 %v284
    %344 = vmatprep.subr.bf16.mxu0 %v289
    %345 = vmatpush1.bf16.msra.mxu0 %v288
    %346 = vmatprep.subr.bf16.mxu0 %v293
    %347 = vmatpush1.bf16.msra.mxu0 %v292
    %348 = vmatprep.subr.bf16.mxu0 %v297
    %349 = vmatpush1.bf16.msra.mxu0 %v296
    %350 = vmatprep.subr.bf16.mxu0 %v301
    %351 = vmatpush1.bf16.msra.mxu0 %v300
    %352 = vmatprep.subr.bf16.mxu0 0
    %353 = vmatpush1.bf16.msra.mxu0 0
    %354 = vmatprep.subr.bf16.mxu0 0
    %355 = vmatpush1.bf16.msra.mxu0 0
    %356 = vmatprep.subr.bf16.mxu0 0
    %357 = vmatpush1.bf16.msra.mxu0 0
    %358 = vmatprep.subr.bf16.mxu0 0
    %359 = vmatpush1.bf16.msra.mxu0 0
    %360 = vmatprep.subr.bf16.mxu0 0
    %361 = vmatpush1.bf16.msra.mxu0 0
    %362 = vmatprep.subr.bf16.mxu0 0
    %363 = vmatpush1.bf16.msra.mxu0 0
    %364 = vmatprep.subr.bf16.mxu0 0
    %365 = vmatpush1.bf16.msra.mxu0 0
    %366 = vmatprep.subr.bf16.mxu0 0
    %367 = vmatpush1.bf16.msra.mxu0 0
    %368 = vmatprep.mubr.bf16.mxu0 0
    %369 = vmatmul.mubr.bf16.gmra.mrb[0].mxu0 %v118
    %v370 = vpop.f32.mrb[0].mxu0
    %v371 = vadd.f32 %v159, %v370
    %v372 = vpop.f32.mrb[0].mxu0
    %v373 = vadd.f32 %v163, %v372
    %v374 = vpop.f32.mrb[0].mxu0
    %v375 = vadd.f32 %v159, %v374
    %v376 = vpop.f32.mrb[0].mxu0
    %v377 = vadd.f32 %v163, %v376
    %378 = vmatprep.mubr.bf16.mxu0 0
    %379 = vmatmul.mubr.bf16.gmra.mrb[0].mxu0 %v119
    %v380 = vpop.f32.mrb[0].mxu0
    %v381 = vadd.f32 %v159, %v380
    %v382 = vpop.f32.mrb[0].mxu0
    %v383 = vadd.f32 %v163, %v382
    %v384 = vpop.f32.mrb[0].mxu0
    %v385 = vadd.f32 %v159, %v384
    %v386 = vpop.f32.mrb[0].mxu0
    %v387 = vadd.f32 %v163, %v386
    %388 = vmatprep.mubr.bf16.mxu0 0
    %389 = vmatmul.mubr.bf16.gmra.mrb[0].mxu0 %v120
    %v390 = vpop.f32.mrb[0].mxu0
    %v391 = vadd.f32 %v159, %v390
    %v392 = vpop.f32.mrb[0].mxu0
    %v393 = vadd.f32 %v163, %v392
    %v394 = vpop.f32.mrb[0].mxu0
    %v395 = vadd.f32 %v159, %v394
    %v396 = vpop.f32.mrb[0].mxu0
    %v397 = vadd.f32 %v163, %v396
    %398 = vmatprep.mubr.bf16.mxu0 0
    %399 = vmatmul.mubr.bf16.gmra.mrb[0].mxu0 %v121
    %v400 = vpop.f32.mrb[0].mxu0
    %v401 = vadd.f32 %v159, %v400
    %v402 = vpop.f32.mrb[0].mxu0
    %v403 = vadd.f32 %v163, %v402
    %v404 = vpop.f32.mrb[0].mxu0
    %v405 = vadd.f32 %v159, %v404
    %v406 = vpop.f32.mrb[0].mxu0
    %v407 = vadd.f32 %v163, %v406
    %408 = vdwg.mxu0
    %409 = vmatprep.subr.bf16.mxu0 %v275
    %410 = vmatpush1.bf16.msra.mxu0 %v274
    %411 = vmatprep.subr.bf16.mxu0 %v279
    %412 = vmatpush1.bf16.msra.mxu0 %v278
    %413 = vmatprep.subr.bf16.mxu0 %v283
    %414 = vmatpush1.bf16.msra.mxu0 %v282
    %415 = vmatprep.subr.bf16.mxu0 %v287
    %416 = vmatpush1.bf16.msra.mxu0 %v286
    %417 = vmatprep.subr.bf16.mxu0 %v291
    %418 = vmatpush1.bf16.msra.mxu0 %v290
    %419 = vmatprep.subr.bf16.mxu0 %v295
    %420 = vmatpush1.bf16.msra.mxu0 %v294
    %421 = vmatprep.subr.bf16.mxu0 %v299
    %422 = vmatpush1.bf16.msra.mxu0 %v298
    %423 = vmatprep.subr.bf16.mxu0 %v303
    %424 = vmatpush1.bf16.msra.mxu0 %v302
    %425 = vmatprep.subr.bf16.mxu0 0
    %426 = vmatpush1.bf16.msra.mxu0 0
    %427 = vmatprep.subr.bf16.mxu0 0
    %428 = vmatpush1.bf16.msra.mxu0 0
    %429 = vmatprep.subr.bf16.mxu0 0
    %430 = vmatpush1.bf16.msra.mxu0 0
    %431 = vmatprep.subr.bf16.mxu0 0
    %432 = vmatpush1.bf16.msra.mxu0 0
    %433 = vmatprep.subr.bf16.mxu0 0
    %434 = vmatpush1.bf16.msra.mxu0 0
    %435 = vmatprep.subr.bf16.mxu0 0
    %436 = vmatpush1.bf16.msra.mxu0 0
    %437 = vmatprep.subr.bf16.mxu0 0
    %438 = vmatpush1.bf16.msra.mxu0 0
    %439 = vmatprep.subr.bf16.mxu0 0
    %440 = vmatpush1.bf16.msra.mxu0 0
    %441 = vmatprep.mubr.bf16.mxu0 0
    %442 = vmatmul.mubr.bf16.gmra.mrb[0].mxu0 %v118
    %v443 = vpop.f32.mrb[0].mxu0
    %v444 = vadd.f32 %v167, %v443
    %v445 = vpop.f32.mrb[0].mxu0
    %v446 = vadd.f32 %v171, %v445
    %v447 = vpop.f32.mrb[0].mxu0
    %v448 = vadd.f32 %v167, %v447
    %v449 = vpop.f32.mrb[0].mxu0
    %v450 = vadd.f32 %v171, %v449
    %451 = vmatprep.mubr.bf16.mxu0 0
    %452 = vmatmul.mubr.bf16.gmra.mrb[0].mxu0 %v119
    %v453 = vpop.f32.mrb[0].mxu0
    %v454 = vadd.f32 %v167, %v453
    %v455 = vpop.f32.mrb[0].mxu0
    %v456 = vadd.f32 %v171, %v455
    %v457 = vpop.f32.mrb[0].mxu0
    %v458 = vadd.f32 %v167, %v457
    %v459 = vpop.f32.mrb[0].mxu0
    %v460 = vadd.f32 %v171, %v459
    %461 = vmatprep.mubr.bf16.mxu0 0
    %462 = vmatmul.mubr.bf16.gmra.mrb[0].mxu0 %v120
    %v463 = vpop.f32.mrb[0].mxu0
    %v464 = vadd.f32 %v167, %v463
    %v465 = vpop.f32.mrb[0].mxu0
    %v466 = vadd.f32 %v171, %v465
    %v467 = vpop.f32.mrb[0].mxu0
    %v468 = vadd.f32 %v167, %v467
    %v469 = vpop.f32.mrb[0].mxu0
    %v470 = vadd.f32 %v171, %v469
    %471 = vmatprep.mubr.bf16.mxu0 0
    %472 = vmatmul.mubr.bf16.gmra.mrb[0].mxu0 %v121
    %v473 = vpop.f32.mrb[0].mxu0
    %v474 = vadd.f32 %v167, %v473
    %v475 = vpop.f32.mrb[0].mxu0
    %v476 = vadd.f32 %v171, %v475
    %v477 = vpop.f32.mrb[0].mxu0
    %v478 = vadd.f32 %v167, %v477
    %v479 = vpop.f32.mrb[0].mxu0
    %v480 = vadd.f32 %v171, %v479
    %481 = vdwg.mxu0
    %482 = vst [vmem:[#allocation4] sm:$0xff] %v371
    %483 = vst [vmem:[#allocation4 + $0x8] sm:$0xff] %v373
    %484 = vst [vmem:[#allocation4 + $0x10] sm:$0xff] %v444
    %485 = vst [vmem:[#allocation4 + $0x18] sm:$0xff] %v446
    %486 = vst [vmem:[#allocation4 + $0x20] sm:$0xff] %v375
    %487 = vst [vmem:[#allocation4 + $0x28] sm:$0xff] %v377
    %488 = vst [vmem:[#allocation4 + $0x30] sm:$0xff] %v448
    %489 = vst [vmem:[#allocation4 + $0x38] sm:$0xff] %v450
    %490 = vst [vmem:[#allocation4 + $0x40] sm:$0xff] %v381
    %491 = vst [vmem:[#allocation4 + $0x48] sm:$0xff] %v383
    %492 = vst [vmem:[#allocation4 + $0x50] sm:$0xff] %v454
    %493 = vst [vmem:[#allocation4 + $0x58] sm:$0xff] %v456
    %494 = vst [vmem:[#allocation4 + $0x60] sm:$0xff] %v385
    %495 = vst [vmem:[#allocation4 + $0x68] sm:$0xff] %v387
    %496 = vst [vmem:[#allocation4 + $0x70] sm:$0xff] %v458
    %497 = vst [vmem:[#allocation4 + $0x78] sm:$0xff] %v460
    %498 = vst [vmem:[#allocation4 + $0x80] sm:$0xff] %v391
    %499 = vst [vmem:[#allocation4 + $0x88] sm:$0xff] %v393
    %500 = vst [vmem:[#allocation4 + $0x90] sm:$0xff] %v464
    %501 = vst [vmem:[#allocation4 + $0x98] sm:$0xff] %v466
    %502 = vst [vmem:[#allocation4 + $0xa0] sm:$0xff] %v395
    %503 = vst [vmem:[#allocation4 + $0xa8] sm:$0xff] %v397
    %504 = vst [vmem:[#allocation4 + $0xb0] sm:$0xff] %v468
    %505 = vst [vmem:[#allocation4 + $0xb8] sm:$0xff] %v470
    %506 = vst [vmem:[#allocation4 + $0xc0] sm:$0xff] %v401
    %507 = vst [vmem:[#allocation4 + $0xc8] sm:$0xff] %v403
    %508 = vst [vmem:[#allocation4 + $0xd0] sm:$0xff] %v474
    %509 = vst [vmem:[#allocation4 + $0xd8] sm:$0xff] %v476
    %510 = vst [vmem:[#allocation4 + $0xe0] sm:$0xff] %v405
    %511 = vst [vmem:[#allocation4 + $0xe8] sm:$0xff] %v407
    %512 = vst [vmem:[#allocation4 + $0xf0] sm:$0xff] %v478
    %513 = vst [vmem:[#allocation4 + $0xf8] sm:$0xff] %v480
    %v514 = vld [vmem:[#allocation4] sm:$0xff]
    %v515 = vld [vmem:[#allocation4 + $0x8] sm:$0xff]
    %v516 = vld [vmem:[#allocation4 + $0x10] sm:$0xff]
    %v517 = vld [vmem:[#allocation4 + $0x18] sm:$0xff]
    %v518 = vld [vmem:[#allocation4 + $0xe0] sm:$0xff]
    %v519 = vld [vmem:[#allocation4 + $0xe8] sm:$0xff]
    %v520 = vld [vmem:[#allocation4 + $0xf0] sm:$0xff]
    %v521 = vld [vmem:[#allocation4 + $0xf8] sm:$0xff]
    %v522 = vsel %vm105, %v514, %v518
    %v523 = vsel %vm106, %v515, %v519
    %v524 = vsel %vm107, %v516, %v520
    %v525 = vsel %vm108, %v517, %v521
    %526 = vst [vmem:[#allocation4] sm:$0xff] %v522
    %527 = vst [vmem:[#allocation4 + $0x8] sm:$0xff] %v523
    %528 = vst [vmem:[#allocation4 + $0x10] sm:$0xff] %v524
    %529 = vst [vmem:[#allocation4 + $0x18] sm:$0xff] %v525
    %v530 = vsel %vm105, %v518, %v514
    %v531 = vsel %vm106, %v519, %v515
    %v532 = vsel %vm107, %v520, %v516
    %v533 = vsel %vm108, %v521, %v517
    %534 = vst [vmem:[#allocation4 + $0xe0] sm:$0xff] %v530
    %535 = vst [vmem:[#allocation4 + $0xe8] sm:$0xff] %v531
    %536 = vst [vmem:[#allocation4 + $0xf0] sm:$0xff] %v532
    %537 = vst [vmem:[#allocation4 + $0xf8] sm:$0xff] %v533
    %v538 = vld [vmem:[#allocation4 + $0x20] sm:$0xff]
    %v539 = vld [vmem:[#allocation4 + $0x28] sm:$0xff]
    %v540 = vld [vmem:[#allocation4 + $0x30] sm:$0xff]
    %v541 = vld [vmem:[#allocation4 + $0x38] sm:$0xff]
    %v542 = vld [vmem:[#allocation4 + $0xc0] sm:$0xff]
    %v543 = vld [vmem:[#allocation4 + $0xc8] sm:$0xff]
    %v544 = vld [vmem:[#allocation4 + $0xd0] sm:$0xff]
    %v545 = vld [vmem:[#allocation4 + $0xd8] sm:$0xff]
    %v546 = vsel %vm105, %v538, %v542
    %v547 = vsel %vm106, %v539, %v543
    %v548 = vsel %vm107, %v540, %v544
    %v549 = vsel %vm108, %v541, %v545
    %550 = vst [vmem:[#allocation4 + $0x20] sm:$0xff] %v546
    %551 = vst [vmem:[#allocation4 + $0x28] sm:$0xff] %v547
    %552 = vst [vmem:[#allocation4 + $0x30] sm:$0xff] %v548
    %553 = vst [vmem:[#allocation4 + $0x38] sm:$0xff] %v549
    %v554 = vsel %vm105, %v542, %v538
    %v555 = vsel %vm106, %v543, %v539
    %v556 = vsel %vm107, %v544, %v540
    %v557 = vsel %vm108, %v545, %v541
    %558 = vst [vmem:[#allocation4 + $0xc0] sm:$0xff] %v554
    %559 = vst [vmem:[#allocation4 + $0xc8] sm:$0xff] %v555
    %560 = vst [vmem:[#allocation4 + $0xd0] sm:$0xff] %v556
    %561 = vst [vmem:[#allocation4 + $0xd8] sm:$0xff] %v557
    %v562 = vld [vmem:[#allocation4 + $0x40] sm:$0xff]
    %v563 = vld [vmem:[#allocation4 + $0x48] sm:$0xff]
    %v564 = vld [vmem:[#allocation4 + $0x50] sm:$0xff]
    %v565 = vld [vmem:[#allocation4 + $0x58] sm:$0xff]
    %v566 = vld [vmem:[#allocation4 + $0xa0] sm:$0xff]
    %v567 = vld [vmem:[#allocation4 + $0xa8] sm:$0xff]
    %v568 = vld [vmem:[#allocation4 + $0xb0] sm:$0xff]
    %v569 = vld [vmem:[#allocation4 + $0xb8] sm:$0xff]
    %v570 = vsel %vm105, %v562, %v566
    %v571 = vsel %vm106, %v563, %v567
    %v572 = vsel %vm107, %v564, %v568
    %v573 = vsel %vm108, %v565, %v569
    %574 = vst [vmem:[#allocation4 + $0x40] sm:$0xff] %v570
    %575 = vst [vmem:[#allocation4 + $0x48] sm:$0xff] %v571
    %576 = vst [vmem:[#allocation4 + $0x50] sm:$0xff] %v572
    %577 = vst [vmem:[#allocation4 + $0x58] sm:$0xff] %v573
    %v578 = vsel %vm105, %v566, %v562
    %v579 = vsel %vm106, %v567, %v563
    %v580 = vsel %vm107, %v568, %v564
    %v581 = vsel %vm108, %v569, %v565
    %582 = vst [vmem:[#allocation4 + $0xa0] sm:$0xff] %v578
    %583 = vst [vmem:[#allocation4 + $0xa8] sm:$0xff] %v579
    %584 = vst [vmem:[#allocation4 + $0xb0] sm:$0xff] %v580
    %585 = vst [vmem:[#allocation4 + $0xb8] sm:$0xff] %v581
    %v586 = vld [vmem:[#allocation4 + $0x60] sm:$0xff]
    %v587 = vld [vmem:[#allocation4 + $0x68] sm:$0xff]
    %v588 = vld [vmem:[#allocation4 + $0x70] sm:$0xff]
    %v589 = vld [vmem:[#allocation4 + $0x78] sm:$0xff]
    %v590 = vld [vmem:[#allocation4 + $0x80] sm:$0xff]
    %v591 = vld [vmem:[#allocation4 + $0x88] sm:$0xff]
    %v592 = vld [vmem:[#allocation4 + $0x90] sm:$0xff]
    %v593 = vld [vmem:[#allocation4 + $0x98] sm:$0xff]
    %v594 = vsel %vm105, %v586, %v590
    %v595 = vsel %vm106, %v587, %v591
    %v596 = vsel %vm107, %v588, %v592
    %v597 = vsel %vm108, %v589, %v593
    %598 = vst [vmem:[#allocation4 + $0x60] sm:$0xff] %v594
    %599 = vst [vmem:[#allocation4 + $0x68] sm:$0xff] %v595
    %600 = vst [vmem:[#allocation4 + $0x70] sm:$0xff] %v596
    %601 = vst [vmem:[#allocation4 + $0x78] sm:$0xff] %v597
    %v602 = vsel %vm105, %v590, %v586
    %v603 = vsel %vm106, %v591, %v587
    %v604 = vsel %vm107, %v592, %v588
    %v605 = vsel %vm108, %v593, %v589
    %606 = vst [vmem:[#allocation4 + $0x80] sm:$0xff] %v602
    %607 = vst [vmem:[#allocation4 + $0x88] sm:$0xff] %v603
    %608 = vst [vmem:[#allocation4 + $0x90] sm:$0xff] %v604
    %609 = vst [vmem:[#allocation4 + $0x98] sm:$0xff] %v605
    %v610 = vld [vmem:[#allocation7] sm:$0xff]
    %v611 = vld [vmem:[#allocation7 + $0x8] sm:$0xff]
    %v612 = vld [vmem:[#allocation7 + $0x10] sm:$0xff]
    %v613 = vld [vmem:[#allocation7 + $0x18] sm:$0xff]
    %v614 = vld [vmem:[#allocation7 + $0x20] sm:$0xff]
    %v615 = vld [vmem:[#allocation7 + $0x28] sm:$0xff]
    %v616 = vld [vmem:[#allocation7 + $0x30] sm:$0xff]
    %v617 = vld [vmem:[#allocation7 + $0x38] sm:$0xff]
    %v618 = vld [vmem:[#allocation7 + $0x40] sm:$0xff]
    %v619 = vld [vmem:[#allocation7 + $0x48] sm:$0xff]
    %v620 = vld [vmem:[#allocation7 + $0x50] sm:$0xff]
    %v621 = vld [vmem:[#allocation7 + $0x58] sm:$0xff]
    %v622 = vld [vmem:[#allocation7 + $0x60] sm:$0xff]
    %v623 = vld [vmem:[#allocation7 + $0x68] sm:$0xff]
    %v624 = vld [vmem:[#allocation7 + $0x70] sm:$0xff]
    %v625 = vld [vmem:[#allocation7 + $0x78] sm:$0xff]
    %v626 = vld [vmem:[#allocation7 + $0x80] sm:$0xff]
    %v627 = vld [vmem:[#allocation7 + $0x88] sm:$0xff]
    %v628 = vld [vmem:[#allocation7 + $0x90] sm:$0xff]
    %v629 = vld [vmem:[#allocation7 + $0x98] sm:$0xff]
    %v630 = vld [vmem:[#allocation7 + $0xa0] sm:$0xff]
    %v631 = vld [vmem:[#allocation7 + $0xa8] sm:$0xff]
    %v632 = vld [vmem:[#allocation7 + $0xb0] sm:$0xff]
    %v633 = vld [vmem:[#allocation7 + $0xb8] sm:$0xff]
    %v634 = vld [vmem:[#allocation7 + $0xc0] sm:$0xff]
    %v635 = vld [vmem:[#allocation7 + $0xc8] sm:$0xff]
    %v636 = vld [vmem:[#allocation7 + $0xd0] sm:$0xff]
    %v637 = vld [vmem:[#allocation7 + $0xd8] sm:$0xff]
    %v638 = vld [vmem:[#allocation7 + $0xe0] sm:$0xff]
    %v639 = vld [vmem:[#allocation7 + $0xe8] sm:$0xff]
    %v640 = vld [vmem:[#allocation7 + $0xf0] sm:$0xff]
    %v641 = vld [vmem:[#allocation7 + $0xf8] sm:$0xff]
    %s642 = smul.u32 0, 4
    %s643 = smul.addr %s642, 8
    %s644 = scalar_lea.vmem [#allocation4], %s643
    %v645 = vld [vmem:[%s644] sm:$0xff]
    %v646 = vld [vmem:[%s644 + $0x8] sm:$0xff]
    %v647 = vld [vmem:[%s644 + $0x10] sm:$0xff]
    %v648 = vld [vmem:[%s644 + $0x18] sm:$0xff]
    %v681 = vunpack.c.l.b16 %v610
    %v682 = vunpack.c.h.b16 %v610
    %v683 = vunpack.c.l.b16 %v611
    %v684 = vunpack.c.h.b16 %v611
    %v685 = vunpack.c.l.b16 %v612
    %v686 = vunpack.c.h.b16 %v612
    %v687 = vunpack.c.l.b16 %v613
    %v688 = vunpack.c.h.b16 %v613
    %v689 = vunpack.c.l.b16 %v614
    %v690 = vunpack.c.h.b16 %v614
    %v691 = vunpack.c.l.b16 %v615
    %v692 = vunpack.c.h.b16 %v615
    %v693 = vunpack.c.l.b16 %v616
    %v694 = vunpack.c.h.b16 %v616
    %v695 = vunpack.c.l.b16 %v617
    %v696 = vunpack.c.h.b16 %v617
    %v697 = vunpack.c.l.b16 %v618
    %v698 = vunpack.c.h.b16 %v618
    %v699 = vunpack.c.l.b16 %v619
    %v700 = vunpack.c.h.b16 %v619
    %v701 = vunpack.c.l.b16 %v620
    %v702 = vunpack.c.h.b16 %v620
    %v703 = vunpack.c.l.b16 %v621
    %v704 = vunpack.c.h.b16 %v621
    %v705 = vunpack.c.l.b16 %v622
    %v706 = vunpack.c.h.b16 %v622
    %v707 = vunpack.c.l.b16 %v623
    %v708 = vunpack.c.h.b16 %v623
    %v709 = vunpack.c.l.b16 %v624
    %v710 = vunpack.c.h.b16 %v624
    %v711 = vunpack.c.l.b16 %v625
    %v712 = vunpack.c.h.b16 %v625
    %v713 = vunpack.c.l.b16 %v626
    %v714 = vunpack.c.h.b16 %v626
    %v715 = vunpack.c.l.b16 %v627
    %v716 = vunpack.c.h.b16 %v627
    %v717 = vunpack.c.l.b16 %v628
    %v718 = vunpack.c.h.b16 %v628
    %v719 = vunpack.c.l.b16 %v629
    %v720 = vunpack.c.h.b16 %v629
    %v721 = vunpack.c.l.b16 %v630
    %v722 = vunpack.c.h.b16 %v630
    %v723 = vunpack.c.l.b16 %v631
    %v724 = vunpack.c.h.b16 %v631
    %v725 = vunpack.c.l.b16 %v632
    %v726 = vunpack.c.h.b16 %v632
    %v727 = vunpack.c.l.b16 %v633
    %v728 = vunpack.c.h.b16 %v633
    %v729 = vunpack.c.l.b16 %v634
    %v730 = vunpack.c.h.b16 %v634
    %v731 = vunpack.c.l.b16 %v635
    %v732 = vunpack.c.h.b16 %v635
    %v733 = vunpack.c.l.b16 %v636
    %v734 = vunpack.c.h.b16 %v636
    %v735 = vunpack.c.l.b16 %v637
    %v736 = vunpack.c.h.b16 %v637
    %v737 = vunpack.c.l.b16 %v638
    %v738 = vunpack.c.h.b16 %v638
    %v739 = vunpack.c.l.b16 %v639
    %v740 = vunpack.c.h.b16 %v639
    %v741 = vunpack.c.l.b16 %v640
    %v742 = vunpack.c.h.b16 %v640
    %v743 = vunpack.c.l.b16 %v641
    %v744 = vunpack.c.h.b16 %v641
    %v745 = vpack.c.b16 %v685, %v681
    %v746 = vpack.c.b16 %v686, %v682
    %v747 = vpack.c.b16 %v687, %v683
    %v748 = vpack.c.b16 %v688, %v684
    %v749 = vpack.c.b16 %v693, %v689
    %v750 = vpack.c.b16 %v694, %v690
    %v751 = vpack.c.b16 %v695, %v691
    %v752 = vpack.c.b16 %v696, %v692
    %v753 = vpack.c.b16 %v701, %v697
    %v754 = vpack.c.b16 %v702, %v698
    %v755 = vpack.c.b16 %v703, %v699
    %v756 = vpack.c.b16 %v704, %v700
    %v757 = vpack.c.b16 %v709, %v705
    %v758 = vpack.c.b16 %v710, %v706
    %v759 = vpack.c.b16 %v711, %v707
    %v760 = vpack.c.b16 %v712, %v708
    %v761 = vpack.c.b16 %v717, %v713
    %v762 = vpack.c.b16 %v718, %v714
    %v763 = vpack.c.b16 %v719, %v715
    %v764 = vpack.c.b16 %v720, %v716
    %v765 = vpack.c.b16 %v725, %v721
    %v766 = vpack.c.b16 %v726, %v722
    %v767 = vpack.c.b16 %v727, %v723
    %v768 = vpack.c.b16 %v728, %v724
    %v769 = vpack.c.b16 %v733, %v729
    %v770 = vpack.c.b16 %v734, %v730
    %v771 = vpack.c.b16 %v735, %v731
    %v772 = vpack.c.b16 %v736, %v732
    %v773 = vpack.c.b16 %v741, %v737
    %v774 = vpack.c.b16 %v742, %v738
    %v775 = vpack.c.b16 %v743, %v739
    %v776 = vpack.c.b16 %v744, %v740
    %809 = vmatprep.subr.bf16.mxu0 %v746
    %810 = vmatpush1.bf16.msra.mxu0 %v745
    %811 = vmatprep.subr.bf16.mxu0 %v750
    %812 = vmatpush1.bf16.msra.mxu0 %v749
    %813 = vmatprep.subr.bf16.mxu0 %v754
    %814 = vmatpush1.bf16.msra.mxu0 %v753
    %815 = vmatprep.subr.bf16.mxu0 %v758
    %816 = vmatpush1.bf16.msra.mxu0 %v757
    %817 = vmatprep.subr.bf16.mxu0 %v762
    %818 = vmatpush1.bf16.msra.mxu0 %v761
    %819 = vmatprep.subr.bf16.mxu0 %v766
    %820 = vmatpush1.bf16.msra.mxu0 %v765
    %821 = vmatprep.subr.bf16.mxu0 %v770
    %822 = vmatpush1.bf16.msra.mxu0 %v769
    %823 = vmatprep.subr.bf16.mxu0 %v774
    %824 = vmatpush1.bf16.msra.mxu0 %v773
    %825 = vmatprep.subr.bf16.mxu0 0
    %826 = vmatpush1.bf16.msra.mxu0 0
    %827 = vmatprep.subr.bf16.mxu0 0
    %828 = vmatpush1.bf16.msra.mxu0 0
    %829 = vmatprep.subr.bf16.mxu0 0
    %830 = vmatpush1.bf16.msra.mxu0 0
    %831 = vmatprep.subr.bf16.mxu0 0
    %832 = vmatpush1.bf16.msra.mxu0 0
    %833 = vmatprep.subr.bf16.mxu0 0
    %834 = vmatpush1.bf16.msra.mxu0 0
    %835 = vmatprep.subr.bf16.mxu0 0
    %836 = vmatpush1.bf16.msra.mxu0 0
    %837 = vmatprep.subr.bf16.mxu0 0
    %838 = vmatpush1.bf16.msra.mxu0 0
    %839 = vmatprep.subr.bf16.mxu0 0
    %840 = vmatpush1.bf16.msra.mxu0 0
    %841 = vmatprep.mubr.bf16.mxu0 0
    %842 = vmatmul.mubr.bf16.gmra.mrb[0].mxu0 0
    %v843 = vpop.f32.mrb[0].mxu0
    %v844 = vadd.f32 0.0, %v843
    %v845 = vpop.f32.mrb[0].mxu0
    %v846 = vadd.f32 0.0, %v845
    %v847 = vpop.f32.mrb[0].mxu0
    %v848 = vpop.f32.mrb[0].mxu0
    %849 = vdwg.mxu0
    %850 = vmatprep.subr.bf16.mxu0 %v748
    %851 = vmatpush1.bf16.msra.mxu0 %v747
    %852 = vmatprep.subr.bf16.mxu0 %v752
    %853 = vmatpush1.bf16.msra.mxu0 %v751
    %854 = vmatprep.subr.bf16.mxu0 %v756
    %855 = vmatpush1.bf16.msra.mxu0 %v755
    %856 = vmatprep.subr.bf16.mxu0 %v760
    %857 = vmatpush1.bf16.msra.mxu0 %v759
    %858 = vmatprep.subr.bf16.mxu0 %v764
    %859 = vmatpush1.bf16.msra.mxu0 %v763
    %860 = vmatprep.subr.bf16.mxu0 %v768
    %861 = vmatpush1.bf16.msra.mxu0 %v767
    %862 = vmatprep.subr.bf16.mxu0 %v772
    %863 = vmatpush1.bf16.msra.mxu0 %v771
    %864 = vmatprep.subr.bf16.mxu0 %v776
    %865 = vmatpush1.bf16.msra.mxu0 %v775
    %866 = vmatprep.subr.bf16.mxu0 0
    %867 = vmatpush1.bf16.msra.mxu0 0
    %868 = vmatprep.subr.bf16.mxu0 0
    %869 = vmatpush1.bf16.msra.mxu0 0
    %870 = vmatprep.subr.bf16.mxu0 0
    %871 = vmatpush1.bf16.msra.mxu0 0
    %872 = vmatprep.subr.bf16.mxu0 0
    %873 = vmatpush1.bf16.msra.mxu0 0
    %874 = vmatprep.subr.bf16.mxu0 0
    %875 = vmatpush1.bf16.msra.mxu0 0
    %876 = vmatprep.subr.bf16.mxu0 0
    %877 = vmatpush1.bf16.msra.mxu0 0
    %878 = vmatprep.subr.bf16.mxu0 0
    %879 = vmatpush1.bf16.msra.mxu0 0
    %880 = vmatprep.subr.bf16.mxu0 0
    %881 = vmatpush1.bf16.msra.mxu0 0
    %882 = vmatprep.mubr.bf16.mxu0 0
    %883 = vmatmul.mubr.bf16.gmra.mrb[0].mxu0 0
    %v884 = vpop.f32.mrb[0].mxu0
    %v885 = vadd.f32 0.0, %v884
    %v886 = vpop.f32.mrb[0].mxu0
    %v887 = vadd.f32 0.0, %v886
    %v888 = vpop.f32.mrb[0].mxu0
    %v889 = vpop.f32.mrb[0].mxu0
    %890 = vdwg.mxu0
    %v891 = vadd.f32 %v645, %v844
    %v892 = vadd.f32 %v646, %v846
    %v893 = vadd.f32 %v647, %v885
    %v894 = vadd.f32 %v648, %v887
    %v895 = vxor.u32 %v891, 2147483648
    %v896 = vmul.f32 %v895, 1.442695
    %v897 = vpow.pop %v896
    %v898 = vadd.f32 %v897, 1.0
    %v899 = vrcp.pop %v898
    %v900 = vmul.f32 1.0, %v899
    %v901 = vxor.u32 %v892, 2147483648
    %v902 = vmul.f32 %v901, 1.442695
    %v903 = vpow.pop %v902
    %v904 = vadd.f32 %v903, 1.0
    %v905 = vrcp.pop %v904
    %v906 = vmul.f32 1.0, %v905
    %v907 = vtanh.pop %v893
    %v908 = vxor.u32 %v894, 2147483648
    %v909 = vmul.f32 %v908, 1.442695
    %v910 = vpow.pop %v909
    %v911 = vadd.f32 %v910, 1.0
    %v912 = vrcp.pop %v911
    %v913 = vmul.f32 1.0, %v912
    %v914 = vmul.f32 %v906, 0.0
    %v915 = vmul.f32 %v900, %v907
    %v916 = vadd.f32 %v914, %v915
    %v917 = vtanh.pop %v916
    %v918 = vmul.f32 %v913, %v917
    %919 = vst [vmem:[#allocation2] sm:$0xff] %v918
    %s920 = smul.u32 1, 4
    %s921 = smul.addr %s920, 8
    %s922 = scalar_lea.vmem [#allocation4], %s921
    %v923 = vld [vmem:[%s922] sm:$0xff]
    %v924 = vld [vmem:[%s922 + $0x8] sm:$0xff]
    %v925 = vld [vmem:[%s922 + $0x10] sm:$0xff]
    %v926 = vld [vmem:[%s922 + $0x18] sm:$0xff]
    %v927 = vpack.c.bf16 %v918, %v918
    %928 = vmatprep.subr.bf16.mxu0 %v746
    %929 = vmatpush1.bf16.msra.mxu0 %v745
    %930 = vmatprep.subr.bf16.mxu0 %v750
    %931 = vmatpush1.bf16.msra.mxu0 %v749
    %932 = vmatprep.subr.bf16.mxu0 %v754
    %933 = vmatpush1.bf16.msra.mxu0 %v753
    %934 = vmatprep.subr.bf16.mxu0 %v758
    %935 = vmatpush1.bf16.msra.mxu0 %v757
    %936 = vmatprep.subr.bf16.mxu0 %v762
    %937 = vmatpush1.bf16.msra.mxu0 %v761
    %938 = vmatprep.subr.bf16.mxu0 %v766
    %939 = vmatpush1.bf16.msra.mxu0 %v765
    %940 = vmatprep.subr.bf16.mxu0 %v770
    %941 = vmatpush1.bf16.msra.mxu0 %v769
    %942 = vmatprep.subr.bf16.mxu0 %v774
    %943 = vmatpush1.bf16.msra.mxu0 %v773
    %944 = vmatprep.subr.bf16.mxu0 0
    %945 = vmatpush1.bf16.msra.mxu0 0
    %946 = vmatprep.subr.bf16.mxu0 0
    %947 = vmatpush1.bf16.msra.mxu0 0
    %948 = vmatprep.subr.bf16.mxu0 0
    %949 = vmatpush1.bf16.msra.mxu0 0
    %950 = vmatprep.subr.bf16.mxu0 0
    %951 = vmatpush1.bf16.msra.mxu0 0
    %952 = vmatprep.subr.bf16.mxu0 0
    %953 = vmatpush1.bf16.msra.mxu0 0
    %954 = vmatprep.subr.bf16.mxu0 0
    %955 = vmatpush1.bf16.msra.mxu0 0
    %956 = vmatprep.subr.bf16.mxu0 0
    %957 = vmatpush1.bf16.msra.mxu0 0
    %958 = vmatprep.subr.bf16.mxu0 0
    %959 = vmatpush1.bf16.msra.mxu0 0
    %960 = vmatprep.mubr.bf16.mxu0 0
    %961 = vmatmul.mubr.bf16.gmra.mrb[0].mxu0 %v927
    %v962 = vpop.f32.mrb[0].mxu0
    %v963 = vadd.f32 0.0, %v962
    %v964 = vpop.f32.mrb[0].mxu0
    %v965 = vadd.f32 0.0, %v964
    %v966 = vpop.f32.mrb[0].mxu0
    %v967 = vpop.f32.mrb[0].mxu0
    %968 = vdwg.mxu0
    %969 = vmatprep.subr.bf16.mxu0 %v748
    %970 = vmatpush1.bf16.msra.mxu0 %v747
    %971 = vmatprep.subr.bf16.mxu0 %v752
    %972 = vmatpush1.bf16.msra.mxu0 %v751
    %973 = vmatprep.subr.bf16.mxu0 %v756
    %974 = vmatpush1.bf16.msra.mxu0 %v755
    %975 = vmatprep.subr.bf16.mxu0 %v760
    %976 = vmatpush1.bf16.msra.mxu0 %v759
    %977 = vmatprep.subr.bf16.mxu0 %v764
    %978 = vmatpush1.bf16.msra.mxu0 %v763
    %979 = vmatprep.subr.bf16.mxu0 %v768
    %980 = vmatpush1.bf16.msra.mxu0 %v767
    %981 = vmatprep.subr.bf16.mxu0 %v772
    %982 = vmatpush1.bf16.msra.mxu0 %v771
    %983 = vmatprep.subr.bf16.mxu0 %v776
    %984 = vmatpush1.bf16.msra.mxu0 %v775
    %985 = vmatprep.subr.bf16.mxu0 0
    %986 = vmatpush1.bf16.msra.mxu0 0
    %987 = vmatprep.subr.bf16.mxu0 0
    %988 = vmatpush1.bf16.msra.mxu0 0
    %989 = vmatprep.subr.bf16.mxu0 0
    %990 = vmatpush1.bf16.msra.mxu0 0
    %991 = vmatprep.subr.bf16.mxu0 0
    %992 = vmatpush1.bf16.msra.mxu0 0
    %993 = vmatprep.subr.bf16.mxu0 0
    %994 = vmatpush1.bf16.msra.mxu0 0
    %995 = vmatprep.subr.bf16.mxu0 0
    %996 = vmatpush1.bf16.msra.mxu0 0
    %997 = vmatprep.subr.bf16.mxu0 0
    %998 = vmatpush1.bf16.msra.mxu0 0
    %999 = vmatprep.subr.bf16.mxu0 0
    %1000 = vmatpush1.bf16.msra.mxu0 0
    %1001 = vmatprep.mubr.bf16.mxu0 0
    %1002 = vmatmul.mubr.bf16.gmra.mrb[0].mxu0 %v927
    %v1003 = vpop.f32.mrb[0].mxu0
    %v1004 = vadd.f32 0.0, %v1003
    %v1005 = vpop.f32.mrb[0].mxu0
    %v1006 = vadd.f32 0.0, %v1005
    %v1007 = vpop.f32.mrb[0].mxu0
    %v1008 = vpop.f32.mrb[0].mxu0
    %1009 = vdwg.mxu0
    %v1010 = vadd.f32 %v923, %v963
    %v1011 = vadd.f32 %v924, %v965
    %v1012 = vadd.f32 %v925, %v1004
    %v1013 = vadd.f32 %v926, %v1006
    %v1014 = vxor.u32 %v1010, 2147483648
    %v1015 = vmul.f32 %v1014, 1.442695
    %v1016 = vpow.pop %v1015
    %v1017 = vadd.f32 %v1016, 1.0
    %v1018 = vrcp.pop %v1017
    %v1019 = vmul.f32 1.0, %v1018
    %v1020 = vxor.u32 %v1011, 2147483648
    %v1021 = vmul.f32 %v1020, 1.442695
    %v1022 = vpow.pop %v1021
    %v1023 = vadd.f32 %v1022, 1.0
    %v1024 = vrcp.pop %v1023
    %v1025 = vmul.f32 1.0, %v1024
    %v1026 = vtanh.pop %v1012
    %v1027 = vxor.u32 %v1013, 2147483648
    %v1028 = vmul.f32 %v1027, 1.442695
    %v1029 = vpow.pop %v1028
    %v1030 = vadd.f32 %v1029, 1.0
    %v1031 = vrcp.pop %v1030
    %v1032 = vmul.f32 1.0, %v1031
    %v1033 = vmul.f32 %v1025, %v916
    %v1034 = vmul.f32 %v1019, %v1026
    %v1035 = vadd.f32 %v1033, %v1034
    %v1036 = vtanh.pop %v1035
    %v1037 = vmul.f32 %v1032, %v1036
    %s1038 = scalar_lea.vmem [#allocation2], 8
    %1039 = vst [vmem:[%s1038] sm:$0xff] %v1037
    %s1040 = smul.u32 2, 4
    %s1041 = smul.addr %s1040, 8
    %s1042 = scalar_lea.vmem [#allocation4], %s1041
    %v1043 = vld [vmem:[%s1042] sm:$0xff]
    %v1044 = vld [vmem:[%s1042 + $0x8] sm:$0xff]
    %v1045 = vld [vmem:[%s1042 + $0x10] sm:$0xff]
    %v1046 = vld [vmem:[%s1042 + $0x18] sm:$0xff]
    %v1047 = vpack.c.bf16 %v1037, %v1037
    %1048 = vmatprep.subr.bf16.mxu0 %v746
    %1049 = vmatpush1.bf16.msra.mxu0 %v745
    %1050 = vmatprep.subr.bf16.mxu0 %v750
    %1051 = vmatpush1.bf16.msra.mxu0 %v749
    %1052 = vmatprep.subr.bf16.mxu0 %v754
    %1053 = vmatpush1.bf16.msra.mxu0 %v753
    %1054 = vmatprep.subr.bf16.mxu0 %v758
    %1055 = vmatpush1.bf16.msra.mxu0 %v757
    %1056 = vmatprep.subr.bf16.mxu0 %v762
    %1057 = vmatpush1.bf16.msra.mxu0 %v761
    %1058 = vmatprep.subr.bf16.mxu0 %v766
    %1059 = vmatpush1.bf16.msra.mxu0 %v765
    %1060 = vmatprep.subr.bf16.mxu0 %v770
    %1061 = vmatpush1.bf16.msra.mxu0 %v769
    %1062 = vmatprep.subr.bf16.mxu0 %v774
    %1063 = vmatpush1.bf16.msra.mxu0 %v773
    %1064 = vmatprep.subr.bf16.mxu0 0
    %1065 = vmatpush1.bf16.msra.mxu0 0
    %1066 = vmatprep.subr.bf16.mxu0 0
    %1067 = vmatpush1.bf16.msra.mxu0 0
    %1068 = vmatprep.subr.bf16.mxu0 0
    %1069 = vmatpush1.bf16.msra.mxu0 0
    %1070 = vmatprep.subr.bf16.mxu0 0
    %1071 = vmatpush1.bf16.msra.mxu0 0
    %1072 = vmatprep.subr.bf16.mxu0 0
    %1073 = vmatpush1.bf16.msra.mxu0 0
    %1074 = vmatprep.subr.bf16.mxu0 0
    %1075 = vmatpush1.bf16.msra.mxu0 0
    %1076 = vmatprep.subr.bf16.mxu0 0
    %1077 = vmatpush1.bf16.msra.mxu0 0
    %1078 = vmatprep.subr.bf16.mxu0 0
    %1079 = vmatpush1.bf16.msra.mxu0 0
    %1080 = vmatprep.mubr.bf16.mxu0 0
    %1081 = vmatmul.mubr.bf16.gmra.mrb[0].mxu0 %v1047
    %v1082 = vpop.f32.mrb[0].mxu0
    %v1083 = vadd.f32 0.0, %v1082
    %v1084 = vpop.f32.mrb[0].mxu0
    %v1085 = vadd.f32 0.0, %v1084
    %v1086 = vpop.f32.mrb[0].mxu0
    %v1087 = vpop.f32.mrb[0].mxu0
    %1088 = vdwg.mxu0
    %1089 = vmatprep.subr.bf16.mxu0 %v748
    %1090 = vmatpush1.bf16.msra.mxu0 %v747
    %1091 = vmatprep.subr.bf16.mxu0 %v752
    %1092 = vmatpush1.bf16.msra.mxu0 %v751
    %1093 = vmatprep.subr.bf16.mxu0 %v756
    %1094 = vmatpush1.bf16.msra.mxu0 %v755
    %1095 = vmatprep.subr.bf16.mxu0 %v760
    %1096 = vmatpush1.bf16.msra.mxu0 %v759
    %1097 = vmatprep.subr.bf16.mxu0 %v764
    %1098 = vmatpush1.bf16.msra.mxu0 %v763
    %1099 = vmatprep.subr.bf16.mxu0 %v768
    %1100 = vmatpush1.bf16.msra.mxu0 %v767
    %1101 = vmatprep.subr.bf16.mxu0 %v772
    %1102 = vmatpush1.bf16.msra.mxu0 %v771
    %1103 = vmatprep.subr.bf16.mxu0 %v776
    %1104 = vmatpush1.bf16.msra.mxu0 %v775
    %1105 = vmatprep.subr.bf16.mxu0 0
    %1106 = vmatpush1.bf16.msra.mxu0 0
    %1107 = vmatprep.subr.bf16.mxu0 0
    %1108 = vmatpush1.bf16.msra.mxu0 0
    %1109 = vmatprep.subr.bf16.mxu0 0
    %1110 = vmatpush1.bf16.msra.mxu0 0
    %1111 = vmatprep.subr.bf16.mxu0 0
    %1112 = vmatpush1.bf16.msra.mxu0 0
    %1113 = vmatprep.subr.bf16.mxu0 0
    %1114 = vmatpush1.bf16.msra.mxu0 0
    %1115 = vmatprep.subr.bf16.mxu0 0
    %1116 = vmatpush1.bf16.msra.mxu0 0
    %1117 = vmatprep.subr.bf16.mxu0 0
    %1118 = vmatpush1.bf16.msra.mxu0 0
    %1119 = vmatprep.subr.bf16.mxu0 0
    %1120 = vmatpush1.bf16.msra.mxu0 0
    %1121 = vmatprep.mubr.bf16.mxu0 0
    %1122 = vmatmul.mubr.bf16.gmra.mrb[0].mxu0 %v1047
    %v1123 = vpop.f32.mrb[0].mxu0
    %v1124 = vadd.f32 0.0, %v1123
    %v1125 = vpop.f32.mrb[0].mxu0
    %v1126 = vadd.f32 0.0, %v1125
    %v1127 = vpop.f32.mrb[0].mxu0
    %v1128 = vpop.f32.mrb[0].mxu0
    %1129 = vdwg.mxu0
    %v1130 = vadd.f32 %v1043, %v1083
    %v1131 = vadd.f32 %v1044, %v1085
    %v1132 = vadd.f32 %v1045, %v1124
    %v1133 = vadd.f32 %v1046, %v1126
    %v1134 = vxor.u32 %v1130, 2147483648
    %v1135 = vmul.f32 %v1134, 1.442695
    %v1136 = vpow.pop %v1135
    %v1137 = vadd.f32 %v1136, 1.0
    %v1138 = vrcp.pop %v1137
    %v1139 = vmul.f32 1.0, %v1138
    %v1140 = vxor.u32 %v1131, 2147483648
    %v1141 = vmul.f32 %v1140, 1.442695
    %v1142 = vpow.pop %v1141
    %v1143 = vadd.f32 %v1142, 1.0
    %v1144 = vrcp.pop %v1143
    %v1145 = vmul.f32 1.0, %v1144
    %v1146 = vtanh.pop %v1132
    %v1147 = vxor.u32 %v1133, 2147483648
    %v1148 = vmul.f32 %v1147, 1.442695
    %v1149 = vpow.pop %v1148
    %v1150 = vadd.f32 %v1149, 1.0
    %v1151 = vrcp.pop %v1150
    %v1152 = vmul.f32 1.0, %v1151
    %v1153 = vmul.f32 %v1145, %v1035
    %v1154 = vmul.f32 %v1139, %v1146
    %v1155 = vadd.f32 %v1153, %v1154
    %v1156 = vtanh.pop %v1155
    %v1157 = vmul.f32 %v1152, %v1156
    %s1158 = scalar_lea.vmem [#allocation2], 16
    %1159 = vst [vmem:[%s1158] sm:$0xff] %v1157
    %s1160 = smul.u32 3, 4
    %s1161 = smul.addr %s1160, 8
    %s1162 = scalar_lea.vmem [#allocation4], %s1161
    %v1163 = vld [vmem:[%s1162] sm:$0xff]
    %v1164 = vld [vmem:[%s1162 + $0x8] sm:$0xff]
    %v1165 = vld [vmem:[%s1162 + $0x10] sm:$0xff]
    %v1166 = vld [vmem:[%s1162 + $0x18] sm:$0xff]
    %v1167 = vpack.c.bf16 %v1157, %v1157
    %1168 = vmatprep.subr.bf16.mxu0 %v746
    %1169 = vmatpush1.bf16.msra.mxu0 %v745
    %1170 = vmatprep.subr.bf16.mxu0 %v750
    %1171 = vmatpush1.bf16.msra.mxu0 %v749
    %1172 = vmatprep.subr.bf16.mxu0 %v754
    %1173 = vmatpush1.bf16.msra.mxu0 %v753
    %1174 = vmatprep.subr.bf16.mxu0 %v758
    %1175 = vmatpush1.bf16.msra.mxu0 %v757
    %1176 = vmatprep.subr.bf16.mxu0 %v762
    %1177 = vmatpush1.bf16.msra.mxu0 %v761
    %1178 = vmatprep.subr.bf16.mxu0 %v766
    %1179 = vmatpush1.bf16.msra.mxu0 %v765
    %1180 = vmatprep.subr.bf16.mxu0 %v770
    %1181 = vmatpush1.bf16.msra.mxu0 %v769
    %1182 = vmatprep.subr.bf16.mxu0 %v774
    %1183 = vmatpush1.bf16.msra.mxu0 %v773
    %1184 = vmatprep.subr.bf16.mxu0 0
    %1185 = vmatpush1.bf16.msra.mxu0 0
    %1186 = vmatprep.subr.bf16.mxu0 0
    %1187 = vmatpush1.bf16.msra.mxu0 0
    %1188 = vmatprep.subr.bf16.mxu0 0
    %1189 = vmatpush1.bf16.msra.mxu0 0
    %1190 = vmatprep.subr.bf16.mxu0 0
    %1191 = vmatpush1.bf16.msra.mxu0 0
    %1192 = vmatprep.subr.bf16.mxu0 0
    %1193 = vmatpush1.bf16.msra.mxu0 0
    %1194 = vmatprep.subr.bf16.mxu0 0
    %1195 = vmatpush1.bf16.msra.mxu0 0
    %1196 = vmatprep.subr.bf16.mxu0 0
    %1197 = vmatpush1.bf16.msra.mxu0 0
    %1198 = vmatprep.subr.bf16.mxu0 0
    %1199 = vmatpush1.bf16.msra.mxu0 0
    %1200 = vmatprep.mubr.bf16.mxu0 0
    %1201 = vmatmul.mubr.bf16.gmra.mrb[0].mxu0 %v1167
    %v1202 = vpop.f32.mrb[0].mxu0
    %v1203 = vadd.f32 0.0, %v1202
    %v1204 = vpop.f32.mrb[0].mxu0
    %v1205 = vadd.f32 0.0, %v1204
    %v1206 = vpop.f32.mrb[0].mxu0
    %v1207 = vpop.f32.mrb[0].mxu0
    %1208 = vdwg.mxu0
    %1209 = vmatprep.subr.bf16.mxu0 %v748
    %1210 = vmatpush1.bf16.msra.mxu0 %v747
    %1211 = vmatprep.subr.bf16.mxu0 %v752
    %1212 = vmatpush1.bf16.msra.mxu0 %v751
    %1213 = vmatprep.subr.bf16.mxu0 %v756
    %1214 = vmatpush1.bf16.msra.mxu0 %v755
    %1215 = vmatprep.subr.bf16.mxu0 %v760
    %1216 = vmatpush1.bf16.msra.mxu0 %v759
    %1217 = vmatprep.subr.bf16.mxu0 %v764
    %1218 = vmatpush1.bf16.msra.mxu0 %v763
    %1219 = vmatprep.subr.bf16.mxu0 %v768
    %1220 = vmatpush1.bf16.msra.mxu0 %v767
    %1221 = vmatprep.subr.bf16.mxu0 %v772
    %1222 = vmatpush1.bf16.msra.mxu0 %v771
    %1223 = vmatprep.subr.bf16.mxu0 %v776
    %1224 = vmatpush1.bf16.msra.mxu0 %v775
    %1225 = vmatprep.subr.bf16.mxu0 0
    %1226 = vmatpush1.bf16.msra.mxu0 0
    %1227 = vmatprep.subr.bf16.mxu0 0
    %1228 = vmatpush1.bf16.msra.mxu0 0
    %1229 = vmatprep.subr.bf16.mxu0 0
    %1230 = vmatpush1.bf16.msra.mxu0 0
    %1231 = vmatprep.subr.bf16.mxu0 0
    %1232 = vmatpush1.bf16.msra.mxu0 0
    %1233 = vmatprep.subr.bf16.mxu0 0
    %1234 = vmatpush1.bf16.msra.mxu0 0
    %1235 = vmatprep.subr.bf16.mxu0 0
    %1236 = vmatpush1.bf16.msra.mxu0 0
    %1237 = vmatprep.subr.bf16.mxu0 0
    %1238 = vmatpush1.bf16.msra.mxu0 0
    %1239 = vmatprep.subr.bf16.mxu0 0
    %1240 = vmatpush1.bf16.msra.mxu0 0
    %1241 = vmatprep.mubr.bf16.mxu0 0
    %1242 = vmatmul.mubr.bf16.gmra.mrb[0].mxu0 %v1167
    %v1243 = vpop.f32.mrb[0].mxu0
    %v1244 = vadd.f32 0.0, %v1243
    %v1245 = vpop.f32.mrb[0].mxu0
    %v1246 = vadd.f32 0.0, %v1245
    %v1247 = vpop.f32.mrb[0].mxu0
    %v1248 = vpop.f32.mrb[0].mxu0
    %1249 = vdwg.mxu0
    %v1250 = vadd.f32 %v1163, %v1203
    %v1251 = vadd.f32 %v1164, %v1205
    %v1252 = vadd.f32 %v1165, %v1244
    %v1253 = vadd.f32 %v1166, %v1246
    %v1254 = vxor.u32 %v1250, 2147483648
    %v1255 = vmul.f32 %v1254, 1.442695
    %v1256 = vpow.pop %v1255
    %v1257 = vadd.f32 %v1256, 1.0
    %v1258 = vrcp.pop %v1257
    %v1259 = vmul.f32 1.0, %v1258
    %v1260 = vxor.u32 %v1251, 2147483648
    %v1261 = vmul.f32 %v1260, 1.442695
    %v1262 = vpow.pop %v1261
    %v1263 = vadd.f32 %v1262, 1.0
    %v1264 = vrcp.pop %v1263
    %v1265 = vmul.f32 1.0, %v1264
    %v1266 = vtanh.pop %v1252
    %v1267 = vxor.u32 %v1253, 2147483648
    %v1268 = vmul.f32 %v1267, 1.442695
    %v1269 = vpow.pop %v1268
    %v1270 = vadd.f32 %v1269, 1.0
    %v1271 = vrcp.pop %v1270
    %v1272 = vmul.f32 1.0, %v1271
    %v1273 = vmul.f32 %v1265, %v1155
    %v1274 = vmul.f32 %v1259, %v1266
    %v1275 = vadd.f32 %v1273, %v1274
    %v1276 = vtanh.pop %v1275
    %v1277 = vmul.f32 %v1272, %v1276
    %s1278 = scalar_lea.vmem [#allocation2], 24
    %1279 = vst [vmem:[%s1278] sm:$0xff] %v1277
    %s1280 = smul.u32 4, 4
    %s1281 = smul.addr %s1280, 8
    %s1282 = scalar_lea.vmem [#allocation4], %s1281
    %v1283 = vld [vmem:[%s1282] sm:$0xff]
    %v1284 = vld [vmem:[%s1282 + $0x8] sm:$0xff]
    %v1285 = vld [vmem:[%s1282 + $0x10] sm:$0xff]
    %v1286 = vld [vmem:[%s1282 + $0x18] sm:$0xff]
    %v1287 = vpack.c.bf16 %v1277, %v1277
    %1288 = vmatprep.subr.bf16.mxu0 %v746
    %1289 = vmatpush1.bf16.msra.mxu0 %v745
    %1290 = vmatprep.subr.bf16.mxu0 %v750
    %1291 = vmatpush1.bf16.msra.mxu0 %v749
    %1292 = vmatprep.subr.bf16.mxu0 %v754
    %1293 = vmatpush1.bf16.msra.mxu0 %v753
    %1294 = vmatprep.subr.bf16.mxu0 %v758
    %1295 = vmatpush1.bf16.msra.mxu0 %v757
    %1296 = vmatprep.subr.bf16.mxu0 %v762
    %1297 = vmatpush1.bf16.msra.mxu0 %v761
    %1298 = vmatprep.subr.bf16.mxu0 %v766
    %1299 = vmatpush1.bf16.msra.mxu0 %v765
    %1300 = vmatprep.subr.bf16.mxu0 %v770
    %1301 = vmatpush1.bf16.msra.mxu0 %v769
    %1302 = vmatprep.subr.bf16.mxu0 %v774
    %1303 = vmatpush1.bf16.msra.mxu0 %v773
    %1304 = vmatprep.subr.bf16.mxu0 0
    %1305 = vmatpush1.bf16.msra.mxu0 0
    %1306 = vmatprep.subr.bf16.mxu0 0
    %1307 = vmatpush1.bf16.msra.mxu0 0
    %1308 = vmatprep.subr.bf16.mxu0 0
    %1309 = vmatpush1.bf16.msra.mxu0 0
    %1310 = vmatprep.subr.bf16.mxu0 0
    %1311 = vmatpush1.bf16.msra.mxu0 0
    %1312 = vmatprep.subr.bf16.mxu0 0
    %1313 = vmatpush1.bf16.msra.mxu0 0
    %1314 = vmatprep.subr.bf16.mxu0 0
    %1315 = vmatpush1.bf16.msra.mxu0 0
    %1316 = vmatprep.subr.bf16.mxu0 0
    %1317 = vmatpush1.bf16.msra.mxu0 0
    %1318 = vmatprep.subr.bf16.mxu0 0
    %1319 = vmatpush1.bf16.msra.mxu0 0
    %1320 = vmatprep.mubr.bf16.mxu0 0
    %1321 = vmatmul.mubr.bf16.gmra.mrb[0].mxu0 %v1287
    %v1322 = vpop.f32.mrb[0].mxu0
    %v1323 = vadd.f32 0.0, %v1322
    %v1324 = vpop.f32.mrb[0].mxu0
    %v1325 = vadd.f32 0.0, %v1324
    %v1326 = vpop.f32.mrb[0].mxu0
    %v1327 = vpop.f32.mrb[0].mxu0
    %1328 = vdwg.mxu0
    %1329 = vmatprep.subr.bf16.mxu0 %v748
    %1330 = vmatpush1.bf16.msra.mxu0 %v747
    %1331 = vmatprep.subr.bf16.mxu0 %v752
    %1332 = vmatpush1.bf16.msra.mxu0 %v751
    %1333 = vmatprep.subr.bf16.mxu0 %v756
    %1334 = vmatpush1.bf16.msra.mxu0 %v755
    %1335 = vmatprep.subr.bf16.mxu0 %v760
    %1336 = vmatpush1.bf16.msra.mxu0 %v759
    %1337 = vmatprep.subr.bf16.mxu0 %v764
    %1338 = vmatpush1.bf16.msra.mxu0 %v763
    %1339 = vmatprep.subr.bf16.mxu0 %v768
    %1340 = vmatpush1.bf16.msra.mxu0 %v767
    %1341 = vmatprep.subr.bf16.mxu0 %v772
    %1342 = vmatpush1.bf16.msra.mxu0 %v771
    %1343 = vmatprep.subr.bf16.mxu0 %v776
    %1344 = vmatpush1.bf16.msra.mxu0 %v775
    %1345 = vmatprep.subr.bf16.mxu0 0
    %1346 = vmatpush1.bf16.msra.mxu0 0
    %1347 = vmatprep.subr.bf16.mxu0 0
    %1348 = vmatpush1.bf16.msra.mxu0 0
    %1349 = vmatprep.subr.bf16.mxu0 0
    %1350 = vmatpush1.bf16.msra.mxu0 0
    %1351 = vmatprep.subr.bf16.mxu0 0
    %1352 = vmatpush1.bf16.msra.mxu0 0
    %1353 = vmatprep.subr.bf16.mxu0 0
    %1354 = vmatpush1.bf16.msra.mxu0 0
    %1355 = vmatprep.subr.bf16.mxu0 0
    %1356 = vmatpush1.bf16.msra.mxu0 0
    %1357 = vmatprep.subr.bf16.mxu0 0
    %1358 = vmatpush1.bf16.msra.mxu0 0
    %1359 = vmatprep.subr.bf16.mxu0 0
    %1360 = vmatpush1.bf16.msra.mxu0 0
    %1361 = vmatprep.mubr.bf16.mxu0 0
    %1362 = vmatmul.mubr.bf16.gmra.mrb[0].mxu0 %v1287
    %v1363 = vpop.f32.mrb[0].mxu0
    %v1364 = vadd.f32 0.0, %v1363
    %v1365 = vpop.f32.mrb[0].mxu0
    %v1366 = vadd.f32 0.0, %v1365
    %v1367 = vpop.f32.mrb[0].mxu0
    %v1368 = vpop.f32.mrb[0].mxu0
    %1369 = vdwg.mxu0
    %v1370 = vadd.f32 %v1283, %v1323
    %v1371 = vadd.f32 %v1284, %v1325
    %v1372 = vadd.f32 %v1285, %v1364
    %v1373 = vadd.f32 %v1286, %v1366
    %v1374 = vxor.u32 %v1370, 2147483648
    %v1375 = vmul.f32 %v1374, 1.442695
    %v1376 = vpow.pop %v1375
    %v1377 = vadd.f32 %v1376, 1.0
    %v1378 = vrcp.pop %v1377
    %v1379 = vmul.f32 1.0, %v1378
    %v1380 = vxor.u32 %v1371, 2147483648
    %v1381 = vmul.f32 %v1380, 1.442695
    %v1382 = vpow.pop %v1381
    %v1383 = vadd.f32 %v1382, 1.0
    %v1384 = vrcp.pop %v1383
    %v1385 = vmul.f32 1.0, %v1384
    %v1386 = vtanh.pop %v1372
    %v1387 = vxor.u32 %v1373, 2147483648
    %v1388 = vmul.f32 %v1387, 1.442695
    %v1389 = vpow.pop %v1388
    %v1390 = vadd.f32 %v1389, 1.0
    %v1391 = vrcp.pop %v1390
    %v1392 = vmul.f32 1.0, %v1391
    %v1393 = vmul.f32 %v1385, %v1275
    %v1394 = vmul.f32 %v1379, %v1386
    %v1395 = vadd.f32 %v1393, %v1394
    %v1396 = vtanh.pop %v1395
    %v1397 = vmul.f32 %v1392, %v1396
    %s1398 = scalar_lea.vmem [#allocation2], 32
    %1399 = vst [vmem:[%s1398] sm:$0xff] %v1397
    %s1400 = smul.u32 5, 4
    %s1401 = smul.addr %s1400, 8
    %s1402 = scalar_lea.vmem [#allocation4], %s1401
    %v1403 = vld [vmem:[%s1402] sm:$0xff]
    %v1404 = vld [vmem:[%s1402 + $0x8] sm:$0xff]
    %v1405 = vld [vmem:[%s1402 + $0x10] sm:$0xff]
    %v1406 = vld [vmem:[%s1402 + $0x18] sm:$0xff]
    %v1407 = vpack.c.bf16 %v1397, %v1397
    %1408 = vmatprep.subr.bf16.mxu0 %v746
    %1409 = vmatpush1.bf16.msra.mxu0 %v745
    %1410 = vmatprep.subr.bf16.mxu0 %v750
    %1411 = vmatpush1.bf16.msra.mxu0 %v749
    %1412 = vmatprep.subr.bf16.mxu0 %v754
    %1413 = vmatpush1.bf16.msra.mxu0 %v753
    %1414 = vmatprep.subr.bf16.mxu0 %v758
    %1415 = vmatpush1.bf16.msra.mxu0 %v757
    %1416 = vmatprep.subr.bf16.mxu0 %v762
    %1417 = vmatpush1.bf16.msra.mxu0 %v761
    %1418 = vmatprep.subr.bf16.mxu0 %v766
    %1419 = vmatpush1.bf16.msra.mxu0 %v765
    %1420 = vmatprep.subr.bf16.mxu0 %v770
    %1421 = vmatpush1.bf16.msra.mxu0 %v769
    %1422 = vmatprep.subr.bf16.mxu0 %v774
    %1423 = vmatpush1.bf16.msra.mxu0 %v773
    %1424 = vmatprep.subr.bf16.mxu0 0
    %1425 = vmatpush1.bf16.msra.mxu0 0
    %1426 = vmatprep.subr.bf16.mxu0 0
    %1427 = vmatpush1.bf16.msra.mxu0 0
    %1428 = vmatprep.subr.bf16.mxu0 0
    %1429 = vmatpush1.bf16.msra.mxu0 0
    %1430 = vmatprep.subr.bf16.mxu0 0
    %1431 = vmatpush1.bf16.msra.mxu0 0
    %1432 = vmatprep.subr.bf16.mxu0 0
    %1433 = vmatpush1.bf16.msra.mxu0 0
    %1434 = vmatprep.subr.bf16.mxu0 0
    %1435 = vmatpush1.bf16.msra.mxu0 0
    %1436 = vmatprep.subr.bf16.mxu0 0
    %1437 = vmatpush1.bf16.msra.mxu0 0
    %1438 = vmatprep.subr.bf16.mxu0 0
    %1439 = vmatpush1.bf16.msra.mxu0 0
    %1440 = vmatprep.mubr.bf16.mxu0 0
    %1441 = vmatmul.mubr.bf16.gmra.mrb[0].mxu0 %v1407
    %v1442 = vpop.f32.mrb[0].mxu0
    %v1443 = vadd.f32 0.0, %v1442
    %v1444 = vpop.f32.mrb[0].mxu0
    %v1445 = vadd.f32 0.0, %v1444
    %v1446 = vpop.f32.mrb[0].mxu0
    %v1447 = vpop.f32.mrb[0].mxu0
    %1448 = vdwg.mxu0
    %1449 = vmatprep.subr.bf16.mxu0 %v748
    %1450 = vmatpush1.bf16.msra.mxu0 %v747
    %1451 = vmatprep.subr.bf16.mxu0 %v752
    %1452 = vmatpush1.bf16.msra.mxu0 %v751
    %1453 = vmatprep.subr.bf16.mxu0 %v756
    %1454 = vmatpush1.bf16.msra.mxu0 %v755
    %1455 = vmatprep.subr.bf16.mxu0 %v760
    %1456 = vmatpush1.bf16.msra.mxu0 %v759
    %1457 = vmatprep.subr.bf16.mxu0 %v764
    %1458 = vmatpush1.bf16.msra.mxu0 %v763
    %1459 = vmatprep.subr.bf16.mxu0 %v768
    %1460 = vmatpush1.bf16.msra.mxu0 %v767
    %1461 = vmatprep.subr.bf16.mxu0 %v772
    %1462 = vmatpush1.bf16.msra.mxu0 %v771
    %1463 = vmatprep.subr.bf16.mxu0 %v776
    %1464 = vmatpush1.bf16.msra.mxu0 %v775
    %1465 = vmatprep.subr.bf16.mxu0 0
    %1466 = vmatpush1.bf16.msra.mxu0 0
    %1467 = vmatprep.subr.bf16.mxu0 0
    %1468 = vmatpush1.bf16.msra.mxu0 0
    %1469 = vmatprep.subr.bf16.mxu0 0
    %1470 = vmatpush1.bf16.msra.mxu0 0
    %1471 = vmatprep.subr.bf16.mxu0 0
    %1472 = vmatpush1.bf16.msra.mxu0 0
    %1473 = vmatprep.subr.bf16.mxu0 0
    %1474 = vmatpush1.bf16.msra.mxu0 0
    %1475 = vmatprep.subr.bf16.mxu0 0
    %1476 = vmatpush1.bf16.msra.mxu0 0
    %1477 = vmatprep.subr.bf16.mxu0 0
    %1478 = vmatpush1.bf16.msra.mxu0 0
    %1479 = vmatprep.subr.bf16.mxu0 0
    %1480 = vmatpush1.bf16.msra.mxu0 0
    %1481 = vmatprep.mubr.bf16.mxu0 0
    %1482 = vmatmul.mubr.bf16.gmra.mrb[0].mxu0 %v1407
    %v1483 = vpop.f32.mrb[0].mxu0
    %v1484 = vadd.f32 0.0, %v1483
    %v1485 = vpop.f32.mrb[0].mxu0
    %v1486 = vadd.f32 0.0, %v1485
    %v1487 = vpop.f32.mrb[0].mxu0
    %v1488 = vpop.f32.mrb[0].mxu0
    %1489 = vdwg.mxu0
    %v1490 = vadd.f32 %v1403, %v1443
    %v1491 = vadd.f32 %v1404, %v1445
    %v1492 = vadd.f32 %v1405, %v1484
    %v1493 = vadd.f32 %v1406, %v1486
    %v1494 = vxor.u32 %v1490, 2147483648
    %v1495 = vmul.f32 %v1494, 1.442695
    %v1496 = vpow.pop %v1495
    %v1497 = vadd.f32 %v1496, 1.0
    %v1498 = vrcp.pop %v1497
    %v1499 = vmul.f32 1.0, %v1498
    %v1500 = vxor.u32 %v1491, 2147483648
    %v1501 = vmul.f32 %v1500, 1.442695
    %v1502 = vpow.pop %v1501
    %v1503 = vadd.f32 %v1502, 1.0
    %v1504 = vrcp.pop %v1503
    %v1505 = vmul.f32 1.0, %v1504
    %v1506 = vtanh.pop %v1492
    %v1507 = vxor.u32 %v1493, 2147483648
    %v1508 = vmul.f32 %v1507, 1.442695
    %v1509 = vpow.pop %v1508
    %v1510 = vadd.f32 %v1509, 1.0
    %v1511 = vrcp.pop %v1510
    %v1512 = vmul.f32 1.0, %v1511
    %v1513 = vmul.f32 %v1505, %v1395
    %v1514 = vmul.f32 %v1499, %v1506
    %v1515 = vadd.f32 %v1513, %v1514
    %v1516 = vtanh.pop %v1515
    %v1517 = vmul.f32 %v1512, %v1516
    %s1518 = scalar_lea.vmem [#allocation2], 40
    %1519 = vst [vmem:[%s1518] sm:$0xff] %v1517
    %s1520 = smul.u32 6, 4
    %s1521 = smul.addr %s1520, 8
    %s1522 = scalar_lea.vmem [#allocation4], %s1521
    %v1523 = vld [vmem:[%s1522] sm:$0xff]
    %v1524 = vld [vmem:[%s1522 + $0x8] sm:$0xff]
    %v1525 = vld [vmem:[%s1522 + $0x10] sm:$0xff]
    %v1526 = vld [vmem:[%s1522 + $0x18] sm:$0xff]
    %v1527 = vpack.c.bf16 %v1517, %v1517
    %1528 = vmatprep.subr.bf16.mxu0 %v746
    %1529 = vmatpush1.bf16.msra.mxu0 %v745
    %1530 = vmatprep.subr.bf16.mxu0 %v750
    %1531 = vmatpush1.bf16.msra.mxu0 %v749
    %1532 = vmatprep.subr.bf16.mxu0 %v754
    %1533 = vmatpush1.bf16.msra.mxu0 %v753
    %1534 = vmatprep.subr.bf16.mxu0 %v758
    %1535 = vmatpush1.bf16.msra.mxu0 %v757
    %1536 = vmatprep.subr.bf16.mxu0 %v762
    %1537 = vmatpush1.bf16.msra.mxu0 %v761
    %1538 = vmatprep.subr.bf16.mxu0 %v766
    %1539 = vmatpush1.bf16.msra.mxu0 %v765
    %1540 = vmatprep.subr.bf16.mxu0 %v770
    %1541 = vmatpush1.bf16.msra.mxu0 %v769
    %1542 = vmatprep.subr.bf16.mxu0 %v774
    %1543 = vmatpush1.bf16.msra.mxu0 %v773
    %1544 = vmatprep.subr.bf16.mxu0 0
    %1545 = vmatpush1.bf16.msra.mxu0 0
    %1546 = vmatprep.subr.bf16.mxu0 0
    %1547 = vmatpush1.bf16.msra.mxu0 0
    %1548 = vmatprep.subr.bf16.mxu0 0
    %1549 = vmatpush1.bf16.msra.mxu0 0
    %1550 = vmatprep.subr.bf16.mxu0 0
    %1551 = vmatpush1.bf16.msra.mxu0 0
    %1552 = vmatprep.subr.bf16.mxu0 0
    %1553 = vmatpush1.bf16.msra.mxu0 0
    %1554 = vmatprep.subr.bf16.mxu0 0
    %1555 = vmatpush1.bf16.msra.mxu0 0
    %1556 = vmatprep.subr.bf16.mxu0 0
    %1557 = vmatpush1.bf16.msra.mxu0 0
    %1558 = vmatprep.subr.bf16.mxu0 0
    %1559 = vmatpush1.bf16.msra.mxu0 0
    %1560 = vmatprep.mubr.bf16.mxu0 0
    %1561 = vmatmul.mubr.bf16.gmra.mrb[0].mxu0 %v1527
    %v1562 = vpop.f32.mrb[0].mxu0
    %v1563 = vadd.f32 0.0, %v1562
    %v1564 = vpop.f32.mrb[0].mxu0
    %v1565 = vadd.f32 0.0, %v1564
    %v1566 = vpop.f32.mrb[0].mxu0
    %v1567 = vpop.f32.mrb[0].mxu0
    %1568 = vdwg.mxu0
    %1569 = vmatprep.subr.bf16.mxu0 %v748
    %1570 = vmatpush1.bf16.msra.mxu0 %v747
    %1571 = vmatprep.subr.bf16.mxu0 %v752
    %1572 = vmatpush1.bf16.msra.mxu0 %v751
    %1573 = vmatprep.subr.bf16.mxu0 %v756
    %1574 = vmatpush1.bf16.msra.mxu0 %v755
    %1575 = vmatprep.subr.bf16.mxu0 %v760
    %1576 = vmatpush1.bf16.msra.mxu0 %v759
    %1577 = vmatprep.subr.bf16.mxu0 %v764
    %1578 = vmatpush1.bf16.msra.mxu0 %v763
    %1579 = vmatprep.subr.bf16.mxu0 %v768
    %1580 = vmatpush1.bf16.msra.mxu0 %v767
    %1581 = vmatprep.subr.bf16.mxu0 %v772
    %1582 = vmatpush1.bf16.msra.mxu0 %v771
    %1583 = vmatprep.subr.bf16.mxu0 %v776
    %1584 = vmatpush1.bf16.msra.mxu0 %v775
    %1585 = vmatprep.subr.bf16.mxu0 0
    %1586 = vmatpush1.bf16.msra.mxu0 0
    %1587 = vmatprep.subr.bf16.mxu0 0
    %1588 = vmatpush1.bf16.msra.mxu0 0
    %1589 = vmatprep.subr.bf16.mxu0 0
    %1590 = vmatpush1.bf16.msra.mxu0 0
    %1591 = vmatprep.subr.bf16.mxu0 0
    %1592 = vmatpush1.bf16.msra.mxu0 0
    %1593 = vmatprep.subr.bf16.mxu0 0
    %1594 = vmatpush1.bf16.msra.mxu0 0
    %1595 = vmatprep.subr.bf16.mxu0 0
    %1596 = vmatpush1.bf16.msra.mxu0 0
    %1597 = vmatprep.subr.bf16.mxu0 0
    %1598 = vmatpush1.bf16.msra.mxu0 0
    %1599 = vmatprep.subr.bf16.mxu0 0
    %1600 = vmatpush1.bf16.msra.mxu0 0
    %1601 = vmatprep.mubr.bf16.mxu0 0
    %1602 = vmatmul.mubr.bf16.gmra.mrb[0].mxu0 %v1527
    %v1603 = vpop.f32.mrb[0].mxu0
    %v1604 = vadd.f32 0.0, %v1603
    %v1605 = vpop.f32.mrb[0].mxu0
    %v1606 = vadd.f32 0.0, %v1605
    %v1607 = vpop.f32.mrb[0].mxu0
    %v1608 = vpop.f32.mrb[0].mxu0
    %1609 = vdwg.mxu0
    %v1610 = vadd.f32 %v1523, %v1563
    %v1611 = vadd.f32 %v1524, %v1565
    %v1612 = vadd.f32 %v1525, %v1604
    %v1613 = vadd.f32 %v1526, %v1606
    %v1614 = vxor.u32 %v1610, 2147483648
    %v1615 = vmul.f32 %v1614, 1.442695
    %v1616 = vpow.pop %v1615
    %v1617 = vadd.f32 %v1616, 1.0
    %v1618 = vrcp.pop %v1617
    %v1619 = vmul.f32 1.0, %v1618
    %v1620 = vxor.u32 %v1611, 2147483648
    %v1621 = vmul.f32 %v1620, 1.442695
    %v1622 = vpow.pop %v1621
    %v1623 = vadd.f32 %v1622, 1.0
    %v1624 = vrcp.pop %v1623
    %v1625 = vmul.f32 1.0, %v1624
    %v1626 = vtanh.pop %v1612
    %v1627 = vxor.u32 %v1613, 2147483648
    %v1628 = vmul.f32 %v1627, 1.442695
    %v1629 = vpow.pop %v1628
    %v1630 = vadd.f32 %v1629, 1.0
    %v1631 = vrcp.pop %v1630
    %v1632 = vmul.f32 1.0, %v1631
    %v1633 = vmul.f32 %v1625, %v1515
    %v1634 = vmul.f32 %v1619, %v1626
    %v1635 = vadd.f32 %v1633, %v1634
    %v1636 = vtanh.pop %v1635
    %v1637 = vmul.f32 %v1632, %v1636
    %s1638 = scalar_lea.vmem [#allocation2], 48
    %1639 = vst [vmem:[%s1638] sm:$0xff] %v1637
    %s1640 = smul.u32 7, 4
    %s1641 = smul.addr %s1640, 8
    %s1642 = scalar_lea.vmem [#allocation4], %s1641
    %v1643 = vld [vmem:[%s1642] sm:$0xff]
    %v1644 = vld [vmem:[%s1642 + $0x8] sm:$0xff]
    %v1645 = vld [vmem:[%s1642 + $0x10] sm:$0xff]
    %v1646 = vld [vmem:[%s1642 + $0x18] sm:$0xff]
    %v1647 = vpack.c.bf16 %v1637, %v1637
    %1648 = vmatprep.subr.bf16.mxu0 %v746
    %1649 = vmatpush1.bf16.msra.mxu0 %v745
    %1650 = vmatprep.subr.bf16.mxu0 %v750
    %1651 = vmatpush1.bf16.msra.mxu0 %v749
    %1652 = vmatprep.subr.bf16.mxu0 %v754
    %1653 = vmatpush1.bf16.msra.mxu0 %v753
    %1654 = vmatprep.subr.bf16.mxu0 %v758
    %1655 = vmatpush1.bf16.msra.mxu0 %v757
    %1656 = vmatprep.subr.bf16.mxu0 %v762
    %1657 = vmatpush1.bf16.msra.mxu0 %v761
    %1658 = vmatprep.subr.bf16.mxu0 %v766
    %1659 = vmatpush1.bf16.msra.mxu0 %v765
    %1660 = vmatprep.subr.bf16.mxu0 %v770
    %1661 = vmatpush1.bf16.msra.mxu0 %v769
    %1662 = vmatprep.subr.bf16.mxu0 %v774
    %1663 = vmatpush1.bf16.msra.mxu0 %v773
    %1664 = vmatprep.subr.bf16.mxu0 0
    %1665 = vmatpush1.bf16.msra.mxu0 0
    %1666 = vmatprep.subr.bf16.mxu0 0
    %1667 = vmatpush1.bf16.msra.mxu0 0
    %1668 = vmatprep.subr.bf16.mxu0 0
    %1669 = vmatpush1.bf16.msra.mxu0 0
    %1670 = vmatprep.subr.bf16.mxu0 0
    %1671 = vmatpush1.bf16.msra.mxu0 0
    %1672 = vmatprep.subr.bf16.mxu0 0
    %1673 = vmatpush1.bf16.msra.mxu0 0
    %1674 = vmatprep.subr.bf16.mxu0 0
    %1675 = vmatpush1.bf16.msra.mxu0 0
    %1676 = vmatprep.subr.bf16.mxu0 0
    %1677 = vmatpush1.bf16.msra.mxu0 0
    %1678 = vmatprep.subr.bf16.mxu0 0
    %1679 = vmatpush1.bf16.msra.mxu0 0
    %1680 = vmatprep.mubr.bf16.mxu0 0
    %1681 = vmatmul.mubr.bf16.gmra.mrb[0].mxu0 %v1647
    %v1682 = vpop.f32.mrb[0].mxu0
    %v1683 = vadd.f32 0.0, %v1682
    %v1684 = vpop.f32.mrb[0].mxu0
    %v1685 = vadd.f32 0.0, %v1684
    %v1686 = vpop.f32.mrb[0].mxu0
    %v1687 = vpop.f32.mrb[0].mxu0
    %1688 = vdwg.mxu0
    %1689 = vmatprep.subr.bf16.mxu0 %v748
    %1690 = vmatpush1.bf16.msra.mxu0 %v747
    %1691 = vmatprep.subr.bf16.mxu0 %v752
    %1692 = vmatpush1.bf16.msra.mxu0 %v751
    %1693 = vmatprep.subr.bf16.mxu0 %v756
    %1694 = vmatpush1.bf16.msra.mxu0 %v755
    %1695 = vmatprep.subr.bf16.mxu0 %v760
    %1696 = vmatpush1.bf16.msra.mxu0 %v759
    %1697 = vmatprep.subr.bf16.mxu0 %v764
    %1698 = vmatpush1.bf16.msra.mxu0 %v763
    %1699 = vmatprep.subr.bf16.mxu0 %v768
    %1700 = vmatpush1.bf16.msra.mxu0 %v767
    %1701 = vmatprep.subr.bf16.mxu0 %v772
    %1702 = vmatpush1.bf16.msra.mxu0 %v771
    %1703 = vmatprep.subr.bf16.mxu0 %v776
    %1704 = vmatpush1.bf16.msra.mxu0 %v775
    %1705 = vmatprep.subr.bf16.mxu0 0
    %1706 = vmatpush1.bf16.msra.mxu0 0
    %1707 = vmatprep.subr.bf16.mxu0 0
    %1708 = vmatpush1.bf16.msra.mxu0 0
    %1709 = vmatprep.subr.bf16.mxu0 0
    %1710 = vmatpush1.bf16.msra.mxu0 0
    %1711 = vmatprep.subr.bf16.mxu0 0
    %1712 = vmatpush1.bf16.msra.mxu0 0
    %1713 = vmatprep.subr.bf16.mxu0 0
    %1714 = vmatpush1.bf16.msra.mxu0 0
    %1715 = vmatprep.subr.bf16.mxu0 0
    %1716 = vmatpush1.bf16.msra.mxu0 0
    %1717 = vmatprep.subr.bf16.mxu0 0
    %1718 = vmatpush1.bf16.msra.mxu0 0
    %1719 = vmatprep.subr.bf16.mxu0 0
    %1720 = vmatpush1.bf16.msra.mxu0 0
    %1721 = vmatprep.mubr.bf16.mxu0 0
    %1722 = vmatmul.mubr.bf16.gmra.mrb[0].mxu0 %v1647
    %v1723 = vpop.f32.mrb[0].mxu0
    %v1724 = vadd.f32 0.0, %v1723
    %v1725 = vpop.f32.mrb[0].mxu0
    %v1726 = vadd.f32 0.0, %v1725
    %v1727 = vpop.f32.mrb[0].mxu0
    %v1728 = vpop.f32.mrb[0].mxu0
    %1729 = vdwg.mxu0
    %v1730 = vadd.f32 %v1643, %v1683
    %v1731 = vadd.f32 %v1644, %v1685
    %v1732 = vadd.f32 %v1645, %v1724
    %v1733 = vadd.f32 %v1646, %v1726
    %v1734 = vxor.u32 %v1730, 2147483648
    %v1735 = vmul.f32 %v1734, 1.442695
    %v1736 = vpow.pop %v1735
    %v1737 = vadd.f32 %v1736, 1.0
    %v1738 = vrcp.pop %v1737
    %v1739 = vmul.f32 1.0, %v1738
    %v1740 = vxor.u32 %v1731, 2147483648
    %v1741 = vmul.f32 %v1740, 1.442695
    %v1742 = vpow.pop %v1741
    %v1743 = vadd.f32 %v1742, 1.0
    %v1744 = vrcp.pop %v1743
    %v1745 = vmul.f32 1.0, %v1744
    %v1746 = vtanh.pop %v1732
    %v1747 = vxor.u32 %v1733, 2147483648
    %v1748 = vmul.f32 %v1747, 1.442695
    %v1749 = vpow.pop %v1748
    %v1750 = vadd.f32 %v1749, 1.0
    %v1751 = vrcp.pop %v1750
    %v1752 = vmul.f32 1.0, %v1751
    %v1753 = vmul.f32 %v1745, %v1635
    %v1754 = vmul.f32 %v1739, %v1746
    %v1755 = vadd.f32 %v1753, %v1754
    %v1756 = vtanh.pop %v1755
    %v1757 = vmul.f32 %v1752, %v1756
    %s1758 = scalar_lea.vmem [#allocation2], 56
    %1759 = vst [vmem:[%s1758] sm:$0xff] %v1757
    %v1760 = vld [vmem:[#allocation2] sm:$0xff]
    %v1761 = vld [vmem:[#allocation2 + $0x38] sm:$0xff]
    %v1762 = vsel %vm109, %v1760, %v1761
    %1763 = vst [vmem:[#allocation2] sm:$0xff] %v1762
    %v1764 = vsel %vm109, %v1761, %v1760
    %1765 = vst [vmem:[#allocation2 + $0x38] sm:$0xff] %v1764
    %v1766 = vld [vmem:[#allocation2 + $0x8] sm:$0xff]
    %v1767 = vld [vmem:[#allocation2 + $0x30] sm:$0xff]
    %v1768 = vsel %vm109, %v1766, %v1767
    %1769 = vst [vmem:[#allocation2 + $0x8] sm:$0xff] %v1768
    %v1770 = vsel %vm109, %v1767, %v1766
    %1771 = vst [vmem:[#allocation2 + $0x30] sm:$0xff] %v1770
    %v1772 = vld [vmem:[#allocation2 + $0x10] sm:$0xff]
    %v1773 = vld [vmem:[#allocation2 + $0x28] sm:$0xff]
    %v1774 = vsel %vm109, %v1772, %v1773
    %1775 = vst [vmem:[#allocation2 + $0x10] sm:$0xff] %v1774
    %v1776 = vsel %vm109, %v1773, %v1772
    %1777 = vst [vmem:[#allocation2 + $0x28] sm:$0xff] %v1776
    %v1778 = vld [vmem:[#allocation2 + $0x18] sm:$0xff]
    %v1779 = vld [vmem:[#allocation2 + $0x20] sm:$0xff]
    %v1780 = vsel %vm109, %v1778, %v1779
    %1781 = vst [vmem:[#allocation2 + $0x18] sm:$0xff] %v1780
    %v1782 = vsel %vm109, %v1779, %v1778
    %1783 = vst [vmem:[#allocation2 + $0x20] sm:$0xff] %v1782
    %v1784 = vld [vmem:[#allocation2] sm:$0xff]
    %v1785 = vld [vmem:[#allocation2 + $0x8] sm:$0xff]
    %v1786 = vld [vmem:[#allocation2 + $0x10] sm:$0xff]
    %v1787 = vld [vmem:[#allocation2 + $0x18] sm:$0xff]
    %v1788 = vld [vmem:[#allocation2 + $0x20] sm:$0xff]
    %v1789 = vld [vmem:[#allocation2 + $0x28] sm:$0xff]
    %v1790 = vld [vmem:[#allocation2 + $0x30] sm:$0xff]
    %v1791 = vld [vmem:[#allocation2 + $0x38] sm:$0xff]
    %v1792 = vpack.c.bf16 %v1785, %v1784
    %v1793 = vpack.c.bf16 %v1787, %v1786
    %v1794 = vpack.c.bf16 %v1789, %v1788
    %v1795 = vpack.c.bf16 %v1791, %v1790
    %s1796 = scalar_lea.vmem [#allocation5], 256
    %v1797 = vld [vmem:[%s1796] sm:$0xff]
    %v1798 = vld [vmem:[%s1796 + $0x8] sm:$0xff]
    %v1799 = vld [vmem:[%s1796 + $0x10] sm:$0xff]
    %v1800 = vld [vmem:[%s1796 + $0x18] sm:$0xff]
    %v1801 = vld [vmem:[%s1796 + $0x20] sm:$0xff]
    %v1802 = vld [vmem:[%s1796 + $0x28] sm:$0xff]
    %v1803 = vld [vmem:[%s1796 + $0x30] sm:$0xff]
    %v1804 = vld [vmem:[%s1796 + $0x38] sm:$0xff]
    %v1805 = vld [vmem:[%s1796 + $0x40] sm:$0xff]
    %v1806 = vld [vmem:[%s1796 + $0x48] sm:$0xff]
    %v1807 = vld [vmem:[%s1796 + $0x50] sm:$0xff]
    %v1808 = vld [vmem:[%s1796 + $0x58] sm:$0xff]
    %v1809 = vld [vmem:[%s1796 + $0x60] sm:$0xff]
    %v1810 = vld [vmem:[%s1796 + $0x68] sm:$0xff]
    %v1811 = vld [vmem:[%s1796 + $0x70] sm:$0xff]
    %v1812 = vld [vmem:[%s1796 + $0x78] sm:$0xff]
    %v1813 = vld [vmem:[%s1796 + $0x80] sm:$0xff]
    %v1814 = vld [vmem:[%s1796 + $0x88] sm:$0xff]
    %v1815 = vld [vmem:[%s1796 + $0x90] sm:$0xff]
    %v1816 = vld [vmem:[%s1796 + $0x98] sm:$0xff]
    %v1817 = vld [vmem:[%s1796 + $0xa0] sm:$0xff]
    %v1818 = vld [vmem:[%s1796 + $0xa8] sm:$0xff]
    %v1819 = vld [vmem:[%s1796 + $0xb0] sm:$0xff]
    %v1820 = vld [vmem:[%s1796 + $0xb8] sm:$0xff]
    %v1821 = vld [vmem:[%s1796 + $0xc0] sm:$0xff]
    %v1822 = vld [vmem:[%s1796 + $0xc8] sm:$0xff]
    %v1823 = vld [vmem:[%s1796 + $0xd0] sm:$0xff]
    %v1824 = vld [vmem:[%s1796 + $0xd8] sm:$0xff]
    %v1825 = vld [vmem:[%s1796 + $0xe0] sm:$0xff]
    %v1826 = vld [vmem:[%s1796 + $0xe8] sm:$0xff]
    %v1827 = vld [vmem:[%s1796 + $0xf0] sm:$0xff]
    %v1828 = vld [vmem:[%s1796 + $0xf8] sm:$0xff]
    %s1829 = scalar_lea.vmem %s3, 4
    %v1830 = vld [vmem:[%s1829] sm:$0xf]
    %v1832 = vlaneseq
    %v1833 = vshrl.u32 %v1832, 7
    %v1834 = vsub.s32 0, %v1833
    %v1835 = vrot.slane %v1830, %v1834
    %v1836 = vlaneseq
    %v1837 = vshrl.u32 %v1836, 7
    %v1838 = vsub.s32 1, %v1837
    %v1839 = vrot.slane %v1830, %v1838
    %v1840 = vlaneseq
    %v1841 = vshrl.u32 %v1840, 7
    %v1842 = vsub.s32 2, %v1841
    %v1843 = vrot.slane %v1830, %v1842
    %v1844 = vlaneseq
    %v1845 = vshrl.u32 %v1844, 7
    %v1846 = vsub.s32 3, %v1845
    %v1847 = vrot.slane %v1830, %v1846
    %v1884 = vunpack.c.l.b16 %v1797
    %v1885 = vunpack.c.h.b16 %v1797
    %v1886 = vunpack.c.l.b16 %v1798
    %v1887 = vunpack.c.h.b16 %v1798
    %v1888 = vunpack.c.l.b16 %v1799
    %v1889 = vunpack.c.h.b16 %v1799
    %v1890 = vunpack.c.l.b16 %v1800
    %v1891 = vunpack.c.h.b16 %v1800
    %v1892 = vunpack.c.l.b16 %v1801
    %v1893 = vunpack.c.h.b16 %v1801
    %v1894 = vunpack.c.l.b16 %v1802
    %v1895 = vunpack.c.h.b16 %v1802
    %v1896 = vunpack.c.l.b16 %v1803
    %v1897 = vunpack.c.h.b16 %v1803
    %v1898 = vunpack.c.l.b16 %v1804
    %v1899 = vunpack.c.h.b16 %v1804
    %v1900 = vunpack.c.l.b16 %v1805
    %v1901 = vunpack.c.h.b16 %v1805
    %v1902 = vunpack.c.l.b16 %v1806
    %v1903 = vunpack.c.h.b16 %v1806
    %v1904 = vunpack.c.l.b16 %v1807
    %v1905 = vunpack.c.h.b16 %v1807
    %v1906 = vunpack.c.l.b16 %v1808
    %v1907 = vunpack.c.h.b16 %v1808
    %v1908 = vunpack.c.l.b16 %v1809
    %v1909 = vunpack.c.h.b16 %v1809
    %v1910 = vunpack.c.l.b16 %v1810
    %v1911 = vunpack.c.h.b16 %v1810
    %v1912 = vunpack.c.l.b16 %v1811
    %v1913 = vunpack.c.h.b16 %v1811
    %v1914 = vunpack.c.l.b16 %v1812
    %v1915 = vunpack.c.h.b16 %v1812
    %v1916 = vunpack.c.l.b16 %v1813
    %v1917 = vunpack.c.h.b16 %v1813
    %v1918 = vunpack.c.l.b16 %v1814
    %v1919 = vunpack.c.h.b16 %v1814
    %v1920 = vunpack.c.l.b16 %v1815
    %v1921 = vunpack.c.h.b16 %v1815
    %v1922 = vunpack.c.l.b16 %v1816
    %v1923 = vunpack.c.h.b16 %v1816
    %v1924 = vunpack.c.l.b16 %v1817
    %v1925 = vunpack.c.h.b16 %v1817
    %v1926 = vunpack.c.l.b16 %v1818
    %v1927 = vunpack.c.h.b16 %v1818
    %v1928 = vunpack.c.l.b16 %v1819
    %v1929 = vunpack.c.h.b16 %v1819
    %v1930 = vunpack.c.l.b16 %v1820
    %v1931 = vunpack.c.h.b16 %v1820
    %v1932 = vunpack.c.l.b16 %v1821
    %v1933 = vunpack.c.h.b16 %v1821
    %v1934 = vunpack.c.l.b16 %v1822
    %v1935 = vunpack.c.h.b16 %v1822
    %v1936 = vunpack.c.l.b16 %v1823
    %v1937 = vunpack.c.h.b16 %v1823
    %v1938 = vunpack.c.l.b16 %v1824
    %v1939 = vunpack.c.h.b16 %v1824
    %v1940 = vunpack.c.l.b16 %v1825
    %v1941 = vunpack.c.h.b16 %v1825
    %v1942 = vunpack.c.l.b16 %v1826
    %v1943 = vunpack.c.h.b16 %v1826
    %v1944 = vunpack.c.l.b16 %v1827
    %v1945 = vunpack.c.h.b16 %v1827
    %v1946 = vunpack.c.l.b16 %v1828
    %v1947 = vunpack.c.h.b16 %v1828
    %v1948 = vpack.c.b16 %v1888, %v1884
    %v1949 = vpack.c.b16 %v1889, %v1885
    %v1950 = vpack.c.b16 %v1890, %v1886
    %v1951 = vpack.c.b16 %v1891, %v1887
    %v1952 = vpack.c.b16 %v1896, %v1892
    %v1953 = vpack.c.b16 %v1897, %v1893
    %v1954 = vpack.c.b16 %v1898, %v1894
    %v1955 = vpack.c.b16 %v1899, %v1895
    %v1956 = vpack.c.b16 %v1904, %v1900
    %v1957 = vpack.c.b16 %v1905, %v1901
    %v1958 = vpack.c.b16 %v1906, %v1902
    %v1959 = vpack.c.b16 %v1907, %v1903
    %v1960 = vpack.c.b16 %v1912, %v1908
    %v1961 = vpack.c.b16 %v1913, %v1909
    %v1962 = vpack.c.b16 %v1914, %v1910
    %v1963 = vpack.c.b16 %v1915, %v1911
    %v1964 = vpack.c.b16 %v1920, %v1916
    %v1965 = vpack.c.b16 %v1921, %v1917
    %v1966 = vpack.c.b16 %v1922, %v1918
    %v1967 = vpack.c.b16 %v1923, %v1919
    %v1968 = vpack.c.b16 %v1928, %v1924
    %v1969 = vpack.c.b16 %v1929, %v1925
    %v1970 = vpack.c.b16 %v1930, %v1926
    %v1971 = vpack.c.b16 %v1931, %v1927
    %v1972 = vpack.c.b16 %v1936, %v1932
    %v1973 = vpack.c.b16 %v1937, %v1933
    %v1974 = vpack.c.b16 %v1938, %v1934
    %v1975 = vpack.c.b16 %v1939, %v1935
    %v1976 = vpack.c.b16 %v1944, %v1940
    %v1977 = vpack.c.b16 %v1945, %v1941
    %v1978 = vpack.c.b16 %v1946, %v1942
    %v1979 = vpack.c.b16 %v1947, %v1943
    %2012 = vmatprep.subr.bf16.mxu0 %v1949
    %2013 = vmatpush1.bf16.msra.mxu0 %v1948
    %2014 = vmatprep.subr.bf16.mxu0 %v1953
    %2015 = vmatpush1.bf16.msra.mxu0 %v1952
    %2016 = vmatprep.subr.bf16.mxu0 %v1957
    %2017 = vmatpush1.bf16.msra.mxu0 %v1956
    %2018 = vmatprep.subr.bf16.mxu0 %v1961
    %2019 = vmatpush1.bf16.msra.mxu0 %v1960
    %2020 = vmatprep.subr.bf16.mxu0 %v1965
    %2021 = vmatpush1.bf16.msra.mxu0 %v1964
    %2022 = vmatprep.subr.bf16.mxu0 %v1969
    %2023 = vmatpush1.bf16.msra.mxu0 %v1968
    %2024 = vmatprep.subr.bf16.mxu0 %v1973
    %2025 = vmatpush1.bf16.msra.mxu0 %v1972
    %2026 = vmatprep.subr.bf16.mxu0 %v1977
    %2027 = vmatpush1.bf16.msra.mxu0 %v1976
    %2028 = vmatprep.subr.bf16.mxu0 0
    %2029 = vmatpush1.bf16.msra.mxu0 0
    %2030 = vmatprep.subr.bf16.mxu0 0
    %2031 = vmatpush1.bf16.msra.mxu0 0
    %2032 = vmatprep.subr.bf16.mxu0 0
    %2033 = vmatpush1.bf16.msra.mxu0 0
    %2034 = vmatprep.subr.bf16.mxu0 0
    %2035 = vmatpush1.bf16.msra.mxu0 0
    %2036 = vmatprep.subr.bf16.mxu0 0
    %2037 = vmatpush1.bf16.msra.mxu0 0
    %2038 = vmatprep.subr.bf16.mxu0 0
    %2039 = vmatpush1.bf16.msra.mxu0 0
    %2040 = vmatprep.subr.bf16.mxu0 0
    %2041 = vmatpush1.bf16.msra.mxu0 0
    %2042 = vmatprep.subr.bf16.mxu0 0
    %2043 = vmatpush1.bf16.msra.mxu0 0
    %2044 = vmatprep.mubr.bf16.mxu0 0
    %2045 = vmatmul.mubr.bf16.gmra.mrb[0].mxu0 %v1792
    %v2046 = vpop.f32.mrb[0].mxu0
    %v2047 = vadd.f32 %v1835, %v2046
    %v2048 = vpop.f32.mrb[0].mxu0
    %v2049 = vadd.f32 %v1839, %v2048
    %v2050 = vpop.f32.mrb[0].mxu0
    %v2051 = vadd.f32 %v1835, %v2050
    %v2052 = vpop.f32.mrb[0].mxu0
    %v2053 = vadd.f32 %v1839, %v2052
    %2054 = vmatprep.mubr.bf16.mxu0 0
    %2055 = vmatmul.mubr.bf16.gmra.mrb[0].mxu0 %v1793
    %v2056 = vpop.f32.mrb[0].mxu0
    %v2057 = vadd.f32 %v1835, %v2056
    %v2058 = vpop.f32.mrb[0].mxu0
    %v2059 = vadd.f32 %v1839, %v2058
    %v2060 = vpop.f32.mrb[0].mxu0
    %v2061 = vadd.f32 %v1835, %v2060
    %v2062 = vpop.f32.mrb[0].mxu0
    %v2063 = vadd.f32 %v1839, %v2062
    %2064 = vmatprep.mubr.bf16.mxu0 0
    %2065 = vmatmul.mubr.bf16.gmra.mrb[0].mxu0 %v1794
    %v2066 = vpop.f32.mrb[0].mxu0
    %v2067 = vadd.f32 %v1835, %v2066
    %v2068 = vpop.f32.mrb[0].mxu0
    %v2069 = vadd.f32 %v1839, %v2068
    %v2070 = vpop.f32.mrb[0].mxu0
    %v2071 = vadd.f32 %v1835, %v2070
    %v2072 = vpop.f32.mrb[0].mxu0
    %v2073 = vadd.f32 %v1839, %v2072
    %2074 = vmatprep.mubr.bf16.mxu0 0
    %2075 = vmatmul.mubr.bf16.gmra.mrb[0].mxu0 %v1795
    %v2076 = vpop.f32.mrb[0].mxu0
    %v2077 = vadd.f32 %v1835, %v2076
    %v2078 = vpop.f32.mrb[0].mxu0
    %v2079 = vadd.f32 %v1839, %v2078
    %v2080 = vpop.f32.mrb[0].mxu0
    %v2081 = vadd.f32 %v1835, %v2080
    %v2082 = vpop.f32.mrb[0].mxu0
    %v2083 = vadd.f32 %v1839, %v2082
    %2084 = vdwg.mxu0
    %2085 = vmatprep.subr.bf16.mxu0 %v1951
    %2086 = vmatpush1.bf16.msra.mxu0 %v1950
    %2087 = vmatprep.subr.bf16.mxu0 %v1955
    %2088 = vmatpush1.bf16.msra.mxu0 %v1954
    %2089 = vmatprep.subr.bf16.mxu0 %v1959
    %2090 = vmatpush1.bf16.msra.mxu0 %v1958
    %2091 = vmatprep.subr.bf16.mxu0 %v1963
    %2092 = vmatpush1.bf16.msra.mxu0 %v1962
    %2093 = vmatprep.subr.bf16.mxu0 %v1967
    %2094 = vmatpush1.bf16.msra.mxu0 %v1966
    %2095 = vmatprep.subr.bf16.mxu0 %v1971
    %2096 = vmatpush1.bf16.msra.mxu0 %v1970
    %2097 = vmatprep.subr.bf16.mxu0 %v1975
    %2098 = vmatpush1.bf16.msra.mxu0 %v1974
    %2099 = vmatprep.subr.bf16.mxu0 %v1979
    %2100 = vmatpush1.bf16.msra.mxu0 %v1978
    %2101 = vmatprep.subr.bf16.mxu0 0
    %2102 = vmatpush1.bf16.msra.mxu0 0
    %2103 = vmatprep.subr.bf16.mxu0 0
    %2104 = vmatpush1.bf16.msra.mxu0 0
    %2105 = vmatprep.subr.bf16.mxu0 0
    %2106 = vmatpush1.bf16.msra.mxu0 0
    %2107 = vmatprep.subr.bf16.mxu0 0
    %2108 = vmatpush1.bf16.msra.mxu0 0
    %2109 = vmatprep.subr.bf16.mxu0 0
    %2110 = vmatpush1.bf16.msra.mxu0 0
    %2111 = vmatprep.subr.bf16.mxu0 0
    %2112 = vmatpush1.bf16.msra.mxu0 0
    %2113 = vmatprep.subr.bf16.mxu0 0
    %2114 = vmatpush1.bf16.msra.mxu0 0
    %2115 = vmatprep.subr.bf16.mxu0 0
    %2116 = vmatpush1.bf16.msra.mxu0 0
    %2117 = vmatprep.mubr.bf16.mxu0 0
    %2118 = vmatmul.mubr.bf16.gmra.mrb[0].mxu0 %v1792
    %v2119 = vpop.f32.mrb[0].mxu0
    %v2120 = vadd.f32 %v1843, %v2119
    %v2121 = vpop.f32.mrb[0].mxu0
    %v2122 = vadd.f32 %v1847, %v2121
    %v2123 = vpop.f32.mrb[0].mxu0
    %v2124 = vadd.f32 %v1843, %v2123
    %v2125 = vpop.f32.mrb[0].mxu0
    %v2126 = vadd.f32 %v1847, %v2125
    %2127 = vmatprep.mubr.bf16.mxu0 0
    %2128 = vmatmul.mubr.bf16.gmra.mrb[0].mxu0 %v1793
    %v2129 = vpop.f32.mrb[0].mxu0
    %v2130 = vadd.f32 %v1843, %v2129
    %v2131 = vpop.f32.mrb[0].mxu0
    %v2132 = vadd.f32 %v1847, %v2131
    %v2133 = vpop.f32.mrb[0].mxu0
    %v2134 = vadd.f32 %v1843, %v2133
    %v2135 = vpop.f32.mrb[0].mxu0
    %v2136 = vadd.f32 %v1847, %v2135
    %2137 = vmatprep.mubr.bf16.mxu0 0
    %2138 = vmatmul.mubr.bf16.gmra.mrb[0].mxu0 %v1794
    %v2139 = vpop.f32.mrb[0].mxu0
    %v2140 = vadd.f32 %v1843, %v2139
    %v2141 = vpop.f32.mrb[0].mxu0
    %v2142 = vadd.f32 %v1847, %v2141
    %v2143 = vpop.f32.mrb[0].mxu0
    %v2144 = vadd.f32 %v1843, %v2143
    %v2145 = vpop.f32.mrb[0].mxu0
    %v2146 = vadd.f32 %v1847, %v2145
    %2147 = vmatprep.mubr.bf16.mxu0 0
    %2148 = vmatmul.mubr.bf16.gmra.mrb[0].mxu0 %v1795
    %v2149 = vpop.f32.mrb[0].mxu0
    %v2150 = vadd.f32 %v1843, %v2149
    %v2151 = vpop.f32.mrb[0].mxu0
    %v2152 = vadd.f32 %v1847, %v2151
    %v2153 = vpop.f32.mrb[0].mxu0
    %v2154 = vadd.f32 %v1843, %v2153
    %v2155 = vpop.f32.mrb[0].mxu0
    %v2156 = vadd.f32 %v1847, %v2155
    %2157 = vdwg.mxu0
    %2158 = vst [vmem:[#allocation4] sm:$0xff] %v2047
    %2159 = vst [vmem:[#allocation4 + $0x8] sm:$0xff] %v2049
    %2160 = vst [vmem:[#allocation4 + $0x10] sm:$0xff] %v2120
    %2161 = vst [vmem:[#allocation4 + $0x18] sm:$0xff] %v2122
    %2162 = vst [vmem:[#allocation4 + $0x20] sm:$0xff] %v2051
    %2163 = vst [vmem:[#allocation4 + $0x28] sm:$0xff] %v2053
    %2164 = vst [vmem:[#allocation4 + $0x30] sm:$0xff] %v2124
    %2165 = vst [vmem:[#allocation4 + $0x38] sm:$0xff] %v2126
    %2166 = vst [vmem:[#allocation4 + $0x40] sm:$0xff] %v2057
    %2167 = vst [vmem:[#allocation4 + $0x48] sm:$0xff] %v2059
    %2168 = vst [vmem:[#allocation4 + $0x50] sm:$0xff] %v2130
    %2169 = vst [vmem:[#allocation4 + $0x58] sm:$0xff] %v2132
    %2170 = vst [vmem:[#allocation4 + $0x60] sm:$0xff] %v2061
    %2171 = vst [vmem:[#allocation4 + $0x68] sm:$0xff] %v2063
    %2172 = vst [vmem:[#allocation4 + $0x70] sm:$0xff] %v2134
    %2173 = vst [vmem:[#allocation4 + $0x78] sm:$0xff] %v2136
    %2174 = vst [vmem:[#allocation4 + $0x80] sm:$0xff] %v2067
    %2175 = vst [vmem:[#allocation4 + $0x88] sm:$0xff] %v2069
    %2176 = vst [vmem:[#allocation4 + $0x90] sm:$0xff] %v2140
    %2177 = vst [vmem:[#allocation4 + $0x98] sm:$0xff] %v2142
    %2178 = vst [vmem:[#allocation4 + $0xa0] sm:$0xff] %v2071
    %2179 = vst [vmem:[#allocation4 + $0xa8] sm:$0xff] %v2073
    %2180 = vst [vmem:[#allocation4 + $0xb0] sm:$0xff] %v2144
    %2181 = vst [vmem:[#allocation4 + $0xb8] sm:$0xff] %v2146
    %2182 = vst [vmem:[#allocation4 + $0xc0] sm:$0xff] %v2077
    %2183 = vst [vmem:[#allocation4 + $0xc8] sm:$0xff] %v2079
    %2184 = vst [vmem:[#allocation4 + $0xd0] sm:$0xff] %v2150
    %2185 = vst [vmem:[#allocation4 + $0xd8] sm:$0xff] %v2152
    %2186 = vst [vmem:[#allocation4 + $0xe0] sm:$0xff] %v2081
    %2187 = vst [vmem:[#allocation4 + $0xe8] sm:$0xff] %v2083
    %2188 = vst [vmem:[#allocation4 + $0xf0] sm:$0xff] %v2154
    %2189 = vst [vmem:[#allocation4 + $0xf8] sm:$0xff] %v2156
    %v2190 = vld [vmem:[#allocation4] sm:$0xff]
    %v2191 = vld [vmem:[#allocation4 + $0x8] sm:$0xff]
    %v2192 = vld [vmem:[#allocation4 + $0x10] sm:$0xff]
    %v2193 = vld [vmem:[#allocation4 + $0x18] sm:$0xff]
    %v2194 = vld [vmem:[#allocation4 + $0xe0] sm:$0xff]
    %v2195 = vld [vmem:[#allocation4 + $0xe8] sm:$0xff]
    %v2196 = vld [vmem:[#allocation4 + $0xf0] sm:$0xff]
    %v2197 = vld [vmem:[#allocation4 + $0xf8] sm:$0xff]
    %v2198 = vsel %vm105, %v2190, %v2194
    %v2199 = vsel %vm106, %v2191, %v2195
    %v2200 = vsel %vm107, %v2192, %v2196
    %v2201 = vsel %vm108, %v2193, %v2197
    %2202 = vst [vmem:[#allocation4] sm:$0xff] %v2198
    %2203 = vst [vmem:[#allocation4 + $0x8] sm:$0xff] %v2199
    %2204 = vst [vmem:[#allocation4 + $0x10] sm:$0xff] %v2200
    %2205 = vst [vmem:[#allocation4 + $0x18] sm:$0xff] %v2201
    %v2206 = vsel %vm105, %v2194, %v2190
    %v2207 = vsel %vm106, %v2195, %v2191
    %v2208 = vsel %vm107, %v2196, %v2192
    %v2209 = vsel %vm108, %v2197, %v2193
    %2210 = vst [vmem:[#allocation4 + $0xe0] sm:$0xff] %v2206
    %2211 = vst [vmem:[#allocation4 + $0xe8] sm:$0xff] %v2207
    %2212 = vst [vmem:[#allocation4 + $0xf0] sm:$0xff] %v2208
    %2213 = vst [vmem:[#allocation4 + $0xf8] sm:$0xff] %v2209
    %v2214 = vld [vmem:[#allocation4 + $0x20] sm:$0xff]
    %v2215 = vld [vmem:[#allocation4 + $0x28] sm:$0xff]
    %v2216 = vld [vmem:[#allocation4 + $0x30] sm:$0xff]
    %v2217 = vld [vmem:[#allocation4 + $0x38] sm:$0xff]
    %v2218 = vld [vmem:[#allocation4 + $0xc0] sm:$0xff]
    %v2219 = vld [vmem:[#allocation4 + $0xc8] sm:$0xff]
    %v2220 = vld [vmem:[#allocation4 + $0xd0] sm:$0xff]
    %v2221 = vld [vmem:[#allocation4 + $0xd8] sm:$0xff]
    %v2222 = vsel %vm105, %v2214, %v2218
    %v2223 = vsel %vm106, %v2215, %v2219
    %v2224 = vsel %vm107, %v2216, %v2220
    %v2225 = vsel %vm108, %v2217, %v2221
    %2226 = vst [vmem:[#allocation4 + $0x20] sm:$0xff] %v2222
    %2227 = vst [vmem:[#allocation4 + $0x28] sm:$0xff] %v2223
    %2228 = vst [vmem:[#allocation4 + $0x30] sm:$0xff] %v2224
    %2229 = vst [vmem:[#allocation4 + $0x38] sm:$0xff] %v2225
    %v2230 = vsel %vm105, %v2218, %v2214
    %v2231 = vsel %vm106, %v2219, %v2215
    %v2232 = vsel %vm107, %v2220, %v2216
    %v2233 = vsel %vm108, %v2221, %v2217
    %2234 = vst [vmem:[#allocation4 + $0xc0] sm:$0xff] %v2230
    %2235 = vst [vmem:[#allocation4 + $0xc8] sm:$0xff] %v2231
    %2236 = vst [vmem:[#allocation4 + $0xd0] sm:$0xff] %v2232
    %2237 = vst [vmem:[#allocation4 + $0xd8] sm:$0xff] %v2233
    %v2238 = vld [vmem:[#allocation4 + $0x40] sm:$0xff]
    %v2239 = vld [vmem:[#allocation4 + $0x48] sm:$0xff]
    %v2240 = vld [vmem:[#allocation4 + $0x50] sm:$0xff]
    %v2241 = vld [vmem:[#allocation4 + $0x58] sm:$0xff]
    %v2242 = vld [vmem:[#allocation4 + $0xa0] sm:$0xff]
    %v2243 = vld [vmem:[#allocation4 + $0xa8] sm:$0xff]
    %v2244 = vld [vmem:[#allocation4 + $0xb0] sm:$0xff]
    %v2245 = vld [vmem:[#allocation4 + $0xb8] sm:$0xff]
    %v2246 = vsel %vm105, %v2238, %v2242
    %v2247 = vsel %vm106, %v2239, %v2243
    %v2248 = vsel %vm107, %v2240, %v2244
    %v2249 = vsel %vm108, %v2241, %v2245
    %2250 = vst [vmem:[#allocation4 + $0x40] sm:$0xff] %v2246
    %2251 = vst [vmem:[#allocation4 + $0x48] sm:$0xff] %v2247
    %2252 = vst [vmem:[#allocation4 + $0x50] sm:$0xff] %v2248
    %2253 = vst [vmem:[#allocation4 + $0x58] sm:$0xff] %v2249
    %v2254 = vsel %vm105, %v2242, %v2238
    %v2255 = vsel %vm106, %v2243, %v2239
    %v2256 = vsel %vm107, %v2244, %v2240
    %v2257 = vsel %vm108, %v2245, %v2241
    %2258 = vst [vmem:[#allocation4 + $0xa0] sm:$0xff] %v2254
    %2259 = vst [vmem:[#allocation4 + $0xa8] sm:$0xff] %v2255
    %2260 = vst [vmem:[#allocation4 + $0xb0] sm:$0xff] %v2256
    %2261 = vst [vmem:[#allocation4 + $0xb8] sm:$0xff] %v2257
    %v2262 = vld [vmem:[#allocation4 + $0x60] sm:$0xff]
    %v2263 = vld [vmem:[#allocation4 + $0x68] sm:$0xff]
    %v2264 = vld [vmem:[#allocation4 + $0x70] sm:$0xff]
    %v2265 = vld [vmem:[#allocation4 + $0x78] sm:$0xff]
    %v2266 = vld [vmem:[#allocation4 + $0x80] sm:$0xff]
    %v2267 = vld [vmem:[#allocation4 + $0x88] sm:$0xff]
    %v2268 = vld [vmem:[#allocation4 + $0x90] sm:$0xff]
    %v2269 = vld [vmem:[#allocation4 + $0x98] sm:$0xff]
    %v2270 = vsel %vm105, %v2262, %v2266
    %v2271 = vsel %vm106, %v2263, %v2267
    %v2272 = vsel %vm107, %v2264, %v2268
    %v2273 = vsel %vm108, %v2265, %v2269
    %2274 = vst [vmem:[#allocation4 + $0x60] sm:$0xff] %v2270
    %2275 = vst [vmem:[#allocation4 + $0x68] sm:$0xff] %v2271
    %2276 = vst [vmem:[#allocation4 + $0x70] sm:$0xff] %v2272
    %2277 = vst [vmem:[#allocation4 + $0x78] sm:$0xff] %v2273
    %v2278 = vsel %vm105, %v2266, %v2262
    %v2279 = vsel %vm106, %v2267, %v2263
    %v2280 = vsel %vm107, %v2268, %v2264
    %v2281 = vsel %vm108, %v2269, %v2265
    %2282 = vst [vmem:[#allocation4 + $0x80] sm:$0xff] %v2278
    %2283 = vst [vmem:[#allocation4 + $0x88] sm:$0xff] %v2279
    %2284 = vst [vmem:[#allocation4 + $0x90] sm:$0xff] %v2280
    %2285 = vst [vmem:[#allocation4 + $0x98] sm:$0xff] %v2281
    %s2286 = scalar_lea.vmem [#allocation7], 256
    %v2287 = vld [vmem:[%s2286] sm:$0xff]
    %v2288 = vld [vmem:[%s2286 + $0x8] sm:$0xff]
    %v2289 = vld [vmem:[%s2286 + $0x10] sm:$0xff]
    %v2290 = vld [vmem:[%s2286 + $0x18] sm:$0xff]
    %v2291 = vld [vmem:[%s2286 + $0x20] sm:$0xff]
    %v2292 = vld [vmem:[%s2286 + $0x28] sm:$0xff]
    %v2293 = vld [vmem:[%s2286 + $0x30] sm:$0xff]
    %v2294 = vld [vmem:[%s2286 + $0x38] sm:$0xff]
    %v2295 = vld [vmem:[%s2286 + $0x40] sm:$0xff]
    %v2296 = vld [vmem:[%s2286 + $0x48] sm:$0xff]
    %v2297 = vld [vmem:[%s2286 + $0x50] sm:$0xff]
    %v2298 = vld [vmem:[%s2286 + $0x58] sm:$0xff]
    %v2299 = vld [vmem:[%s2286 + $0x60] sm:$0xff]
    %v2300 = vld [vmem:[%s2286 + $0x68] sm:$0xff]
    %v2301 = vld [vmem:[%s2286 + $0x70] sm:$0xff]
    %v2302 = vld [vmem:[%s2286 + $0x78] sm:$0xff]
    %v2303 = vld [vmem:[%s2286 + $0x80] sm:$0xff]
    %v2304 = vld [vmem:[%s2286 + $0x88] sm:$0xff]
    %v2305 = vld [vmem:[%s2286 + $0x90] sm:$0xff]
    %v2306 = vld [vmem:[%s2286 + $0x98] sm:$0xff]
    %v2307 = vld [vmem:[%s2286 + $0xa0] sm:$0xff]
    %v2308 = vld [vmem:[%s2286 + $0xa8] sm:$0xff]
    %v2309 = vld [vmem:[%s2286 + $0xb0] sm:$0xff]
    %v2310 = vld [vmem:[%s2286 + $0xb8] sm:$0xff]
    %v2311 = vld [vmem:[%s2286 + $0xc0] sm:$0xff]
    %v2312 = vld [vmem:[%s2286 + $0xc8] sm:$0xff]
    %v2313 = vld [vmem:[%s2286 + $0xd0] sm:$0xff]
    %v2314 = vld [vmem:[%s2286 + $0xd8] sm:$0xff]
    %v2315 = vld [vmem:[%s2286 + $0xe0] sm:$0xff]
    %v2316 = vld [vmem:[%s2286 + $0xe8] sm:$0xff]
    %v2317 = vld [vmem:[%s2286 + $0xf0] sm:$0xff]
    %v2318 = vld [vmem:[%s2286 + $0xf8] sm:$0xff]
    %v2319 = vld [vmem:[%s644] sm:$0xff]
    %v2320 = vld [vmem:[%s644 + $0x8] sm:$0xff]
    %v2321 = vld [vmem:[%s644 + $0x10] sm:$0xff]
    %v2322 = vld [vmem:[%s644 + $0x18] sm:$0xff]
    %v2355 = vunpack.c.l.b16 %v2287
    %v2356 = vunpack.c.h.b16 %v2287
    %v2357 = vunpack.c.l.b16 %v2288
    %v2358 = vunpack.c.h.b16 %v2288
    %v2359 = vunpack.c.l.b16 %v2289
    %v2360 = vunpack.c.h.b16 %v2289
    %v2361 = vunpack.c.l.b16 %v2290
    %v2362 = vunpack.c.h.b16 %v2290
    %v2363 = vunpack.c.l.b16 %v2291
    %v2364 = vunpack.c.h.b16 %v2291
    %v2365 = vunpack.c.l.b16 %v2292
    %v2366 = vunpack.c.h.b16 %v2292
    %v2367 = vunpack.c.l.b16 %v2293
    %v2368 = vunpack.c.h.b16 %v2293
    %v2369 = vunpack.c.l.b16 %v2294
    %v2370 = vunpack.c.h.b16 %v2294
    %v2371 = vunpack.c.l.b16 %v2295
    %v2372 = vunpack.c.h.b16 %v2295
    %v2373 = vunpack.c.l.b16 %v2296
    %v2374 = vunpack.c.h.b16 %v2296
    %v2375 = vunpack.c.l.b16 %v2297
    %v2376 = vunpack.c.h.b16 %v2297
    %v2377 = vunpack.c.l.b16 %v2298
    %v2378 = vunpack.c.h.b16 %v2298
    %v2379 = vunpack.c.l.b16 %v2299
    %v2380 = vunpack.c.h.b16 %v2299
    %v2381 = vunpack.c.l.b16 %v2300
    %v2382 = vunpack.c.h.b16 %v2300
    %v2383 = vunpack.c.l.b16 %v2301
    %v2384 = vunpack.c.h.b16 %v2301
    %v2385 = vunpack.c.l.b16 %v2302
    %v2386 = vunpack.c.h.b16 %v2302
    %v2387 = vunpack.c.l.b16 %v2303
    %v2388 = vunpack.c.h.b16 %v2303
    %v2389 = vunpack.c.l.b16 %v2304
    %v2390 = vunpack.c.h.b16 %v2304
    %v2391 = vunpack.c.l.b16 %v2305
    %v2392 = vunpack.c.h.b16 %v2305
    %v2393 = vunpack.c.l.b16 %v2306
    %v2394 = vunpack.c.h.b16 %v2306
    %v2395 = vunpack.c.l.b16 %v2307
    %v2396 = vunpack.c.h.b16 %v2307
    %v2397 = vunpack.c.l.b16 %v2308
    %v2398 = vunpack.c.h.b16 %v2308
    %v2399 = vunpack.c.l.b16 %v2309
    %v2400 = vunpack.c.h.b16 %v2309
    %v2401 = vunpack.c.l.b16 %v2310
    %v2402 = vunpack.c.h.b16 %v2310
    %v2403 = vunpack.c.l.b16 %v2311
    %v2404 = vunpack.c.h.b16 %v2311
    %v2405 = vunpack.c.l.b16 %v2312
    %v2406 = vunpack.c.h.b16 %v2312
    %v2407 = vunpack.c.l.b16 %v2313
    %v2408 = vunpack.c.h.b16 %v2313
    %v2409 = vunpack.c.l.b16 %v2314
    %v2410 = vunpack.c.h.b16 %v2314
    %v2411 = vunpack.c.l.b16 %v2315
    %v2412 = vunpack.c.h.b16 %v2315
    %v2413 = vunpack.c.l.b16 %v2316
    %v2414 = vunpack.c.h.b16 %v2316
    %v2415 = vunpack.c.l.b16 %v2317
    %v2416 = vunpack.c.h.b16 %v2317
    %v2417 = vunpack.c.l.b16 %v2318
    %v2418 = vunpack.c.h.b16 %v2318
    %v2419 = vpack.c.b16 %v2359, %v2355
    %v2420 = vpack.c.b16 %v2360, %v2356
    %v2421 = vpack.c.b16 %v2361, %v2357
    %v2422 = vpack.c.b16 %v2362, %v2358
    %v2423 = vpack.c.b16 %v2367, %v2363
    %v2424 = vpack.c.b16 %v2368, %v2364
    %v2425 = vpack.c.b16 %v2369, %v2365
    %v2426 = vpack.c.b16 %v2370, %v2366
    %v2427 = vpack.c.b16 %v2375, %v2371
    %v2428 = vpack.c.b16 %v2376, %v2372
    %v2429 = vpack.c.b16 %v2377, %v2373
    %v2430 = vpack.c.b16 %v2378, %v2374
    %v2431 = vpack.c.b16 %v2383, %v2379
    %v2432 = vpack.c.b16 %v2384, %v2380
    %v2433 = vpack.c.b16 %v2385, %v2381
    %v2434 = vpack.c.b16 %v2386, %v2382
    %v2435 = vpack.c.b16 %v2391, %v2387
    %v2436 = vpack.c.b16 %v2392, %v2388
    %v2437 = vpack.c.b16 %v2393, %v2389
    %v2438 = vpack.c.b16 %v2394, %v2390
    %v2439 = vpack.c.b16 %v2399, %v2395
    %v2440 = vpack.c.b16 %v2400, %v2396
    %v2441 = vpack.c.b16 %v2401, %v2397
    %v2442 = vpack.c.b16 %v2402, %v2398
    %v2443 = vpack.c.b16 %v2407, %v2403
    %v2444 = vpack.c.b16 %v2408, %v2404
    %v2445 = vpack.c.b16 %v2409, %v2405
    %v2446 = vpack.c.b16 %v2410, %v2406
    %v2447 = vpack.c.b16 %v2415, %v2411
    %v2448 = vpack.c.b16 %v2416, %v2412
    %v2449 = vpack.c.b16 %v2417, %v2413
    %v2450 = vpack.c.b16 %v2418, %v2414
    %2483 = vmatprep.subr.bf16.mxu0 %v2420
    %2484 = vmatpush1.bf16.msra.mxu0 %v2419
    %2485 = vmatprep.subr.bf16.mxu0 %v2424
    %2486 = vmatpush1.bf16.msra.mxu0 %v2423
    %2487 = vmatprep.subr.bf16.mxu0 %v2428
    %2488 = vmatpush1.bf16.msra.mxu0 %v2427
    %2489 = vmatprep.subr.bf16.mxu0 %v2432
    %2490 = vmatpush1.bf16.msra.mxu0 %v2431
    %2491 = vmatprep.subr.bf16.mxu0 %v2436
    %2492 = vmatpush1.bf16.msra.mxu0 %v2435
    %2493 = vmatprep.subr.bf16.mxu0 %v2440
    %2494 = vmatpush1.bf16.msra.mxu0 %v2439
    %2495 = vmatprep.subr.bf16.mxu0 %v2444
    %2496 = vmatpush1.bf16.msra.mxu0 %v2443
    %2497 = vmatprep.subr.bf16.mxu0 %v2448
    %2498 = vmatpush1.bf16.msra.mxu0 %v2447
    %2499 = vmatprep.subr.bf16.mxu0 0
    %2500 = vmatpush1.bf16.msra.mxu0 0
    %2501 = vmatprep.subr.bf16.mxu0 0
    %2502 = vmatpush1.bf16.msra.mxu0 0
    %2503 = vmatprep.subr.bf16.mxu0 0
    %2504 = vmatpush1.bf16.msra.mxu0 0
    %2505 = vmatprep.subr.bf16.mxu0 0
    %2506 = vmatpush1.bf16.msra.mxu0 0
    %2507 = vmatprep.subr.bf16.mxu0 0
    %2508 = vmatpush1.bf16.msra.mxu0 0
    %2509 = vmatprep.subr.bf16.mxu0 0
    %2510 = vmatpush1.bf16.msra.mxu0 0
    %2511 = vmatprep.subr.bf16.mxu0 0
    %2512 = vmatpush1.bf16.msra.mxu0 0
    %2513 = vmatprep.subr.bf16.mxu0 0
    %2514 = vmatpush1.bf16.msra.mxu0 0
    %2515 = vmatprep.mubr.bf16.mxu0 0
    %2516 = vmatmul.mubr.bf16.gmra.mrb[0].mxu0 0
    %v2517 = vpop.f32.mrb[0].mxu0
    %v2518 = vadd.f32 0.0, %v2517
    %v2519 = vpop.f32.mrb[0].mxu0
    %v2520 = vadd.f32 0.0, %v2519
    %v2521 = vpop.f32.mrb[0].mxu0
    %v2522 = vpop.f32.mrb[0].mxu0
    %2523 = vdwg.mxu0
    %2524 = vmatprep.subr.bf16.mxu0 %v2422
    %2525 = vmatpush1.bf16.msra.mxu0 %v2421
    %2526 = vmatprep.subr.bf16.mxu0 %v2426
    %2527 = vmatpush1.bf16.msra.mxu0 %v2425
    %2528 = vmatprep.subr.bf16.mxu0 %v2430
    %2529 = vmatpush1.bf16.msra.mxu0 %v2429
    %2530 = vmatprep.subr.bf16.mxu0 %v2434
    %2531 = vmatpush1.bf16.msra.mxu0 %v2433
    %2532 = vmatprep.subr.bf16.mxu0 %v2438
    %2533 = vmatpush1.bf16.msra.mxu0 %v2437
    %2534 = vmatprep.subr.bf16.mxu0 %v2442
    %2535 = vmatpush1.bf16.msra.mxu0 %v2441
    %2536 = vmatprep.subr.bf16.mxu0 %v2446
    %2537 = vmatpush1.bf16.msra.mxu0 %v2445
    %2538 = vmatprep.subr.bf16.mxu0 %v2450
    %2539 = vmatpush1.bf16.msra.mxu0 %v2449
    %2540 = vmatprep.subr.bf16.mxu0 0
    %2541 = vmatpush1.bf16.msra.mxu0 0
    %2542 = vmatprep.subr.bf16.mxu0 0
    %2543 = vmatpush1.bf16.msra.mxu0 0
    %2544 = vmatprep.subr.bf16.mxu0 0
    %2545 = vmatpush1.bf16.msra.mxu0 0
    %2546 = vmatprep.subr.bf16.mxu0 0
    %2547 = vmatpush1.bf16.msra.mxu0 0
    %2548 = vmatprep.subr.bf16.mxu0 0
    %2549 = vmatpush1.bf16.msra.mxu0 0
    %2550 = vmatprep.subr.bf16.mxu0 0
    %2551 = vmatpush1.bf16.msra.mxu0 0
    %2552 = vmatprep.subr.bf16.mxu0 0
    %2553 = vmatpush1.bf16.msra.mxu0 0
    %2554 = vmatprep.subr.bf16.mxu0 0
    %2555 = vmatpush1.bf16.msra.mxu0 0
    %2556 = vmatprep.mubr.bf16.mxu0 0
    %2557 = vmatmul.mubr.bf16.gmra.mrb[0].mxu0 0
    %v2558 = vpop.f32.mrb[0].mxu0
    %v2559 = vadd.f32 0.0, %v2558
    %v2560 = vpop.f32.mrb[0].mxu0
    %v2561 = vadd.f32 0.0, %v2560
    %v2562 = vpop.f32.mrb[0].mxu0
    %v2563 = vpop.f32.mrb[0].mxu0
    %2564 = vdwg.mxu0
    %v2565 = vadd.f32 %v2319, %v2518
    %v2566 = vadd.f32 %v2320, %v2520
    %v2567 = vadd.f32 %v2321, %v2559
    %v2568 = vadd.f32 %v2322, %v2561
    %v2569 = vxor.u32 %v2565, 2147483648
    %v2570 = vmul.f32 %v2569, 1.442695
    %v2571 = vpow.pop %v2570
    %v2572 = vadd.f32 %v2571, 1.0
    %v2573 = vrcp.pop %v2572
    %v2574 = vmul.f32 1.0, %v2573
    %v2575 = vxor.u32 %v2566, 2147483648
    %v2576 = vmul.f32 %v2575, 1.442695
    %v2577 = vpow.pop %v2576
    %v2578 = vadd.f32 %v2577, 1.0
    %v2579 = vrcp.pop %v2578
    %v2580 = vmul.f32 1.0, %v2579
    %v2581 = vtanh.pop %v2567
    %v2582 = vxor.u32 %v2568, 2147483648
    %v2583 = vmul.f32 %v2582, 1.442695
    %v2584 = vpow.pop %v2583
    %v2585 = vadd.f32 %v2584, 1.0
    %v2586 = vrcp.pop %v2585
    %v2587 = vmul.f32 1.0, %v2586
    %v2588 = vmul.f32 %v2580, 0.0
    %v2589 = vmul.f32 %v2574, %v2581
    %v2590 = vadd.f32 %v2588, %v2589
    %v2591 = vtanh.pop %v2590
    %v2592 = vmul.f32 %v2587, %v2591
    %2593 = vst [vmem:[#allocation3] sm:$0xff] %v2592
    %v2594 = vld [vmem:[%s922] sm:$0xff]
    %v2595 = vld [vmem:[%s922 + $0x8] sm:$0xff]
    %v2596 = vld [vmem:[%s922 + $0x10] sm:$0xff]
    %v2597 = vld [vmem:[%s922 + $0x18] sm:$0xff]
    %v2598 = vpack.c.bf16 %v2592, %v2592
    %2599 = vmatprep.subr.bf16.mxu0 %v2420
    %2600 = vmatpush1.bf16.msra.mxu0 %v2419
    %2601 = vmatprep.subr.bf16.mxu0 %v2424
    %2602 = vmatpush1.bf16.msra.mxu0 %v2423
    %2603 = vmatprep.subr.bf16.mxu0 %v2428
    %2604 = vmatpush1.bf16.msra.mxu0 %v2427
    %2605 = vmatprep.subr.bf16.mxu0 %v2432
    %2606 = vmatpush1.bf16.msra.mxu0 %v2431
    %2607 = vmatprep.subr.bf16.mxu0 %v2436
    %2608 = vmatpush1.bf16.msra.mxu0 %v2435
    %2609 = vmatprep.subr.bf16.mxu0 %v2440
    %2610 = vmatpush1.bf16.msra.mxu0 %v2439
    %2611 = vmatprep.subr.bf16.mxu0 %v2444
    %2612 = vmatpush1.bf16.msra.mxu0 %v2443
    %2613 = vmatprep.subr.bf16.mxu0 %v2448
    %2614 = vmatpush1.bf16.msra.mxu0 %v2447
    %2615 = vmatprep.subr.bf16.mxu0 0
    %2616 = vmatpush1.bf16.msra.mxu0 0
    %2617 = vmatprep.subr.bf16.mxu0 0
    %2618 = vmatpush1.bf16.msra.mxu0 0
    %2619 = vmatprep.subr.bf16.mxu0 0
    %2620 = vmatpush1.bf16.msra.mxu0 0
    %2621 = vmatprep.subr.bf16.mxu0 0
    %2622 = vmatpush1.bf16.msra.mxu0 0
    %2623 = vmatprep.subr.bf16.mxu0 0
    %2624 = vmatpush1.bf16.msra.mxu0 0
    %2625 = vmatprep.subr.bf16.mxu0 0
    %2626 = vmatpush1.bf16.msra.mxu0 0
    %2627 = vmatprep.subr.bf16.mxu0 0
    %2628 = vmatpush1.bf16.msra.mxu0 0
    %2629 = vmatprep.subr.bf16.mxu0 0
    %2630 = vmatpush1.bf16.msra.mxu0 0
    %2631 = vmatprep.mubr.bf16.mxu0 0
    %2632 = vmatmul.mubr.bf16.gmra.mrb[0].mxu0 %v2598
    %v2633 = vpop.f32.mrb[0].mxu0
    %v2634 = vadd.f32 0.0, %v2633
    %v2635 = vpop.f32.mrb[0].mxu0
    %v2636 = vadd.f32 0.0, %v2635
    %v2637 = vpop.f32.mrb[0].mxu0
    %v2638 = vpop.f32.mrb[0].mxu0
    %2639 = vdwg.mxu0
    %2640 = vmatprep.subr.bf16.mxu0 %v2422
    %2641 = vmatpush1.bf16.msra.mxu0 %v2421
    %2642 = vmatprep.subr.bf16.mxu0 %v2426
    %2643 = vmatpush1.bf16.msra.mxu0 %v2425
    %2644 = vmatprep.subr.bf16.mxu0 %v2430
    %2645 = vmatpush1.bf16.msra.mxu0 %v2429
    %2646 = vmatprep.subr.bf16.mxu0 %v2434
    %2647 = vmatpush1.bf16.msra.mxu0 %v2433
    %2648 = vmatprep.subr.bf16.mxu0 %v2438
    %2649 = vmatpush1.bf16.msra.mxu0 %v2437
    %2650 = vmatprep.subr.bf16.mxu0 %v2442
    %2651 = vmatpush1.bf16.msra.mxu0 %v2441
    %2652 = vmatprep.subr.bf16.mxu0 %v2446
    %2653 = vmatpush1.bf16.msra.mxu0 %v2445
    %2654 = vmatprep.subr.bf16.mxu0 %v2450
    %2655 = vmatpush1.bf16.msra.mxu0 %v2449
    %2656 = vmatprep.subr.bf16.mxu0 0
    %2657 = vmatpush1.bf16.msra.mxu0 0
    %2658 = vmatprep.subr.bf16.mxu0 0
    %2659 = vmatpush1.bf16.msra.mxu0 0
    %2660 = vmatprep.subr.bf16.mxu0 0
    %2661 = vmatpush1.bf16.msra.mxu0 0
    %2662 = vmatprep.subr.bf16.mxu0 0
    %2663 = vmatpush1.bf16.msra.mxu0 0
    %2664 = vmatprep.subr.bf16.mxu0 0
    %2665 = vmatpush1.bf16.msra.mxu0 0
    %2666 = vmatprep.subr.bf16.mxu0 0
    %2667 = vmatpush1.bf16.msra.mxu0 0
    %2668 = vmatprep.subr.bf16.mxu0 0
    %2669 = vmatpush1.bf16.msra.mxu0 0
    %2670 = vmatprep.subr.bf16.mxu0 0
    %2671 = vmatpush1.bf16.msra.mxu0 0
    %2672 = vmatprep.mubr.bf16.mxu0 0
    %2673 = vmatmul.mubr.bf16.gmra.mrb[0].mxu0 %v2598
    %v2674 = vpop.f32.mrb[0].mxu0
    %v2675 = vadd.f32 0.0, %v2674
    %v2676 = vpop.f32.mrb[0].mxu0
    %v2677 = vadd.f32 0.0, %v2676
    %v2678 = vpop.f32.mrb[0].mxu0
    %v2679 = vpop.f32.mrb[0].mxu0
    %2680 = vdwg.mxu0
    %v2681 = vadd.f32 %v2594, %v2634
    %v2682 = vadd.f32 %v2595, %v2636
    %v2683 = vadd.f32 %v2596, %v2675
    %v2684 = vadd.f32 %v2597, %v2677
    %v2685 = vxor.u32 %v2681, 2147483648
    %v2686 = vmul.f32 %v2685, 1.442695
    %v2687 = vpow.pop %v2686
    %v2688 = vadd.f32 %v2687, 1.0
    %v2689 = vrcp.pop %v2688
    %v2690 = vmul.f32 1.0, %v2689
    %v2691 = vxor.u32 %v2682, 2147483648
    %v2692 = vmul.f32 %v2691, 1.442695
    %v2693 = vpow.pop %v2692
    %v2694 = vadd.f32 %v2693, 1.0
    %v2695 = vrcp.pop %v2694
    %v2696 = vmul.f32 1.0, %v2695
    %v2697 = vtanh.pop %v2683
    %v2698 = vxor.u32 %v2684, 2147483648
    %v2699 = vmul.f32 %v2698, 1.442695
    %v2700 = vpow.pop %v2699
    %v2701 = vadd.f32 %v2700, 1.0
    %v2702 = vrcp.pop %v2701
    %v2703 = vmul.f32 1.0, %v2702
    %v2704 = vmul.f32 %v2696, %v2590
    %v2705 = vmul.f32 %v2690, %v2697
    %v2706 = vadd.f32 %v2704, %v2705
    %v2707 = vtanh.pop %v2706
    %v2708 = vmul.f32 %v2703, %v2707
    %s2709 = scalar_lea.vmem [#allocation3], 8
    %2710 = vst [vmem:[%s2709] sm:$0xff] %v2708
    %v2711 = vld [vmem:[%s1042] sm:$0xff]
    %v2712 = vld [vmem:[%s1042 + $0x8] sm:$0xff]
    %v2713 = vld [vmem:[%s1042 + $0x10] sm:$0xff]
    %v2714 = vld [vmem:[%s1042 + $0x18] sm:$0xff]
    %v2715 = vpack.c.bf16 %v2708, %v2708
    %2716 = vmatprep.subr.bf16.mxu0 %v2420
    %2717 = vmatpush1.bf16.msra.mxu0 %v2419
    %2718 = vmatprep.subr.bf16.mxu0 %v2424
    %2719 = vmatpush1.bf16.msra.mxu0 %v2423
    %2720 = vmatprep.subr.bf16.mxu0 %v2428
    %2721 = vmatpush1.bf16.msra.mxu0 %v2427
    %2722 = vmatprep.subr.bf16.mxu0 %v2432
    %2723 = vmatpush1.bf16.msra.mxu0 %v2431
    %2724 = vmatprep.subr.bf16.mxu0 %v2436
    %2725 = vmatpush1.bf16.msra.mxu0 %v2435
    %2726 = vmatprep.subr.bf16.mxu0 %v2440
    %2727 = vmatpush1.bf16.msra.mxu0 %v2439
    %2728 = vmatprep.subr.bf16.mxu0 %v2444
    %2729 = vmatpush1.bf16.msra.mxu0 %v2443
    %2730 = vmatprep.subr.bf16.mxu0 %v2448
    %2731 = vmatpush1.bf16.msra.mxu0 %v2447
    %2732 = vmatprep.subr.bf16.mxu0 0
    %2733 = vmatpush1.bf16.msra.mxu0 0
    %2734 = vmatprep.subr.bf16.mxu0 0
    %2735 = vmatpush1.bf16.msra.mxu0 0
    %2736 = vmatprep.subr.bf16.mxu0 0
    %2737 = vmatpush1.bf16.msra.mxu0 0
    %2738 = vmatprep.subr.bf16.mxu0 0
    %2739 = vmatpush1.bf16.msra.mxu0 0
    %2740 = vmatprep.subr.bf16.mxu0 0
    %2741 = vmatpush1.bf16.msra.mxu0 0
    %2742 = vmatprep.subr.bf16.mxu0 0
    %2743 = vmatpush1.bf16.msra.mxu0 0
    %2744 = vmatprep.subr.bf16.mxu0 0
    %2745 = vmatpush1.bf16.msra.mxu0 0
    %2746 = vmatprep.subr.bf16.mxu0 0
    %2747 = vmatpush1.bf16.msra.mxu0 0
    %2748 = vmatprep.mubr.bf16.mxu0 0
    %2749 = vmatmul.mubr.bf16.gmra.mrb[0].mxu0 %v2715
    %v2750 = vpop.f32.mrb[0].mxu0
    %v2751 = vadd.f32 0.0, %v2750
    %v2752 = vpop.f32.mrb[0].mxu0
    %v2753 = vadd.f32 0.0, %v2752
    %v2754 = vpop.f32.mrb[0].mxu0
    %v2755 = vpop.f32.mrb[0].mxu0
    %2756 = vdwg.mxu0
    %2757 = vmatprep.subr.bf16.mxu0 %v2422
    %2758 = vmatpush1.bf16.msra.mxu0 %v2421
    %2759 = vmatprep.subr.bf16.mxu0 %v2426
    %2760 = vmatpush1.bf16.msra.mxu0 %v2425
    %2761 = vmatprep.subr.bf16.mxu0 %v2430
    %2762 = vmatpush1.bf16.msra.mxu0 %v2429
    %2763 = vmatprep.subr.bf16.mxu0 %v2434
    %2764 = vmatpush1.bf16.msra.mxu0 %v2433
    %2765 = vmatprep.subr.bf16.mxu0 %v2438
    %2766 = vmatpush1.bf16.msra.mxu0 %v2437
    %2767 = vmatprep.subr.bf16.mxu0 %v2442
    %2768 = vmatpush1.bf16.msra.mxu0 %v2441
    %2769 = vmatprep.subr.bf16.mxu0 %v2446
    %2770 = vmatpush1.bf16.msra.mxu0 %v2445
    %2771 = vmatprep.subr.bf16.mxu0 %v2450
    %2772 = vmatpush1.bf16.msra.mxu0 %v2449
    %2773 = vmatprep.subr.bf16.mxu0 0
    %2774 = vmatpush1.bf16.msra.mxu0 0
    %2775 = vmatprep.subr.bf16.mxu0 0
    %2776 = vmatpush1.bf16.msra.mxu0 0
    %2777 = vmatprep.subr.bf16.mxu0 0
    %2778 = vmatpush1.bf16.msra.mxu0 0
    %2779 = vmatprep.subr.bf16.mxu0 0
    %2780 = vmatpush1.bf16.msra.mxu0 0
    %2781 = vmatprep.subr.bf16.mxu0 0
    %2782 = vmatpush1.bf16.msra.mxu0 0
    %2783 = vmatprep.subr.bf16.mxu0 0
    %2784 = vmatpush1.bf16.msra.mxu0 0
    %2785 = vmatprep.subr.bf16.mxu0 0
    %2786 = vmatpush1.bf16.msra.mxu0 0
    %2787 = vmatprep.subr.bf16.mxu0 0
    %2788 = vmatpush1.bf16.msra.mxu0 0
    %2789 = vmatprep.mubr.bf16.mxu0 0
    %2790 = vmatmul.mubr.bf16.gmra.mrb[0].mxu0 %v2715
    %v2791 = vpop.f32.mrb[0].mxu0
    %v2792 = vadd.f32 0.0, %v2791
    %v2793 = vpop.f32.mrb[0].mxu0
    %v2794 = vadd.f32 0.0, %v2793
    %v2795 = vpop.f32.mrb[0].mxu0
    %v2796 = vpop.f32.mrb[0].mxu0
    %2797 = vdwg.mxu0
    %v2798 = vadd.f32 %v2711, %v2751
    %v2799 = vadd.f32 %v2712, %v2753
    %v2800 = vadd.f32 %v2713, %v2792
    %v2801 = vadd.f32 %v2714, %v2794
    %v2802 = vxor.u32 %v2798, 2147483648
    %v2803 = vmul.f32 %v2802, 1.442695
    %v2804 = vpow.pop %v2803
    %v2805 = vadd.f32 %v2804, 1.0
    %v2806 = vrcp.pop %v2805
    %v2807 = vmul.f32 1.0, %v2806
    %v2808 = vxor.u32 %v2799, 2147483648
    %v2809 = vmul.f32 %v2808, 1.442695
    %v2810 = vpow.pop %v2809
    %v2811 = vadd.f32 %v2810, 1.0
    %v2812 = vrcp.pop %v2811
    %v2813 = vmul.f32 1.0, %v2812
    %v2814 = vtanh.pop %v2800
    %v2815 = vxor.u32 %v2801, 2147483648
    %v2816 = vmul.f32 %v2815, 1.442695
    %v2817 = vpow.pop %v2816
    %v2818 = vadd.f32 %v2817, 1.0
    %v2819 = vrcp.pop %v2818
    %v2820 = vmul.f32 1.0, %v2819
    %v2821 = vmul.f32 %v2813, %v2706
    %v2822 = vmul.f32 %v2807, %v2814
    %v2823 = vadd.f32 %v2821, %v2822
    %v2824 = vtanh.pop %v2823
    %v2825 = vmul.f32 %v2820, %v2824
    %s2826 = scalar_lea.vmem [#allocation3], 16
    %2827 = vst [vmem:[%s2826] sm:$0xff] %v2825
    %v2828 = vld [vmem:[%s1162] sm:$0xff]
    %v2829 = vld [vmem:[%s1162 + $0x8] sm:$0xff]
    %v2830 = vld [vmem:[%s1162 + $0x10] sm:$0xff]
    %v2831 = vld [vmem:[%s1162 + $0x18] sm:$0xff]
    %v2832 = vpack.c.bf16 %v2825, %v2825
    %2833 = vmatprep.subr.bf16.mxu0 %v2420
    %2834 = vmatpush1.bf16.msra.mxu0 %v2419
    %2835 = vmatprep.subr.bf16.mxu0 %v2424
    %2836 = vmatpush1.bf16.msra.mxu0 %v2423
    %2837 = vmatprep.subr.bf16.mxu0 %v2428
    %2838 = vmatpush1.bf16.msra.mxu0 %v2427
    %2839 = vmatprep.subr.bf16.mxu0 %v2432
    %2840 = vmatpush1.bf16.msra.mxu0 %v2431
    %2841 = vmatprep.subr.bf16.mxu0 %v2436
    %2842 = vmatpush1.bf16.msra.mxu0 %v2435
    %2843 = vmatprep.subr.bf16.mxu0 %v2440
    %2844 = vmatpush1.bf16.msra.mxu0 %v2439
    %2845 = vmatprep.subr.bf16.mxu0 %v2444
    %2846 = vmatpush1.bf16.msra.mxu0 %v2443
    %2847 = vmatprep.subr.bf16.mxu0 %v2448
    %2848 = vmatpush1.bf16.msra.mxu0 %v2447
    %2849 = vmatprep.subr.bf16.mxu0 0
    %2850 = vmatpush1.bf16.msra.mxu0 0
    %2851 = vmatprep.subr.bf16.mxu0 0
    %2852 = vmatpush1.bf16.msra.mxu0 0
    %2853 = vmatprep.subr.bf16.mxu0 0
    %2854 = vmatpush1.bf16.msra.mxu0 0
    %2855 = vmatprep.subr.bf16.mxu0 0
    %2856 = vmatpush1.bf16.msra.mxu0 0
    %2857 = vmatprep.subr.bf16.mxu0 0
    %2858 = vmatpush1.bf16.msra.mxu0 0
    %2859 = vmatprep.subr.bf16.mxu0 0
    %2860 = vmatpush1.bf16.msra.mxu0 0
    %2861 = vmatprep.subr.bf16.mxu0 0
    %2862 = vmatpush1.bf16.msra.mxu0 0
    %2863 = vmatprep.subr.bf16.mxu0 0
    %2864 = vmatpush1.bf16.msra.mxu0 0
    %2865 = vmatprep.mubr.bf16.mxu0 0
    %2866 = vmatmul.mubr.bf16.gmra.mrb[0].mxu0 %v2832
    %v2867 = vpop.f32.mrb[0].mxu0
    %v2868 = vadd.f32 0.0, %v2867
    %v2869 = vpop.f32.mrb[0].mxu0
    %v2870 = vadd.f32 0.0, %v2869
    %v2871 = vpop.f32.mrb[0].mxu0
    %v2872 = vpop.f32.mrb[0].mxu0
    %2873 = vdwg.mxu0
    %2874 = vmatprep.subr.bf16.mxu0 %v2422
    %2875 = vmatpush1.bf16.msra.mxu0 %v2421
    %2876 = vmatprep.subr.bf16.mxu0 %v2426
    %2877 = vmatpush1.bf16.msra.mxu0 %v2425
    %2878 = vmatprep.subr.bf16.mxu0 %v2430
    %2879 = vmatpush1.bf16.msra.mxu0 %v2429
    %2880 = vmatprep.subr.bf16.mxu0 %v2434
    %2881 = vmatpush1.bf16.msra.mxu0 %v2433
    %2882 = vmatprep.subr.bf16.mxu0 %v2438
    %2883 = vmatpush1.bf16.msra.mxu0 %v2437
    %2884 = vmatprep.subr.bf16.mxu0 %v2442
    %2885 = vmatpush1.bf16.msra.mxu0 %v2441
    %2886 = vmatprep.subr.bf16.mxu0 %v2446
    %2887 = vmatpush1.bf16.msra.mxu0 %v2445
    %2888 = vmatprep.subr.bf16.mxu0 %v2450
    %2889 = vmatpush1.bf16.msra.mxu0 %v2449
    %2890 = vmatprep.subr.bf16.mxu0 0
    %2891 = vmatpush1.bf16.msra.mxu0 0
    %2892 = vmatprep.subr.bf16.mxu0 0
    %2893 = vmatpush1.bf16.msra.mxu0 0
    %2894 = vmatprep.subr.bf16.mxu0 0
    %2895 = vmatpush1.bf16.msra.mxu0 0
    %2896 = vmatprep.subr.bf16.mxu0 0
    %2897 = vmatpush1.bf16.msra.mxu0 0
    %2898 = vmatprep.subr.bf16.mxu0 0
    %2899 = vmatpush1.bf16.msra.mxu0 0
    %2900 = vmatprep.subr.bf16.mxu0 0
    %2901 = vmatpush1.bf16.msra.mxu0 0
    %2902 = vmatprep.subr.bf16.mxu0 0
    %2903 = vmatpush1.bf16.msra.mxu0 0
    %2904 = vmatprep.subr.bf16.mxu0 0
    %2905 = vmatpush1.bf16.msra.mxu0 0
    %2906 = vmatprep.mubr.bf16.mxu0 0
    %2907 = vmatmul.mubr.bf16.gmra.mrb[0].mxu0 %v2832
    %v2908 = vpop.f32.mrb[0].mxu0
    %v2909 = vadd.f32 0.0, %v2908
    %v2910 = vpop.f32.mrb[0].mxu0
    %v2911 = vadd.f32 0.0, %v2910
    %v2912 = vpop.f32.mrb[0].mxu0
    %v2913 = vpop.f32.mrb[0].mxu0
    %2914 = vdwg.mxu0
    %v2915 = vadd.f32 %v2828, %v2868
    %v2916 = vadd.f32 %v2829, %v2870
    %v2917 = vadd.f32 %v2830, %v2909
    %v2918 = vadd.f32 %v2831, %v2911
    %v2919 = vxor.u32 %v2915, 2147483648
    %v2920 = vmul.f32 %v2919, 1.442695
    %v2921 = vpow.pop %v2920
    %v2922 = vadd.f32 %v2921, 1.0
    %v2923 = vrcp.pop %v2922
    %v2924 = vmul.f32 1.0, %v2923
    %v2925 = vxor.u32 %v2916, 2147483648
    %v2926 = vmul.f32 %v2925, 1.442695
    %v2927 = vpow.pop %v2926
    %v2928 = vadd.f32 %v2927, 1.0
    %v2929 = vrcp.pop %v2928
    %v2930 = vmul.f32 1.0, %v2929
    %v2931 = vtanh.pop %v2917
    %v2932 = vxor.u32 %v2918, 2147483648
    %v2933 = vmul.f32 %v2932, 1.442695
    %v2934 = vpow.pop %v2933
    %v2935 = vadd.f32 %v2934, 1.0
    %v2936 = vrcp.pop %v2935
    %v2937 = vmul.f32 1.0, %v2936
    %v2938 = vmul.f32 %v2930, %v2823
    %v2939 = vmul.f32 %v2924, %v2931
    %v2940 = vadd.f32 %v2938, %v2939
    %v2941 = vtanh.pop %v2940
    %v2942 = vmul.f32 %v2937, %v2941
    %s2943 = scalar_lea.vmem [#allocation3], 24
    %2944 = vst [vmem:[%s2943] sm:$0xff] %v2942
    %v2945 = vld [vmem:[%s1282] sm:$0xff]
    %v2946 = vld [vmem:[%s1282 + $0x8] sm:$0xff]
    %v2947 = vld [vmem:[%s1282 + $0x10] sm:$0xff]
    %v2948 = vld [vmem:[%s1282 + $0x18] sm:$0xff]
    %v2949 = vpack.c.bf16 %v2942, %v2942
    %2950 = vmatprep.subr.bf16.mxu0 %v2420
    %2951 = vmatpush1.bf16.msra.mxu0 %v2419
    %2952 = vmatprep.subr.bf16.mxu0 %v2424
    %2953 = vmatpush1.bf16.msra.mxu0 %v2423
    %2954 = vmatprep.subr.bf16.mxu0 %v2428
    %2955 = vmatpush1.bf16.msra.mxu0 %v2427
    %2956 = vmatprep.subr.bf16.mxu0 %v2432
    %2957 = vmatpush1.bf16.msra.mxu0 %v2431
    %2958 = vmatprep.subr.bf16.mxu0 %v2436
    %2959 = vmatpush1.bf16.msra.mxu0 %v2435
    %2960 = vmatprep.subr.bf16.mxu0 %v2440
    %2961 = vmatpush1.bf16.msra.mxu0 %v2439
    %2962 = vmatprep.subr.bf16.mxu0 %v2444
    %2963 = vmatpush1.bf16.msra.mxu0 %v2443
    %2964 = vmatprep.subr.bf16.mxu0 %v2448
    %2965 = vmatpush1.bf16.msra.mxu0 %v2447
    %2966 = vmatprep.subr.bf16.mxu0 0
    %2967 = vmatpush1.bf16.msra.mxu0 0
    %2968 = vmatprep.subr.bf16.mxu0 0
    %2969 = vmatpush1.bf16.msra.mxu0 0
    %2970 = vmatprep.subr.bf16.mxu0 0
    %2971 = vmatpush1.bf16.msra.mxu0 0
    %2972 = vmatprep.subr.bf16.mxu0 0
    %2973 = vmatpush1.bf16.msra.mxu0 0
    %2974 = vmatprep.subr.bf16.mxu0 0
    %2975 = vmatpush1.bf16.msra.mxu0 0
    %2976 = vmatprep.subr.bf16.mxu0 0
    %2977 = vmatpush1.bf16.msra.mxu0 0
    %2978 = vmatprep.subr.bf16.mxu0 0
    %2979 = vmatpush1.bf16.msra.mxu0 0
    %2980 = vmatprep.subr.bf16.mxu0 0
    %2981 = vmatpush1.bf16.msra.mxu0 0
    %2982 = vmatprep.mubr.bf16.mxu0 0
    %2983 = vmatmul.mubr.bf16.gmra.mrb[0].mxu0 %v2949
    %v2984 = vpop.f32.mrb[0].mxu0
    %v2985 = vadd.f32 0.0, %v2984
    %v2986 = vpop.f32.mrb[0].mxu0
    %v2987 = vadd.f32 0.0, %v2986
    %v2988 = vpop.f32.mrb[0].mxu0
    %v2989 = vpop.f32.mrb[0].mxu0
    %2990 = vdwg.mxu0
    %2991 = vmatprep.subr.bf16.mxu0 %v2422
    %2992 = vmatpush1.bf16.msra.mxu0 %v2421
    %2993 = vmatprep.subr.bf16.mxu0 %v2426
    %2994 = vmatpush1.bf16.msra.mxu0 %v2425
    %2995 = vmatprep.subr.bf16.mxu0 %v2430
    %2996 = vmatpush1.bf16.msra.mxu0 %v2429
    %2997 = vmatprep.subr.bf16.mxu0 %v2434
    %2998 = vmatpush1.bf16.msra.mxu0 %v2433
    %2999 = vmatprep.subr.bf16.mxu0 %v2438
    %3000 = vmatpush1.bf16.msra.mxu0 %v2437
    %3001 = vmatprep.subr.bf16.mxu0 %v2442
    %3002 = vmatpush1.bf16.msra.mxu0 %v2441
    %3003 = vmatprep.subr.bf16.mxu0 %v2446
    %3004 = vmatpush1.bf16.msra.mxu0 %v2445
    %3005 = vmatprep.subr.bf16.mxu0 %v2450
    %3006 = vmatpush1.bf16.msra.mxu0 %v2449
    %3007 = vmatprep.subr.bf16.mxu0 0
    %3008 = vmatpush1.bf16.msra.mxu0 0
    %3009 = vmatprep.subr.bf16.mxu0 0
    %3010 = vmatpush1.bf16.msra.mxu0 0
    %3011 = vmatprep.subr.bf16.mxu0 0
    %3012 = vmatpush1.bf16.msra.mxu0 0
    %3013 = vmatprep.subr.bf16.mxu0 0
    %3014 = vmatpush1.bf16.msra.mxu0 0
    %3015 = vmatprep.subr.bf16.mxu0 0
    %3016 = vmatpush1.bf16.msra.mxu0 0
    %3017 = vmatprep.subr.bf16.mxu0 0
    %3018 = vmatpush1.bf16.msra.mxu0 0
    %3019 = vmatprep.subr.bf16.mxu0 0
    %3020 = vmatpush1.bf16.msra.mxu0 0
    %3021 = vmatprep.subr.bf16.mxu0 0
    %3022 = vmatpush1.bf16.msra.mxu0 0
    %3023 = vmatprep.mubr.bf16.mxu0 0
    %3024 = vmatmul.mubr.bf16.gmra.mrb[0].mxu0 %v2949
    %v3025 = vpop.f32.mrb[0].mxu0
    %v3026 = vadd.f32 0.0, %v3025
    %v3027 = vpop.f32.mrb[0].mxu0
    %v3028 = vadd.f32 0.0, %v3027
    %v3029 = vpop.f32.mrb[0].mxu0
    %v3030 = vpop.f32.mrb[0].mxu0
    %3031 = vdwg.mxu0
    %v3032 = vadd.f32 %v2945, %v2985
    %v3033 = vadd.f32 %v2946, %v2987
    %v3034 = vadd.f32 %v2947, %v3026
    %v3035 = vadd.f32 %v2948, %v3028
    %v3036 = vxor.u32 %v3032, 2147483648
    %v3037 = vmul.f32 %v3036, 1.442695
    %v3038 = vpow.pop %v3037
    %v3039 = vadd.f32 %v3038, 1.0
    %v3040 = vrcp.pop %v3039
    %v3041 = vmul.f32 1.0, %v3040
    %v3042 = vxor.u32 %v3033, 2147483648
    %v3043 = vmul.f32 %v3042, 1.442695
    %v3044 = vpow.pop %v3043
    %v3045 = vadd.f32 %v3044, 1.0
    %v3046 = vrcp.pop %v3045
    %v3047 = vmul.f32 1.0, %v3046
    %v3048 = vtanh.pop %v3034
    %v3049 = vxor.u32 %v3035, 2147483648
    %v3050 = vmul.f32 %v3049, 1.442695
    %v3051 = vpow.pop %v3050
    %v3052 = vadd.f32 %v3051, 1.0
    %v3053 = vrcp.pop %v3052
    %v3054 = vmul.f32 1.0, %v3053
    %v3055 = vmul.f32 %v3047, %v2940
    %v3056 = vmul.f32 %v3041, %v3048
    %v3057 = vadd.f32 %v3055, %v3056
    %v3058 = vtanh.pop %v3057
    %v3059 = vmul.f32 %v3054, %v3058
    %s3060 = scalar_lea.vmem [#allocation3], 32
    %3061 = vst [vmem:[%s3060] sm:$0xff] %v3059
    %v3062 = vld [vmem:[%s1402] sm:$0xff]
    %v3063 = vld [vmem:[%s1402 + $0x8] sm:$0xff]
    %v3064 = vld [vmem:[%s1402 + $0x10] sm:$0xff]
    %v3065 = vld [vmem:[%s1402 + $0x18] sm:$0xff]
    %v3066 = vpack.c.bf16 %v3059, %v3059
    %3067 = vmatprep.subr.bf16.mxu0 %v2420
    %3068 = vmatpush1.bf16.msra.mxu0 %v2419
    %3069 = vmatprep.subr.bf16.mxu0 %v2424
    %3070 = vmatpush1.bf16.msra.mxu0 %v2423
    %3071 = vmatprep.subr.bf16.mxu0 %v2428
    %3072 = vmatpush1.bf16.msra.mxu0 %v2427
    %3073 = vmatprep.subr.bf16.mxu0 %v2432
    %3074 = vmatpush1.bf16.msra.mxu0 %v2431
    %3075 = vmatprep.subr.bf16.mxu0 %v2436
    %3076 = vmatpush1.bf16.msra.mxu0 %v2435
    %3077 = vmatprep.subr.bf16.mxu0 %v2440
    %3078 = vmatpush1.bf16.msra.mxu0 %v2439
    %3079 = vmatprep.subr.bf16.mxu0 %v2444
    %3080 = vmatpush1.bf16.msra.mxu0 %v2443
    %3081 = vmatprep.subr.bf16.mxu0 %v2448
    %3082 = vmatpush1.bf16.msra.mxu0 %v2447
    %3083 = vmatprep.subr.bf16.mxu0 0
    %3084 = vmatpush1.bf16.msra.mxu0 0
    %3085 = vmatprep.subr.bf16.mxu0 0
    %3086 = vmatpush1.bf16.msra.mxu0 0
    %3087 = vmatprep.subr.bf16.mxu0 0
    %3088 = vmatpush1.bf16.msra.mxu0 0
    %3089 = vmatprep.subr.bf16.mxu0 0
    %3090 = vmatpush1.bf16.msra.mxu0 0
    %3091 = vmatprep.subr.bf16.mxu0 0
    %3092 = vmatpush1.bf16.msra.mxu0 0
    %3093 = vmatprep.subr.bf16.mxu0 0
    %3094 = vmatpush1.bf16.msra.mxu0 0
    %3095 = vmatprep.subr.bf16.mxu0 0
    %3096 = vmatpush1.bf16.msra.mxu0 0
    %3097 = vmatprep.subr.bf16.mxu0 0
    %3098 = vmatpush1.bf16.msra.mxu0 0
    %3099 = vmatprep.mubr.bf16.mxu0 0
    %3100 = vmatmul.mubr.bf16.gmra.mrb[0].mxu0 %v3066
    %v3101 = vpop.f32.mrb[0].mxu0
    %v3102 = vadd.f32 0.0, %v3101
    %v3103 = vpop.f32.mrb[0].mxu0
    %v3104 = vadd.f32 0.0, %v3103
    %v3105 = vpop.f32.mrb[0].mxu0
    %v3106 = vpop.f32.mrb[0].mxu0
    %3107 = vdwg.mxu0
    %3108 = vmatprep.subr.bf16.mxu0 %v2422
    %3109 = vmatpush1.bf16.msra.mxu0 %v2421
    %3110 = vmatprep.subr.bf16.mxu0 %v2426
    %3111 = vmatpush1.bf16.msra.mxu0 %v2425
    %3112 = vmatprep.subr.bf16.mxu0 %v2430
    %3113 = vmatpush1.bf16.msra.mxu0 %v2429
    %3114 = vmatprep.subr.bf16.mxu0 %v2434
    %3115 = vmatpush1.bf16.msra.mxu0 %v2433
    %3116 = vmatprep.subr.bf16.mxu0 %v2438
    %3117 = vmatpush1.bf16.msra.mxu0 %v2437
    %3118 = vmatprep.subr.bf16.mxu0 %v2442
    %3119 = vmatpush1.bf16.msra.mxu0 %v2441
    %3120 = vmatprep.subr.bf16.mxu0 %v2446
    %3121 = vmatpush1.bf16.msra.mxu0 %v2445
    %3122 = vmatprep.subr.bf16.mxu0 %v2450
    %3123 = vmatpush1.bf16.msra.mxu0 %v2449
    %3124 = vmatprep.subr.bf16.mxu0 0
    %3125 = vmatpush1.bf16.msra.mxu0 0
    %3126 = vmatprep.subr.bf16.mxu0 0
    %3127 = vmatpush1.bf16.msra.mxu0 0
    %3128 = vmatprep.subr.bf16.mxu0 0
    %3129 = vmatpush1.bf16.msra.mxu0 0
    %3130 = vmatprep.subr.bf16.mxu0 0
    %3131 = vmatpush1.bf16.msra.mxu0 0
    %3132 = vmatprep.subr.bf16.mxu0 0
    %3133 = vmatpush1.bf16.msra.mxu0 0
    %3134 = vmatprep.subr.bf16.mxu0 0
    %3135 = vmatpush1.bf16.msra.mxu0 0
    %3136 = vmatprep.subr.bf16.mxu0 0
    %3137 = vmatpush1.bf16.msra.mxu0 0
    %3138 = vmatprep.subr.bf16.mxu0 0
    %3139 = vmatpush1.bf16.msra.mxu0 0
    %3140 = vmatprep.mubr.bf16.mxu0 0
    %3141 = vmatmul.mubr.bf16.gmra.mrb[0].mxu0 %v3066
    %v3142 = vpop.f32.mrb[0].mxu0
    %v3143 = vadd.f32 0.0, %v3142
    %v3144 = vpop.f32.mrb[0].mxu0
    %v3145 = vadd.f32 0.0, %v3144
    %v3146 = vpop.f32.mrb[0].mxu0
    %v3147 = vpop.f32.mrb[0].mxu0
    %3148 = vdwg.mxu0
    %v3149 = vadd.f32 %v3062, %v3102
    %v3150 = vadd.f32 %v3063, %v3104
    %v3151 = vadd.f32 %v3064, %v3143
    %v3152 = vadd.f32 %v3065, %v3145
    %v3153 = vxor.u32 %v3149, 2147483648
    %v3154 = vmul.f32 %v3153, 1.442695
    %v3155 = vpow.pop %v3154
    %v3156 = vadd.f32 %v3155, 1.0
    %v3157 = vrcp.pop %v3156
    %v3158 = vmul.f32 1.0, %v3157
    %v3159 = vxor.u32 %v3150, 2147483648
    %v3160 = vmul.f32 %v3159, 1.442695
    %v3161 = vpow.pop %v3160
    %v3162 = vadd.f32 %v3161, 1.0
    %v3163 = vrcp.pop %v3162
    %v3164 = vmul.f32 1.0, %v3163
    %v3165 = vtanh.pop %v3151
    %v3166 = vxor.u32 %v3152, 2147483648
    %v3167 = vmul.f32 %v3166, 1.442695
    %v3168 = vpow.pop %v3167
    %v3169 = vadd.f32 %v3168, 1.0
    %v3170 = vrcp.pop %v3169
    %v3171 = vmul.f32 1.0, %v3170
    %v3172 = vmul.f32 %v3164, %v3057
    %v3173 = vmul.f32 %v3158, %v3165
    %v3174 = vadd.f32 %v3172, %v3173
    %v3175 = vtanh.pop %v3174
    %v3176 = vmul.f32 %v3171, %v3175
    %s3177 = scalar_lea.vmem [#allocation3], 40
    %3178 = vst [vmem:[%s3177] sm:$0xff] %v3176
    %v3179 = vld [vmem:[%s1522] sm:$0xff]
    %v3180 = vld [vmem:[%s1522 + $0x8] sm:$0xff]
    %v3181 = vld [vmem:[%s1522 + $0x10] sm:$0xff]
    %v3182 = vld [vmem:[%s1522 + $0x18] sm:$0xff]
    %v3183 = vpack.c.bf16 %v3176, %v3176
    %3184 = vmatprep.subr.bf16.mxu0 %v2420
    %3185 = vmatpush1.bf16.msra.mxu0 %v2419
    %3186 = vmatprep.subr.bf16.mxu0 %v2424
    %3187 = vmatpush1.bf16.msra.mxu0 %v2423
    %3188 = vmatprep.subr.bf16.mxu0 %v2428
    %3189 = vmatpush1.bf16.msra.mxu0 %v2427
    %3190 = vmatprep.subr.bf16.mxu0 %v2432
    %3191 = vmatpush1.bf16.msra.mxu0 %v2431
    %3192 = vmatprep.subr.bf16.mxu0 %v2436
    %3193 = vmatpush1.bf16.msra.mxu0 %v2435
    %3194 = vmatprep.subr.bf16.mxu0 %v2440
    %3195 = vmatpush1.bf16.msra.mxu0 %v2439
    %3196 = vmatprep.subr.bf16.mxu0 %v2444
    %3197 = vmatpush1.bf16.msra.mxu0 %v2443
    %3198 = vmatprep.subr.bf16.mxu0 %v2448
    %3199 = vmatpush1.bf16.msra.mxu0 %v2447
    %3200 = vmatprep.subr.bf16.mxu0 0
    %3201 = vmatpush1.bf16.msra.mxu0 0
    %3202 = vmatprep.subr.bf16.mxu0 0
    %3203 = vmatpush1.bf16.msra.mxu0 0
    %3204 = vmatprep.subr.bf16.mxu0 0
    %3205 = vmatpush1.bf16.msra.mxu0 0
    %3206 = vmatprep.subr.bf16.mxu0 0
    %3207 = vmatpush1.bf16.msra.mxu0 0
    %3208 = vmatprep.subr.bf16.mxu0 0
    %3209 = vmatpush1.bf16.msra.mxu0 0
    %3210 = vmatprep.subr.bf16.mxu0 0
    %3211 = vmatpush1.bf16.msra.mxu0 0
    %3212 = vmatprep.subr.bf16.mxu0 0
    %3213 = vmatpush1.bf16.msra.mxu0 0
    %3214 = vmatprep.subr.bf16.mxu0 0
    %3215 = vmatpush1.bf16.msra.mxu0 0
    %3216 = vmatprep.mubr.bf16.mxu0 0
    %3217 = vmatmul.mubr.bf16.gmra.mrb[0].mxu0 %v3183
    %v3218 = vpop.f32.mrb[0].mxu0
    %v3219 = vadd.f32 0.0, %v3218
    %v3220 = vpop.f32.mrb[0].mxu0
    %v3221 = vadd.f32 0.0, %v3220
    %v3222 = vpop.f32.mrb[0].mxu0
    %v3223 = vpop.f32.mrb[0].mxu0
    %3224 = vdwg.mxu0
    %3225 = vmatprep.subr.bf16.mxu0 %v2422
    %3226 = vmatpush1.bf16.msra.mxu0 %v2421
    %3227 = vmatprep.subr.bf16.mxu0 %v2426
    %3228 = vmatpush1.bf16.msra.mxu0 %v2425
    %3229 = vmatprep.subr.bf16.mxu0 %v2430
    %3230 = vmatpush1.bf16.msra.mxu0 %v2429
    %3231 = vmatprep.subr.bf16.mxu0 %v2434
    %3232 = vmatpush1.bf16.msra.mxu0 %v2433
    %3233 = vmatprep.subr.bf16.mxu0 %v2438
    %3234 = vmatpush1.bf16.msra.mxu0 %v2437
    %3235 = vmatprep.subr.bf16.mxu0 %v2442
    %3236 = vmatpush1.bf16.msra.mxu0 %v2441
    %3237 = vmatprep.subr.bf16.mxu0 %v2446
    %3238 = vmatpush1.bf16.msra.mxu0 %v2445
    %3239 = vmatprep.subr.bf16.mxu0 %v2450
    %3240 = vmatpush1.bf16.msra.mxu0 %v2449
    %3241 = vmatprep.subr.bf16.mxu0 0
    %3242 = vmatpush1.bf16.msra.mxu0 0
    %3243 = vmatprep.subr.bf16.mxu0 0
    %3244 = vmatpush1.bf16.msra.mxu0 0
    %3245 = vmatprep.subr.bf16.mxu0 0
    %3246 = vmatpush1.bf16.msra.mxu0 0
    %3247 = vmatprep.subr.bf16.mxu0 0
    %3248 = vmatpush1.bf16.msra.mxu0 0
    %3249 = vmatprep.subr.bf16.mxu0 0
    %3250 = vmatpush1.bf16.msra.mxu0 0
    %3251 = vmatprep.subr.bf16.mxu0 0
    %3252 = vmatpush1.bf16.msra.mxu0 0
    %3253 = vmatprep.subr.bf16.mxu0 0
    %3254 = vmatpush1.bf16.msra.mxu0 0
    %3255 = vmatprep.subr.bf16.mxu0 0
    %3256 = vmatpush1.bf16.msra.mxu0 0
    %3257 = vmatprep.mubr.bf16.mxu0 0
    %3258 = vmatmul.mubr.bf16.gmra.mrb[0].mxu0 %v3183
    %v3259 = vpop.f32.mrb[0].mxu0
    %v3260 = vadd.f32 0.0, %v3259
    %v3261 = vpop.f32.mrb[0].mxu0
    %v3262 = vadd.f32 0.0, %v3261
    %v3263 = vpop.f32.mrb[0].mxu0
    %v3264 = vpop.f32.mrb[0].mxu0
    %3265 = vdwg.mxu0
    %v3266 = vadd.f32 %v3179, %v3219
    %v3267 = vadd.f32 %v3180, %v3221
    %v3268 = vadd.f32 %v3181, %v3260
    %v3269 = vadd.f32 %v3182, %v3262
    %v3270 = vxor.u32 %v3266, 2147483648
    %v3271 = vmul.f32 %v3270, 1.442695
    %v3272 = vpow.pop %v3271
    %v3273 = vadd.f32 %v3272, 1.0
    %v3274 = vrcp.pop %v3273
    %v3275 = vmul.f32 1.0, %v3274
    %v3276 = vxor.u32 %v3267, 2147483648
    %v3277 = vmul.f32 %v3276, 1.442695
    %v3278 = vpow.pop %v3277
    %v3279 = vadd.f32 %v3278, 1.0
    %v3280 = vrcp.pop %v3279
    %v3281 = vmul.f32 1.0, %v3280
    %v3282 = vtanh.pop %v3268
    %v3283 = vxor.u32 %v3269, 2147483648
    %v3284 = vmul.f32 %v3283, 1.442695
    %v3285 = vpow.pop %v3284
    %v3286 = vadd.f32 %v3285, 1.0
    %v3287 = vrcp.pop %v3286
    %v3288 = vmul.f32 1.0, %v3287
    %v3289 = vmul.f32 %v3281, %v3174
    %v3290 = vmul.f32 %v3275, %v3282
    %v3291 = vadd.f32 %v3289, %v3290
    %v3292 = vtanh.pop %v3291
    %v3293 = vmul.f32 %v3288, %v3292
    %s3294 = scalar_lea.vmem [#allocation3], 48
    %3295 = vst [vmem:[%s3294] sm:$0xff] %v3293
    %v3296 = vld [vmem:[%s1642] sm:$0xff]
    %v3297 = vld [vmem:[%s1642 + $0x8] sm:$0xff]
    %v3298 = vld [vmem:[%s1642 + $0x10] sm:$0xff]
    %v3299 = vld [vmem:[%s1642 + $0x18] sm:$0xff]
    %v3300 = vpack.c.bf16 %v3293, %v3293
    %3301 = vmatprep.subr.bf16.mxu0 %v2420
    %3302 = vmatpush1.bf16.msra.mxu0 %v2419
    %3303 = vmatprep.subr.bf16.mxu0 %v2424
    %3304 = vmatpush1.bf16.msra.mxu0 %v2423
    %3305 = vmatprep.subr.bf16.mxu0 %v2428
    %3306 = vmatpush1.bf16.msra.mxu0 %v2427
    %3307 = vmatprep.subr.bf16.mxu0 %v2432
    %3308 = vmatpush1.bf16.msra.mxu0 %v2431
    %3309 = vmatprep.subr.bf16.mxu0 %v2436
    %3310 = vmatpush1.bf16.msra.mxu0 %v2435
    %3311 = vmatprep.subr.bf16.mxu0 %v2440
    %3312 = vmatpush1.bf16.msra.mxu0 %v2439
    %3313 = vmatprep.subr.bf16.mxu0 %v2444
    %3314 = vmatpush1.bf16.msra.mxu0 %v2443
    %3315 = vmatprep.subr.bf16.mxu0 %v2448
    %3316 = vmatpush1.bf16.msra.mxu0 %v2447
    %3317 = vmatprep.subr.bf16.mxu0 0
    %3318 = vmatpush1.bf16.msra.mxu0 0
    %3319 = vmatprep.subr.bf16.mxu0 0
    %3320 = vmatpush1.bf16.msra.mxu0 0
    %3321 = vmatprep.subr.bf16.mxu0 0
    %3322 = vmatpush1.bf16.msra.mxu0 0
    %3323 = vmatprep.subr.bf16.mxu0 0
    %3324 = vmatpush1.bf16.msra.mxu0 0
    %3325 = vmatprep.subr.bf16.mxu0 0
    %3326 = vmatpush1.bf16.msra.mxu0 0
    %3327 = vmatprep.subr.bf16.mxu0 0
    %3328 = vmatpush1.bf16.msra.mxu0 0
    %3329 = vmatprep.subr.bf16.mxu0 0
    %3330 = vmatpush1.bf16.msra.mxu0 0
    %3331 = vmatprep.subr.bf16.mxu0 0
    %3332 = vmatpush1.bf16.msra.mxu0 0
    %3333 = vmatprep.mubr.bf16.mxu0 0
    %3334 = vmatmul.mubr.bf16.gmra.mrb[0].mxu0 %v3300
    %v3335 = vpop.f32.mrb[0].mxu0
    %v3336 = vadd.f32 0.0, %v3335
    %v3337 = vpop.f32.mrb[0].mxu0
    %v3338 = vadd.f32 0.0, %v3337
    %v3339 = vpop.f32.mrb[0].mxu0
    %v3340 = vpop.f32.mrb[0].mxu0
    %3341 = vdwg.mxu0
    %3342 = vmatprep.subr.bf16.mxu0 %v2422
    %3343 = vmatpush1.bf16.msra.mxu0 %v2421
    %3344 = vmatprep.subr.bf16.mxu0 %v2426
    %3345 = vmatpush1.bf16.msra.mxu0 %v2425
    %3346 = vmatprep.subr.bf16.mxu0 %v2430
    %3347 = vmatpush1.bf16.msra.mxu0 %v2429
    %3348 = vmatprep.subr.bf16.mxu0 %v2434
    %3349 = vmatpush1.bf16.msra.mxu0 %v2433
    %3350 = vmatprep.subr.bf16.mxu0 %v2438
    %3351 = vmatpush1.bf16.msra.mxu0 %v2437
    %3352 = vmatprep.subr.bf16.mxu0 %v2442
    %3353 = vmatpush1.bf16.msra.mxu0 %v2441
    %3354 = vmatprep.subr.bf16.mxu0 %v2446
    %3355 = vmatpush1.bf16.msra.mxu0 %v2445
    %3356 = vmatprep.subr.bf16.mxu0 %v2450
    %3357 = vmatpush1.bf16.msra.mxu0 %v2449
    %3358 = vmatprep.subr.bf16.mxu0 0
    %3359 = vmatpush1.bf16.msra.mxu0 0
    %3360 = vmatprep.subr.bf16.mxu0 0
    %3361 = vmatpush1.bf16.msra.mxu0 0
    %3362 = vmatprep.subr.bf16.mxu0 0
    %3363 = vmatpush1.bf16.msra.mxu0 0
    %3364 = vmatprep.subr.bf16.mxu0 0
    %3365 = vmatpush1.bf16.msra.mxu0 0
    %3366 = vmatprep.subr.bf16.mxu0 0
    %3367 = vmatpush1.bf16.msra.mxu0 0
    %3368 = vmatprep.subr.bf16.mxu0 0
    %3369 = vmatpush1.bf16.msra.mxu0 0
    %3370 = vmatprep.subr.bf16.mxu0 0
    %3371 = vmatpush1.bf16.msra.mxu0 0
    %3372 = vmatprep.subr.bf16.mxu0 0
    %3373 = vmatpush1.bf16.msra.mxu0 0
    %3374 = vmatprep.mubr.bf16.mxu0 0
    %3375 = vmatmul.mubr.bf16.gmra.mrb[0].mxu0 %v3300
    %v3376 = vpop.f32.mrb[0].mxu0
    %v3377 = vadd.f32 0.0, %v3376
    %v3378 = vpop.f32.mrb[0].mxu0
    %v3379 = vadd.f32 0.0, %v3378
    %v3380 = vpop.f32.mrb[0].mxu0
    %v3381 = vpop.f32.mrb[0].mxu0
    %3382 = vdwg.mxu0
    %v3383 = vadd.f32 %v3296, %v3336
    %v3384 = vadd.f32 %v3297, %v3338
    %v3385 = vadd.f32 %v3298, %v3377
    %v3386 = vadd.f32 %v3299, %v3379
    %v3387 = vxor.u32 %v3383, 2147483648
    %v3388 = vmul.f32 %v3387, 1.442695
    %v3389 = vpow.pop %v3388
    %v3390 = vadd.f32 %v3389, 1.0
    %v3391 = vrcp.pop %v3390
    %v3392 = vmul.f32 1.0, %v3391
    %v3393 = vxor.u32 %v3384, 2147483648
    %v3394 = vmul.f32 %v3393, 1.442695
    %v3395 = vpow.pop %v3394
    %v3396 = vadd.f32 %v3395, 1.0
    %v3397 = vrcp.pop %v3396
    %v3398 = vmul.f32 1.0, %v3397
    %v3399 = vtanh.pop %v3385
    %v3400 = vxor.u32 %v3386, 2147483648
    %v3401 = vmul.f32 %v3400, 1.442695
    %v3402 = vpow.pop %v3401
    %v3403 = vadd.f32 %v3402, 1.0
    %v3404 = vrcp.pop %v3403
    %v3405 = vmul.f32 1.0, %v3404
    %v3406 = vmul.f32 %v3398, %v3291
    %v3407 = vmul.f32 %v3392, %v3399
    %v3408 = vadd.f32 %v3406, %v3407
    %v3409 = vtanh.pop %v3408
    %v3410 = vmul.f32 %v3405, %v3409
    %s3411 = scalar_lea.vmem [#allocation3], 56
    %3412 = vst [vmem:[%s3411] sm:$0xff] %v3410
    %v3413 = vld [vmem:[#allocation3] sm:$0xff]
    %v3414 = vld [vmem:[#allocation3 + $0x38] sm:$0xff]
    %v3415 = vsel %vm109, %v3413, %v3414
    %3416 = vst [vmem:[#allocation3] sm:$0xff] %v3415
    %v3417 = vsel %vm109, %v3414, %v3413
    %3418 = vst [vmem:[#allocation3 + $0x38] sm:$0xff] %v3417
    %v3419 = vld [vmem:[#allocation3 + $0x8] sm:$0xff]
    %v3420 = vld [vmem:[#allocation3 + $0x30] sm:$0xff]
    %v3421 = vsel %vm109, %v3419, %v3420
    %3422 = vst [vmem:[#allocation3 + $0x8] sm:$0xff] %v3421
    %v3423 = vsel %vm109, %v3420, %v3419
    %3424 = vst [vmem:[#allocation3 + $0x30] sm:$0xff] %v3423
    %v3425 = vld [vmem:[#allocation3 + $0x10] sm:$0xff]
    %v3426 = vld [vmem:[#allocation3 + $0x28] sm:$0xff]
    %v3427 = vsel %vm109, %v3425, %v3426
    %3428 = vst [vmem:[#allocation3 + $0x10] sm:$0xff] %v3427
    %v3429 = vsel %vm109, %v3426, %v3425
    %3430 = vst [vmem:[#allocation3 + $0x28] sm:$0xff] %v3429
    %v3431 = vld [vmem:[#allocation3 + $0x18] sm:$0xff]
    %v3432 = vld [vmem:[#allocation3 + $0x20] sm:$0xff]
    %v3433 = vsel %vm109, %v3431, %v3432
    %3434 = vst [vmem:[#allocation3 + $0x18] sm:$0xff] %v3433
    %v3435 = vsel %vm109, %v3432, %v3431
    %3436 = vst [vmem:[#allocation3 + $0x20] sm:$0xff] %v3435
    %v3437 = vld [vmem:[#allocation3] sm:$0xff]
    %v3438 = vld [vmem:[#allocation3 + $0x8] sm:$0xff]
    %v3439 = vld [vmem:[#allocation3 + $0x10] sm:$0xff]
    %v3440 = vld [vmem:[#allocation3 + $0x18] sm:$0xff]
    %v3441 = vld [vmem:[#allocation3 + $0x20] sm:$0xff]
    %v3442 = vld [vmem:[#allocation3 + $0x28] sm:$0xff]
    %v3443 = vld [vmem:[#allocation3 + $0x30] sm:$0xff]
    %v3444 = vld [vmem:[#allocation3 + $0x38] sm:$0xff]
    %v3445 = vpack.c.bf16 %v3438, %v3437
    %v3446 = vpack.c.bf16 %v3440, %v3439
    %v3447 = vpack.c.bf16 %v3442, %v3441
    %v3448 = vpack.c.bf16 %v3444, %v3443
    %s3449 = scalar_lea.vmem [#allocation5], 512
    %v3450 = vld [vmem:[%s3449] sm:$0xff]
    %v3451 = vld [vmem:[%s3449 + $0x8] sm:$0xff]
    %v3452 = vld [vmem:[%s3449 + $0x10] sm:$0xff]
    %v3453 = vld [vmem:[%s3449 + $0x18] sm:$0xff]
    %v3454 = vld [vmem:[%s3449 + $0x20] sm:$0xff]
    %v3455 = vld [vmem:[%s3449 + $0x28] sm:$0xff]
    %v3456 = vld [vmem:[%s3449 + $0x30] sm:$0xff]
    %v3457 = vld [vmem:[%s3449 + $0x38] sm:$0xff]
    %v3458 = vld [vmem:[%s3449 + $0x40] sm:$0xff]
    %v3459 = vld [vmem:[%s3449 + $0x48] sm:$0xff]
    %v3460 = vld [vmem:[%s3449 + $0x50] sm:$0xff]
    %v3461 = vld [vmem:[%s3449 + $0x58] sm:$0xff]
    %v3462 = vld [vmem:[%s3449 + $0x60] sm:$0xff]
    %v3463 = vld [vmem:[%s3449 + $0x68] sm:$0xff]
    %v3464 = vld [vmem:[%s3449 + $0x70] sm:$0xff]
    %v3465 = vld [vmem:[%s3449 + $0x78] sm:$0xff]
    %v3466 = vld [vmem:[%s3449 + $0x80] sm:$0xff]
    %v3467 = vld [vmem:[%s3449 + $0x88] sm:$0xff]
    %v3468 = vld [vmem:[%s3449 + $0x90] sm:$0xff]
    %v3469 = vld [vmem:[%s3449 + $0x98] sm:$0xff]
    %v3470 = vld [vmem:[%s3449 + $0xa0] sm:$0xff]
    %v3471 = vld [vmem:[%s3449 + $0xa8] sm:$0xff]
    %v3472 = vld [vmem:[%s3449 + $0xb0] sm:$0xff]
    %v3473 = vld [vmem:[%s3449 + $0xb8] sm:$0xff]
    %v3474 = vld [vmem:[%s3449 + $0xc0] sm:$0xff]
    %v3475 = vld [vmem:[%s3449 + $0xc8] sm:$0xff]
    %v3476 = vld [vmem:[%s3449 + $0xd0] sm:$0xff]
    %v3477 = vld [vmem:[%s3449 + $0xd8] sm:$0xff]
    %v3478 = vld [vmem:[%s3449 + $0xe0] sm:$0xff]
    %v3479 = vld [vmem:[%s3449 + $0xe8] sm:$0xff]
    %v3480 = vld [vmem:[%s3449 + $0xf0] sm:$0xff]
    %v3481 = vld [vmem:[%s3449 + $0xf8] sm:$0xff]
    %s3482 = scalar_lea.vmem %s3, 8
    %v3483 = vld [vmem:[%s3482] sm:$0xf]
    %v3485 = vlaneseq
    %v3486 = vshrl.u32 %v3485, 7
    %v3487 = vsub.s32 0, %v3486
    %v3488 = vrot.slane %v3483, %v3487
    %v3489 = vlaneseq
    %v3490 = vshrl.u32 %v3489, 7
    %v3491 = vsub.s32 1, %v3490
    %v3492 = vrot.slane %v3483, %v3491
    %v3493 = vlaneseq
    %v3494 = vshrl.u32 %v3493, 7
    %v3495 = vsub.s32 2, %v3494
    %v3496 = vrot.slane %v3483, %v3495
    %v3497 = vlaneseq
    %v3498 = vshrl.u32 %v3497, 7
    %v3499 = vsub.s32 3, %v3498
    %v3500 = vrot.slane %v3483, %v3499
    %v3537 = vunpack.c.l.b16 %v3450
    %v3538 = vunpack.c.h.b16 %v3450
    %v3539 = vunpack.c.l.b16 %v3451
    %v3540 = vunpack.c.h.b16 %v3451
    %v3541 = vunpack.c.l.b16 %v3452
    %v3542 = vunpack.c.h.b16 %v3452
    %v3543 = vunpack.c.l.b16 %v3453
    %v3544 = vunpack.c.h.b16 %v3453
    %v3545 = vunpack.c.l.b16 %v3454
    %v3546 = vunpack.c.h.b16 %v3454
    %v3547 = vunpack.c.l.b16 %v3455
    %v3548 = vunpack.c.h.b16 %v3455
    %v3549 = vunpack.c.l.b16 %v3456
    %v3550 = vunpack.c.h.b16 %v3456
    %v3551 = vunpack.c.l.b16 %v3457
    %v3552 = vunpack.c.h.b16 %v3457
    %v3553 = vunpack.c.l.b16 %v3458
    %v3554 = vunpack.c.h.b16 %v3458
    %v3555 = vunpack.c.l.b16 %v3459
    %v3556 = vunpack.c.h.b16 %v3459
    %v3557 = vunpack.c.l.b16 %v3460
    %v3558 = vunpack.c.h.b16 %v3460
    %v3559 = vunpack.c.l.b16 %v3461
    %v3560 = vunpack.c.h.b16 %v3461
    %v3561 = vunpack.c.l.b16 %v3462
    %v3562 = vunpack.c.h.b16 %v3462
    %v3563 = vunpack.c.l.b16 %v3463
    %v3564 = vunpack.c.h.b16 %v3463
    %v3565 = vunpack.c.l.b16 %v3464
    %v3566 = vunpack.c.h.b16 %v3464
    %v3567 = vunpack.c.l.b16 %v3465
    %v3568 = vunpack.c.h.b16 %v3465
    %v3569 = vunpack.c.l.b16 %v3466
    %v3570 = vunpack.c.h.b16 %v3466
    %v3571 = vunpack.c.l.b16 %v3467
    %v3572 = vunpack.c.h.b16 %v3467
    %v3573 = vunpack.c.l.b16 %v3468
    %v3574 = vunpack.c.h.b16 %v3468
    %v3575 = vunpack.c.l.b16 %v3469
    %v3576 = vunpack.c.h.b16 %v3469
    %v3577 = vunpack.c.l.b16 %v3470
    %v3578 = vunpack.c.h.b16 %v3470
    %v3579 = vunpack.c.l.b16 %v3471
    %v3580 = vunpack.c.h.b16 %v3471
    %v3581 = vunpack.c.l.b16 %v3472
    %v3582 = vunpack.c.h.b16 %v3472
    %v3583 = vunpack.c.l.b16 %v3473
    %v3584 = vunpack.c.h.b16 %v3473
    %v3585 = vunpack.c.l.b16 %v3474
    %v3586 = vunpack.c.h.b16 %v3474
    %v3587 = vunpack.c.l.b16 %v3475
    %v3588 = vunpack.c.h.b16 %v3475
    %v3589 = vunpack.c.l.b16 %v3476
    %v3590 = vunpack.c.h.b16 %v3476
    %v3591 = vunpack.c.l.b16 %v3477
    %v3592 = vunpack.c.h.b16 %v3477
    %v3593 = vunpack.c.l.b16 %v3478
    %v3594 = vunpack.c.h.b16 %v3478
    %v3595 = vunpack.c.l.b16 %v3479
    %v3596 = vunpack.c.h.b16 %v3479
    %v3597 = vunpack.c.l.b16 %v3480
    %v3598 = vunpack.c.h.b16 %v3480
    %v3599 = vunpack.c.l.b16 %v3481
    %v3600 = vunpack.c.h.b16 %v3481
    %v3601 = vpack.c.b16 %v3541, %v3537
    %v3602 = vpack.c.b16 %v3542, %v3538
    %v3603 = vpack.c.b16 %v3543, %v3539
    %v3604 = vpack.c.b16 %v3544, %v3540
    %v3605 = vpack.c.b16 %v3549, %v3545
    %v3606 = vpack.c.b16 %v3550, %v3546
    %v3607 = vpack.c.b16 %v3551, %v3547
    %v3608 = vpack.c.b16 %v3552, %v3548
    %v3609 = vpack.c.b16 %v3557, %v3553
    %v3610 = vpack.c.b16 %v3558, %v3554
    %v3611 = vpack.c.b16 %v3559, %v3555
    %v3612 = vpack.c.b16 %v3560, %v3556
    %v3613 = vpack.c.b16 %v3565, %v3561
    %v3614 = vpack.c.b16 %v3566, %v3562
    %v3615 = vpack.c.b16 %v3567, %v3563
    %v3616 = vpack.c.b16 %v3568, %v3564
    %v3617 = vpack.c.b16 %v3573, %v3569
    %v3618 = vpack.c.b16 %v3574, %v3570
    %v3619 = vpack.c.b16 %v3575, %v3571
    %v3620 = vpack.c.b16 %v3576, %v3572
    %v3621 = vpack.c.b16 %v3581, %v3577
    %v3622 = vpack.c.b16 %v3582, %v3578
    %v3623 = vpack.c.b16 %v3583, %v3579
    %v3624 = vpack.c.b16 %v3584, %v3580
    %v3625 = vpack.c.b16 %v3589, %v3585
    %v3626 = vpack.c.b16 %v3590, %v3586
    %v3627 = vpack.c.b16 %v3591, %v3587
    %v3628 = vpack.c.b16 %v3592, %v3588
    %v3629 = vpack.c.b16 %v3597, %v3593
    %v3630 = vpack.c.b16 %v3598, %v3594
    %v3631 = vpack.c.b16 %v3599, %v3595
    %v3632 = vpack.c.b16 %v3600, %v3596
    %3665 = vmatprep.subr.bf16.mxu0 %v3602
    %3666 = vmatpush1.bf16.msra.mxu0 %v3601
    %3667 = vmatprep.subr.bf16.mxu0 %v3606
    %3668 = vmatpush1.bf16.msra.mxu0 %v3605
    %3669 = vmatprep.subr.bf16.mxu0 %v3610
    %3670 = vmatpush1.bf16.msra.mxu0 %v3609
    %3671 = vmatprep.subr.bf16.mxu0 %v3614
    %3672 = vmatpush1.bf16.msra.mxu0 %v3613
    %3673 = vmatprep.subr.bf16.mxu0 %v3618
    %3674 = vmatpush1.bf16.msra.mxu0 %v3617
    %3675 = vmatprep.subr.bf16.mxu0 %v3622
    %3676 = vmatpush1.bf16.msra.mxu0 %v3621
    %3677 = vmatprep.subr.bf16.mxu0 %v3626
    %3678 = vmatpush1.bf16.msra.mxu0 %v3625
    %3679 = vmatprep.subr.bf16.mxu0 %v3630
    %3680 = vmatpush1.bf16.msra.mxu0 %v3629
    %3681 = vmatprep.subr.bf16.mxu0 0
    %3682 = vmatpush1.bf16.msra.mxu0 0
    %3683 = vmatprep.subr.bf16.mxu0 0
    %3684 = vmatpush1.bf16.msra.mxu0 0
    %3685 = vmatprep.subr.bf16.mxu0 0
    %3686 = vmatpush1.bf16.msra.mxu0 0
    %3687 = vmatprep.subr.bf16.mxu0 0
    %3688 = vmatpush1.bf16.msra.mxu0 0
    %3689 = vmatprep.subr.bf16.mxu0 0
    %3690 = vmatpush1.bf16.msra.mxu0 0
    %3691 = vmatprep.subr.bf16.mxu0 0
    %3692 = vmatpush1.bf16.msra.mxu0 0
    %3693 = vmatprep.subr.bf16.mxu0 0
    %3694 = vmatpush1.bf16.msra.mxu0 0
    %3695 = vmatprep.subr.bf16.mxu0 0
    %3696 = vmatpush1.bf16.msra.mxu0 0
    %3697 = vmatprep.mubr.bf16.mxu0 0
    %3698 = vmatmul.mubr.bf16.gmra.mrb[0].mxu0 %v3445
    %v3699 = vpop.f32.mrb[0].mxu0
    %v3700 = vadd.f32 %v3488, %v3699
    %v3701 = vpop.f32.mrb[0].mxu0
    %v3702 = vadd.f32 %v3492, %v3701
    %v3703 = vpop.f32.mrb[0].mxu0
    %v3704 = vadd.f32 %v3488, %v3703
    %v3705 = vpop.f32.mrb[0].mxu0
    %v3706 = vadd.f32 %v3492, %v3705
    %3707 = vmatprep.mubr.bf16.mxu0 0
    %3708 = vmatmul.mubr.bf16.gmra.mrb[0].mxu0 %v3446
    %v3709 = vpop.f32.mrb[0].mxu0
    %v3710 = vadd.f32 %v3488, %v3709
    %v3711 = vpop.f32.mrb[0].mxu0
    %v3712 = vadd.f32 %v3492, %v3711
    %v3713 = vpop.f32.mrb[0].mxu0
    %v3714 = vadd.f32 %v3488, %v3713
    %v3715 = vpop.f32.mrb[0].mxu0
    %v3716 = vadd.f32 %v3492, %v3715
    %3717 = vmatprep.mubr.bf16.mxu0 0
    %3718 = vmatmul.mubr.bf16.gmra.mrb[0].mxu0 %v3447
    %v3719 = vpop.f32.mrb[0].mxu0
    %v3720 = vadd.f32 %v3488, %v3719
    %v3721 = vpop.f32.mrb[0].mxu0
    %v3722 = vadd.f32 %v3492, %v3721
    %v3723 = vpop.f32.mrb[0].mxu0
    %v3724 = vadd.f32 %v3488, %v3723
    %v3725 = vpop.f32.mrb[0].mxu0
    %v3726 = vadd.f32 %v3492, %v3725
    %3727 = vmatprep.mubr.bf16.mxu0 0
    %3728 = vmatmul.mubr.bf16.gmra.mrb[0].mxu0 %v3448
    %v3729 = vpop.f32.mrb[0].mxu0
    %v3730 = vadd.f32 %v3488, %v3729
    %v3731 = vpop.f32.mrb[0].mxu0
    %v3732 = vadd.f32 %v3492, %v3731
    %v3733 = vpop.f32.mrb[0].mxu0
    %v3734 = vadd.f32 %v3488, %v3733
    %v3735 = vpop.f32.mrb[0].mxu0
    %v3736 = vadd.f32 %v3492, %v3735
    %3737 = vdwg.mxu0
    %3738 = vmatprep.subr.bf16.mxu0 %v3604
    %3739 = vmatpush1.bf16.msra.mxu0 %v3603
    %3740 = vmatprep.subr.bf16.mxu0 %v3608
    %3741 = vmatpush1.bf16.msra.mxu0 %v3607
    %3742 = vmatprep.subr.bf16.mxu0 %v3612
    %3743 = vmatpush1.bf16.msra.mxu0 %v3611
    %3744 = vmatprep.subr.bf16.mxu0 %v3616
    %3745 = vmatpush1.bf16.msra.mxu0 %v3615
    %3746 = vmatprep.subr.bf16.mxu0 %v3620
    %3747 = vmatpush1.bf16.msra.mxu0 %v3619
    %3748 = vmatprep.subr.bf16.mxu0 %v3624
    %3749 = vmatpush1.bf16.msra.mxu0 %v3623
    %3750 = vmatprep.subr.bf16.mxu0 %v3628
    %3751 = vmatpush1.bf16.msra.mxu0 %v3627
    %3752 = vmatprep.subr.bf16.mxu0 %v3632
    %3753 = vmatpush1.bf16.msra.mxu0 %v3631
    %3754 = vmatprep.subr.bf16.mxu0 0
    %3755 = vmatpush1.bf16.msra.mxu0 0
    %3756 = vmatprep.subr.bf16.mxu0 0
    %3757 = vmatpush1.bf16.msra.mxu0 0
    %3758 = vmatprep.subr.bf16.mxu0 0
    %3759 = vmatpush1.bf16.msra.mxu0 0
    %3760 = vmatprep.subr.bf16.mxu0 0
    %3761 = vmatpush1.bf16.msra.mxu0 0
    %3762 = vmatprep.subr.bf16.mxu0 0
    %3763 = vmatpush1.bf16.msra.mxu0 0
    %3764 = vmatprep.subr.bf16.mxu0 0
    %3765 = vmatpush1.bf16.msra.mxu0 0
    %3766 = vmatprep.subr.bf16.mxu0 0
    %3767 = vmatpush1.bf16.msra.mxu0 0
    %3768 = vmatprep.subr.bf16.mxu0 0
    %3769 = vmatpush1.bf16.msra.mxu0 0
    %3770 = vmatprep.mubr.bf16.mxu0 0
    %3771 = vmatmul.mubr.bf16.gmra.mrb[0].mxu0 %v3445
    %v3772 = vpop.f32.mrb[0].mxu0
    %v3773 = vadd.f32 %v3496, %v3772
    %v3774 = vpop.f32.mrb[0].mxu0
    %v3775 = vadd.f32 %v3500, %v3774
    %v3776 = vpop.f32.mrb[0].mxu0
    %v3777 = vadd.f32 %v3496, %v3776
    %v3778 = vpop.f32.mrb[0].mxu0
    %v3779 = vadd.f32 %v3500, %v3778
    %3780 = vmatprep.mubr.bf16.mxu0 0
    %3781 = vmatmul.mubr.bf16.gmra.mrb[0].mxu0 %v3446
    %v3782 = vpop.f32.mrb[0].mxu0
    %v3783 = vadd.f32 %v3496, %v3782
    %v3784 = vpop.f32.mrb[0].mxu0
    %v3785 = vadd.f32 %v3500, %v3784
    %v3786 = vpop.f32.mrb[0].mxu0
    %v3787 = vadd.f32 %v3496, %v3786
    %v3788 = vpop.f32.mrb[0].mxu0
    %v3789 = vadd.f32 %v3500, %v3788
    %3790 = vmatprep.mubr.bf16.mxu0 0
    %3791 = vmatmul.mubr.bf16.gmra.mrb[0].mxu0 %v3447
    %v3792 = vpop.f32.mrb[0].mxu0
    %v3793 = vadd.f32 %v3496, %v3792
    %v3794 = vpop.f32.mrb[0].mxu0
    %v3795 = vadd.f32 %v3500, %v3794
    %v3796 = vpop.f32.mrb[0].mxu0
    %v3797 = vadd.f32 %v3496, %v3796
    %v3798 = vpop.f32.mrb[0].mxu0
    %v3799 = vadd.f32 %v3500, %v3798
    %3800 = vmatprep.mubr.bf16.mxu0 0
    %3801 = vmatmul.mubr.bf16.gmra.mrb[0].mxu0 %v3448
    %v3802 = vpop.f32.mrb[0].mxu0
    %v3803 = vadd.f32 %v3496, %v3802
    %v3804 = vpop.f32.mrb[0].mxu0
    %v3805 = vadd.f32 %v3500, %v3804
    %v3806 = vpop.f32.mrb[0].mxu0
    %v3807 = vadd.f32 %v3496, %v3806
    %v3808 = vpop.f32.mrb[0].mxu0
    %v3809 = vadd.f32 %v3500, %v3808
    %3810 = vdwg.mxu0
    %3811 = vst [vmem:[#allocation4] sm:$0xff] %v3700
    %3812 = vst [vmem:[#allocation4 + $0x8] sm:$0xff] %v3702
    %3813 = vst [vmem:[#allocation4 + $0x10] sm:$0xff] %v3773
    %3814 = vst [vmem:[#allocation4 + $0x18] sm:$0xff] %v3775
    %3815 = vst [vmem:[#allocation4 + $0x20] sm:$0xff] %v3704
    %3816 = vst [vmem:[#allocation4 + $0x28] sm:$0xff] %v3706
    %3817 = vst [vmem:[#allocation4 + $0x30] sm:$0xff] %v3777
    %3818 = vst [vmem:[#allocation4 + $0x38] sm:$0xff] %v3779
    %3819 = vst [vmem:[#allocation4 + $0x40] sm:$0xff] %v3710
    %3820 = vst [vmem:[#allocation4 + $0x48] sm:$0xff] %v3712
    %3821 = vst [vmem:[#allocation4 + $0x50] sm:$0xff] %v3783
    %3822 = vst [vmem:[#allocation4 + $0x58] sm:$0xff] %v3785
    %3823 = vst [vmem:[#allocation4 + $0x60] sm:$0xff] %v3714
    %3824 = vst [vmem:[#allocation4 + $0x68] sm:$0xff] %v3716
    %3825 = vst [vmem:[#allocation4 + $0x70] sm:$0xff] %v3787
    %3826 = vst [vmem:[#allocation4 + $0x78] sm:$0xff] %v3789
    %3827 = vst [vmem:[#allocation4 + $0x80] sm:$0xff] %v3720
    %3828 = vst [vmem:[#allocation4 + $0x88] sm:$0xff] %v3722
    %3829 = vst [vmem:[#allocation4 + $0x90] sm:$0xff] %v3793
    %3830 = vst [vmem:[#allocation4 + $0x98] sm:$0xff] %v3795
    %3831 = vst [vmem:[#allocation4 + $0xa0] sm:$0xff] %v3724
    %3832 = vst [vmem:[#allocation4 + $0xa8] sm:$0xff] %v3726
    %3833 = vst [vmem:[#allocation4 + $0xb0] sm:$0xff] %v3797
    %3834 = vst [vmem:[#allocation4 + $0xb8] sm:$0xff] %v3799
    %3835 = vst [vmem:[#allocation4 + $0xc0] sm:$0xff] %v3730
    %3836 = vst [vmem:[#allocation4 + $0xc8] sm:$0xff] %v3732
    %3837 = vst [vmem:[#allocation4 + $0xd0] sm:$0xff] %v3803
    %3838 = vst [vmem:[#allocation4 + $0xd8] sm:$0xff] %v3805
    %3839 = vst [vmem:[#allocation4 + $0xe0] sm:$0xff] %v3734
    %3840 = vst [vmem:[#allocation4 + $0xe8] sm:$0xff] %v3736
    %3841 = vst [vmem:[#allocation4 + $0xf0] sm:$0xff] %v3807
    %3842 = vst [vmem:[#allocation4 + $0xf8] sm:$0xff] %v3809
    %v3843 = vld [vmem:[#allocation4] sm:$0xff]
    %v3844 = vld [vmem:[#allocation4 + $0x8] sm:$0xff]
    %v3845 = vld [vmem:[#allocation4 + $0x10] sm:$0xff]
    %v3846 = vld [vmem:[#allocation4 + $0x18] sm:$0xff]
    %v3847 = vld [vmem:[#allocation4 + $0xe0] sm:$0xff]
    %v3848 = vld [vmem:[#allocation4 + $0xe8] sm:$0xff]
    %v3849 = vld [vmem:[#allocation4 + $0xf0] sm:$0xff]
    %v3850 = vld [vmem:[#allocation4 + $0xf8] sm:$0xff]
    %v3851 = vsel %vm105, %v3843, %v3847
    %v3852 = vsel %vm106, %v3844, %v3848
    %v3853 = vsel %vm107, %v3845, %v3849
    %v3854 = vsel %vm108, %v3846, %v3850
    %3855 = vst [vmem:[#allocation4] sm:$0xff] %v3851
    %3856 = vst [vmem:[#allocation4 + $0x8] sm:$0xff] %v3852
    %3857 = vst [vmem:[#allocation4 + $0x10] sm:$0xff] %v3853
    %3858 = vst [vmem:[#allocation4 + $0x18] sm:$0xff] %v3854
    %v3859 = vsel %vm105, %v3847, %v3843
    %v3860 = vsel %vm106, %v3848, %v3844
    %v3861 = vsel %vm107, %v3849, %v3845
    %v3862 = vsel %vm108, %v3850, %v3846
    %3863 = vst [vmem:[#allocation4 + $0xe0] sm:$0xff] %v3859
    %3864 = vst [vmem:[#allocation4 + $0xe8] sm:$0xff] %v3860
    %3865 = vst [vmem:[#allocation4 + $0xf0] sm:$0xff] %v3861
    %3866 = vst [vmem:[#allocation4 + $0xf8] sm:$0xff] %v3862
    %v3867 = vld [vmem:[#allocation4 + $0x20] sm:$0xff]
    %v3868 = vld [vmem:[#allocation4 + $0x28] sm:$0xff]
    %v3869 = vld [vmem:[#allocation4 + $0x30] sm:$0xff]
    %v3870 = vld [vmem:[#allocation4 + $0x38] sm:$0xff]
    %v3871 = vld [vmem:[#allocation4 + $0xc0] sm:$0xff]
    %v3872 = vld [vmem:[#allocation4 + $0xc8] sm:$0xff]
    %v3873 = vld [vmem:[#allocation4 + $0xd0] sm:$0xff]
    %v3874 = vld [vmem:[#allocation4 + $0xd8] sm:$0xff]
    %v3875 = vsel %vm105, %v3867, %v3871
    %v3876 = vsel %vm106, %v3868, %v3872
    %v3877 = vsel %vm107, %v3869, %v3873
    %v3878 = vsel %vm108, %v3870, %v3874
    %3879 = vst [vmem:[#allocation4 + $0x20] sm:$0xff] %v3875
    %3880 = vst [vmem:[#allocation4 + $0x28] sm:$0xff] %v3876
    %3881 = vst [vmem:[#allocation4 + $0x30] sm:$0xff] %v3877
    %3882 = vst [vmem:[#allocation4 + $0x38] sm:$0xff] %v3878
    %v3883 = vsel %vm105, %v3871, %v3867
    %v3884 = vsel %vm106, %v3872, %v3868
    %v3885 = vsel %vm107, %v3873, %v3869
    %v3886 = vsel %vm108, %v3874, %v3870
    %3887 = vst [vmem:[#allocation4 + $0xc0] sm:$0xff] %v3883
    %3888 = vst [vmem:[#allocation4 + $0xc8] sm:$0xff] %v3884
    %3889 = vst [vmem:[#allocation4 + $0xd0] sm:$0xff] %v3885
    %3890 = vst [vmem:[#allocation4 + $0xd8] sm:$0xff] %v3886
    %v3891 = vld [vmem:[#allocation4 + $0x40] sm:$0xff]
    %v3892 = vld [vmem:[#allocation4 + $0x48] sm:$0xff]
    %v3893 = vld [vmem:[#allocation4 + $0x50] sm:$0xff]
    %v3894 = vld [vmem:[#allocation4 + $0x58] sm:$0xff]
    %v3895 = vld [vmem:[#allocation4 + $0xa0] sm:$0xff]
    %v3896 = vld [vmem:[#allocation4 + $0xa8] sm:$0xff]
    %v3897 = vld [vmem:[#allocation4 + $0xb0] sm:$0xff]
    %v3898 = vld [vmem:[#allocation4 + $0xb8] sm:$0xff]
    %v3899 = vsel %vm105, %v3891, %v3895
    %v3900 = vsel %vm106, %v3892, %v3896
    %v3901 = vsel %vm107, %v3893, %v3897
    %v3902 = vsel %vm108, %v3894, %v3898
    %3903 = vst [vmem:[#allocation4 + $0x40] sm:$0xff] %v3899
    %3904 = vst [vmem:[#allocation4 + $0x48] sm:$0xff] %v3900
    %3905 = vst [vmem:[#allocation4 + $0x50] sm:$0xff] %v3901
    %3906 = vst [vmem:[#allocation4 + $0x58] sm:$0xff] %v3902
    %v3907 = vsel %vm105, %v3895, %v3891
    %v3908 = vsel %vm106, %v3896, %v3892
    %v3909 = vsel %vm107, %v3897, %v3893
    %v3910 = vsel %vm108, %v3898, %v3894
    %3911 = vst [vmem:[#allocation4 + $0xa0] sm:$0xff] %v3907
    %3912 = vst [vmem:[#allocation4 + $0xa8] sm:$0xff] %v3908
    %3913 = vst [vmem:[#allocation4 + $0xb0] sm:$0xff] %v3909
    %3914 = vst [vmem:[#allocation4 + $0xb8] sm:$0xff] %v3910
    %v3915 = vld [vmem:[#allocation4 + $0x60] sm:$0xff]
    %v3916 = vld [vmem:[#allocation4 + $0x68] sm:$0xff]
    %v3917 = vld [vmem:[#allocation4 + $0x70] sm:$0xff]
    %v3918 = vld [vmem:[#allocation4 + $0x78] sm:$0xff]
    %v3919 = vld [vmem:[#allocation4 + $0x80] sm:$0xff]
    %v3920 = vld [vmem:[#allocation4 + $0x88] sm:$0xff]
    %v3921 = vld [vmem:[#allocation4 + $0x90] sm:$0xff]
    %v3922 = vld [vmem:[#allocation4 + $0x98] sm:$0xff]
    %v3923 = vsel %vm105, %v3915, %v3919
    %v3924 = vsel %vm106, %v3916, %v3920
    %v3925 = vsel %vm107, %v3917, %v3921
    %v3926 = vsel %vm108, %v3918, %v3922
    %3927 = vst [vmem:[#allocation4 + $0x60] sm:$0xff] %v3923
    %3928 = vst [vmem:[#allocation4 + $0x68] sm:$0xff] %v3924
    %3929 = vst [vmem:[#allocation4 + $0x70] sm:$0xff] %v3925
    %3930 = vst [vmem:[#allocation4 + $0x78] sm:$0xff] %v3926
    %v3931 = vsel %vm105, %v3919, %v3915
    %v3932 = vsel %vm106, %v3920, %v3916
    %v3933 = vsel %vm107, %v3921, %v3917
    %v3934 = vsel %vm108, %v3922, %v3918
    %3935 = vst [vmem:[#allocation4 + $0x80] sm:$0xff] %v3931
    %3936 = vst [vmem:[#allocation4 + $0x88] sm:$0xff] %v3932
    %3937 = vst [vmem:[#allocation4 + $0x90] sm:$0xff] %v3933
    %3938 = vst [vmem:[#allocation4 + $0x98] sm:$0xff] %v3934
    %s3939 = scalar_lea.vmem [#allocation7], 512
    %v3940 = vld [vmem:[%s3939] sm:$0xff]
    %v3941 = vld [vmem:[%s3939 + $0x8] sm:$0xff]
    %v3942 = vld [vmem:[%s3939 + $0x10] sm:$0xff]
    %v3943 = vld [vmem:[%s3939 + $0x18] sm:$0xff]
    %v3944 = vld [vmem:[%s3939 + $0x20] sm:$0xff]
    %v3945 = vld [vmem:[%s3939 + $0x28] sm:$0xff]
    %v3946 = vld [vmem:[%s3939 + $0x30] sm:$0xff]
    %v3947 = vld [vmem:[%s3939 + $0x38] sm:$0xff]
    %v3948 = vld [vmem:[%s3939 + $0x40] sm:$0xff]
    %v3949 = vld [vmem:[%s3939 + $0x48] sm:$0xff]
    %v3950 = vld [vmem:[%s3939 + $0x50] sm:$0xff]
    %v3951 = vld [vmem:[%s3939 + $0x58] sm:$0xff]
    %v3952 = vld [vmem:[%s3939 + $0x60] sm:$0xff]
    %v3953 = vld [vmem:[%s3939 + $0x68] sm:$0xff]
    %v3954 = vld [vmem:[%s3939 + $0x70] sm:$0xff]
    %v3955 = vld [vmem:[%s3939 + $0x78] sm:$0xff]
    %v3956 = vld [vmem:[%s3939 + $0x80] sm:$0xff]
    %v3957 = vld [vmem:[%s3939 + $0x88] sm:$0xff]
    %v3958 = vld [vmem:[%s3939 + $0x90] sm:$0xff]
    %v3959 = vld [vmem:[%s3939 + $0x98] sm:$0xff]
    %v3960 = vld [vmem:[%s3939 + $0xa0] sm:$0xff]
    %v3961 = vld [vmem:[%s3939 + $0xa8] sm:$0xff]
    %v3962 = vld [vmem:[%s3939 + $0xb0] sm:$0xff]
    %v3963 = vld [vmem:[%s3939 + $0xb8] sm:$0xff]
    %v3964 = vld [vmem:[%s3939 + $0xc0] sm:$0xff]
    %v3965 = vld [vmem:[%s3939 + $0xc8] sm:$0xff]
    %v3966 = vld [vmem:[%s3939 + $0xd0] sm:$0xff]
    %v3967 = vld [vmem:[%s3939 + $0xd8] sm:$0xff]
    %v3968 = vld [vmem:[%s3939 + $0xe0] sm:$0xff]
    %v3969 = vld [vmem:[%s3939 + $0xe8] sm:$0xff]
    %v3970 = vld [vmem:[%s3939 + $0xf0] sm:$0xff]
    %v3971 = vld [vmem:[%s3939 + $0xf8] sm:$0xff]
    %v3972 = vld [vmem:[%s644] sm:$0xff]
    %v3973 = vld [vmem:[%s644 + $0x8] sm:$0xff]
    %v3974 = vld [vmem:[%s644 + $0x10] sm:$0xff]
    %v3975 = vld [vmem:[%s644 + $0x18] sm:$0xff]
    %v4008 = vunpack.c.l.b16 %v3940
    %v4009 = vunpack.c.h.b16 %v3940
    %v4010 = vunpack.c.l.b16 %v3941
    %v4011 = vunpack.c.h.b16 %v3941
    %v4012 = vunpack.c.l.b16 %v3942
    %v4013 = vunpack.c.h.b16 %v3942
    %v4014 = vunpack.c.l.b16 %v3943
    %v4015 = vunpack.c.h.b16 %v3943
    %v4016 = vunpack.c.l.b16 %v3944
    %v4017 = vunpack.c.h.b16 %v3944
    %v4018 = vunpack.c.l.b16 %v3945
    %v4019 = vunpack.c.h.b16 %v3945
    %v4020 = vunpack.c.l.b16 %v3946
    %v4021 = vunpack.c.h.b16 %v3946
    %v4022 = vunpack.c.l.b16 %v3947
    %v4023 = vunpack.c.h.b16 %v3947
    %v4024 = vunpack.c.l.b16 %v3948
    %v4025 = vunpack.c.h.b16 %v3948
    %v4026 = vunpack.c.l.b16 %v3949
    %v4027 = vunpack.c.h.b16 %v3949
    %v4028 = vunpack.c.l.b16 %v3950
    %v4029 = vunpack.c.h.b16 %v3950
    %v4030 = vunpack.c.l.b16 %v3951
    %v4031 = vunpack.c.h.b16 %v3951
    %v4032 = vunpack.c.l.b16 %v3952
    %v4033 = vunpack.c.h.b16 %v3952
    %v4034 = vunpack.c.l.b16 %v3953
    %v4035 = vunpack.c.h.b16 %v3953
    %v4036 = vunpack.c.l.b16 %v3954
    %v4037 = vunpack.c.h.b16 %v3954
    %v4038 = vunpack.c.l.b16 %v3955
    %v4039 = vunpack.c.h.b16 %v3955
    %v4040 = vunpack.c.l.b16 %v3956
    %v4041 = vunpack.c.h.b16 %v3956
    %v4042 = vunpack.c.l.b16 %v3957
    %v4043 = vunpack.c.h.b16 %v3957
    %v4044 = vunpack.c.l.b16 %v3958
    %v4045 = vunpack.c.h.b16 %v3958
    %v4046 = vunpack.c.l.b16 %v3959
    %v4047 = vunpack.c.h.b16 %v3959
    %v4048 = vunpack.c.l.b16 %v3960
    %v4049 = vunpack.c.h.b16 %v3960
    %v4050 = vunpack.c.l.b16 %v3961
    %v4051 = vunpack.c.h.b16 %v3961
    %v4052 = vunpack.c.l.b16 %v3962
    %v4053 = vunpack.c.h.b16 %v3962
    %v4054 = vunpack.c.l.b16 %v3963
    %v4055 = vunpack.c.h.b16 %v3963
    %v4056 = vunpack.c.l.b16 %v3964
    %v4057 = vunpack.c.h.b16 %v3964
    %v4058 = vunpack.c.l.b16 %v3965
    %v4059 = vunpack.c.h.b16 %v3965
    %v4060 = vunpack.c.l.b16 %v3966
    %v4061 = vunpack.c.h.b16 %v3966
    %v4062 = vunpack.c.l.b16 %v3967
    %v4063 = vunpack.c.h.b16 %v3967
    %v4064 = vunpack.c.l.b16 %v3968
    %v4065 = vunpack.c.h.b16 %v3968
    %v4066 = vunpack.c.l.b16 %v3969
    %v4067 = vunpack.c.h.b16 %v3969
    %v4068 = vunpack.c.l.b16 %v3970
    %v4069 = vunpack.c.h.b16 %v3970
    %v4070 = vunpack.c.l.b16 %v3971
    %v4071 = vunpack.c.h.b16 %v3971
    %v4072 = vpack.c.b16 %v4012, %v4008
    %v4073 = vpack.c.b16 %v4013, %v4009
    %v4074 = vpack.c.b16 %v4014, %v4010
    %v4075 = vpack.c.b16 %v4015, %v4011
    %v4076 = vpack.c.b16 %v4020, %v4016
    %v4077 = vpack.c.b16 %v4021, %v4017
    %v4078 = vpack.c.b16 %v4022, %v4018
    %v4079 = vpack.c.b16 %v4023, %v4019
    %v4080 = vpack.c.b16 %v4028, %v4024
    %v4081 = vpack.c.b16 %v4029, %v4025
    %v4082 = vpack.c.b16 %v4030, %v4026
    %v4083 = vpack.c.b16 %v4031, %v4027
    %v4084 = vpack.c.b16 %v4036, %v4032
    %v4085 = vpack.c.b16 %v4037, %v4033
    %v4086 = vpack.c.b16 %v4038, %v4034
    %v4087 = vpack.c.b16 %v4039, %v4035
    %v4088 = vpack.c.b16 %v4044, %v4040
    %v4089 = vpack.c.b16 %v4045, %v4041
    %v4090 = vpack.c.b16 %v4046, %v4042
    %v4091 = vpack.c.b16 %v4047, %v4043
    %v4092 = vpack.c.b16 %v4052, %v4048
    %v4093 = vpack.c.b16 %v4053, %v4049
    %v4094 = vpack.c.b16 %v4054, %v4050
    %v4095 = vpack.c.b16 %v4055, %v4051
    %v4096 = vpack.c.b16 %v4060, %v4056
    %v4097 = vpack.c.b16 %v4061, %v4057
    %v4098 = vpack.c.b16 %v4062, %v4058
    %v4099 = vpack.c.b16 %v4063, %v4059
    %v4100 = vpack.c.b16 %v4068, %v4064
    %v4101 = vpack.c.b16 %v4069, %v4065
    %v4102 = vpack.c.b16 %v4070, %v4066
    %v4103 = vpack.c.b16 %v4071, %v4067
    %4136 = vmatprep.subr.bf16.mxu0 %v4073
    %4137 = vmatpush1.bf16.msra.mxu0 %v4072
    %4138 = vmatprep.subr.bf16.mxu0 %v4077
    %4139 = vmatpush1.bf16.msra.mxu0 %v4076
    %4140 = vmatprep.subr.bf16.mxu0 %v4081
    %4141 = vmatpush1.bf16.msra.mxu0 %v4080
    %4142 = vmatprep.subr.bf16.mxu0 %v4085
    %4143 = vmatpush1.bf16.msra.mxu0 %v4084
    %4144 = vmatprep.subr.bf16.mxu0 %v4089
    %4145 = vmatpush1.bf16.msra.mxu0 %v4088
    %4146 = vmatprep.subr.bf16.mxu0 %v4093
    %4147 = vmatpush1.bf16.msra.mxu0 %v4092
    %4148 = vmatprep.subr.bf16.mxu0 %v4097
    %4149 = vmatpush1.bf16.msra.mxu0 %v4096
    %4150 = vmatprep.subr.bf16.mxu0 %v4101
    %4151 = vmatpush1.bf16.msra.mxu0 %v4100
    %4152 = vmatprep.subr.bf16.mxu0 0
    %4153 = vmatpush1.bf16.msra.mxu0 0
    %4154 = vmatprep.subr.bf16.mxu0 0
    %4155 = vmatpush1.bf16.msra.mxu0 0
    %4156 = vmatprep.subr.bf16.mxu0 0
    %4157 = vmatpush1.bf16.msra.mxu0 0
    %4158 = vmatprep.subr.bf16.mxu0 0
    %4159 = vmatpush1.bf16.msra.mxu0 0
    %4160 = vmatprep.subr.bf16.mxu0 0
    %4161 = vmatpush1.bf16.msra.mxu0 0
    %4162 = vmatprep.subr.bf16.mxu0 0
    %4163 = vmatpush1.bf16.msra.mxu0 0
    %4164 = vmatprep.subr.bf16.mxu0 0
    %4165 = vmatpush1.bf16.msra.mxu0 0
    %4166 = vmatprep.subr.bf16.mxu0 0
    %4167 = vmatpush1.bf16.msra.mxu0 0
    %4168 = vmatprep.mubr.bf16.mxu0 0
    %4169 = vmatmul.mubr.bf16.gmra.mrb[0].mxu0 0
    %v4170 = vpop.f32.mrb[0].mxu0
    %v4171 = vadd.f32 0.0, %v4170
    %v4172 = vpop.f32.mrb[0].mxu0
    %v4173 = vadd.f32 0.0, %v4172
    %v4174 = vpop.f32.mrb[0].mxu0
    %v4175 = vpop.f32.mrb[0].mxu0
    %4176 = vdwg.mxu0
    %4177 = vmatprep.subr.bf16.mxu0 %v4075
    %4178 = vmatpush1.bf16.msra.mxu0 %v4074
    %4179 = vmatprep.subr.bf16.mxu0 %v4079
    %4180 = vmatpush1.bf16.msra.mxu0 %v4078
    %4181 = vmatprep.subr.bf16.mxu0 %v4083
    %4182 = vmatpush1.bf16.msra.mxu0 %v4082
    %4183 = vmatprep.subr.bf16.mxu0 %v4087
    %4184 = vmatpush1.bf16.msra.mxu0 %v4086
    %4185 = vmatprep.subr.bf16.mxu0 %v4091
    %4186 = vmatpush1.bf16.msra.mxu0 %v4090
    %4187 = vmatprep.subr.bf16.mxu0 %v4095
    %4188 = vmatpush1.bf16.msra.mxu0 %v4094
    %4189 = vmatprep.subr.bf16.mxu0 %v4099
    %4190 = vmatpush1.bf16.msra.mxu0 %v4098
    %4191 = vmatprep.subr.bf16.mxu0 %v4103
    %4192 = vmatpush1.bf16.msra.mxu0 %v4102
    %4193 = vmatprep.subr.bf16.mxu0 0
    %4194 = vmatpush1.bf16.msra.mxu0 0
    %4195 = vmatprep.subr.bf16.mxu0 0
    %4196 = vmatpush1.bf16.msra.mxu0 0
    %4197 = vmatprep.subr.bf16.mxu0 0
    %4198 = vmatpush1.bf16.msra.mxu0 0
    %4199 = vmatprep.subr.bf16.mxu0 0
    %4200 = vmatpush1.bf16.msra.mxu0 0
    %4201 = vmatprep.subr.bf16.mxu0 0
    %4202 = vmatpush1.bf16.msra.mxu0 0
    %4203 = vmatprep.subr.bf16.mxu0 0
    %4204 = vmatpush1.bf16.msra.mxu0 0
    %4205 = vmatprep.subr.bf16.mxu0 0
    %4206 = vmatpush1.bf16.msra.mxu0 0
    %4207 = vmatprep.subr.bf16.mxu0 0
    %4208 = vmatpush1.bf16.msra.mxu0 0
    %4209 = vmatprep.mubr.bf16.mxu0 0
    %4210 = vmatmul.mubr.bf16.gmra.mrb[0].mxu0 0
    %v4211 = vpop.f32.mrb[0].mxu0
    %v4212 = vadd.f32 0.0, %v4211
    %v4213 = vpop.f32.mrb[0].mxu0
    %v4214 = vadd.f32 0.0, %v4213
    %v4215 = vpop.f32.mrb[0].mxu0
    %v4216 = vpop.f32.mrb[0].mxu0
    %4217 = vdwg.mxu0
    %v4218 = vadd.f32 %v3972, %v4171
    %v4219 = vadd.f32 %v3973, %v4173
    %v4220 = vadd.f32 %v3974, %v4212
    %v4221 = vadd.f32 %v3975, %v4214
    %v4222 = vxor.u32 %v4218, 2147483648
    %v4223 = vmul.f32 %v4222, 1.442695
    %v4224 = vpow.pop %v4223
    %v4225 = vadd.f32 %v4224, 1.0
    %v4226 = vrcp.pop %v4225
    %v4227 = vmul.f32 1.0, %v4226
    %v4228 = vxor.u32 %v4219, 2147483648
    %v4229 = vmul.f32 %v4228, 1.442695
    %v4230 = vpow.pop %v4229
    %v4231 = vadd.f32 %v4230, 1.0
    %v4232 = vrcp.pop %v4231
    %v4233 = vmul.f32 1.0, %v4232
    %v4234 = vtanh.pop %v4220
    %v4235 = vxor.u32 %v4221, 2147483648
    %v4236 = vmul.f32 %v4235, 1.442695
    %v4237 = vpow.pop %v4236
    %v4238 = vadd.f32 %v4237, 1.0
    %v4239 = vrcp.pop %v4238
    %v4240 = vmul.f32 1.0, %v4239
    %v4241 = vmul.f32 %v4233, 0.0
    %v4242 = vmul.f32 %v4227, %v4234
    %v4243 = vadd.f32 %v4241, %v4242
    %v4244 = vtanh.pop %v4243
    %v4245 = vmul.f32 %v4240, %v4244
    %4246 = vst [vmem:[#allocation2] sm:$0xff] %v4245
    %v4247 = vld [vmem:[%s922] sm:$0xff]
    %v4248 = vld [vmem:[%s922 + $0x8] sm:$0xff]
    %v4249 = vld [vmem:[%s922 + $0x10] sm:$0xff]
    %v4250 = vld [vmem:[%s922 + $0x18] sm:$0xff]
    %v4251 = vpack.c.bf16 %v4245, %v4245
    %4252 = vmatprep.subr.bf16.mxu0 %v4073
    %4253 = vmatpush1.bf16.msra.mxu0 %v4072
    %4254 = vmatprep.subr.bf16.mxu0 %v4077
    %4255 = vmatpush1.bf16.msra.mxu0 %v4076
    %4256 = vmatprep.subr.bf16.mxu0 %v4081
    %4257 = vmatpush1.bf16.msra.mxu0 %v4080
    %4258 = vmatprep.subr.bf16.mxu0 %v4085
    %4259 = vmatpush1.bf16.msra.mxu0 %v4084
    %4260 = vmatprep.subr.bf16.mxu0 %v4089
    %4261 = vmatpush1.bf16.msra.mxu0 %v4088
    %4262 = vmatprep.subr.bf16.mxu0 %v4093
    %4263 = vmatpush1.bf16.msra.mxu0 %v4092
    %4264 = vmatprep.subr.bf16.mxu0 %v4097
    %4265 = vmatpush1.bf16.msra.mxu0 %v4096
    %4266 = vmatprep.subr.bf16.mxu0 %v4101
    %4267 = vmatpush1.bf16.msra.mxu0 %v4100
    %4268 = vmatprep.subr.bf16.mxu0 0
    %4269 = vmatpush1.bf16.msra.mxu0 0
    %4270 = vmatprep.subr.bf16.mxu0 0
    %4271 = vmatpush1.bf16.msra.mxu0 0
    %4272 = vmatprep.subr.bf16.mxu0 0
    %4273 = vmatpush1.bf16.msra.mxu0 0
    %4274 = vmatprep.subr.bf16.mxu0 0
    %4275 = vmatpush1.bf16.msra.mxu0 0
    %4276 = vmatprep.subr.bf16.mxu0 0
    %4277 = vmatpush1.bf16.msra.mxu0 0
    %4278 = vmatprep.subr.bf16.mxu0 0
    %4279 = vmatpush1.bf16.msra.mxu0 0
    %4280 = vmatprep.subr.bf16.mxu0 0
    %4281 = vmatpush1.bf16.msra.mxu0 0
    %4282 = vmatprep.subr.bf16.mxu0 0
    %4283 = vmatpush1.bf16.msra.mxu0 0
    %4284 = vmatprep.mubr.bf16.mxu0 0
    %4285 = vmatmul.mubr.bf16.gmra.mrb[0].mxu0 %v4251
    %v4286 = vpop.f32.mrb[0].mxu0
    %v4287 = vadd.f32 0.0, %v4286
    %v4288 = vpop.f32.mrb[0].mxu0
    %v4289 = vadd.f32 0.0, %v4288
    %v4290 = vpop.f32.mrb[0].mxu0
    %v4291 = vpop.f32.mrb[0].mxu0
    %4292 = vdwg.mxu0
    %4293 = vmatprep.subr.bf16.mxu0 %v4075
    %4294 = vmatpush1.bf16.msra.mxu0 %v4074
    %4295 = vmatprep.subr.bf16.mxu0 %v4079
    %4296 = vmatpush1.bf16.msra.mxu0 %v4078
    %4297 = vmatprep.subr.bf16.mxu0 %v4083
    %4298 = vmatpush1.bf16.msra.mxu0 %v4082
    %4299 = vmatprep.subr.bf16.mxu0 %v4087
    %4300 = vmatpush1.bf16.msra.mxu0 %v4086
    %4301 = vmatprep.subr.bf16.mxu0 %v4091
    %4302 = vmatpush1.bf16.msra.mxu0 %v4090
    %4303 = vmatprep.subr.bf16.mxu0 %v4095
    %4304 = vmatpush1.bf16.msra.mxu0 %v4094
    %4305 = vmatprep.subr.bf16.mxu0 %v4099
    %4306 = vmatpush1.bf16.msra.mxu0 %v4098
    %4307 = vmatprep.subr.bf16.mxu0 %v4103
    %4308 = vmatpush1.bf16.msra.mxu0 %v4102
    %4309 = vmatprep.subr.bf16.mxu0 0
    %4310 = vmatpush1.bf16.msra.mxu0 0
    %4311 = vmatprep.subr.bf16.mxu0 0
    %4312 = vmatpush1.bf16.msra.mxu0 0
    %4313 = vmatprep.subr.bf16.mxu0 0
    %4314 = vmatpush1.bf16.msra.mxu0 0
    %4315 = vmatprep.subr.bf16.mxu0 0
    %4316 = vmatpush1.bf16.msra.mxu0 0
    %4317 = vmatprep.subr.bf16.mxu0 0
    %4318 = vmatpush1.bf16.msra.mxu0 0
    %4319 = vmatprep.subr.bf16.mxu0 0
    %4320 = vmatpush1.bf16.msra.mxu0 0
    %4321 = vmatprep.subr.bf16.mxu0 0
    %4322 = vmatpush1.bf16.msra.mxu0 0
    %4323 = vmatprep.subr.bf16.mxu0 0
    %4324 = vmatpush1.bf16.msra.mxu0 0
    %4325 = vmatprep.mubr.bf16.mxu0 0
    %4326 = vmatmul.mubr.bf16.gmra.mrb[0].mxu0 %v4251
    %v4327 = vpop.f32.mrb[0].mxu0
    %v4328 = vadd.f32 0.0, %v4327
    %v4329 = vpop.f32.mrb[0].mxu0
    %v4330 = vadd.f32 0.0, %v4329
    %v4331 = vpop.f32.mrb[0].mxu0
    %v4332 = vpop.f32.mrb[0].mxu0
    %4333 = vdwg.mxu0
    %v4334 = vadd.f32 %v4247, %v4287
    %v4335 = vadd.f32 %v4248, %v4289
    %v4336 = vadd.f32 %v4249, %v4328
    %v4337 = vadd.f32 %v4250, %v4330
    %v4338 = vxor.u32 %v4334, 2147483648
    %v4339 = vmul.f32 %v4338, 1.442695
    %v4340 = vpow.pop %v4339
    %v4341 = vadd.f32 %v4340, 1.0
    %v4342 = vrcp.pop %v4341
    %v4343 = vmul.f32 1.0, %v4342
    %v4344 = vxor.u32 %v4335, 2147483648
    %v4345 = vmul.f32 %v4344, 1.442695
    %v4346 = vpow.pop %v4345
    %v4347 = vadd.f32 %v4346, 1.0
    %v4348 = vrcp.pop %v4347
    %v4349 = vmul.f32 1.0, %v4348
    %v4350 = vtanh.pop %v4336
    %v4351 = vxor.u32 %v4337, 2147483648
    %v4352 = vmul.f32 %v4351, 1.442695
    %v4353 = vpow.pop %v4352
    %v4354 = vadd.f32 %v4353, 1.0
    %v4355 = vrcp.pop %v4354
    %v4356 = vmul.f32 1.0, %v4355
    %v4357 = vmul.f32 %v4349, %v4243
    %v4358 = vmul.f32 %v4343, %v4350
    %v4359 = vadd.f32 %v4357, %v4358
    %v4360 = vtanh.pop %v4359
    %v4361 = vmul.f32 %v4356, %v4360
    %4362 = vst [vmem:[%s1038] sm:$0xff] %v4361
    %v4363 = vld [vmem:[%s1042] sm:$0xff]
    %v4364 = vld [vmem:[%s1042 + $0x8] sm:$0xff]
    %v4365 = vld [vmem:[%s1042 + $0x10] sm:$0xff]
    %v4366 = vld [vmem:[%s1042 + $0x18] sm:$0xff]
    %v4367 = vpack.c.bf16 %v4361, %v4361
    %4368 = vmatprep.subr.bf16.mxu0 %v4073
    %4369 = vmatpush1.bf16.msra.mxu0 %v4072
    %4370 = vmatprep.subr.bf16.mxu0 %v4077
    %4371 = vmatpush1.bf16.msra.mxu0 %v4076
    %4372 = vmatprep.subr.bf16.mxu0 %v4081
    %4373 = vmatpush1.bf16.msra.mxu0 %v4080
    %4374 = vmatprep.subr.bf16.mxu0 %v4085
    %4375 = vmatpush1.bf16.msra.mxu0 %v4084
    %4376 = vmatprep.subr.bf16.mxu0 %v4089
    %4377 = vmatpush1.bf16.msra.mxu0 %v4088
    %4378 = vmatprep.subr.bf16.mxu0 %v4093
    %4379 = vmatpush1.bf16.msra.mxu0 %v4092
    %4380 = vmatprep.subr.bf16.mxu0 %v4097
    %4381 = vmatpush1.bf16.msra.mxu0 %v4096
    %4382 = vmatprep.subr.bf16.mxu0 %v4101
    %4383 = vmatpush1.bf16.msra.mxu0 %v4100
    %4384 = vmatprep.subr.bf16.mxu0 0
    %4385 = vmatpush1.bf16.msra.mxu0 0
    %4386 = vmatprep.subr.bf16.mxu0 0
    %4387 = vmatpush1.bf16.msra.mxu0 0
    %4388 = vmatprep.subr.bf16.mxu0 0
    %4389 = vmatpush1.bf16.msra.mxu0 0
    %4390 = vmatprep.subr.bf16.mxu0 0
    %4391 = vmatpush1.bf16.msra.mxu0 0
    %4392 = vmatprep.subr.bf16.mxu0 0
    %4393 = vmatpush1.bf16.msra.mxu0 0
    %4394 = vmatprep.subr.bf16.mxu0 0
    %4395 = vmatpush1.bf16.msra.mxu0 0
    %4396 = vmatprep.subr.bf16.mxu0 0
    %4397 = vmatpush1.bf16.msra.mxu0 0
    %4398 = vmatprep.subr.bf16.mxu0 0
    %4399 = vmatpush1.bf16.msra.mxu0 0
    %4400 = vmatprep.mubr.bf16.mxu0 0
    %4401 = vmatmul.mubr.bf16.gmra.mrb[0].mxu0 %v4367
    %v4402 = vpop.f32.mrb[0].mxu0
    %v4403 = vadd.f32 0.0, %v4402
    %v4404 = vpop.f32.mrb[0].mxu0
    %v4405 = vadd.f32 0.0, %v4404
    %v4406 = vpop.f32.mrb[0].mxu0
    %v4407 = vpop.f32.mrb[0].mxu0
    %4408 = vdwg.mxu0
    %4409 = vmatprep.subr.bf16.mxu0 %v4075
    %4410 = vmatpush1.bf16.msra.mxu0 %v4074
    %4411 = vmatprep.subr.bf16.mxu0 %v4079
    %4412 = vmatpush1.bf16.msra.mxu0 %v4078
    %4413 = vmatprep.subr.bf16.mxu0 %v4083
    %4414 = vmatpush1.bf16.msra.mxu0 %v4082
    %4415 = vmatprep.subr.bf16.mxu0 %v4087
    %4416 = vmatpush1.bf16.msra.mxu0 %v4086
    %4417 = vmatprep.subr.bf16.mxu0 %v4091
    %4418 = vmatpush1.bf16.msra.mxu0 %v4090
    %4419 = vmatprep.subr.bf16.mxu0 %v4095
    %4420 = vmatpush1.bf16.msra.mxu0 %v4094
    %4421 = vmatprep.subr.bf16.mxu0 %v4099
    %4422 = vmatpush1.bf16.msra.mxu0 %v4098
    %4423 = vmatprep.subr.bf16.mxu0 %v4103
    %4424 = vmatpush1.bf16.msra.mxu0 %v4102
    %4425 = vmatprep.subr.bf16.mxu0 0
    %4426 = vmatpush1.bf16.msra.mxu0 0
    %4427 = vmatprep.subr.bf16.mxu0 0
    %4428 = vmatpush1.bf16.msra.mxu0 0
    %4429 = vmatprep.subr.bf16.mxu0 0
    %4430 = vmatpush1.bf16.msra.mxu0 0
    %4431 = vmatprep.subr.bf16.mxu0 0
    %4432 = vmatpush1.bf16.msra.mxu0 0
    %4433 = vmatprep.subr.bf16.mxu0 0
    %4434 = vmatpush1.bf16.msra.mxu0 0
    %4435 = vmatprep.subr.bf16.mxu0 0
    %4436 = vmatpush1.bf16.msra.mxu0 0
    %4437 = vmatprep.subr.bf16.mxu0 0
    %4438 = vmatpush1.bf16.msra.mxu0 0
    %4439 = vmatprep.subr.bf16.mxu0 0
    %4440 = vmatpush1.bf16.msra.mxu0 0
    %4441 = vmatprep.mubr.bf16.mxu0 0
    %4442 = vmatmul.mubr.bf16.gmra.mrb[0].mxu0 %v4367
    %v4443 = vpop.f32.mrb[0].mxu0
    %v4444 = vadd.f32 0.0, %v4443
    %v4445 = vpop.f32.mrb[0].mxu0
    %v4446 = vadd.f32 0.0, %v4445
    %v4447 = vpop.f32.mrb[0].mxu0
    %v4448 = vpop.f32.mrb[0].mxu0
    %4449 = vdwg.mxu0
    %v4450 = vadd.f32 %v4363, %v4403
    %v4451 = vadd.f32 %v4364, %v4405
    %v4452 = vadd.f32 %v4365, %v4444
    %v4453 = vadd.f32 %v4366, %v4446
    %v4454 = vxor.u32 %v4450, 2147483648
    %v4455 = vmul.f32 %v4454, 1.442695
    %v4456 = vpow.pop %v4455
    %v4457 = vadd.f32 %v4456, 1.0
    %v4458 = vrcp.pop %v4457
    %v4459 = vmul.f32 1.0, %v4458
    %v4460 = vxor.u32 %v4451, 2147483648
    %v4461 = vmul.f32 %v4460, 1.442695
    %v4462 = vpow.pop %v4461
    %v4463 = vadd.f32 %v4462, 1.0
    %v4464 = vrcp.pop %v4463
    %v4465 = vmul.f32 1.0, %v4464
    %v4466 = vtanh.pop %v4452
    %v4467 = vxor.u32 %v4453, 2147483648
    %v4468 = vmul.f32 %v4467, 1.442695
    %v4469 = vpow.pop %v4468
    %v4470 = vadd.f32 %v4469, 1.0
    %v4471 = vrcp.pop %v4470
    %v4472 = vmul.f32 1.0, %v4471
    %v4473 = vmul.f32 %v4465, %v4359
    %v4474 = vmul.f32 %v4459, %v4466
    %v4475 = vadd.f32 %v4473, %v4474
    %v4476 = vtanh.pop %v4475
    %v4477 = vmul.f32 %v4472, %v4476
    %4478 = vst [vmem:[%s1158] sm:$0xff] %v4477
    %v4479 = vld [vmem:[%s1162] sm:$0xff]
    %v4480 = vld [vmem:[%s1162 + $0x8] sm:$0xff]
    %v4481 = vld [vmem:[%s1162 + $0x10] sm:$0xff]
    %v4482 = vld [vmem:[%s1162 + $0x18] sm:$0xff]
    %v4483 = vpack.c.bf16 %v4477, %v4477
    %4484 = vmatprep.subr.bf16.mxu0 %v4073
    %4485 = vmatpush1.bf16.msra.mxu0 %v4072
    %4486 = vmatprep.subr.bf16.mxu0 %v4077
    %4487 = vmatpush1.bf16.msra.mxu0 %v4076
    %4488 = vmatprep.subr.bf16.mxu0 %v4081
    %4489 = vmatpush1.bf16.msra.mxu0 %v4080
    %4490 = vmatprep.subr.bf16.mxu0 %v4085
    %4491 = vmatpush1.bf16.msra.mxu0 %v4084
    %4492 = vmatprep.subr.bf16.mxu0 %v4089
    %4493 = vmatpush1.bf16.msra.mxu0 %v4088
    %4494 = vmatprep.subr.bf16.mxu0 %v4093
    %4495 = vmatpush1.bf16.msra.mxu0 %v4092
    %4496 = vmatprep.subr.bf16.mxu0 %v4097
    %4497 = vmatpush1.bf16.msra.mxu0 %v4096
    %4498 = vmatprep.subr.bf16.mxu0 %v4101
    %4499 = vmatpush1.bf16.msra.mxu0 %v4100
    %4500 = vmatprep.subr.bf16.mxu0 0
    %4501 = vmatpush1.bf16.msra.mxu0 0
    %4502 = vmatprep.subr.bf16.mxu0 0
    %4503 = vmatpush1.bf16.msra.mxu0 0
    %4504 = vmatprep.subr.bf16.mxu0 0
    %4505 = vmatpush1.bf16.msra.mxu0 0
    %4506 = vmatprep.subr.bf16.mxu0 0
    %4507 = vmatpush1.bf16.msra.mxu0 0
    %4508 = vmatprep.subr.bf16.mxu0 0
    %4509 = vmatpush1.bf16.msra.mxu0 0
    %4510 = vmatprep.subr.bf16.mxu0 0
    %4511 = vmatpush1.bf16.msra.mxu0 0
    %4512 = vmatprep.subr.bf16.mxu0 0
    %4513 = vmatpush1.bf16.msra.mxu0 0
    %4514 = vmatprep.subr.bf16.mxu0 0
    %4515 = vmatpush1.bf16.msra.mxu0 0
    %4516 = vmatprep.mubr.bf16.mxu0 0
    %4517 = vmatmul.mubr.bf16.gmra.mrb[0].mxu0 %v4483
    %v4518 = vpop.f32.mrb[0].mxu0
    %v4519 = vadd.f32 0.0, %v4518
    %v4520 = vpop.f32.mrb[0].mxu0
    %v4521 = vadd.f32 0.0, %v4520
    %v4522 = vpop.f32.mrb[0].mxu0
    %v4523 = vpop.f32.mrb[0].mxu0
    %4524 = vdwg.mxu0
    %4525 = vmatprep.subr.bf16.mxu0 %v4075
    %4526 = vmatpush1.bf16.msra.mxu0 %v4074
    %4527 = vmatprep.subr.bf16.mxu0 %v4079
    %4528 = vmatpush1.bf16.msra.mxu0 %v4078
    %4529 = vmatprep.subr.bf16.mxu0 %v4083
    %4530 = vmatpush1.bf16.msra.mxu0 %v4082
    %4531 = vmatprep.subr.bf16.mxu0 %v4087
    %4532 = vmatpush1.bf16.msra.mxu0 %v4086
    %4533 = vmatprep.subr.bf16.mxu0 %v4091
    %4534 = vmatpush1.bf16.msra.mxu0 %v4090
    %4535 = vmatprep.subr.bf16.mxu0 %v4095
    %4536 = vmatpush1.bf16.msra.mxu0 %v4094
    %4537 = vmatprep.subr.bf16.mxu0 %v4099
    %4538 = vmatpush1.bf16.msra.mxu0 %v4098
    %4539 = vmatprep.subr.bf16.mxu0 %v4103
    %4540 = vmatpush1.bf16.msra.mxu0 %v4102
    %4541 = vmatprep.subr.bf16.mxu0 0
    %4542 = vmatpush1.bf16.msra.mxu0 0
    %4543 = vmatprep.subr.bf16.mxu0 0
    %4544 = vmatpush1.bf16.msra.mxu0 0
    %4545 = vmatprep.subr.bf16.mxu0 0
    %4546 = vmatpush1.bf16.msra.mxu0 0
    %4547 = vmatprep.subr.bf16.mxu0 0
    %4548 = vmatpush1.bf16.msra.mxu0 0
    %4549 = vmatprep.subr.bf16.mxu0 0
    %4550 = vmatpush1.bf16.msra.mxu0 0
    %4551 = vmatprep.subr.bf16.mxu0 0
    %4552 = vmatpush1.bf16.msra.mxu0 0
    %4553 = vmatprep.subr.bf16.mxu0 0
    %4554 = vmatpush1.bf16.msra.mxu0 0
    %4555 = vmatprep.subr.bf16.mxu0 0
    %4556 = vmatpush1.bf16.msra.mxu0 0
    %4557 = vmatprep.mubr.bf16.mxu0 0
    %4558 = vmatmul.mubr.bf16.gmra.mrb[0].mxu0 %v4483
    %v4559 = vpop.f32.mrb[0].mxu0
    %v4560 = vadd.f32 0.0, %v4559
    %v4561 = vpop.f32.mrb[0].mxu0
    %v4562 = vadd.f32 0.0, %v4561
    %v4563 = vpop.f32.mrb[0].mxu0
    %v4564 = vpop.f32.mrb[0].mxu0
    %4565 = vdwg.mxu0
    %v4566 = vadd.f32 %v4479, %v4519
    %v4567 = vadd.f32 %v4480, %v4521
    %v4568 = vadd.f32 %v4481, %v4560
    %v4569 = vadd.f32 %v4482, %v4562
    %v4570 = vxor.u32 %v4566, 2147483648
    %v4571 = vmul.f32 %v4570, 1.442695
    %v4572 = vpow.pop %v4571
    %v4573 = vadd.f32 %v4572, 1.0
    %v4574 = vrcp.pop %v4573
    %v4575 = vmul.f32 1.0, %v4574
    %v4576 = vxor.u32 %v4567, 2147483648
    %v4577 = vmul.f32 %v4576, 1.442695
    %v4578 = vpow.pop %v4577
    %v4579 = vadd.f32 %v4578, 1.0
    %v4580 = vrcp.pop %v4579
    %v4581 = vmul.f32 1.0, %v4580
    %v4582 = vtanh.pop %v4568
    %v4583 = vxor.u32 %v4569, 2147483648
    %v4584 = vmul.f32 %v4583, 1.442695
    %v4585 = vpow.pop %v4584
    %v4586 = vadd.f32 %v4585, 1.0
    %v4587 = vrcp.pop %v4586
    %v4588 = vmul.f32 1.0, %v4587
    %v4589 = vmul.f32 %v4581, %v4475
    %v4590 = vmul.f32 %v4575, %v4582
    %v4591 = vadd.f32 %v4589, %v4590
    %v4592 = vtanh.pop %v4591
    %v4593 = vmul.f32 %v4588, %v4592
    %4594 = vst [vmem:[%s1278] sm:$0xff] %v4593
    %v4595 = vld [vmem:[%s1282] sm:$0xff]
    %v4596 = vld [vmem:[%s1282 + $0x8] sm:$0xff]
    %v4597 = vld [vmem:[%s1282 + $0x10] sm:$0xff]
    %v4598 = vld [vmem:[%s1282 + $0x18] sm:$0xff]
    %v4599 = vpack.c.bf16 %v4593, %v4593
    %4600 = vmatprep.subr.bf16.mxu0 %v4073
    %4601 = vmatpush1.bf16.msra.mxu0 %v4072
    %4602 = vmatprep.subr.bf16.mxu0 %v4077
    %4603 = vmatpush1.bf16.msra.mxu0 %v4076
    %4604 = vmatprep.subr.bf16.mxu0 %v4081
    %4605 = vmatpush1.bf16.msra.mxu0 %v4080
    %4606 = vmatprep.subr.bf16.mxu0 %v4085
    %4607 = vmatpush1.bf16.msra.mxu0 %v4084
    %4608 = vmatprep.subr.bf16.mxu0 %v4089
    %4609 = vmatpush1.bf16.msra.mxu0 %v4088
    %4610 = vmatprep.subr.bf16.mxu0 %v4093
    %4611 = vmatpush1.bf16.msra.mxu0 %v4092
    %4612 = vmatprep.subr.bf16.mxu0 %v4097
    %4613 = vmatpush1.bf16.msra.mxu0 %v4096
    %4614 = vmatprep.subr.bf16.mxu0 %v4101
    %4615 = vmatpush1.bf16.msra.mxu0 %v4100
    %4616 = vmatprep.subr.bf16.mxu0 0
    %4617 = vmatpush1.bf16.msra.mxu0 0
    %4618 = vmatprep.subr.bf16.mxu0 0
    %4619 = vmatpush1.bf16.msra.mxu0 0
    %4620 = vmatprep.subr.bf16.mxu0 0
    %4621 = vmatpush1.bf16.msra.mxu0 0
    %4622 = vmatprep.subr.bf16.mxu0 0
    %4623 = vmatpush1.bf16.msra.mxu0 0
    %4624 = vmatprep.subr.bf16.mxu0 0
    %4625 = vmatpush1.bf16.msra.mxu0 0
    %4626 = vmatprep.subr.bf16.mxu0 0
    %4627 = vmatpush1.bf16.msra.mxu0 0
    %4628 = vmatprep.subr.bf16.mxu0 0
    %4629 = vmatpush1.bf16.msra.mxu0 0
    %4630 = vmatprep.subr.bf16.mxu0 0
    %4631 = vmatpush1.bf16.msra.mxu0 0
    %4632 = vmatprep.mubr.bf16.mxu0 0
    %4633 = vmatmul.mubr.bf16.gmra.mrb[0].mxu0 %v4599
    %v4634 = vpop.f32.mrb[0].mxu0
    %v4635 = vadd.f32 0.0, %v4634
    %v4636 = vpop.f32.mrb[0].mxu0
    %v4637 = vadd.f32 0.0, %v4636
    %v4638 = vpop.f32.mrb[0].mxu0
    %v4639 = vpop.f32.mrb[0].mxu0
    %4640 = vdwg.mxu0
    %4641 = vmatprep.subr.bf16.mxu0 %v4075
    %4642 = vmatpush1.bf16.msra.mxu0 %v4074
    %4643 = vmatprep.subr.bf16.mxu0 %v4079
    %4644 = vmatpush1.bf16.msra.mxu0 %v4078
    %4645 = vmatprep.subr.bf16.mxu0 %v4083
    %4646 = vmatpush1.bf16.msra.mxu0 %v4082
    %4647 = vmatprep.subr.bf16.mxu0 %v4087
    %4648 = vmatpush1.bf16.msra.mxu0 %v4086
    %4649 = vmatprep.subr.bf16.mxu0 %v4091
    %4650 = vmatpush1.bf16.msra.mxu0 %v4090
    %4651 = vmatprep.subr.bf16.mxu0 %v4095
    %4652 = vmatpush1.bf16.msra.mxu0 %v4094
    %4653 = vmatprep.subr.bf16.mxu0 %v4099
    %4654 = vmatpush1.bf16.msra.mxu0 %v4098
    %4655 = vmatprep.subr.bf16.mxu0 %v4103
    %4656 = vmatpush1.bf16.msra.mxu0 %v4102
    %4657 = vmatprep.subr.bf16.mxu0 0
    %4658 = vmatpush1.bf16.msra.mxu0 0
    %4659 = vmatprep.subr.bf16.mxu0 0
    %4660 = vmatpush1.bf16.msra.mxu0 0
    %4661 = vmatprep.subr.bf16.mxu0 0
    %4662 = vmatpush1.bf16.msra.mxu0 0
    %4663 = vmatprep.subr.bf16.mxu0 0
    %4664 = vmatpush1.bf16.msra.mxu0 0
    %4665 = vmatprep.subr.bf16.mxu0 0
    %4666 = vmatpush1.bf16.msra.mxu0 0
    %4667 = vmatprep.subr.bf16.mxu0 0
    %4668 = vmatpush1.bf16.msra.mxu0 0
    %4669 = vmatprep.subr.bf16.mxu0 0
    %4670 = vmatpush1.bf16.msra.mxu0 0
    %4671 = vmatprep.subr.bf16.mxu0 0
    %4672 = vmatpush1.bf16.msra.mxu0 0
    %4673 = vmatprep.mubr.bf16.mxu0 0
    %4674 = vmatmul.mubr.bf16.gmra.mrb[0].mxu0 %v4599
    %v4675 = vpop.f32.mrb[0].mxu0
    %v4676 = vadd.f32 0.0, %v4675
    %v4677 = vpop.f32.mrb[0].mxu0
    %v4678 = vadd.f32 0.0, %v4677
    %v4679 = vpop.f32.mrb[0].mxu0
    %v4680 = vpop.f32.mrb[0].mxu0
    %4681 = vdwg.mxu0
    %v4682 = vadd.f32 %v4595, %v4635
    %v4683 = vadd.f32 %v4596, %v4637
    %v4684 = vadd.f32 %v4597, %v4676
    %v4685 = vadd.f32 %v4598, %v4678
    %v4686 = vxor.u32 %v4682, 2147483648
    %v4687 = vmul.f32 %v4686, 1.442695
    %v4688 = vpow.pop %v4687
    %v4689 = vadd.f32 %v4688, 1.0
    %v4690 = vrcp.pop %v4689
    %v4691 = vmul.f32 1.0, %v4690
    %v4692 = vxor.u32 %v4683, 2147483648
    %v4693 = vmul.f32 %v4692, 1.442695
    %v4694 = vpow.pop %v4693
    %v4695 = vadd.f32 %v4694, 1.0
    %v4696 = vrcp.pop %v4695
    %v4697 = vmul.f32 1.0, %v4696
    %v4698 = vtanh.pop %v4684
    %v4699 = vxor.u32 %v4685, 2147483648
    %v4700 = vmul.f32 %v4699, 1.442695
    %v4701 = vpow.pop %v4700
    %v4702 = vadd.f32 %v4701, 1.0
    %v4703 = vrcp.pop %v4702
    %v4704 = vmul.f32 1.0, %v4703
    %v4705 = vmul.f32 %v4697, %v4591
    %v4706 = vmul.f32 %v4691, %v4698
    %v4707 = vadd.f32 %v4705, %v4706
    %v4708 = vtanh.pop %v4707
    %v4709 = vmul.f32 %v4704, %v4708
    %4710 = vst [vmem:[%s1398] sm:$0xff] %v4709
    %v4711 = vld [vmem:[%s1402] sm:$0xff]
    %v4712 = vld [vmem:[%s1402 + $0x8] sm:$0xff]
    %v4713 = vld [vmem:[%s1402 + $0x10] sm:$0xff]
    %v4714 = vld [vmem:[%s1402 + $0x18] sm:$0xff]
    %v4715 = vpack.c.bf16 %v4709, %v4709
    %4716 = vmatprep.subr.bf16.mxu0 %v4073
    %4717 = vmatpush1.bf16.msra.mxu0 %v4072
    %4718 = vmatprep.subr.bf16.mxu0 %v4077
    %4719 = vmatpush1.bf16.msra.mxu0 %v4076
    %4720 = vmatprep.subr.bf16.mxu0 %v4081
    %4721 = vmatpush1.bf16.msra.mxu0 %v4080
    %4722 = vmatprep.subr.bf16.mxu0 %v4085
    %4723 = vmatpush1.bf16.msra.mxu0 %v4084
    %4724 = vmatprep.subr.bf16.mxu0 %v4089
    %4725 = vmatpush1.bf16.msra.mxu0 %v4088
    %4726 = vmatprep.subr.bf16.mxu0 %v4093
    %4727 = vmatpush1.bf16.msra.mxu0 %v4092
    %4728 = vmatprep.subr.bf16.mxu0 %v4097
    %4729 = vmatpush1.bf16.msra.mxu0 %v4096
    %4730 = vmatprep.subr.bf16.mxu0 %v4101
    %4731 = vmatpush1.bf16.msra.mxu0 %v4100
    %4732 = vmatprep.subr.bf16.mxu0 0
    %4733 = vmatpush1.bf16.msra.mxu0 0
    %4734 = vmatprep.subr.bf16.mxu0 0
    %4735 = vmatpush1.bf16.msra.mxu0 0
    %4736 = vmatprep.subr.bf16.mxu0 0
    %4737 = vmatpush1.bf16.msra.mxu0 0
    %4738 = vmatprep.subr.bf16.mxu0 0
    %4739 = vmatpush1.bf16.msra.mxu0 0
    %4740 = vmatprep.subr.bf16.mxu0 0
    %4741 = vmatpush1.bf16.msra.mxu0 0
    %4742 = vmatprep.subr.bf16.mxu0 0
    %4743 = vmatpush1.bf16.msra.mxu0 0
    %4744 = vmatprep.subr.bf16.mxu0 0
    %4745 = vmatpush1.bf16.msra.mxu0 0
    %4746 = vmatprep.subr.bf16.mxu0 0
    %4747 = vmatpush1.bf16.msra.mxu0 0
    %4748 = vmatprep.mubr.bf16.mxu0 0
    %4749 = vmatmul.mubr.bf16.gmra.mrb[0].mxu0 %v4715
    %v4750 = vpop.f32.mrb[0].mxu0
    %v4751 = vadd.f32 0.0, %v4750
    %v4752 = vpop.f32.mrb[0].mxu0
    %v4753 = vadd.f32 0.0, %v4752
    %v4754 = vpop.f32.mrb[0].mxu0
    %v4755 = vpop.f32.mrb[0].mxu0
    %4756 = vdwg.mxu0
    %4757 = vmatprep.subr.bf16.mxu0 %v4075
    %4758 = vmatpush1.bf16.msra.mxu0 %v4074
    %4759 = vmatprep.subr.bf16.mxu0 %v4079
    %4760 = vmatpush1.bf16.msra.mxu0 %v4078
    %4761 = vmatprep.subr.bf16.mxu0 %v4083
    %4762 = vmatpush1.bf16.msra.mxu0 %v4082
    %4763 = vmatprep.subr.bf16.mxu0 %v4087
    %4764 = vmatpush1.bf16.msra.mxu0 %v4086
    %4765 = vmatprep.subr.bf16.mxu0 %v4091
    %4766 = vmatpush1.bf16.msra.mxu0 %v4090
    %4767 = vmatprep.subr.bf16.mxu0 %v4095
    %4768 = vmatpush1.bf16.msra.mxu0 %v4094
    %4769 = vmatprep.subr.bf16.mxu0 %v4099
    %4770 = vmatpush1.bf16.msra.mxu0 %v4098
    %4771 = vmatprep.subr.bf16.mxu0 %v4103
    %4772 = vmatpush1.bf16.msra.mxu0 %v4102
    %4773 = vmatprep.subr.bf16.mxu0 0
    %4774 = vmatpush1.bf16.msra.mxu0 0
    %4775 = vmatprep.subr.bf16.mxu0 0
    %4776 = vmatpush1.bf16.msra.mxu0 0
    %4777 = vmatprep.subr.bf16.mxu0 0
    %4778 = vmatpush1.bf16.msra.mxu0 0
    %4779 = vmatprep.subr.bf16.mxu0 0
    %4780 = vmatpush1.bf16.msra.mxu0 0
    %4781 = vmatprep.subr.bf16.mxu0 0
    %4782 = vmatpush1.bf16.msra.mxu0 0
    %4783 = vmatprep.subr.bf16.mxu0 0
    %4784 = vmatpush1.bf16.msra.mxu0 0
    %4785 = vmatprep.subr.bf16.mxu0 0
    %4786 = vmatpush1.bf16.msra.mxu0 0
    %4787 = vmatprep.subr.bf16.mxu0 0
    %4788 = vmatpush1.bf16.msra.mxu0 0
    %4789 = vmatprep.mubr.bf16.mxu0 0
    %4790 = vmatmul.mubr.bf16.gmra.mrb[0].mxu0 %v4715
    %v4791 = vpop.f32.mrb[0].mxu0
    %v4792 = vadd.f32 0.0, %v4791
    %v4793 = vpop.f32.mrb[0].mxu0
    %v4794 = vadd.f32 0.0, %v4793
    %v4795 = vpop.f32.mrb[0].mxu0
    %v4796 = vpop.f32.mrb[0].mxu0
    %4797 = vdwg.mxu0
    %v4798 = vadd.f32 %v4711, %v4751
    %v4799 = vadd.f32 %v4712, %v4753
    %v4800 = vadd.f32 %v4713, %v4792
    %v4801 = vadd.f32 %v4714, %v4794
    %v4802 = vxor.u32 %v4798, 2147483648
    %v4803 = vmul.f32 %v4802, 1.442695
    %v4804 = vpow.pop %v4803
    %v4805 = vadd.f32 %v4804, 1.0
    %v4806 = vrcp.pop %v4805
    %v4807 = vmul.f32 1.0, %v4806
    %v4808 = vxor.u32 %v4799, 2147483648
    %v4809 = vmul.f32 %v4808, 1.442695
    %v4810 = vpow.pop %v4809
    %v4811 = vadd.f32 %v4810, 1.0
    %v4812 = vrcp.pop %v4811
    %v4813 = vmul.f32 1.0, %v4812
    %v4814 = vtanh.pop %v4800
    %v4815 = vxor.u32 %v4801, 2147483648
    %v4816 = vmul.f32 %v4815, 1.442695
    %v4817 = vpow.pop %v4816
    %v4818 = vadd.f32 %v4817, 1.0
    %v4819 = vrcp.pop %v4818
    %v4820 = vmul.f32 1.0, %v4819
    %v4821 = vmul.f32 %v4813, %v4707
    %v4822 = vmul.f32 %v4807, %v4814
    %v4823 = vadd.f32 %v4821, %v4822
    %v4824 = vtanh.pop %v4823
    %v4825 = vmul.f32 %v4820, %v4824
    %4826 = vst [vmem:[%s1518] sm:$0xff] %v4825
    %v4827 = vld [vmem:[%s1522] sm:$0xff]
    %v4828 = vld [vmem:[%s1522 + $0x8] sm:$0xff]
    %v4829 = vld [vmem:[%s1522 + $0x10] sm:$0xff]
    %v4830 = vld [vmem:[%s1522 + $0x18] sm:$0xff]
    %v4831 = vpack.c.bf16 %v4825, %v4825
    %4832 = vmatprep.subr.bf16.mxu0 %v4073
    %4833 = vmatpush1.bf16.msra.mxu0 %v4072
    %4834 = vmatprep.subr.bf16.mxu0 %v4077
    %4835 = vmatpush1.bf16.msra.mxu0 %v4076
    %4836 = vmatprep.subr.bf16.mxu0 %v4081
    %4837 = vmatpush1.bf16.msra.mxu0 %v4080
    %4838 = vmatprep.subr.bf16.mxu0 %v4085
    %4839 = vmatpush1.bf16.msra.mxu0 %v4084
    %4840 = vmatprep.subr.bf16.mxu0 %v4089
    %4841 = vmatpush1.bf16.msra.mxu0 %v4088
    %4842 = vmatprep.subr.bf16.mxu0 %v4093
    %4843 = vmatpush1.bf16.msra.mxu0 %v4092
    %4844 = vmatprep.subr.bf16.mxu0 %v4097
    %4845 = vmatpush1.bf16.msra.mxu0 %v4096
    %4846 = vmatprep.subr.bf16.mxu0 %v4101
    %4847 = vmatpush1.bf16.msra.mxu0 %v4100
    %4848 = vmatprep.subr.bf16.mxu0 0
    %4849 = vmatpush1.bf16.msra.mxu0 0
    %4850 = vmatprep.subr.bf16.mxu0 0
    %4851 = vmatpush1.bf16.msra.mxu0 0
    %4852 = vmatprep.subr.bf16.mxu0 0
    %4853 = vmatpush1.bf16.msra.mxu0 0
    %4854 = vmatprep.subr.bf16.mxu0 0
    %4855 = vmatpush1.bf16.msra.mxu0 0
    %4856 = vmatprep.subr.bf16.mxu0 0
    %4857 = vmatpush1.bf16.msra.mxu0 0
    %4858 = vmatprep.subr.bf16.mxu0 0
    %4859 = vmatpush1.bf16.msra.mxu0 0
    %4860 = vmatprep.subr.bf16.mxu0 0
    %4861 = vmatpush1.bf16.msra.mxu0 0
    %4862 = vmatprep.subr.bf16.mxu0 0
    %4863 = vmatpush1.bf16.msra.mxu0 0
    %4864 = vmatprep.mubr.bf16.mxu0 0
    %4865 = vmatmul.mubr.bf16.gmra.mrb[0].mxu0 %v4831
    %v4866 = vpop.f32.mrb[0].mxu0
    %v4867 = vadd.f32 0.0, %v4866
    %v4868 = vpop.f32.mrb[0].mxu0
    %v4869 = vadd.f32 0.0, %v4868
    %v4870 = vpop.f32.mrb[0].mxu0
    %v4871 = vpop.f32.mrb[0].mxu0
    %4872 = vdwg.mxu0
    %4873 = vmatprep.subr.bf16.mxu0 %v4075
    %4874 = vmatpush1.bf16.msra.mxu0 %v4074
    %4875 = vmatprep.subr.bf16.mxu0 %v4079
    %4876 = vmatpush1.bf16.msra.mxu0 %v4078
    %4877 = vmatprep.subr.bf16.mxu0 %v4083
    %4878 = vmatpush1.bf16.msra.mxu0 %v4082
    %4879 = vmatprep.subr.bf16.mxu0 %v4087
    %4880 = vmatpush1.bf16.msra.mxu0 %v4086
    %4881 = vmatprep.subr.bf16.mxu0 %v4091
    %4882 = vmatpush1.bf16.msra.mxu0 %v4090
    %4883 = vmatprep.subr.bf16.mxu0 %v4095
    %4884 = vmatpush1.bf16.msra.mxu0 %v4094
    %4885 = vmatprep.subr.bf16.mxu0 %v4099
    %4886 = vmatpush1.bf16.msra.mxu0 %v4098
    %4887 = vmatprep.subr.bf16.mxu0 %v4103
    %4888 = vmatpush1.bf16.msra.mxu0 %v4102
    %4889 = vmatprep.subr.bf16.mxu0 0
    %4890 = vmatpush1.bf16.msra.mxu0 0
    %4891 = vmatprep.subr.bf16.mxu0 0
    %4892 = vmatpush1.bf16.msra.mxu0 0
    %4893 = vmatprep.subr.bf16.mxu0 0
    %4894 = vmatpush1.bf16.msra.mxu0 0
    %4895 = vmatprep.subr.bf16.mxu0 0
    %4896 = vmatpush1.bf16.msra.mxu0 0
    %4897 = vmatprep.subr.bf16.mxu0 0
    %4898 = vmatpush1.bf16.msra.mxu0 0
    %4899 = vmatprep.subr.bf16.mxu0 0
    %4900 = vmatpush1.bf16.msra.mxu0 0
    %4901 = vmatprep.subr.bf16.mxu0 0
    %4902 = vmatpush1.bf16.msra.mxu0 0
    %4903 = vmatprep.subr.bf16.mxu0 0
    %4904 = vmatpush1.bf16.msra.mxu0 0
    %4905 = vmatprep.mubr.bf16.mxu0 0
    %4906 = vmatmul.mubr.bf16.gmra.mrb[0].mxu0 %v4831
    %v4907 = vpop.f32.mrb[0].mxu0
    %v4908 = vadd.f32 0.0, %v4907
    %v4909 = vpop.f32.mrb[0].mxu0
    %v4910 = vadd.f32 0.0, %v4909
    %v4911 = vpop.f32.mrb[0].mxu0
    %v4912 = vpop.f32.mrb[0].mxu0
    %4913 = vdwg.mxu0
    %v4914 = vadd.f32 %v4827, %v4867
    %v4915 = vadd.f32 %v4828, %v4869
    %v4916 = vadd.f32 %v4829, %v4908
    %v4917 = vadd.f32 %v4830, %v4910
    %v4918 = vxor.u32 %v4914, 2147483648
    %v4919 = vmul.f32 %v4918, 1.442695
    %v4920 = vpow.pop %v4919
    %v4921 = vadd.f32 %v4920, 1.0
    %v4922 = vrcp.pop %v4921
    %v4923 = vmul.f32 1.0, %v4922
    %v4924 = vxor.u32 %v4915, 2147483648
    %v4925 = vmul.f32 %v4924, 1.442695
    %v4926 = vpow.pop %v4925
    %v4927 = vadd.f32 %v4926, 1.0
    %v4928 = vrcp.pop %v4927
    %v4929 = vmul.f32 1.0, %v4928
    %v4930 = vtanh.pop %v4916
    %v4931 = vxor.u32 %v4917, 2147483648
    %v4932 = vmul.f32 %v4931, 1.442695
    %v4933 = vpow.pop %v4932
    %v4934 = vadd.f32 %v4933, 1.0
    %v4935 = vrcp.pop %v4934
    %v4936 = vmul.f32 1.0, %v4935
    %v4937 = vmul.f32 %v4929, %v4823
    %v4938 = vmul.f32 %v4923, %v4930
    %v4939 = vadd.f32 %v4937, %v4938
    %v4940 = vtanh.pop %v4939
    %v4941 = vmul.f32 %v4936, %v4940
    %4942 = vst [vmem:[%s1638] sm:$0xff] %v4941
    %v4943 = vld [vmem:[%s1642] sm:$0xff]
    %v4944 = vld [vmem:[%s1642 + $0x8] sm:$0xff]
    %v4945 = vld [vmem:[%s1642 + $0x10] sm:$0xff]
    %v4946 = vld [vmem:[%s1642 + $0x18] sm:$0xff]
    %v4947 = vpack.c.bf16 %v4941, %v4941
    %4948 = vmatprep.subr.bf16.mxu0 %v4073
    %4949 = vmatpush1.bf16.msra.mxu0 %v4072
    %4950 = vmatprep.subr.bf16.mxu0 %v4077
    %4951 = vmatpush1.bf16.msra.mxu0 %v4076
    %4952 = vmatprep.subr.bf16.mxu0 %v4081
    %4953 = vmatpush1.bf16.msra.mxu0 %v4080
    %4954 = vmatprep.subr.bf16.mxu0 %v4085
    %4955 = vmatpush1.bf16.msra.mxu0 %v4084
    %4956 = vmatprep.subr.bf16.mxu0 %v4089
    %4957 = vmatpush1.bf16.msra.mxu0 %v4088
    %4958 = vmatprep.subr.bf16.mxu0 %v4093
    %4959 = vmatpush1.bf16.msra.mxu0 %v4092
    %4960 = vmatprep.subr.bf16.mxu0 %v4097
    %4961 = vmatpush1.bf16.msra.mxu0 %v4096
    %4962 = vmatprep.subr.bf16.mxu0 %v4101
    %4963 = vmatpush1.bf16.msra.mxu0 %v4100
    %4964 = vmatprep.subr.bf16.mxu0 0
    %4965 = vmatpush1.bf16.msra.mxu0 0
    %4966 = vmatprep.subr.bf16.mxu0 0
    %4967 = vmatpush1.bf16.msra.mxu0 0
    %4968 = vmatprep.subr.bf16.mxu0 0
    %4969 = vmatpush1.bf16.msra.mxu0 0
    %4970 = vmatprep.subr.bf16.mxu0 0
    %4971 = vmatpush1.bf16.msra.mxu0 0
    %4972 = vmatprep.subr.bf16.mxu0 0
    %4973 = vmatpush1.bf16.msra.mxu0 0
    %4974 = vmatprep.subr.bf16.mxu0 0
    %4975 = vmatpush1.bf16.msra.mxu0 0
    %4976 = vmatprep.subr.bf16.mxu0 0
    %4977 = vmatpush1.bf16.msra.mxu0 0
    %4978 = vmatprep.subr.bf16.mxu0 0
    %4979 = vmatpush1.bf16.msra.mxu0 0
    %4980 = vmatprep.mubr.bf16.mxu0 0
    %4981 = vmatmul.mubr.bf16.gmra.mrb[0].mxu0 %v4947
    %v4982 = vpop.f32.mrb[0].mxu0
    %v4983 = vadd.f32 0.0, %v4982
    %v4984 = vpop.f32.mrb[0].mxu0
    %v4985 = vadd.f32 0.0, %v4984
    %v4986 = vpop.f32.mrb[0].mxu0
    %v4987 = vpop.f32.mrb[0].mxu0
    %4988 = vdwg.mxu0
    %4989 = vmatprep.subr.bf16.mxu0 %v4075
    %4990 = vmatpush1.bf16.msra.mxu0 %v4074
    %4991 = vmatprep.subr.bf16.mxu0 %v4079
    %4992 = vmatpush1.bf16.msra.mxu0 %v4078
    %4993 = vmatprep.subr.bf16.mxu0 %v4083
    %4994 = vmatpush1.bf16.msra.mxu0 %v4082
    %4995 = vmatprep.subr.bf16.mxu0 %v4087
    %4996 = vmatpush1.bf16.msra.mxu0 %v4086
    %4997 = vmatprep.subr.bf16.mxu0 %v4091
    %4998 = vmatpush1.bf16.msra.mxu0 %v4090
    %4999 = vmatprep.subr.bf16.mxu0 %v4095
    %5000 = vmatpush1.bf16.msra.mxu0 %v4094
    %5001 = vmatprep.subr.bf16.mxu0 %v4099
    %5002 = vmatpush1.bf16.msra.mxu0 %v4098
    %5003 = vmatprep.subr.bf16.mxu0 %v4103
    %5004 = vmatpush1.bf16.msra.mxu0 %v4102
    %5005 = vmatprep.subr.bf16.mxu0 0
    %5006 = vmatpush1.bf16.msra.mxu0 0
    %5007 = vmatprep.subr.bf16.mxu0 0
    %5008 = vmatpush1.bf16.msra.mxu0 0
    %5009 = vmatprep.subr.bf16.mxu0 0
    %5010 = vmatpush1.bf16.msra.mxu0 0
    %5011 = vmatprep.subr.bf16.mxu0 0
    %5012 = vmatpush1.bf16.msra.mxu0 0
    %5013 = vmatprep.subr.bf16.mxu0 0
    %5014 = vmatpush1.bf16.msra.mxu0 0
    %5015 = vmatprep.subr.bf16.mxu0 0
    %5016 = vmatpush1.bf16.msra.mxu0 0
    %5017 = vmatprep.subr.bf16.mxu0 0
    %5018 = vmatpush1.bf16.msra.mxu0 0
    %5019 = vmatprep.subr.bf16.mxu0 0
    %5020 = vmatpush1.bf16.msra.mxu0 0
    %5021 = vmatprep.mubr.bf16.mxu0 0
    %5022 = vmatmul.mubr.bf16.gmra.mrb[0].mxu0 %v4947
    %v5023 = vpop.f32.mrb[0].mxu0
    %v5024 = vadd.f32 0.0, %v5023
    %v5025 = vpop.f32.mrb[0].mxu0
    %v5026 = vadd.f32 0.0, %v5025
    %v5027 = vpop.f32.mrb[0].mxu0
    %v5028 = vpop.f32.mrb[0].mxu0
    %5029 = vdwg.mxu0
    %v5030 = vadd.f32 %v4943, %v4983
    %v5031 = vadd.f32 %v4944, %v4985
    %v5032 = vadd.f32 %v4945, %v5024
    %v5033 = vadd.f32 %v4946, %v5026
    %v5034 = vxor.u32 %v5030, 2147483648
    %v5035 = vmul.f32 %v5034, 1.442695
    %v5036 = vpow.pop %v5035
    %v5037 = vadd.f32 %v5036, 1.0
    %v5038 = vrcp.pop %v5037
    %v5039 = vmul.f32 1.0, %v5038
    %v5040 = vxor.u32 %v5031, 2147483648
    %v5041 = vmul.f32 %v5040, 1.442695
    %v5042 = vpow.pop %v5041
    %v5043 = vadd.f32 %v5042, 1.0
    %v5044 = vrcp.pop %v5043
    %v5045 = vmul.f32 1.0, %v5044
    %v5046 = vtanh.pop %v5032
    %v5047 = vxor.u32 %v5033, 2147483648
    %v5048 = vmul.f32 %v5047, 1.442695
    %v5049 = vpow.pop %v5048
    %v5050 = vadd.f32 %v5049, 1.0
    %v5051 = vrcp.pop %v5050
    %v5052 = vmul.f32 1.0, %v5051
    %v5053 = vmul.f32 %v5045, %v4939
    %v5054 = vmul.f32 %v5039, %v5046
    %v5055 = vadd.f32 %v5053, %v5054
    %v5056 = vtanh.pop %v5055
    %v5057 = vmul.f32 %v5052, %v5056
    %5058 = vst [vmem:[%s1758] sm:$0xff] %v5057
    %v5059 = vld [vmem:[#allocation2] sm:$0xff]
    %v5060 = vld [vmem:[#allocation2 + $0x38] sm:$0xff]
    %v5061 = vsel %vm109, %v5059, %v5060
    %5062 = vst [vmem:[#allocation2] sm:$0xff] %v5061
    %v5063 = vsel %vm109, %v5060, %v5059
    %5064 = vst [vmem:[#allocation2 + $0x38] sm:$0xff] %v5063
    %v5065 = vld [vmem:[#allocation2 + $0x8] sm:$0xff]
    %v5066 = vld [vmem:[#allocation2 + $0x30] sm:$0xff]
    %v5067 = vsel %vm109, %v5065, %v5066
    %5068 = vst [vmem:[#allocation2 + $0x8] sm:$0xff] %v5067
    %v5069 = vsel %vm109, %v5066, %v5065
    %5070 = vst [vmem:[#allocation2 + $0x30] sm:$0xff] %v5069
    %v5071 = vld [vmem:[#allocation2 + $0x10] sm:$0xff]
    %v5072 = vld [vmem:[#allocation2 + $0x28] sm:$0xff]
    %v5073 = vsel %vm109, %v5071, %v5072
    %5074 = vst [vmem:[#allocation2 + $0x10] sm:$0xff] %v5073
    %v5075 = vsel %vm109, %v5072, %v5071
    %5076 = vst [vmem:[#allocation2 + $0x28] sm:$0xff] %v5075
    %v5077 = vld [vmem:[#allocation2 + $0x18] sm:$0xff]
    %v5078 = vld [vmem:[#allocation2 + $0x20] sm:$0xff]
    %v5079 = vsel %vm109, %v5077, %v5078
    %5080 = vst [vmem:[#allocation2 + $0x18] sm:$0xff] %v5079
    %v5081 = vsel %vm109, %v5078, %v5077
    %5082 = vst [vmem:[#allocation2 + $0x20] sm:$0xff] %v5081
    %v5083 = vld [vmem:[#allocation2] sm:$0xff]
    %v5084 = vld [vmem:[#allocation2 + $0x8] sm:$0xff]
    %v5085 = vld [vmem:[#allocation2 + $0x10] sm:$0xff]
    %v5086 = vld [vmem:[#allocation2 + $0x18] sm:$0xff]
    %v5087 = vld [vmem:[#allocation2 + $0x20] sm:$0xff]
    %v5088 = vld [vmem:[#allocation2 + $0x28] sm:$0xff]
    %v5089 = vld [vmem:[#allocation2 + $0x30] sm:$0xff]
    %v5090 = vld [vmem:[#allocation2 + $0x38] sm:$0xff]
    %v5091 = vpack.c.bf16 %v5084, %v5083
    %v5092 = vpack.c.bf16 %v5086, %v5085
    %v5093 = vpack.c.bf16 %v5088, %v5087
    %v5094 = vpack.c.bf16 %v5090, %v5089
    %s5095 = scalar_lea.vmem [#allocation5], 768
    %v5096 = vld [vmem:[%s5095] sm:$0xff]
    %v5097 = vld [vmem:[%s5095 + $0x8] sm:$0xff]
    %v5098 = vld [vmem:[%s5095 + $0x10] sm:$0xff]
    %v5099 = vld [vmem:[%s5095 + $0x18] sm:$0xff]
    %v5100 = vld [vmem:[%s5095 + $0x20] sm:$0xff]
    %v5101 = vld [vmem:[%s5095 + $0x28] sm:$0xff]
    %v5102 = vld [vmem:[%s5095 + $0x30] sm:$0xff]
    %v5103 = vld [vmem:[%s5095 + $0x38] sm:$0xff]
    %v5104 = vld [vmem:[%s5095 + $0x40] sm:$0xff]
    %v5105 = vld [vmem:[%s5095 + $0x48] sm:$0xff]
    %v5106 = vld [vmem:[%s5095 + $0x50] sm:$0xff]
    %v5107 = vld [vmem:[%s5095 + $0x58] sm:$0xff]
    %v5108 = vld [vmem:[%s5095 + $0x60] sm:$0xff]
    %v5109 = vld [vmem:[%s5095 + $0x68] sm:$0xff]
    %v5110 = vld [vmem:[%s5095 + $0x70] sm:$0xff]
    %v5111 = vld [vmem:[%s5095 + $0x78] sm:$0xff]
    %v5112 = vld [vmem:[%s5095 + $0x80] sm:$0xff]
    %v5113 = vld [vmem:[%s5095 + $0x88] sm:$0xff]
    %v5114 = vld [vmem:[%s5095 + $0x90] sm:$0xff]
    %v5115 = vld [vmem:[%s5095 + $0x98] sm:$0xff]
    %v5116 = vld [vmem:[%s5095 + $0xa0] sm:$0xff]
    %v5117 = vld [vmem:[%s5095 + $0xa8] sm:$0xff]
    %v5118 = vld [vmem:[%s5095 + $0xb0] sm:$0xff]
    %v5119 = vld [vmem:[%s5095 + $0xb8] sm:$0xff]
    %v5120 = vld [vmem:[%s5095 + $0xc0] sm:$0xff]
    %v5121 = vld [vmem:[%s5095 + $0xc8] sm:$0xff]
    %v5122 = vld [vmem:[%s5095 + $0xd0] sm:$0xff]
    %v5123 = vld [vmem:[%s5095 + $0xd8] sm:$0xff]
    %v5124 = vld [vmem:[%s5095 + $0xe0] sm:$0xff]
    %v5125 = vld [vmem:[%s5095 + $0xe8] sm:$0xff]
    %v5126 = vld [vmem:[%s5095 + $0xf0] sm:$0xff]
    %v5127 = vld [vmem:[%s5095 + $0xf8] sm:$0xff]
    %s5128 = scalar_lea.vmem %s3, 12
    %v5129 = vld [vmem:[%s5128] sm:$0xf]
    %v5131 = vlaneseq
    %v5132 = vshrl.u32 %v5131, 7
    %v5133 = vsub.s32 0, %v5132
    %v5134 = vrot.slane %v5129, %v5133
    %v5135 = vlaneseq
    %v5136 = vshrl.u32 %v5135, 7
    %v5137 = vsub.s32 1, %v5136
    %v5138 = vrot.slane %v5129, %v5137
    %v5139 = vlaneseq
    %v5140 = vshrl.u32 %v5139, 7
    %v5141 = vsub.s32 2, %v5140
    %v5142 = vrot.slane %v5129, %v5141
    %v5143 = vlaneseq
    %v5144 = vshrl.u32 %v5143, 7
    %v5145 = vsub.s32 3, %v5144
    %v5146 = vrot.slane %v5129, %v5145
    %v5183 = vunpack.c.l.b16 %v5096
    %v5184 = vunpack.c.h.b16 %v5096
    %v5185 = vunpack.c.l.b16 %v5097
    %v5186 = vunpack.c.h.b16 %v5097
    %v5187 = vunpack.c.l.b16 %v5098
    %v5188 = vunpack.c.h.b16 %v5098
    %v5189 = vunpack.c.l.b16 %v5099
    %v5190 = vunpack.c.h.b16 %v5099
    %v5191 = vunpack.c.l.b16 %v5100
    %v5192 = vunpack.c.h.b16 %v5100
    %v5193 = vunpack.c.l.b16 %v5101
    %v5194 = vunpack.c.h.b16 %v5101
    %v5195 = vunpack.c.l.b16 %v5102
    %v5196 = vunpack.c.h.b16 %v5102
    %v5197 = vunpack.c.l.b16 %v5103
    %v5198 = vunpack.c.h.b16 %v5103
    %v5199 = vunpack.c.l.b16 %v5104
    %v5200 = vunpack.c.h.b16 %v5104
    %v5201 = vunpack.c.l.b16 %v5105
    %v5202 = vunpack.c.h.b16 %v5105
    %v5203 = vunpack.c.l.b16 %v5106
    %v5204 = vunpack.c.h.b16 %v5106
    %v5205 = vunpack.c.l.b16 %v5107
    %v5206 = vunpack.c.h.b16 %v5107
    %v5207 = vunpack.c.l.b16 %v5108
    %v5208 = vunpack.c.h.b16 %v5108
    %v5209 = vunpack.c.l.b16 %v5109
    %v5210 = vunpack.c.h.b16 %v5109
    %v5211 = vunpack.c.l.b16 %v5110
    %v5212 = vunpack.c.h.b16 %v5110
    %v5213 = vunpack.c.l.b16 %v5111
    %v5214 = vunpack.c.h.b16 %v5111
    %v5215 = vunpack.c.l.b16 %v5112
    %v5216 = vunpack.c.h.b16 %v5112
    %v5217 = vunpack.c.l.b16 %v5113
    %v5218 = vunpack.c.h.b16 %v5113
    %v5219 = vunpack.c.l.b16 %v5114
    %v5220 = vunpack.c.h.b16 %v5114
    %v5221 = vunpack.c.l.b16 %v5115
    %v5222 = vunpack.c.h.b16 %v5115
    %v5223 = vunpack.c.l.b16 %v5116
    %v5224 = vunpack.c.h.b16 %v5116
    %v5225 = vunpack.c.l.b16 %v5117
    %v5226 = vunpack.c.h.b16 %v5117
    %v5227 = vunpack.c.l.b16 %v5118
    %v5228 = vunpack.c.h.b16 %v5118
    %v5229 = vunpack.c.l.b16 %v5119
    %v5230 = vunpack.c.h.b16 %v5119
    %v5231 = vunpack.c.l.b16 %v5120
    %v5232 = vunpack.c.h.b16 %v5120
    %v5233 = vunpack.c.l.b16 %v5121
    %v5234 = vunpack.c.h.b16 %v5121
    %v5235 = vunpack.c.l.b16 %v5122
    %v5236 = vunpack.c.h.b16 %v5122
    %v5237 = vunpack.c.l.b16 %v5123
    %v5238 = vunpack.c.h.b16 %v5123
    %v5239 = vunpack.c.l.b16 %v5124
    %v5240 = vunpack.c.h.b16 %v5124
    %v5241 = vunpack.c.l.b16 %v5125
    %v5242 = vunpack.c.h.b16 %v5125
    %v5243 = vunpack.c.l.b16 %v5126
    %v5244 = vunpack.c.h.b16 %v5126
    %v5245 = vunpack.c.l.b16 %v5127
    %v5246 = vunpack.c.h.b16 %v5127
    %v5247 = vpack.c.b16 %v5187, %v5183
    %v5248 = vpack.c.b16 %v5188, %v5184
    %v5249 = vpack.c.b16 %v5189, %v5185
    %v5250 = vpack.c.b16 %v5190, %v5186
    %v5251 = vpack.c.b16 %v5195, %v5191
    %v5252 = vpack.c.b16 %v5196, %v5192
    %v5253 = vpack.c.b16 %v5197, %v5193
    %v5254 = vpack.c.b16 %v5198, %v5194
    %v5255 = vpack.c.b16 %v5203, %v5199
    %v5256 = vpack.c.b16 %v5204, %v5200
    %v5257 = vpack.c.b16 %v5205, %v5201
    %v5258 = vpack.c.b16 %v5206, %v5202
    %v5259 = vpack.c.b16 %v5211, %v5207
    %v5260 = vpack.c.b16 %v5212, %v5208
    %v5261 = vpack.c.b16 %v5213, %v5209
    %v5262 = vpack.c.b16 %v5214, %v5210
    %v5263 = vpack.c.b16 %v5219, %v5215
    %v5264 = vpack.c.b16 %v5220, %v5216
    %v5265 = vpack.c.b16 %v5221, %v5217
    %v5266 = vpack.c.b16 %v5222, %v5218
    %v5267 = vpack.c.b16 %v5227, %v5223
    %v5268 = vpack.c.b16 %v5228, %v5224
    %v5269 = vpack.c.b16 %v5229, %v5225
    %v5270 = vpack.c.b16 %v5230, %v5226
    %v5271 = vpack.c.b16 %v5235, %v5231
    %v5272 = vpack.c.b16 %v5236, %v5232
    %v5273 = vpack.c.b16 %v5237, %v5233
    %v5274 = vpack.c.b16 %v5238, %v5234
    %v5275 = vpack.c.b16 %v5243, %v5239
    %v5276 = vpack.c.b16 %v5244, %v5240
    %v5277 = vpack.c.b16 %v5245, %v5241
    %v5278 = vpack.c.b16 %v5246, %v5242
    %5311 = vmatprep.subr.bf16.mxu0 %v5248
    %5312 = vmatpush1.bf16.msra.mxu0 %v5247
    %5313 = vmatprep.subr.bf16.mxu0 %v5252
    %5314 = vmatpush1.bf16.msra.mxu0 %v5251
    %5315 = vmatprep.subr.bf16.mxu0 %v5256
    %5316 = vmatpush1.bf16.msra.mxu0 %v5255
    %5317 = vmatprep.subr.bf16.mxu0 %v5260
    %5318 = vmatpush1.bf16.msra.mxu0 %v5259
    %5319 = vmatprep.subr.bf16.mxu0 %v5264
    %5320 = vmatpush1.bf16.msra.mxu0 %v5263
    %5321 = vmatprep.subr.bf16.mxu0 %v5268
    %5322 = vmatpush1.bf16.msra.mxu0 %v5267
    %5323 = vmatprep.subr.bf16.mxu0 %v5272
    %5324 = vmatpush1.bf16.msra.mxu0 %v5271
    %5325 = vmatprep.subr.bf16.mxu0 %v5276
    %5326 = vmatpush1.bf16.msra.mxu0 %v5275
    %5327 = vmatprep.subr.bf16.mxu0 0
    %5328 = vmatpush1.bf16.msra.mxu0 0
    %5329 = vmatprep.subr.bf16.mxu0 0
    %5330 = vmatpush1.bf16.msra.mxu0 0
    %5331 = vmatprep.subr.bf16.mxu0 0
    %5332 = vmatpush1.bf16.msra.mxu0 0
    %5333 = vmatprep.subr.bf16.mxu0 0
    %5334 = vmatpush1.bf16.msra.mxu0 0
    %5335 = vmatprep.subr.bf16.mxu0 0
    %5336 = vmatpush1.bf16.msra.mxu0 0
    %5337 = vmatprep.subr.bf16.mxu0 0
    %5338 = vmatpush1.bf16.msra.mxu0 0
    %5339 = vmatprep.subr.bf16.mxu0 0
    %5340 = vmatpush1.bf16.msra.mxu0 0
    %5341 = vmatprep.subr.bf16.mxu0 0
    %5342 = vmatpush1.bf16.msra.mxu0 0
    %5343 = vmatprep.mubr.bf16.mxu0 0
    %5344 = vmatmul.mubr.bf16.gmra.mrb[0].mxu0 %v5091
    %v5345 = vpop.f32.mrb[0].mxu0
    %v5346 = vadd.f32 %v5134, %v5345
    %v5347 = vpop.f32.mrb[0].mxu0
    %v5348 = vadd.f32 %v5138, %v5347
    %v5349 = vpop.f32.mrb[0].mxu0
    %v5350 = vadd.f32 %v5134, %v5349
    %v5351 = vpop.f32.mrb[0].mxu0
    %v5352 = vadd.f32 %v5138, %v5351
    %5353 = vmatprep.mubr.bf16.mxu0 0
    %5354 = vmatmul.mubr.bf16.gmra.mrb[0].mxu0 %v5092
    %v5355 = vpop.f32.mrb[0].mxu0
    %v5356 = vadd.f32 %v5134, %v5355
    %v5357 = vpop.f32.mrb[0].mxu0
    %v5358 = vadd.f32 %v5138, %v5357
    %v5359 = vpop.f32.mrb[0].mxu0
    %v5360 = vadd.f32 %v5134, %v5359
    %v5361 = vpop.f32.mrb[0].mxu0
    %v5362 = vadd.f32 %v5138, %v5361
    %5363 = vmatprep.mubr.bf16.mxu0 0
    %5364 = vmatmul.mubr.bf16.gmra.mrb[0].mxu0 %v5093
    %v5365 = vpop.f32.mrb[0].mxu0
    %v5366 = vadd.f32 %v5134, %v5365
    %v5367 = vpop.f32.mrb[0].mxu0
    %v5368 = vadd.f32 %v5138, %v5367
    %v5369 = vpop.f32.mrb[0].mxu0
    %v5370 = vadd.f32 %v5134, %v5369
    %v5371 = vpop.f32.mrb[0].mxu0
    %v5372 = vadd.f32 %v5138, %v5371
    %5373 = vmatprep.mubr.bf16.mxu0 0
    %5374 = vmatmul.mubr.bf16.gmra.mrb[0].mxu0 %v5094
    %v5375 = vpop.f32.mrb[0].mxu0
    %v5376 = vadd.f32 %v5134, %v5375
    %v5377 = vpop.f32.mrb[0].mxu0
    %v5378 = vadd.f32 %v5138, %v5377
    %v5379 = vpop.f32.mrb[0].mxu0
    %v5380 = vadd.f32 %v5134, %v5379
    %v5381 = vpop.f32.mrb[0].mxu0
    %v5382 = vadd.f32 %v5138, %v5381
    %5383 = vdwg.mxu0
    %5384 = vmatprep.subr.bf16.mxu0 %v5250
    %5385 = vmatpush1.bf16.msra.mxu0 %v5249
    %5386 = vmatprep.subr.bf16.mxu0 %v5254
    %5387 = vmatpush1.bf16.msra.mxu0 %v5253
    %5388 = vmatprep.subr.bf16.mxu0 %v5258
    %5389 = vmatpush1.bf16.msra.mxu0 %v5257
    %5390 = vmatprep.subr.bf16.mxu0 %v5262
    %5391 = vmatpush1.bf16.msra.mxu0 %v5261
    %5392 = vmatprep.subr.bf16.mxu0 %v5266
    %5393 = vmatpush1.bf16.msra.mxu0 %v5265
    %5394 = vmatprep.subr.bf16.mxu0 %v5270
    %5395 = vmatpush1.bf16.msra.mxu0 %v5269
    %5396 = vmatprep.subr.bf16.mxu0 %v5274
    %5397 = vmatpush1.bf16.msra.mxu0 %v5273
    %5398 = vmatprep.subr.bf16.mxu0 %v5278
    %5399 = vmatpush1.bf16.msra.mxu0 %v5277
    %5400 = vmatprep.subr.bf16.mxu0 0
    %5401 = vmatpush1.bf16.msra.mxu0 0
    %5402 = vmatprep.subr.bf16.mxu0 0
    %5403 = vmatpush1.bf16.msra.mxu0 0
    %5404 = vmatprep.subr.bf16.mxu0 0
    %5405 = vmatpush1.bf16.msra.mxu0 0
    %5406 = vmatprep.subr.bf16.mxu0 0
    %5407 = vmatpush1.bf16.msra.mxu0 0
    %5408 = vmatprep.subr.bf16.mxu0 0
    %5409 = vmatpush1.bf16.msra.mxu0 0
    %5410 = vmatprep.subr.bf16.mxu0 0
    %5411 = vmatpush1.bf16.msra.mxu0 0
    %5412 = vmatprep.subr.bf16.mxu0 0
    %5413 = vmatpush1.bf16.msra.mxu0 0
    %5414 = vmatprep.subr.bf16.mxu0 0
    %5415 = vmatpush1.bf16.msra.mxu0 0
    %5416 = vmatprep.mubr.bf16.mxu0 0
    %5417 = vmatmul.mubr.bf16.gmra.mrb[0].mxu0 %v5091
    %v5418 = vpop.f32.mrb[0].mxu0
    %v5419 = vadd.f32 %v5142, %v5418
    %v5420 = vpop.f32.mrb[0].mxu0
    %v5421 = vadd.f32 %v5146, %v5420
    %v5422 = vpop.f32.mrb[0].mxu0
    %v5423 = vadd.f32 %v5142, %v5422
    %v5424 = vpop.f32.mrb[0].mxu0
    %v5425 = vadd.f32 %v5146, %v5424
    %5426 = vmatprep.mubr.bf16.mxu0 0
    %5427 = vmatmul.mubr.bf16.gmra.mrb[0].mxu0 %v5092
    %v5428 = vpop.f32.mrb[0].mxu0
    %v5429 = vadd.f32 %v5142, %v5428
    %v5430 = vpop.f32.mrb[0].mxu0
    %v5431 = vadd.f32 %v5146, %v5430
    %v5432 = vpop.f32.mrb[0].mxu0
    %v5433 = vadd.f32 %v5142, %v5432
    %v5434 = vpop.f32.mrb[0].mxu0
    %v5435 = vadd.f32 %v5146, %v5434
    %5436 = vmatprep.mubr.bf16.mxu0 0
    %5437 = vmatmul.mubr.bf16.gmra.mrb[0].mxu0 %v5093
    %v5438 = vpop.f32.mrb[0].mxu0
    %v5439 = vadd.f32 %v5142, %v5438
    %v5440 = vpop.f32.mrb[0].mxu0
    %v5441 = vadd.f32 %v5146, %v5440
    %v5442 = vpop.f32.mrb[0].mxu0
    %v5443 = vadd.f32 %v5142, %v5442
    %v5444 = vpop.f32.mrb[0].mxu0
    %v5445 = vadd.f32 %v5146, %v5444
    %5446 = vmatprep.mubr.bf16.mxu0 0
    %5447 = vmatmul.mubr.bf16.gmra.mrb[0].mxu0 %v5094
    %v5448 = vpop.f32.mrb[0].mxu0
    %v5449 = vadd.f32 %v5142, %v5448
    %v5450 = vpop.f32.mrb[0].mxu0
    %v5451 = vadd.f32 %v5146, %v5450
    %v5452 = vpop.f32.mrb[0].mxu0
    %v5453 = vadd.f32 %v5142, %v5452
    %v5454 = vpop.f32.mrb[0].mxu0
    %v5455 = vadd.f32 %v5146, %v5454
    %5456 = vdwg.mxu0
    %5457 = vst [vmem:[#allocation4] sm:$0xff] %v5346
    %5458 = vst [vmem:[#allocation4 + $0x8] sm:$0xff] %v5348
    %5459 = vst [vmem:[#allocation4 + $0x10] sm:$0xff] %v5419
    %5460 = vst [vmem:[#allocation4 + $0x18] sm:$0xff] %v5421
    %5461 = vst [vmem:[#allocation4 + $0x20] sm:$0xff] %v5350
    %5462 = vst [vmem:[#allocation4 + $0x28] sm:$0xff] %v5352
    %5463 = vst [vmem:[#allocation4 + $0x30] sm:$0xff] %v5423
    %5464 = vst [vmem:[#allocation4 + $0x38] sm:$0xff] %v5425
    %5465 = vst [vmem:[#allocation4 + $0x40] sm:$0xff] %v5356
    %5466 = vst [vmem:[#allocation4 + $0x48] sm:$0xff] %v5358
    %5467 = vst [vmem:[#allocation4 + $0x50] sm:$0xff] %v5429
    %5468 = vst [vmem:[#allocation4 + $0x58] sm:$0xff] %v5431
    %5469 = vst [vmem:[#allocation4 + $0x60] sm:$0xff] %v5360
    %5470 = vst [vmem:[#allocation4 + $0x68] sm:$0xff] %v5362
    %5471 = vst [vmem:[#allocation4 + $0x70] sm:$0xff] %v5433
    %5472 = vst [vmem:[#allocation4 + $0x78] sm:$0xff] %v5435
    %5473 = vst [vmem:[#allocation4 + $0x80] sm:$0xff] %v5366
    %5474 = vst [vmem:[#allocation4 + $0x88] sm:$0xff] %v5368
    %5475 = vst [vmem:[#allocation4 + $0x90] sm:$0xff] %v5439
    %5476 = vst [vmem:[#allocation4 + $0x98] sm:$0xff] %v5441
    %5477 = vst [vmem:[#allocation4 + $0xa0] sm:$0xff] %v5370
    %5478 = vst [vmem:[#allocation4 + $0xa8] sm:$0xff] %v5372
    %5479 = vst [vmem:[#allocation4 + $0xb0] sm:$0xff] %v5443
    %5480 = vst [vmem:[#allocation4 + $0xb8] sm:$0xff] %v5445
    %5481 = vst [vmem:[#allocation4 + $0xc0] sm:$0xff] %v5376
    %5482 = vst [vmem:[#allocation4 + $0xc8] sm:$0xff] %v5378
    %5483 = vst [vmem:[#allocation4 + $0xd0] sm:$0xff] %v5449
    %5484 = vst [vmem:[#allocation4 + $0xd8] sm:$0xff] %v5451
    %5485 = vst [vmem:[#allocation4 + $0xe0] sm:$0xff] %v5380
    %5486 = vst [vmem:[#allocation4 + $0xe8] sm:$0xff] %v5382
    %5487 = vst [vmem:[#allocation4 + $0xf0] sm:$0xff] %v5453
    %5488 = vst [vmem:[#allocation4 + $0xf8] sm:$0xff] %v5455
    %v5489 = vld [vmem:[#allocation4] sm:$0xff]
    %v5490 = vld [vmem:[#allocation4 + $0x8] sm:$0xff]
    %v5491 = vld [vmem:[#allocation4 + $0x10] sm:$0xff]
    %v5492 = vld [vmem:[#allocation4 + $0x18] sm:$0xff]
    %v5493 = vld [vmem:[#allocation4 + $0xe0] sm:$0xff]
    %v5494 = vld [vmem:[#allocation4 + $0xe8] sm:$0xff]
    %v5495 = vld [vmem:[#allocation4 + $0xf0] sm:$0xff]
    %v5496 = vld [vmem:[#allocation4 + $0xf8] sm:$0xff]
    %v5497 = vsel %vm105, %v5489, %v5493
    %v5498 = vsel %vm106, %v5490, %v5494
    %v5499 = vsel %vm107, %v5491, %v5495
    %v5500 = vsel %vm108, %v5492, %v5496
    %5501 = vst [vmem:[#allocation4] sm:$0xff] %v5497
    %5502 = vst [vmem:[#allocation4 + $0x8] sm:$0xff] %v5498
    %5503 = vst [vmem:[#allocation4 + $0x10] sm:$0xff] %v5499
    %5504 = vst [vmem:[#allocation4 + $0x18] sm:$0xff] %v5500
    %v5505 = vsel %vm105, %v5493, %v5489
    %v5506 = vsel %vm106, %v5494, %v5490
    %v5507 = vsel %vm107, %v5495, %v5491
    %v5508 = vsel %vm108, %v5496, %v5492
    %5509 = vst [vmem:[#allocation4 + $0xe0] sm:$0xff] %v5505
    %5510 = vst [vmem:[#allocation4 + $0xe8] sm:$0xff] %v5506
    %5511 = vst [vmem:[#allocation4 + $0xf0] sm:$0xff] %v5507
    %5512 = vst [vmem:[#allocation4 + $0xf8] sm:$0xff] %v5508
    %v5513 = vld [vmem:[#allocation4 + $0x20] sm:$0xff]
    %v5514 = vld [vmem:[#allocation4 + $0x28] sm:$0xff]
    %v5515 = vld [vmem:[#allocation4 + $0x30] sm:$0xff]
    %v5516 = vld [vmem:[#allocation4 + $0x38] sm:$0xff]
    %v5517 = vld [vmem:[#allocation4 + $0xc0] sm:$0xff]
    %v5518 = vld [vmem:[#allocation4 + $0xc8] sm:$0xff]
    %v5519 = vld [vmem:[#allocation4 + $0xd0] sm:$0xff]
    %v5520 = vld [vmem:[#allocation4 + $0xd8] sm:$0xff]
    %v5521 = vsel %vm105, %v5513, %v5517
    %v5522 = vsel %vm106, %v5514, %v5518
    %v5523 = vsel %vm107, %v5515, %v5519
    %v5524 = vsel %vm108, %v5516, %v5520
    %5525 = vst [vmem:[#allocation4 + $0x20] sm:$0xff] %v5521
    %5526 = vst [vmem:[#allocation4 + $0x28] sm:$0xff] %v5522
    %5527 = vst [vmem:[#allocation4 + $0x30] sm:$0xff] %v5523
    %5528 = vst [vmem:[#allocation4 + $0x38] sm:$0xff] %v5524
    %v5529 = vsel %vm105, %v5517, %v5513
    %v5530 = vsel %vm106, %v5518, %v5514
    %v5531 = vsel %vm107, %v5519, %v5515
    %v5532 = vsel %vm108, %v5520, %v5516
    %5533 = vst [vmem:[#allocation4 + $0xc0] sm:$0xff] %v5529
    %5534 = vst [vmem:[#allocation4 + $0xc8] sm:$0xff] %v5530
    %5535 = vst [vmem:[#allocation4 + $0xd0] sm:$0xff] %v5531
    %5536 = vst [vmem:[#allocation4 + $0xd8] sm:$0xff] %v5532
    %v5537 = vld [vmem:[#allocation4 + $0x40] sm:$0xff]
    %v5538 = vld [vmem:[#allocation4 + $0x48] sm:$0xff]
    %v5539 = vld [vmem:[#allocation4 + $0x50] sm:$0xff]
    %v5540 = vld [vmem:[#allocation4 + $0x58] sm:$0xff]
    %v5541 = vld [vmem:[#allocation4 + $0xa0] sm:$0xff]
    %v5542 = vld [vmem:[#allocation4 + $0xa8] sm:$0xff]
    %v5543 = vld [vmem:[#allocation4 + $0xb0] sm:$0xff]
    %v5544 = vld [vmem:[#allocation4 + $0xb8] sm:$0xff]
    %v5545 = vsel %vm105, %v5537, %v5541
    %v5546 = vsel %vm106, %v5538, %v5542
    %v5547 = vsel %vm107, %v5539, %v5543
    %v5548 = vsel %vm108, %v5540, %v5544
    %5549 = vst [vmem:[#allocation4 + $0x40] sm:$0xff] %v5545
    %5550 = vst [vmem:[#allocation4 + $0x48] sm:$0xff] %v5546
    %5551 = vst [vmem:[#allocation4 + $0x50] sm:$0xff] %v5547
    %5552 = vst [vmem:[#allocation4 + $0x58] sm:$0xff] %v5548
    %v5553 = vsel %vm105, %v5541, %v5537
    %v5554 = vsel %vm106, %v5542, %v5538
    %v5555 = vsel %vm107, %v5543, %v5539
    %v5556 = vsel %vm108, %v5544, %v5540
    %5557 = vst [vmem:[#allocation4 + $0xa0] sm:$0xff] %v5553
    %5558 = vst [vmem:[#allocation4 + $0xa8] sm:$0xff] %v5554
    %5559 = vst [vmem:[#allocation4 + $0xb0] sm:$0xff] %v5555
    %5560 = vst [vmem:[#allocation4 + $0xb8] sm:$0xff] %v5556
    %v5561 = vld [vmem:[#allocation4 + $0x60] sm:$0xff]
    %v5562 = vld [vmem:[#allocation4 + $0x68] sm:$0xff]
    %v5563 = vld [vmem:[#allocation4 + $0x70] sm:$0xff]
    %v5564 = vld [vmem:[#allocation4 + $0x78] sm:$0xff]
    %v5565 = vld [vmem:[#allocation4 + $0x80] sm:$0xff]
    %v5566 = vld [vmem:[#allocation4 + $0x88] sm:$0xff]
    %v5567 = vld [vmem:[#allocation4 + $0x90] sm:$0xff]
    %v5568 = vld [vmem:[#allocation4 + $0x98] sm:$0xff]
    %v5569 = vsel %vm105, %v5561, %v5565
    %v5570 = vsel %vm106, %v5562, %v5566
    %v5571 = vsel %vm107, %v5563, %v5567
    %v5572 = vsel %vm108, %v5564, %v5568
    %5573 = vst [vmem:[#allocation4 + $0x60] sm:$0xff] %v5569
    %5574 = vst [vmem:[#allocation4 + $0x68] sm:$0xff] %v5570
    %5575 = vst [vmem:[#allocation4 + $0x70] sm:$0xff] %v5571
    %5576 = vst [vmem:[#allocation4 + $0x78] sm:$0xff] %v5572
    %v5577 = vsel %vm105, %v5565, %v5561
    %v5578 = vsel %vm106, %v5566, %v5562
    %v5579 = vsel %vm107, %v5567, %v5563
    %v5580 = vsel %vm108, %v5568, %v5564
    %5581 = vst [vmem:[#allocation4 + $0x80] sm:$0xff] %v5577
    %5582 = vst [vmem:[#allocation4 + $0x88] sm:$0xff] %v5578
    %5583 = vst [vmem:[#allocation4 + $0x90] sm:$0xff] %v5579
    %5584 = vst [vmem:[#allocation4 + $0x98] sm:$0xff] %v5580
    %s5585 = scalar_lea.vmem [#allocation7], 768
    %v5586 = vld [vmem:[%s5585] sm:$0xff]
    %v5587 = vld [vmem:[%s5585 + $0x8] sm:$0xff]
    %v5588 = vld [vmem:[%s5585 + $0x10] sm:$0xff]
    %v5589 = vld [vmem:[%s5585 + $0x18] sm:$0xff]
    %v5590 = vld [vmem:[%s5585 + $0x20] sm:$0xff]
    %v5591 = vld [vmem:[%s5585 + $0x28] sm:$0xff]
    %v5592 = vld [vmem:[%s5585 + $0x30] sm:$0xff]
    %v5593 = vld [vmem:[%s5585 + $0x38] sm:$0xff]
    %v5594 = vld [vmem:[%s5585 + $0x40] sm:$0xff]
    %v5595 = vld [vmem:[%s5585 + $0x48] sm:$0xff]
    %v5596 = vld [vmem:[%s5585 + $0x50] sm:$0xff]
    %v5597 = vld [vmem:[%s5585 + $0x58] sm:$0xff]
    %v5598 = vld [vmem:[%s5585 + $0x60] sm:$0xff]
    %v5599 = vld [vmem:[%s5585 + $0x68] sm:$0xff]
    %v5600 = vld [vmem:[%s5585 + $0x70] sm:$0xff]
    %v5601 = vld [vmem:[%s5585 + $0x78] sm:$0xff]
    %v5602 = vld [vmem:[%s5585 + $0x80] sm:$0xff]
    %v5603 = vld [vmem:[%s5585 + $0x88] sm:$0xff]
    %v5604 = vld [vmem:[%s5585 + $0x90] sm:$0xff]
    %v5605 = vld [vmem:[%s5585 + $0x98] sm:$0xff]
    %v5606 = vld [vmem:[%s5585 + $0xa0] sm:$0xff]
    %v5607 = vld [vmem:[%s5585 + $0xa8] sm:$0xff]
    %v5608 = vld [vmem:[%s5585 + $0xb0] sm:$0xff]
    %v5609 = vld [vmem:[%s5585 + $0xb8] sm:$0xff]
    %v5610 = vld [vmem:[%s5585 + $0xc0] sm:$0xff]
    %v5611 = vld [vmem:[%s5585 + $0xc8] sm:$0xff]
    %v5612 = vld [vmem:[%s5585 + $0xd0] sm:$0xff]
    %v5613 = vld [vmem:[%s5585 + $0xd8] sm:$0xff]
    %v5614 = vld [vmem:[%s5585 + $0xe0] sm:$0xff]
    %v5615 = vld [vmem:[%s5585 + $0xe8] sm:$0xff]
    %v5616 = vld [vmem:[%s5585 + $0xf0] sm:$0xff]
    %v5617 = vld [vmem:[%s5585 + $0xf8] sm:$0xff]
    %v5618 = vld [vmem:[%s644] sm:$0xff]
    %v5619 = vld [vmem:[%s644 + $0x8] sm:$0xff]
    %v5620 = vld [vmem:[%s644 + $0x10] sm:$0xff]
    %v5621 = vld [vmem:[%s644 + $0x18] sm:$0xff]
    %v5654 = vunpack.c.l.b16 %v5586
    %v5655 = vunpack.c.h.b16 %v5586
    %v5656 = vunpack.c.l.b16 %v5587
    %v5657 = vunpack.c.h.b16 %v5587
    %v5658 = vunpack.c.l.b16 %v5588
    %v5659 = vunpack.c.h.b16 %v5588
    %v5660 = vunpack.c.l.b16 %v5589
    %v5661 = vunpack.c.h.b16 %v5589
    %v5662 = vunpack.c.l.b16 %v5590
    %v5663 = vunpack.c.h.b16 %v5590
    %v5664 = vunpack.c.l.b16 %v5591
    %v5665 = vunpack.c.h.b16 %v5591
    %v5666 = vunpack.c.l.b16 %v5592
    %v5667 = vunpack.c.h.b16 %v5592
    %v5668 = vunpack.c.l.b16 %v5593
    %v5669 = vunpack.c.h.b16 %v5593
    %v5670 = vunpack.c.l.b16 %v5594
    %v5671 = vunpack.c.h.b16 %v5594
    %v5672 = vunpack.c.l.b16 %v5595
    %v5673 = vunpack.c.h.b16 %v5595
    %v5674 = vunpack.c.l.b16 %v5596
    %v5675 = vunpack.c.h.b16 %v5596
    %v5676 = vunpack.c.l.b16 %v5597
    %v5677 = vunpack.c.h.b16 %v5597
    %v5678 = vunpack.c.l.b16 %v5598
    %v5679 = vunpack.c.h.b16 %v5598
    %v5680 = vunpack.c.l.b16 %v5599
    %v5681 = vunpack.c.h.b16 %v5599
    %v5682 = vunpack.c.l.b16 %v5600
    %v5683 = vunpack.c.h.b16 %v5600
    %v5684 = vunpack.c.l.b16 %v5601
    %v5685 = vunpack.c.h.b16 %v5601
    %v5686 = vunpack.c.l.b16 %v5602
    %v5687 = vunpack.c.h.b16 %v5602
    %v5688 = vunpack.c.l.b16 %v5603
    %v5689 = vunpack.c.h.b16 %v5603
    %v5690 = vunpack.c.l.b16 %v5604
    %v5691 = vunpack.c.h.b16 %v5604
    %v5692 = vunpack.c.l.b16 %v5605
    %v5693 = vunpack.c.h.b16 %v5605
    %v5694 = vunpack.c.l.b16 %v5606
    %v5695 = vunpack.c.h.b16 %v5606
    %v5696 = vunpack.c.l.b16 %v5607
    %v5697 = vunpack.c.h.b16 %v5607
    %v5698 = vunpack.c.l.b16 %v5608
    %v5699 = vunpack.c.h.b16 %v5608
    %v5700 = vunpack.c.l.b16 %v5609
    %v5701 = vunpack.c.h.b16 %v5609
    %v5702 = vunpack.c.l.b16 %v5610
    %v5703 = vunpack.c.h.b16 %v5610
    %v5704 = vunpack.c.l.b16 %v5611
    %v5705 = vunpack.c.h.b16 %v5611
    %v5706 = vunpack.c.l.b16 %v5612
    %v5707 = vunpack.c.h.b16 %v5612
    %v5708 = vunpack.c.l.b16 %v5613
    %v5709 = vunpack.c.h.b16 %v5613
    %v5710 = vunpack.c.l.b16 %v5614
    %v5711 = vunpack.c.h.b16 %v5614
    %v5712 = vunpack.c.l.b16 %v5615
    %v5713 = vunpack.c.h.b16 %v5615
    %v5714 = vunpack.c.l.b16 %v5616
    %v5715 = vunpack.c.h.b16 %v5616
    %v5716 = vunpack.c.l.b16 %v5617
    %v5717 = vunpack.c.h.b16 %v5617
    %v5718 = vpack.c.b16 %v5658, %v5654
    %v5719 = vpack.c.b16 %v5659, %v5655
    %v5720 = vpack.c.b16 %v5660, %v5656
    %v5721 = vpack.c.b16 %v5661, %v5657
    %v5722 = vpack.c.b16 %v5666, %v5662
    %v5723 = vpack.c.b16 %v5667, %v5663
    %v5724 = vpack.c.b16 %v5668, %v5664
    %v5725 = vpack.c.b16 %v5669, %v5665
    %v5726 = vpack.c.b16 %v5674, %v5670
    %v5727 = vpack.c.b16 %v5675, %v5671
    %v5728 = vpack.c.b16 %v5676, %v5672
    %v5729 = vpack.c.b16 %v5677, %v5673
    %v5730 = vpack.c.b16 %v5682, %v5678
    %v5731 = vpack.c.b16 %v5683, %v5679
    %v5732 = vpack.c.b16 %v5684, %v5680
    %v5733 = vpack.c.b16 %v5685, %v5681
    %v5734 = vpack.c.b16 %v5690, %v5686
    %v5735 = vpack.c.b16 %v5691, %v5687
    %v5736 = vpack.c.b16 %v5692, %v5688
    %v5737 = vpack.c.b16 %v5693, %v5689
    %v5738 = vpack.c.b16 %v5698, %v5694
    %v5739 = vpack.c.b16 %v5699, %v5695
    %v5740 = vpack.c.b16 %v5700, %v5696
    %v5741 = vpack.c.b16 %v5701, %v5697
    %v5742 = vpack.c.b16 %v5706, %v5702
    %v5743 = vpack.c.b16 %v5707, %v5703
    %v5744 = vpack.c.b16 %v5708, %v5704
    %v5745 = vpack.c.b16 %v5709, %v5705
    %v5746 = vpack.c.b16 %v5714, %v5710
    %v5747 = vpack.c.b16 %v5715, %v5711
    %v5748 = vpack.c.b16 %v5716, %v5712
    %v5749 = vpack.c.b16 %v5717, %v5713
    %5782 = vmatprep.subr.bf16.mxu0 %v5719
    %5783 = vmatpush1.bf16.msra.mxu0 %v5718
    %5784 = vmatprep.subr.bf16.mxu0 %v5723
    %5785 = vmatpush1.bf16.msra.mxu0 %v5722
    %5786 = vmatprep.subr.bf16.mxu0 %v5727
    %5787 = vmatpush1.bf16.msra.mxu0 %v5726
    %5788 = vmatprep.subr.bf16.mxu0 %v5731
    %5789 = vmatpush1.bf16.msra.mxu0 %v5730
    %5790 = vmatprep.subr.bf16.mxu0 %v5735
    %5791 = vmatpush1.bf16.msra.mxu0 %v5734
    %5792 = vmatprep.subr.bf16.mxu0 %v5739
    %5793 = vmatpush1.bf16.msra.mxu0 %v5738
    %5794 = vmatprep.subr.bf16.mxu0 %v5743
    %5795 = vmatpush1.bf16.msra.mxu0 %v5742
    %5796 = vmatprep.subr.bf16.mxu0 %v5747
    %5797 = vmatpush1.bf16.msra.mxu0 %v5746
    %5798 = vmatprep.subr.bf16.mxu0 0
    %5799 = vmatpush1.bf16.msra.mxu0 0
    %5800 = vmatprep.subr.bf16.mxu0 0
    %5801 = vmatpush1.bf16.msra.mxu0 0
    %5802 = vmatprep.subr.bf16.mxu0 0
    %5803 = vmatpush1.bf16.msra.mxu0 0
    %5804 = vmatprep.subr.bf16.mxu0 0
    %5805 = vmatpush1.bf16.msra.mxu0 0
    %5806 = vmatprep.subr.bf16.mxu0 0
    %5807 = vmatpush1.bf16.msra.mxu0 0
    %5808 = vmatprep.subr.bf16.mxu0 0
    %5809 = vmatpush1.bf16.msra.mxu0 0
    %5810 = vmatprep.subr.bf16.mxu0 0
    %5811 = vmatpush1.bf16.msra.mxu0 0
    %5812 = vmatprep.subr.bf16.mxu0 0
    %5813 = vmatpush1.bf16.msra.mxu0 0
    %5814 = vmatprep.mubr.bf16.mxu0 0
    %5815 = vmatmul.mubr.bf16.gmra.mrb[0].mxu0 0
    %v5816 = vpop.f32.mrb[0].mxu0
    %v5817 = vadd.f32 0.0, %v5816
    %v5818 = vpop.f32.mrb[0].mxu0
    %v5819 = vadd.f32 0.0, %v5818
    %v5820 = vpop.f32.mrb[0].mxu0
    %v5821 = vpop.f32.mrb[0].mxu0
    %5822 = vdwg.mxu0
    %5823 = vmatprep.subr.bf16.mxu0 %v5721
    %5824 = vmatpush1.bf16.msra.mxu0 %v5720
    %5825 = vmatprep.subr.bf16.mxu0 %v5725
    %5826 = vmatpush1.bf16.msra.mxu0 %v5724
    %5827 = vmatprep.subr.bf16.mxu0 %v5729
    %5828 = vmatpush1.bf16.msra.mxu0 %v5728
    %5829 = vmatprep.subr.bf16.mxu0 %v5733
    %5830 = vmatpush1.bf16.msra.mxu0 %v5732
    %5831 = vmatprep.subr.bf16.mxu0 %v5737
    %5832 = vmatpush1.bf16.msra.mxu0 %v5736
    %5833 = vmatprep.subr.bf16.mxu0 %v5741
    %5834 = vmatpush1.bf16.msra.mxu0 %v5740
    %5835 = vmatprep.subr.bf16.mxu0 %v5745
    %5836 = vmatpush1.bf16.msra.mxu0 %v5744
    %5837 = vmatprep.subr.bf16.mxu0 %v5749
    %5838 = vmatpush1.bf16.msra.mxu0 %v5748
    %5839 = vmatprep.subr.bf16.mxu0 0
    %5840 = vmatpush1.bf16.msra.mxu0 0
    %5841 = vmatprep.subr.bf16.mxu0 0
    %5842 = vmatpush1.bf16.msra.mxu0 0
    %5843 = vmatprep.subr.bf16.mxu0 0
    %5844 = vmatpush1.bf16.msra.mxu0 0
    %5845 = vmatprep.subr.bf16.mxu0 0
    %5846 = vmatpush1.bf16.msra.mxu0 0
    %5847 = vmatprep.subr.bf16.mxu0 0
    %5848 = vmatpush1.bf16.msra.mxu0 0
    %5849 = vmatprep.subr.bf16.mxu0 0
    %5850 = vmatpush1.bf16.msra.mxu0 0
    %5851 = vmatprep.subr.bf16.mxu0 0
    %5852 = vmatpush1.bf16.msra.mxu0 0
    %5853 = vmatprep.subr.bf16.mxu0 0
    %5854 = vmatpush1.bf16.msra.mxu0 0
    %5855 = vmatprep.mubr.bf16.mxu0 0
    %5856 = vmatmul.mubr.bf16.gmra.mrb[0].mxu0 0
    %v5857 = vpop.f32.mrb[0].mxu0
    %v5858 = vadd.f32 0.0, %v5857
    %v5859 = vpop.f32.mrb[0].mxu0
    %v5860 = vadd.f32 0.0, %v5859
    %v5861 = vpop.f32.mrb[0].mxu0
    %v5862 = vpop.f32.mrb[0].mxu0
    %5863 = vdwg.mxu0
    %v5864 = vadd.f32 %v5618, %v5817
    %v5865 = vadd.f32 %v5619, %v5819
    %v5866 = vadd.f32 %v5620, %v5858
    %v5867 = vadd.f32 %v5621, %v5860
    %v5868 = vxor.u32 %v5864, 2147483648
    %v5869 = vmul.f32 %v5868, 1.442695
    %v5870 = vpow.pop %v5869
    %v5871 = vadd.f32 %v5870, 1.0
    %v5872 = vrcp.pop %v5871
    %v5873 = vmul.f32 1.0, %v5872
    %v5874 = vxor.u32 %v5865, 2147483648
    %v5875 = vmul.f32 %v5874, 1.442695
    %v5876 = vpow.pop %v5875
    %v5877 = vadd.f32 %v5876, 1.0
    %v5878 = vrcp.pop %v5877
    %v5879 = vmul.f32 1.0, %v5878
    %v5880 = vtanh.pop %v5866
    %v5881 = vxor.u32 %v5867, 2147483648
    %v5882 = vmul.f32 %v5881, 1.442695
    %v5883 = vpow.pop %v5882
    %v5884 = vadd.f32 %v5883, 1.0
    %v5885 = vrcp.pop %v5884
    %v5886 = vmul.f32 1.0, %v5885
    %v5887 = vmul.f32 %v5879, 0.0
    %v5888 = vmul.f32 %v5873, %v5880
    %v5889 = vadd.f32 %v5887, %v5888
    %v5890 = vtanh.pop %v5889
    %v5891 = vmul.f32 %v5886, %v5890
    %5892 = vst [vmem:[#allocation3] sm:$0xff] %v5891
    %v5893 = vld [vmem:[%s922] sm:$0xff]
    %v5894 = vld [vmem:[%s922 + $0x8] sm:$0xff]
    %v5895 = vld [vmem:[%s922 + $0x10] sm:$0xff]
    %v5896 = vld [vmem:[%s922 + $0x18] sm:$0xff]
    %v5897 = vpack.c.bf16 %v5891, %v5891
    %5898 = vmatprep.subr.bf16.mxu0 %v5719
    %5899 = vmatpush1.bf16.msra.mxu0 %v5718
    %5900 = vmatprep.subr.bf16.mxu0 %v5723
    %5901 = vmatpush1.bf16.msra.mxu0 %v5722
    %5902 = vmatprep.subr.bf16.mxu0 %v5727
    %5903 = vmatpush1.bf16.msra.mxu0 %v5726
    %5904 = vmatprep.subr.bf16.mxu0 %v5731
    %5905 = vmatpush1.bf16.msra.mxu0 %v5730
    %5906 = vmatprep.subr.bf16.mxu0 %v5735
    %5907 = vmatpush1.bf16.msra.mxu0 %v5734
    %5908 = vmatprep.subr.bf16.mxu0 %v5739
    %5909 = vmatpush1.bf16.msra.mxu0 %v5738
    %5910 = vmatprep.subr.bf16.mxu0 %v5743
    %5911 = vmatpush1.bf16.msra.mxu0 %v5742
    %5912 = vmatprep.subr.bf16.mxu0 %v5747
    %5913 = vmatpush1.bf16.msra.mxu0 %v5746
    %5914 = vmatprep.subr.bf16.mxu0 0
    %5915 = vmatpush1.bf16.msra.mxu0 0
    %5916 = vmatprep.subr.bf16.mxu0 0
    %5917 = vmatpush1.bf16.msra.mxu0 0
    %5918 = vmatprep.subr.bf16.mxu0 0
    %5919 = vmatpush1.bf16.msra.mxu0 0
    %5920 = vmatprep.subr.bf16.mxu0 0
    %5921 = vmatpush1.bf16.msra.mxu0 0
    %5922 = vmatprep.subr.bf16.mxu0 0
    %5923 = vmatpush1.bf16.msra.mxu0 0
    %5924 = vmatprep.subr.bf16.mxu0 0
    %5925 = vmatpush1.bf16.msra.mxu0 0
    %5926 = vmatprep.subr.bf16.mxu0 0
    %5927 = vmatpush1.bf16.msra.mxu0 0
    %5928 = vmatprep.subr.bf16.mxu0 0
    %5929 = vmatpush1.bf16.msra.mxu0 0
    %5930 = vmatprep.mubr.bf16.mxu0 0
    %5931 = vmatmul.mubr.bf16.gmra.mrb[0].mxu0 %v5897
    %v5932 = vpop.f32.mrb[0].mxu0
    %v5933 = vadd.f32 0.0, %v5932
    %v5934 = vpop.f32.mrb[0].mxu0
    %v5935 = vadd.f32 0.0, %v5934
    %v5936 = vpop.f32.mrb[0].mxu0
    %v5937 = vpop.f32.mrb[0].mxu0
    %5938 = vdwg.mxu0
    %5939 = vmatprep.subr.bf16.mxu0 %v5721
    %5940 = vmatpush1.bf16.msra.mxu0 %v5720
    %5941 = vmatprep.subr.bf16.mxu0 %v5725
    %5942 = vmatpush1.bf16.msra.mxu0 %v5724
    %5943 = vmatprep.subr.bf16.mxu0 %v5729
    %5944 = vmatpush1.bf16.msra.mxu0 %v5728
    %5945 = vmatprep.subr.bf16.mxu0 %v5733
    %5946 = vmatpush1.bf16.msra.mxu0 %v5732
    %5947 = vmatprep.subr.bf16.mxu0 %v5737
    %5948 = vmatpush1.bf16.msra.mxu0 %v5736
    %5949 = vmatprep.subr.bf16.mxu0 %v5741
    %5950 = vmatpush1.bf16.msra.mxu0 %v5740
    %5951 = vmatprep.subr.bf16.mxu0 %v5745
    %5952 = vmatpush1.bf16.msra.mxu0 %v5744
    %5953 = vmatprep.subr.bf16.mxu0 %v5749
    %5954 = vmatpush1.bf16.msra.mxu0 %v5748
    %5955 = vmatprep.subr.bf16.mxu0 0
    %5956 = vmatpush1.bf16.msra.mxu0 0
    %5957 = vmatprep.subr.bf16.mxu0 0
    %5958 = vmatpush1.bf16.msra.mxu0 0
    %5959 = vmatprep.subr.bf16.mxu0 0
    %5960 = vmatpush1.bf16.msra.mxu0 0
    %5961 = vmatprep.subr.bf16.mxu0 0
    %5962 = vmatpush1.bf16.msra.mxu0 0
    %5963 = vmatprep.subr.bf16.mxu0 0
    %5964 = vmatpush1.bf16.msra.mxu0 0
    %5965 = vmatprep.subr.bf16.mxu0 0
    %5966 = vmatpush1.bf16.msra.mxu0 0
    %5967 = vmatprep.subr.bf16.mxu0 0
    %5968 = vmatpush1.bf16.msra.mxu0 0
    %5969 = vmatprep.subr.bf16.mxu0 0
    %5970 = vmatpush1.bf16.msra.mxu0 0
    %5971 = vmatprep.mubr.bf16.mxu0 0
    %5972 = vmatmul.mubr.bf16.gmra.mrb[0].mxu0 %v5897
    %v5973 = vpop.f32.mrb[0].mxu0
    %v5974 = vadd.f32 0.0, %v5973
    %v5975 = vpop.f32.mrb[0].mxu0
    %v5976 = vadd.f32 0.0, %v5975
    %v5977 = vpop.f32.mrb[0].mxu0
    %v5978 = vpop.f32.mrb[0].mxu0
    %5979 = vdwg.mxu0
    %v5980 = vadd.f32 %v5893, %v5933
    %v5981 = vadd.f32 %v5894, %v5935
    %v5982 = vadd.f32 %v5895, %v5974
    %v5983 = vadd.f32 %v5896, %v5976
    %v5984 = vxor.u32 %v5980, 2147483648
    %v5985 = vmul.f32 %v5984, 1.442695
    %v5986 = vpow.pop %v5985
    %v5987 = vadd.f32 %v5986, 1.0
    %v5988 = vrcp.pop %v5987
    %v5989 = vmul.f32 1.0, %v5988
    %v5990 = vxor.u32 %v5981, 2147483648
    %v5991 = vmul.f32 %v5990, 1.442695
    %v5992 = vpow.pop %v5991
    %v5993 = vadd.f32 %v5992, 1.0
    %v5994 = vrcp.pop %v5993
    %v5995 = vmul.f32 1.0, %v5994
    %v5996 = vtanh.pop %v5982
    %v5997 = vxor.u32 %v5983, 2147483648
    %v5998 = vmul.f32 %v5997, 1.442695
    %v5999 = vpow.pop %v5998
    %v6000 = vadd.f32 %v5999, 1.0
    %v6001 = vrcp.pop %v6000
    %v6002 = vmul.f32 1.0, %v6001
    %v6003 = vmul.f32 %v5995, %v5889
    %v6004 = vmul.f32 %v5989, %v5996
    %v6005 = vadd.f32 %v6003, %v6004
    %v6006 = vtanh.pop %v6005
    %v6007 = vmul.f32 %v6002, %v6006
    %6008 = vst [vmem:[%s2709] sm:$0xff] %v6007
    %v6009 = vld [vmem:[%s1042] sm:$0xff]
    %v6010 = vld [vmem:[%s1042 + $0x8] sm:$0xff]
    %v6011 = vld [vmem:[%s1042 + $0x10] sm:$0xff]
    %v6012 = vld [vmem:[%s1042 + $0x18] sm:$0xff]
    %v6013 = vpack.c.bf16 %v6007, %v6007
    %6014 = vmatprep.subr.bf16.mxu0 %v5719
    %6015 = vmatpush1.bf16.msra.mxu0 %v5718
    %6016 = vmatprep.subr.bf16.mxu0 %v5723
    %6017 = vmatpush1.bf16.msra.mxu0 %v5722
    %6018 = vmatprep.subr.bf16.mxu0 %v5727
    %6019 = vmatpush1.bf16.msra.mxu0 %v5726
    %6020 = vmatprep.subr.bf16.mxu0 %v5731
    %6021 = vmatpush1.bf16.msra.mxu0 %v5730
    %6022 = vmatprep.subr.bf16.mxu0 %v5735
    %6023 = vmatpush1.bf16.msra.mxu0 %v5734
    %6024 = vmatprep.subr.bf16.mxu0 %v5739
    %6025 = vmatpush1.bf16.msra.mxu0 %v5738
    %6026 = vmatprep.subr.bf16.mxu0 %v5743
    %6027 = vmatpush1.bf16.msra.mxu0 %v5742
    %6028 = vmatprep.subr.bf16.mxu0 %v5747
    %6029 = vmatpush1.bf16.msra.mxu0 %v5746
    %6030 = vmatprep.subr.bf16.mxu0 0
    %6031 = vmatpush1.bf16.msra.mxu0 0
    %6032 = vmatprep.subr.bf16.mxu0 0
    %6033 = vmatpush1.bf16.msra.mxu0 0
    %6034 = vmatprep.subr.bf16.mxu0 0
    %6035 = vmatpush1.bf16.msra.mxu0 0
    %6036 = vmatprep.subr.bf16.mxu0 0
    %6037 = vmatpush1.bf16.msra.mxu0 0
    %6038 = vmatprep.subr.bf16.mxu0 0
    %6039 = vmatpush1.bf16.msra.mxu0 0
    %6040 = vmatprep.subr.bf16.mxu0 0
    %6041 = vmatpush1.bf16.msra.mxu0 0
    %6042 = vmatprep.subr.bf16.mxu0 0
    %6043 = vmatpush1.bf16.msra.mxu0 0
    %6044 = vmatprep.subr.bf16.mxu0 0
    %6045 = vmatpush1.bf16.msra.mxu0 0
    %6046 = vmatprep.mubr.bf16.mxu0 0
    %6047 = vmatmul.mubr.bf16.gmra.mrb[0].mxu0 %v6013
    %v6048 = vpop.f32.mrb[0].mxu0
    %v6049 = vadd.f32 0.0, %v6048
    %v6050 = vpop.f32.mrb[0].mxu0
    %v6051 = vadd.f32 0.0, %v6050
    %v6052 = vpop.f32.mrb[0].mxu0
    %v6053 = vpop.f32.mrb[0].mxu0
    %6054 = vdwg.mxu0
    %6055 = vmatprep.subr.bf16.mxu0 %v5721
    %6056 = vmatpush1.bf16.msra.mxu0 %v5720
    %6057 = vmatprep.subr.bf16.mxu0 %v5725
    %6058 = vmatpush1.bf16.msra.mxu0 %v5724
    %6059 = vmatprep.subr.bf16.mxu0 %v5729
    %6060 = vmatpush1.bf16.msra.mxu0 %v5728
    %6061 = vmatprep.subr.bf16.mxu0 %v5733
    %6062 = vmatpush1.bf16.msra.mxu0 %v5732
    %6063 = vmatprep.subr.bf16.mxu0 %v5737
    %6064 = vmatpush1.bf16.msra.mxu0 %v5736
    %6065 = vmatprep.subr.bf16.mxu0 %v5741
    %6066 = vmatpush1.bf16.msra.mxu0 %v5740
    %6067 = vmatprep.subr.bf16.mxu0 %v5745
    %6068 = vmatpush1.bf16.msra.mxu0 %v5744
    %6069 = vmatprep.subr.bf16.mxu0 %v5749
    %6070 = vmatpush1.bf16.msra.mxu0 %v5748
    %6071 = vmatprep.subr.bf16.mxu0 0
    %6072 = vmatpush1.bf16.msra.mxu0 0
    %6073 = vmatprep.subr.bf16.mxu0 0
    %6074 = vmatpush1.bf16.msra.mxu0 0
    %6075 = vmatprep.subr.bf16.mxu0 0
    %6076 = vmatpush1.bf16.msra.mxu0 0
    %6077 = vmatprep.subr.bf16.mxu0 0
    %6078 = vmatpush1.bf16.msra.mxu0 0
    %6079 = vmatprep.subr.bf16.mxu0 0
    %6080 = vmatpush1.bf16.msra.mxu0 0
    %6081 = vmatprep.subr.bf16.mxu0 0
    %6082 = vmatpush1.bf16.msra.mxu0 0
    %6083 = vmatprep.subr.bf16.mxu0 0
    %6084 = vmatpush1.bf16.msra.mxu0 0
    %6085 = vmatprep.subr.bf16.mxu0 0
    %6086 = vmatpush1.bf16.msra.mxu0 0
    %6087 = vmatprep.mubr.bf16.mxu0 0
    %6088 = vmatmul.mubr.bf16.gmra.mrb[0].mxu0 %v6013
    %v6089 = vpop.f32.mrb[0].mxu0
    %v6090 = vadd.f32 0.0, %v6089
    %v6091 = vpop.f32.mrb[0].mxu0
    %v6092 = vadd.f32 0.0, %v6091
    %v6093 = vpop.f32.mrb[0].mxu0
    %v6094 = vpop.f32.mrb[0].mxu0
    %6095 = vdwg.mxu0
    %v6096 = vadd.f32 %v6009, %v6049
    %v6097 = vadd.f32 %v6010, %v6051
    %v6098 = vadd.f32 %v6011, %v6090
    %v6099 = vadd.f32 %v6012, %v6092
    %v6100 = vxor.u32 %v6096, 2147483648
    %v6101 = vmul.f32 %v6100, 1.442695
    %v6102 = vpow.pop %v6101
    %v6103 = vadd.f32 %v6102, 1.0
    %v6104 = vrcp.pop %v6103
    %v6105 = vmul.f32 1.0, %v6104
    %v6106 = vxor.u32 %v6097, 2147483648
    %v6107 = vmul.f32 %v6106, 1.442695
    %v6108 = vpow.pop %v6107
    %v6109 = vadd.f32 %v6108, 1.0
    %v6110 = vrcp.pop %v6109
    %v6111 = vmul.f32 1.0, %v6110
    %v6112 = vtanh.pop %v6098
    %v6113 = vxor.u32 %v6099, 2147483648
    %v6114 = vmul.f32 %v6113, 1.442695
    %v6115 = vpow.pop %v6114
    %v6116 = vadd.f32 %v6115, 1.0
    %v6117 = vrcp.pop %v6116
    %v6118 = vmul.f32 1.0, %v6117
    %v6119 = vmul.f32 %v6111, %v6005
    %v6120 = vmul.f32 %v6105, %v6112
    %v6121 = vadd.f32 %v6119, %v6120
    %v6122 = vtanh.pop %v6121
    %v6123 = vmul.f32 %v6118, %v6122
    %6124 = vst [vmem:[%s2826] sm:$0xff] %v6123
    %v6125 = vld [vmem:[%s1162] sm:$0xff]
    %v6126 = vld [vmem:[%s1162 + $0x8] sm:$0xff]
    %v6127 = vld [vmem:[%s1162 + $0x10] sm:$0xff]
    %v6128 = vld [vmem:[%s1162 + $0x18] sm:$0xff]
    %v6129 = vpack.c.bf16 %v6123, %v6123
    %6130 = vmatprep.subr.bf16.mxu0 %v5719
    %6131 = vmatpush1.bf16.msra.mxu0 %v5718
    %6132 = vmatprep.subr.bf16.mxu0 %v5723
    %6133 = vmatpush1.bf16.msra.mxu0 %v5722
    %6134 = vmatprep.subr.bf16.mxu0 %v5727
    %6135 = vmatpush1.bf16.msra.mxu0 %v5726
    %6136 = vmatprep.subr.bf16.mxu0 %v5731
    %6137 = vmatpush1.bf16.msra.mxu0 %v5730
    %6138 = vmatprep.subr.bf16.mxu0 %v5735
    %6139 = vmatpush1.bf16.msra.mxu0 %v5734
    %6140 = vmatprep.subr.bf16.mxu0 %v5739
    %6141 = vmatpush1.bf16.msra.mxu0 %v5738
    %6142 = vmatprep.subr.bf16.mxu0 %v5743
    %6143 = vmatpush1.bf16.msra.mxu0 %v5742
    %6144 = vmatprep.subr.bf16.mxu0 %v5747
    %6145 = vmatpush1.bf16.msra.mxu0 %v5746
    %6146 = vmatprep.subr.bf16.mxu0 0
    %6147 = vmatpush1.bf16.msra.mxu0 0
    %6148 = vmatprep.subr.bf16.mxu0 0
    %6149 = vmatpush1.bf16.msra.mxu0 0
    %6150 = vmatprep.subr.bf16.mxu0 0
    %6151 = vmatpush1.bf16.msra.mxu0 0
    %6152 = vmatprep.subr.bf16.mxu0 0
    %6153 = vmatpush1.bf16.msra.mxu0 0
    %6154 = vmatprep.subr.bf16.mxu0 0
    %6155 = vmatpush1.bf16.msra.mxu0 0
    %6156 = vmatprep.subr.bf16.mxu0 0
    %6157 = vmatpush1.bf16.msra.mxu0 0
    %6158 = vmatprep.subr.bf16.mxu0 0
    %6159 = vmatpush1.bf16.msra.mxu0 0
    %6160 = vmatprep.subr.bf16.mxu0 0
    %6161 = vmatpush1.bf16.msra.mxu0 0
    %6162 = vmatprep.mubr.bf16.mxu0 0
    %6163 = vmatmul.mubr.bf16.gmra.mrb[0].mxu0 %v6129
    %v6164 = vpop.f32.mrb[0].mxu0
    %v6165 = vadd.f32 0.0, %v6164
    %v6166 = vpop.f32.mrb[0].mxu0
    %v6167 = vadd.f32 0.0, %v6166
    %v6168 = vpop.f32.mrb[0].mxu0
    %v6169 = vpop.f32.mrb[0].mxu0
    %6170 = vdwg.mxu0
    %6171 = vmatprep.subr.bf16.mxu0 %v5721
    %6172 = vmatpush1.bf16.msra.mxu0 %v5720
    %6173 = vmatprep.subr.bf16.mxu0 %v5725
    %6174 = vmatpush1.bf16.msra.mxu0 %v5724
    %6175 = vmatprep.subr.bf16.mxu0 %v5729
    %6176 = vmatpush1.bf16.msra.mxu0 %v5728
    %6177 = vmatprep.subr.bf16.mxu0 %v5733
    %6178 = vmatpush1.bf16.msra.mxu0 %v5732
    %6179 = vmatprep.subr.bf16.mxu0 %v5737
    %6180 = vmatpush1.bf16.msra.mxu0 %v5736
    %6181 = vmatprep.subr.bf16.mxu0 %v5741
    %6182 = vmatpush1.bf16.msra.mxu0 %v5740
    %6183 = vmatprep.subr.bf16.mxu0 %v5745
    %6184 = vmatpush1.bf16.msra.mxu0 %v5744
    %6185 = vmatprep.subr.bf16.mxu0 %v5749
    %6186 = vmatpush1.bf16.msra.mxu0 %v5748
    %6187 = vmatprep.subr.bf16.mxu0 0
    %6188 = vmatpush1.bf16.msra.mxu0 0
    %6189 = vmatprep.subr.bf16.mxu0 0
    %6190 = vmatpush1.bf16.msra.mxu0 0
    %6191 = vmatprep.subr.bf16.mxu0 0
    %6192 = vmatpush1.bf16.msra.mxu0 0
    %6193 = vmatprep.subr.bf16.mxu0 0
    %6194 = vmatpush1.bf16.msra.mxu0 0
    %6195 = vmatprep.subr.bf16.mxu0 0
    %6196 = vmatpush1.bf16.msra.mxu0 0
    %6197 = vmatprep.subr.bf16.mxu0 0
    %6198 = vmatpush1.bf16.msra.mxu0 0
    %6199 = vmatprep.subr.bf16.mxu0 0
    %6200 = vmatpush1.bf16.msra.mxu0 0
    %6201 = vmatprep.subr.bf16.mxu0 0
    %6202 = vmatpush1.bf16.msra.mxu0 0
    %6203 = vmatprep.mubr.bf16.mxu0 0
    %6204 = vmatmul.mubr.bf16.gmra.mrb[0].mxu0 %v6129
    %v6205 = vpop.f32.mrb[0].mxu0
    %v6206 = vadd.f32 0.0, %v6205
    %v6207 = vpop.f32.mrb[0].mxu0
    %v6208 = vadd.f32 0.0, %v6207
    %v6209 = vpop.f32.mrb[0].mxu0
    %v6210 = vpop.f32.mrb[0].mxu0
    %6211 = vdwg.mxu0
    %v6212 = vadd.f32 %v6125, %v6165
    %v6213 = vadd.f32 %v6126, %v6167
    %v6214 = vadd.f32 %v6127, %v6206
    %v6215 = vadd.f32 %v6128, %v6208
    %v6216 = vxor.u32 %v6212, 2147483648
    %v6217 = vmul.f32 %v6216, 1.442695
    %v6218 = vpow.pop %v6217
    %v6219 = vadd.f32 %v6218, 1.0
    %v6220 = vrcp.pop %v6219
    %v6221 = vmul.f32 1.0, %v6220
    %v6222 = vxor.u32 %v6213, 2147483648
    %v6223 = vmul.f32 %v6222, 1.442695
    %v6224 = vpow.pop %v6223
    %v6225 = vadd.f32 %v6224, 1.0
    %v6226 = vrcp.pop %v6225
    %v6227 = vmul.f32 1.0, %v6226
    %v6228 = vtanh.pop %v6214
    %v6229 = vxor.u32 %v6215, 2147483648
    %v6230 = vmul.f32 %v6229, 1.442695
    %v6231 = vpow.pop %v6230
    %v6232 = vadd.f32 %v6231, 1.0
    %v6233 = vrcp.pop %v6232
    %v6234 = vmul.f32 1.0, %v6233
    %v6235 = vmul.f32 %v6227, %v6121
    %v6236 = vmul.f32 %v6221, %v6228
    %v6237 = vadd.f32 %v6235, %v6236
    %v6238 = vtanh.pop %v6237
    %v6239 = vmul.f32 %v6234, %v6238
    %6240 = vst [vmem:[%s2943] sm:$0xff] %v6239
    %v6241 = vld [vmem:[%s1282] sm:$0xff]
    %v6242 = vld [vmem:[%s1282 + $0x8] sm:$0xff]
    %v6243 = vld [vmem:[%s1282 + $0x10] sm:$0xff]
    %v6244 = vld [vmem:[%s1282 + $0x18] sm:$0xff]
    %v6245 = vpack.c.bf16 %v6239, %v6239
    %6246 = vmatprep.subr.bf16.mxu0 %v5719
    %6247 = vmatpush1.bf16.msra.mxu0 %v5718
    %6248 = vmatprep.subr.bf16.mxu0 %v5723
    %6249 = vmatpush1.bf16.msra.mxu0 %v5722
    %6250 = vmatprep.subr.bf16.mxu0 %v5727
    %6251 = vmatpush1.bf16.msra.mxu0 %v5726
    %6252 = vmatprep.subr.bf16.mxu0 %v5731
    %6253 = vmatpush1.bf16.msra.mxu0 %v5730
    %6254 = vmatprep.subr.bf16.mxu0 %v5735
    %6255 = vmatpush1.bf16.msra.mxu0 %v5734
    %6256 = vmatprep.subr.bf16.mxu0 %v5739
    %6257 = vmatpush1.bf16.msra.mxu0 %v5738
    %6258 = vmatprep.subr.bf16.mxu0 %v5743
    %6259 = vmatpush1.bf16.msra.mxu0 %v5742
    %6260 = vmatprep.subr.bf16.mxu0 %v5747
    %6261 = vmatpush1.bf16.msra.mxu0 %v5746
    %6262 = vmatprep.subr.bf16.mxu0 0
    %6263 = vmatpush1.bf16.msra.mxu0 0
    %6264 = vmatprep.subr.bf16.mxu0 0
    %6265 = vmatpush1.bf16.msra.mxu0 0
    %6266 = vmatprep.subr.bf16.mxu0 0
    %6267 = vmatpush1.bf16.msra.mxu0 0
    %6268 = vmatprep.subr.bf16.mxu0 0
    %6269 = vmatpush1.bf16.msra.mxu0 0
    %6270 = vmatprep.subr.bf16.mxu0 0
    %6271 = vmatpush1.bf16.msra.mxu0 0
    %6272 = vmatprep.subr.bf16.mxu0 0
    %6273 = vmatpush1.bf16.msra.mxu0 0
    %6274 = vmatprep.subr.bf16.mxu0 0
    %6275 = vmatpush1.bf16.msra.mxu0 0
    %6276 = vmatprep.subr.bf16.mxu0 0
    %6277 = vmatpush1.bf16.msra.mxu0 0
    %6278 = vmatprep.mubr.bf16.mxu0 0
    %6279 = vmatmul.mubr.bf16.gmra.mrb[0].mxu0 %v6245
    %v6280 = vpop.f32.mrb[0].mxu0
    %v6281 = vadd.f32 0.0, %v6280
    %v6282 = vpop.f32.mrb[0].mxu0
    %v6283 = vadd.f32 0.0, %v6282
    %v6284 = vpop.f32.mrb[0].mxu0
    %v6285 = vpop.f32.mrb[0].mxu0
    %6286 = vdwg.mxu0
    %6287 = vmatprep.subr.bf16.mxu0 %v5721
    %6288 = vmatpush1.bf16.msra.mxu0 %v5720
    %6289 = vmatprep.subr.bf16.mxu0 %v5725
    %6290 = vmatpush1.bf16.msra.mxu0 %v5724
    %6291 = vmatprep.subr.bf16.mxu0 %v5729
    %6292 = vmatpush1.bf16.msra.mxu0 %v5728
    %6293 = vmatprep.subr.bf16.mxu0 %v5733
    %6294 = vmatpush1.bf16.msra.mxu0 %v5732
    %6295 = vmatprep.subr.bf16.mxu0 %v5737
    %6296 = vmatpush1.bf16.msra.mxu0 %v5736
    %6297 = vmatprep.subr.bf16.mxu0 %v5741
    %6298 = vmatpush1.bf16.msra.mxu0 %v5740
    %6299 = vmatprep.subr.bf16.mxu0 %v5745
    %6300 = vmatpush1.bf16.msra.mxu0 %v5744
    %6301 = vmatprep.subr.bf16.mxu0 %v5749
    %6302 = vmatpush1.bf16.msra.mxu0 %v5748
    %6303 = vmatprep.subr.bf16.mxu0 0
    %6304 = vmatpush1.bf16.msra.mxu0 0
    %6305 = vmatprep.subr.bf16.mxu0 0
    %6306 = vmatpush1.bf16.msra.mxu0 0
    %6307 = vmatprep.subr.bf16.mxu0 0
    %6308 = vmatpush1.bf16.msra.mxu0 0
    %6309 = vmatprep.subr.bf16.mxu0 0
    %6310 = vmatpush1.bf16.msra.mxu0 0
    %6311 = vmatprep.subr.bf16.mxu0 0
    %6312 = vmatpush1.bf16.msra.mxu0 0
    %6313 = vmatprep.subr.bf16.mxu0 0
    %6314 = vmatpush1.bf16.msra.mxu0 0
    %6315 = vmatprep.subr.bf16.mxu0 0
    %6316 = vmatpush1.bf16.msra.mxu0 0
    %6317 = vmatprep.subr.bf16.mxu0 0
    %6318 = vmatpush1.bf16.msra.mxu0 0
    %6319 = vmatprep.mubr.bf16.mxu0 0
    %6320 = vmatmul.mubr.bf16.gmra.mrb[0].mxu0 %v6245
    %v6321 = vpop.f32.mrb[0].mxu0
    %v6322 = vadd.f32 0.0, %v6321
    %v6323 = vpop.f32.mrb[0].mxu0
    %v6324 = vadd.f32 0.0, %v6323
    %v6325 = vpop.f32.mrb[0].mxu0
    %v6326 = vpop.f32.mrb[0].mxu0
    %6327 = vdwg.mxu0
    %v6328 = vadd.f32 %v6241, %v6281
    %v6329 = vadd.f32 %v6242, %v6283
    %v6330 = vadd.f32 %v6243, %v6322
    %v6331 = vadd.f32 %v6244, %v6324
    %v6332 = vxor.u32 %v6328, 2147483648
    %v6333 = vmul.f32 %v6332, 1.442695
    %v6334 = vpow.pop %v6333
    %v6335 = vadd.f32 %v6334, 1.0
    %v6336 = vrcp.pop %v6335
    %v6337 = vmul.f32 1.0, %v6336
    %v6338 = vxor.u32 %v6329, 2147483648
    %v6339 = vmul.f32 %v6338, 1.442695
    %v6340 = vpow.pop %v6339
    %v6341 = vadd.f32 %v6340, 1.0
    %v6342 = vrcp.pop %v6341
    %v6343 = vmul.f32 1.0, %v6342
    %v6344 = vtanh.pop %v6330
    %v6345 = vxor.u32 %v6331, 2147483648
    %v6346 = vmul.f32 %v6345, 1.442695
    %v6347 = vpow.pop %v6346
    %v6348 = vadd.f32 %v6347, 1.0
    %v6349 = vrcp.pop %v6348
    %v6350 = vmul.f32 1.0, %v6349
    %v6351 = vmul.f32 %v6343, %v6237
    %v6352 = vmul.f32 %v6337, %v6344
    %v6353 = vadd.f32 %v6351, %v6352
    %v6354 = vtanh.pop %v6353
    %v6355 = vmul.f32 %v6350, %v6354
    %6356 = vst [vmem:[%s3060] sm:$0xff] %v6355
    %v6357 = vld [vmem:[%s1402] sm:$0xff]
    %v6358 = vld [vmem:[%s1402 + $0x8] sm:$0xff]
    %v6359 = vld [vmem:[%s1402 + $0x10] sm:$0xff]
    %v6360 = vld [vmem:[%s1402 + $0x18] sm:$0xff]
    %v6361 = vpack.c.bf16 %v6355, %v6355
    %6362 = vmatprep.subr.bf16.mxu0 %v5719
    %6363 = vmatpush1.bf16.msra.mxu0 %v5718
    %6364 = vmatprep.subr.bf16.mxu0 %v5723
    %6365 = vmatpush1.bf16.msra.mxu0 %v5722
    %6366 = vmatprep.subr.bf16.mxu0 %v5727
    %6367 = vmatpush1.bf16.msra.mxu0 %v5726
    %6368 = vmatprep.subr.bf16.mxu0 %v5731
    %6369 = vmatpush1.bf16.msra.mxu0 %v5730
    %6370 = vmatprep.subr.bf16.mxu0 %v5735
    %6371 = vmatpush1.bf16.msra.mxu0 %v5734
    %6372 = vmatprep.subr.bf16.mxu0 %v5739
    %6373 = vmatpush1.bf16.msra.mxu0 %v5738
    %6374 = vmatprep.subr.bf16.mxu0 %v5743
    %6375 = vmatpush1.bf16.msra.mxu0 %v5742
    %6376 = vmatprep.subr.bf16.mxu0 %v5747
    %6377 = vmatpush1.bf16.msra.mxu0 %v5746
    %6378 = vmatprep.subr.bf16.mxu0 0
    %6379 = vmatpush1.bf16.msra.mxu0 0
    %6380 = vmatprep.subr.bf16.mxu0 0
    %6381 = vmatpush1.bf16.msra.mxu0 0
    %6382 = vmatprep.subr.bf16.mxu0 0
    %6383 = vmatpush1.bf16.msra.mxu0 0
    %6384 = vmatprep.subr.bf16.mxu0 0
    %6385 = vmatpush1.bf16.msra.mxu0 0
    %6386 = vmatprep.subr.bf16.mxu0 0
    %6387 = vmatpush1.bf16.msra.mxu0 0
    %6388 = vmatprep.subr.bf16.mxu0 0
    %6389 = vmatpush1.bf16.msra.mxu0 0
    %6390 = vmatprep.subr.bf16.mxu0 0
    %6391 = vmatpush1.bf16.msra.mxu0 0
    %6392 = vmatprep.subr.bf16.mxu0 0
    %6393 = vmatpush1.bf16.msra.mxu0 0
    %6394 = vmatprep.mubr.bf16.mxu0 0
    %6395 = vmatmul.mubr.bf16.gmra.mrb[0].mxu0 %v6361
    %v6396 = vpop.f32.mrb[0].mxu0
    %v6397 = vadd.f32 0.0, %v6396
    %v6398 = vpop.f32.mrb[0].mxu0
    %v6399 = vadd.f32 0.0, %v6398
    %v6400 = vpop.f32.mrb[0].mxu0
    %v6401 = vpop.f32.mrb[0].mxu0
    %6402 = vdwg.mxu0
    %6403 = vmatprep.subr.bf16.mxu0 %v5721
    %6404 = vmatpush1.bf16.msra.mxu0 %v5720
    %6405 = vmatprep.subr.bf16.mxu0 %v5725
    %6406 = vmatpush1.bf16.msra.mxu0 %v5724
    %6407 = vmatprep.subr.bf16.mxu0 %v5729
    %6408 = vmatpush1.bf16.msra.mxu0 %v5728
    %6409 = vmatprep.subr.bf16.mxu0 %v5733
    %6410 = vmatpush1.bf16.msra.mxu0 %v5732
    %6411 = vmatprep.subr.bf16.mxu0 %v5737
    %6412 = vmatpush1.bf16.msra.mxu0 %v5736
    %6413 = vmatprep.subr.bf16.mxu0 %v5741
    %6414 = vmatpush1.bf16.msra.mxu0 %v5740
    %6415 = vmatprep.subr.bf16.mxu0 %v5745
    %6416 = vmatpush1.bf16.msra.mxu0 %v5744
    %6417 = vmatprep.subr.bf16.mxu0 %v5749
    %6418 = vmatpush1.bf16.msra.mxu0 %v5748
    %6419 = vmatprep.subr.bf16.mxu0 0
    %6420 = vmatpush1.bf16.msra.mxu0 0
    %6421 = vmatprep.subr.bf16.mxu0 0
    %6422 = vmatpush1.bf16.msra.mxu0 0
    %6423 = vmatprep.subr.bf16.mxu0 0
    %6424 = vmatpush1.bf16.msra.mxu0 0
    %6425 = vmatprep.subr.bf16.mxu0 0
    %6426 = vmatpush1.bf16.msra.mxu0 0
    %6427 = vmatprep.subr.bf16.mxu0 0
    %6428 = vmatpush1.bf16.msra.mxu0 0
    %6429 = vmatprep.subr.bf16.mxu0 0
    %6430 = vmatpush1.bf16.msra.mxu0 0
    %6431 = vmatprep.subr.bf16.mxu0 0
    %6432 = vmatpush1.bf16.msra.mxu0 0
    %6433 = vmatprep.subr.bf16.mxu0 0
    %6434 = vmatpush1.bf16.msra.mxu0 0
    %6435 = vmatprep.mubr.bf16.mxu0 0
    %6436 = vmatmul.mubr.bf16.gmra.mrb[0].mxu0 %v6361
    %v6437 = vpop.f32.mrb[0].mxu0
    %v6438 = vadd.f32 0.0, %v6437
    %v6439 = vpop.f32.mrb[0].mxu0
    %v6440 = vadd.f32 0.0, %v6439
    %v6441 = vpop.f32.mrb[0].mxu0
    %v6442 = vpop.f32.mrb[0].mxu0
    %6443 = vdwg.mxu0
    %v6444 = vadd.f32 %v6357, %v6397
    %v6445 = vadd.f32 %v6358, %v6399
    %v6446 = vadd.f32 %v6359, %v6438
    %v6447 = vadd.f32 %v6360, %v6440
    %v6448 = vxor.u32 %v6444, 2147483648
    %v6449 = vmul.f32 %v6448, 1.442695
    %v6450 = vpow.pop %v6449
    %v6451 = vadd.f32 %v6450, 1.0
    %v6452 = vrcp.pop %v6451
    %v6453 = vmul.f32 1.0, %v6452
    %v6454 = vxor.u32 %v6445, 2147483648
    %v6455 = vmul.f32 %v6454, 1.442695
    %v6456 = vpow.pop %v6455
    %v6457 = vadd.f32 %v6456, 1.0
    %v6458 = vrcp.pop %v6457
    %v6459 = vmul.f32 1.0, %v6458
    %v6460 = vtanh.pop %v6446
    %v6461 = vxor.u32 %v6447, 2147483648
    %v6462 = vmul.f32 %v6461, 1.442695
    %v6463 = vpow.pop %v6462
    %v6464 = vadd.f32 %v6463, 1.0
    %v6465 = vrcp.pop %v6464
    %v6466 = vmul.f32 1.0, %v6465
    %v6467 = vmul.f32 %v6459, %v6353
    %v6468 = vmul.f32 %v6453, %v6460
    %v6469 = vadd.f32 %v6467, %v6468
    %v6470 = vtanh.pop %v6469
    %v6471 = vmul.f32 %v6466, %v6470
    %6472 = vst [vmem:[%s3177] sm:$0xff] %v6471
    %v6473 = vld [vmem:[%s1522] sm:$0xff]
    %v6474 = vld [vmem:[%s1522 + $0x8] sm:$0xff]
    %v6475 = vld [vmem:[%s1522 + $0x10] sm:$0xff]
    %v6476 = vld [vmem:[%s1522 + $0x18] sm:$0xff]
    %v6477 = vpack.c.bf16 %v6471, %v6471
    %6478 = vmatprep.subr.bf16.mxu0 %v5719
    %6479 = vmatpush1.bf16.msra.mxu0 %v5718
    %6480 = vmatprep.subr.bf16.mxu0 %v5723
    %6481 = vmatpush1.bf16.msra.mxu0 %v5722
    %6482 = vmatprep.subr.bf16.mxu0 %v5727
    %6483 = vmatpush1.bf16.msra.mxu0 %v5726
    %6484 = vmatprep.subr.bf16.mxu0 %v5731
    %6485 = vmatpush1.bf16.msra.mxu0 %v5730
    %6486 = vmatprep.subr.bf16.mxu0 %v5735
    %6487 = vmatpush1.bf16.msra.mxu0 %v5734
    %6488 = vmatprep.subr.bf16.mxu0 %v5739
    %6489 = vmatpush1.bf16.msra.mxu0 %v5738
    %6490 = vmatprep.subr.bf16.mxu0 %v5743
    %6491 = vmatpush1.bf16.msra.mxu0 %v5742
    %6492 = vmatprep.subr.bf16.mxu0 %v5747
    %6493 = vmatpush1.bf16.msra.mxu0 %v5746
    %6494 = vmatprep.subr.bf16.mxu0 0
    %6495 = vmatpush1.bf16.msra.mxu0 0
    %6496 = vmatprep.subr.bf16.mxu0 0
    %6497 = vmatpush1.bf16.msra.mxu0 0
    %6498 = vmatprep.subr.bf16.mxu0 0
    %6499 = vmatpush1.bf16.msra.mxu0 0
    %6500 = vmatprep.subr.bf16.mxu0 0
    %6501 = vmatpush1.bf16.msra.mxu0 0
    %6502 = vmatprep.subr.bf16.mxu0 0
    %6503 = vmatpush1.bf16.msra.mxu0 0
    %6504 = vmatprep.subr.bf16.mxu0 0
    %6505 = vmatpush1.bf16.msra.mxu0 0
    %6506 = vmatprep.subr.bf16.mxu0 0
    %6507 = vmatpush1.bf16.msra.mxu0 0
    %6508 = vmatprep.subr.bf16.mxu0 0
    %6509 = vmatpush1.bf16.msra.mxu0 0
    %6510 = vmatprep.mubr.bf16.mxu0 0
    %6511 = vmatmul.mubr.bf16.gmra.mrb[0].mxu0 %v6477
    %v6512 = vpop.f32.mrb[0].mxu0
    %v6513 = vadd.f32 0.0, %v6512
    %v6514 = vpop.f32.mrb[0].mxu0
    %v6515 = vadd.f32 0.0, %v6514
    %v6516 = vpop.f32.mrb[0].mxu0
    %v6517 = vpop.f32.mrb[0].mxu0
    %6518 = vdwg.mxu0
    %6519 = vmatprep.subr.bf16.mxu0 %v5721
    %6520 = vmatpush1.bf16.msra.mxu0 %v5720
    %6521 = vmatprep.subr.bf16.mxu0 %v5725
    %6522 = vmatpush1.bf16.msra.mxu0 %v5724
    %6523 = vmatprep.subr.bf16.mxu0 %v5729
    %6524 = vmatpush1.bf16.msra.mxu0 %v5728
    %6525 = vmatprep.subr.bf16.mxu0 %v5733
    %6526 = vmatpush1.bf16.msra.mxu0 %v5732
    %6527 = vmatprep.subr.bf16.mxu0 %v5737
    %6528 = vmatpush1.bf16.msra.mxu0 %v5736
    %6529 = vmatprep.subr.bf16.mxu0 %v5741
    %6530 = vmatpush1.bf16.msra.mxu0 %v5740
    %6531 = vmatprep.subr.bf16.mxu0 %v5745
    %6532 = vmatpush1.bf16.msra.mxu0 %v5744
    %6533 = vmatprep.subr.bf16.mxu0 %v5749
    %6534 = vmatpush1.bf16.msra.mxu0 %v5748
    %6535 = vmatprep.subr.bf16.mxu0 0
    %6536 = vmatpush1.bf16.msra.mxu0 0
    %6537 = vmatprep.subr.bf16.mxu0 0
    %6538 = vmatpush1.bf16.msra.mxu0 0
    %6539 = vmatprep.subr.bf16.mxu0 0
    %6540 = vmatpush1.bf16.msra.mxu0 0
    %6541 = vmatprep.subr.bf16.mxu0 0
    %6542 = vmatpush1.bf16.msra.mxu0 0
    %6543 = vmatprep.subr.bf16.mxu0 0
    %6544 = vmatpush1.bf16.msra.mxu0 0
    %6545 = vmatprep.subr.bf16.mxu0 0
    %6546 = vmatpush1.bf16.msra.mxu0 0
    %6547 = vmatprep.subr.bf16.mxu0 0
    %6548 = vmatpush1.bf16.msra.mxu0 0
    %6549 = vmatprep.subr.bf16.mxu0 0
    %6550 = vmatpush1.bf16.msra.mxu0 0
    %6551 = vmatprep.mubr.bf16.mxu0 0
    %6552 = vmatmul.mubr.bf16.gmra.mrb[0].mxu0 %v6477
    %v6553 = vpop.f32.mrb[0].mxu0
    %v6554 = vadd.f32 0.0, %v6553
    %v6555 = vpop.f32.mrb[0].mxu0
    %v6556 = vadd.f32 0.0, %v6555
    %v6557 = vpop.f32.mrb[0].mxu0
    %v6558 = vpop.f32.mrb[0].mxu0
    %6559 = vdwg.mxu0
    %v6560 = vadd.f32 %v6473, %v6513
    %v6561 = vadd.f32 %v6474, %v6515
    %v6562 = vadd.f32 %v6475, %v6554
    %v6563 = vadd.f32 %v6476, %v6556
    %v6564 = vxor.u32 %v6560, 2147483648
    %v6565 = vmul.f32 %v6564, 1.442695
    %v6566 = vpow.pop %v6565
    %v6567 = vadd.f32 %v6566, 1.0
    %v6568 = vrcp.pop %v6567
    %v6569 = vmul.f32 1.0, %v6568
    %v6570 = vxor.u32 %v6561, 2147483648
    %v6571 = vmul.f32 %v6570, 1.442695
    %v6572 = vpow.pop %v6571
    %v6573 = vadd.f32 %v6572, 1.0
    %v6574 = vrcp.pop %v6573
    %v6575 = vmul.f32 1.0, %v6574
    %v6576 = vtanh.pop %v6562
    %v6577 = vxor.u32 %v6563, 2147483648
    %v6578 = vmul.f32 %v6577, 1.442695
    %v6579 = vpow.pop %v6578
    %v6580 = vadd.f32 %v6579, 1.0
    %v6581 = vrcp.pop %v6580
    %v6582 = vmul.f32 1.0, %v6581
    %v6583 = vmul.f32 %v6575, %v6469
    %v6584 = vmul.f32 %v6569, %v6576
    %v6585 = vadd.f32 %v6583, %v6584
    %v6586 = vtanh.pop %v6585
    %v6587 = vmul.f32 %v6582, %v6586
    %6588 = vst [vmem:[%s3294] sm:$0xff] %v6587
    %v6589 = vld [vmem:[%s1642] sm:$0xff]
    %v6590 = vld [vmem:[%s1642 + $0x8] sm:$0xff]
    %v6591 = vld [vmem:[%s1642 + $0x10] sm:$0xff]
    %v6592 = vld [vmem:[%s1642 + $0x18] sm:$0xff]
    %v6593 = vpack.c.bf16 %v6587, %v6587
    %6594 = vmatprep.subr.bf16.mxu0 %v5719
    %6595 = vmatpush1.bf16.msra.mxu0 %v5718
    %6596 = vmatprep.subr.bf16.mxu0 %v5723
    %6597 = vmatpush1.bf16.msra.mxu0 %v5722
    %6598 = vmatprep.subr.bf16.mxu0 %v5727
    %6599 = vmatpush1.bf16.msra.mxu0 %v5726
    %6600 = vmatprep.subr.bf16.mxu0 %v5731
    %6601 = vmatpush1.bf16.msra.mxu0 %v5730
    %6602 = vmatprep.subr.bf16.mxu0 %v5735
    %6603 = vmatpush1.bf16.msra.mxu0 %v5734
    %6604 = vmatprep.subr.bf16.mxu0 %v5739
    %6605 = vmatpush1.bf16.msra.mxu0 %v5738
    %6606 = vmatprep.subr.bf16.mxu0 %v5743
    %6607 = vmatpush1.bf16.msra.mxu0 %v5742
    %6608 = vmatprep.subr.bf16.mxu0 %v5747
    %6609 = vmatpush1.bf16.msra.mxu0 %v5746
    %6610 = vmatprep.subr.bf16.mxu0 0
    %6611 = vmatpush1.bf16.msra.mxu0 0
    %6612 = vmatprep.subr.bf16.mxu0 0
    %6613 = vmatpush1.bf16.msra.mxu0 0
    %6614 = vmatprep.subr.bf16.mxu0 0
    %6615 = vmatpush1.bf16.msra.mxu0 0
    %6616 = vmatprep.subr.bf16.mxu0 0
    %6617 = vmatpush1.bf16.msra.mxu0 0
    %6618 = vmatprep.subr.bf16.mxu0 0
    %6619 = vmatpush1.bf16.msra.mxu0 0
    %6620 = vmatprep.subr.bf16.mxu0 0
    %6621 = vmatpush1.bf16.msra.mxu0 0
    %6622 = vmatprep.subr.bf16.mxu0 0
    %6623 = vmatpush1.bf16.msra.mxu0 0
    %6624 = vmatprep.subr.bf16.mxu0 0
    %6625 = vmatpush1.bf16.msra.mxu0 0
    %6626 = vmatprep.mubr.bf16.mxu0 0
    %6627 = vmatmul.mubr.bf16.gmra.mrb[0].mxu0 %v6593
    %v6628 = vpop.f32.mrb[0].mxu0
    %v6629 = vadd.f32 0.0, %v6628
    %v6630 = vpop.f32.mrb[0].mxu0
    %v6631 = vadd.f32 0.0, %v6630
    %v6632 = vpop.f32.mrb[0].mxu0
    %v6633 = vpop.f32.mrb[0].mxu0
    %6634 = vdwg.mxu0
    %6635 = vmatprep.subr.bf16.mxu0 %v5721
    %6636 = vmatpush1.bf16.msra.mxu0 %v5720
    %6637 = vmatprep.subr.bf16.mxu0 %v5725
    %6638 = vmatpush1.bf16.msra.mxu0 %v5724
    %6639 = vmatprep.subr.bf16.mxu0 %v5729
    %6640 = vmatpush1.bf16.msra.mxu0 %v5728
    %6641 = vmatprep.subr.bf16.mxu0 %v5733
    %6642 = vmatpush1.bf16.msra.mxu0 %v5732
    %6643 = vmatprep.subr.bf16.mxu0 %v5737
    %6644 = vmatpush1.bf16.msra.mxu0 %v5736
    %6645 = vmatprep.subr.bf16.mxu0 %v5741
    %6646 = vmatpush1.bf16.msra.mxu0 %v5740
    %6647 = vmatprep.subr.bf16.mxu0 %v5745
    %6648 = vmatpush1.bf16.msra.mxu0 %v5744
    %6649 = vmatprep.subr.bf16.mxu0 %v5749
    %6650 = vmatpush1.bf16.msra.mxu0 %v5748
    %6651 = vmatprep.subr.bf16.mxu0 0
    %6652 = vmatpush1.bf16.msra.mxu0 0
    %6653 = vmatprep.subr.bf16.mxu0 0
    %6654 = vmatpush1.bf16.msra.mxu0 0
    %6655 = vmatprep.subr.bf16.mxu0 0
    %6656 = vmatpush1.bf16.msra.mxu0 0
    %6657 = vmatprep.subr.bf16.mxu0 0
    %6658 = vmatpush1.bf16.msra.mxu0 0
    %6659 = vmatprep.subr.bf16.mxu0 0
    %6660 = vmatpush1.bf16.msra.mxu0 0
    %6661 = vmatprep.subr.bf16.mxu0 0
    %6662 = vmatpush1.bf16.msra.mxu0 0
    %6663 = vmatprep.subr.bf16.mxu0 0
    %6664 = vmatpush1.bf16.msra.mxu0 0
    %6665 = vmatprep.subr.bf16.mxu0 0
    %6666 = vmatpush1.bf16.msra.mxu0 0
    %6667 = vmatprep.mubr.bf16.mxu0 0
    %6668 = vmatmul.mubr.bf16.gmra.mrb[0].mxu0 %v6593
    %v6669 = vpop.f32.mrb[0].mxu0
    %v6670 = vadd.f32 0.0, %v6669
    %v6671 = vpop.f32.mrb[0].mxu0
    %v6672 = vadd.f32 0.0, %v6671
    %v6673 = vpop.f32.mrb[0].mxu0
    %v6674 = vpop.f32.mrb[0].mxu0
    %6675 = vdwg.mxu0
    %v6676 = vadd.f32 %v6589, %v6629
    %v6677 = vadd.f32 %v6590, %v6631
    %v6678 = vadd.f32 %v6591, %v6670
    %v6679 = vadd.f32 %v6592, %v6672
    %v6680 = vxor.u32 %v6676, 2147483648
    %v6681 = vmul.f32 %v6680, 1.442695
    %v6682 = vpow.pop %v6681
    %v6683 = vadd.f32 %v6682, 1.0
    %v6684 = vrcp.pop %v6683
    %v6685 = vmul.f32 1.0, %v6684
    %v6686 = vxor.u32 %v6677, 2147483648
    %v6687 = vmul.f32 %v6686, 1.442695
    %v6688 = vpow.pop %v6687
    %v6689 = vadd.f32 %v6688, 1.0
    %v6690 = vrcp.pop %v6689
    %v6691 = vmul.f32 1.0, %v6690
    %v6692 = vtanh.pop %v6678
    %v6693 = vxor.u32 %v6679, 2147483648
    %v6694 = vmul.f32 %v6693, 1.442695
    %v6695 = vpow.pop %v6694
    %v6696 = vadd.f32 %v6695, 1.0
    %v6697 = vrcp.pop %v6696
    %v6698 = vmul.f32 1.0, %v6697
    %v6699 = vmul.f32 %v6691, %v6585
    %v6700 = vmul.f32 %v6685, %v6692
    %v6701 = vadd.f32 %v6699, %v6700
    %v6702 = vtanh.pop %v6701
    %v6703 = vmul.f32 %v6698, %v6702
    %6704 = vst [vmem:[%s3411] sm:$0xff] %v6703
    %v6705 = vld [vmem:[#allocation3 + $0x38] sm:$0xff]
    %v6706 = vld [vmem:[#allocation3] sm:$0xff]
    %v6707 = vsel %vm109, %v6705, %v6706
    %v6708 = vpack.c.bf16 %v6707, %v6707
    %v6709 = vld [vmem:[%s4] sm:$0xf]
    %v6710 = vld [vmem:[%s4 + $0x4] sm:$0xf]
    %v6711 = vld [vmem:[%s4 + $0x8] sm:$0xf]
    %v6712 = vld [vmem:[%s4 + $0xc] sm:$0xf]
    %v6713 = vld [vmem:[%s4 + $0x10] sm:$0xf]
    %v6714 = vld [vmem:[%s4 + $0x14] sm:$0xf]
    %v6715 = vld [vmem:[%s4 + $0x18] sm:$0xf]
    %v6716 = vld [vmem:[%s4 + $0x1c] sm:$0xf]
    %v6717 = vld [vmem:[%s4 + $0x20] sm:$0xf]
    %v6718 = vld [vmem:[%s4 + $0x24] sm:$0xf]
    %v6719 = vld [vmem:[%s4 + $0x28] sm:$0xf]
    %v6720 = vld [vmem:[%s4 + $0x2c] sm:$0xf]
    %v6721 = vld [vmem:[%s4 + $0x30] sm:$0xf]
    %v6722 = vld [vmem:[%s4 + $0x34] sm:$0xf]
    %v6723 = vld [vmem:[%s4 + $0x38] sm:$0xf]
    %v6724 = vld [vmem:[%s4 + $0x3c] sm:$0xf]
    %v6725 = vld [vmem:[%s5] sm:$0x1]
    %v6727 = vlaneseq
    %v6728 = vshrl.u32 %v6727, 7
    %v6729 = vsub.s32 0, %v6728
    %v6730 = vrot.slane %v6725, %v6729
    %v6748 = vunpack.c.l.b16 %v6709
    %v6749 = vunpack.c.l.b16 %v6710
    %v6750 = vunpack.c.l.b16 %v6711
    %v6751 = vunpack.c.l.b16 %v6712
    %v6752 = vunpack.c.l.b16 %v6713
    %v6753 = vunpack.c.l.b16 %v6714
    %v6754 = vunpack.c.l.b16 %v6715
    %v6755 = vunpack.c.l.b16 %v6716
    %v6756 = vunpack.c.l.b16 %v6717
    %v6757 = vunpack.c.l.b16 %v6718
    %v6758 = vunpack.c.l.b16 %v6719
    %v6759 = vunpack.c.l.b16 %v6720
    %v6760 = vunpack.c.l.b16 %v6721
    %v6761 = vunpack.c.l.b16 %v6722
    %v6762 = vunpack.c.l.b16 %v6723
    %v6763 = vunpack.c.l.b16 %v6724
    %v6764 = vpack.c.b16 %v6749, %v6748
    %v6765 = vpack.c.b16 %v6751, %v6750
    %v6766 = vpack.c.b16 %v6753, %v6752
    %v6767 = vpack.c.b16 %v6755, %v6754
    %v6768 = vpack.c.b16 %v6757, %v6756
    %v6769 = vpack.c.b16 %v6759, %v6758
    %v6770 = vpack.c.b16 %v6761, %v6760
    %v6771 = vpack.c.b16 %v6763, %v6762
    %6780 = vmatprep.subr.bf16.mxu0 0
    %6781 = vmatpush1.bf16.msra.mxu0 %v6764
    %6782 = vmatprep.subr.bf16.mxu0 0
    %6783 = vmatpush1.bf16.msra.mxu0 %v6765
    %6784 = vmatprep.subr.bf16.mxu0 0
    %6785 = vmatpush1.bf16.msra.mxu0 %v6766
    %6786 = vmatprep.subr.bf16.mxu0 0
    %6787 = vmatpush1.bf16.msra.mxu0 %v6767
    %6788 = vmatprep.subr.bf16.mxu0 0
    %6789 = vmatpush1.bf16.msra.mxu0 %v6768
    %6790 = vmatprep.subr.bf16.mxu0 0
    %6791 = vmatpush1.bf16.msra.mxu0 %v6769
    %6792 = vmatprep.subr.bf16.mxu0 0
    %6793 = vmatpush1.bf16.msra.mxu0 %v6770
    %6794 = vmatprep.subr.bf16.mxu0 0
    %6795 = vmatpush1.bf16.msra.mxu0 %v6771
    %6796 = vmatprep.subr.bf16.mxu0 0
    %6797 = vmatpush1.bf16.msra.mxu0 0
    %6798 = vmatprep.subr.bf16.mxu0 0
    %6799 = vmatpush1.bf16.msra.mxu0 0
    %6800 = vmatprep.subr.bf16.mxu0 0
    %6801 = vmatpush1.bf16.msra.mxu0 0
    %6802 = vmatprep.subr.bf16.mxu0 0
    %6803 = vmatpush1.bf16.msra.mxu0 0
    %6804 = vmatprep.subr.bf16.mxu0 0
    %6805 = vmatpush1.bf16.msra.mxu0 0
    %6806 = vmatprep.subr.bf16.mxu0 0
    %6807 = vmatpush1.bf16.msra.mxu0 0
    %6808 = vmatprep.subr.bf16.mxu0 0
    %6809 = vmatpush1.bf16.msra.mxu0 0
    %6810 = vmatprep.subr.bf16.mxu0 0
    %6811 = vmatpush1.bf16.msra.mxu0 0
    %6812 = vmatprep.mubr.bf16.mxu0 0
    %6813 = vmatmul.mubr.bf16.gmra.mrb[0].mxu0 %v6708
    %v6814 = vpop.f32.mrb[0].mxu0
    %v6815 = vadd.f32 %v6730, %v6814
    %v6816 = vpop.f32.mrb[0].mxu0
    %v6817 = vpop.f32.mrb[0].mxu0
    %v6818 = vpop.f32.mrb[0].mxu0
    %6819 = vdwg.mxu0
    %6820 = vst [vmem:[%s6] sm:$0xff] %v6815
    // Predicated region
    $region34: #{lstm_lstm_forward.1} parent=1 // pred_check
      _
    $region35: #{lstm_lstm_forward.1} parent=1 // pred_check_branch
      %6822 = sbr.rel (0) target = $region37
    $region36: #{lstm_lstm_forward.1} parent=1 // pred_region
      _
    $region37: #{lstm_lstm_forward.1} parent=1 // pred_fallthru
      _
    // Predicated region
    $region38: #{lstm_lstm_forward.1} parent=1 // pred_check
      _
    $region39: #{lstm_lstm_forward.1} parent=1 // pred_check_branch
      %6824 = sbr.rel (0) target = $region41
    $region40: #{lstm_lstm_forward.1} parent=1 // pred_region
      _
    $region41: #{lstm_lstm_forward.1} parent=1 // pred_fallthru
      _
    %6825 = vsyncpa [#allocation6], 1
    %6826 = vsyncpa [#allocation8], 1

</llo_original>
